<compile_context>
chip_gen: v6e
topology: v6e:2x2x1
jax: 0.10.0
libtpu: 0.0.40
codegen_flags: <defaults>
</compile_context>

<pallas_src>
import functools

import jax
import jax.numpy as jnp
import numpy as np
from jax.experimental import pallas as pl
from jax.experimental.pallas import tpu as pltpu


# ---------------------------------------------------------------------------
# Kernel 1: fused conv1 (1x1) + conv2 (3x3 / stride 2 / pad 1), per batch group
# ---------------------------------------------------------------------------
def _conv12_kernel(xe_ref, xo_ref, w1_ref, b1_ref, w2_ref, b2_ref,
                   y2_ref, xds_ref, y1e_s, y1o_s, col_s,
                   *, gb, h, wo, cmid):
    """One batch group: y1 = relu(x@w1+b1) entirely in VMEM, then the stride-2
    3x3 conv as a single (gb*ho*wo, 9*cmid) @ (9*cmid, cmid) matmul over an
    in-VMEM im2col tile.  Also emits the stride-2 residual input xds."""
    ho = h // 2
    m2 = gb * ho * wo
    cin = xe_ref.shape[1]

    # ---- conv1 on the even-column view ------------------------------------
    xe = xe_ref[...]                                           # (gb*h*wo, cin)
    ye = jnp.dot(xe, w1_ref[...], preferred_element_type=jnp.float32)
    ye = jnp.maximum(ye + b1_ref[...], 0.0).astype(y1e_s.dtype)
    # split rows by parity: row i = 2r + t  ->  (gb, ho, 2, wo, cmid)
    y1e_s[...] = ye.reshape(gb, ho, 2, wo, cmid)

    # ---- conv1 on the odd-column view (with 1 zero col on the left) -------
    # the extra left column realizes conv2's left zero padding; since conv1 of
    # a zero pixel is relu(b1) != 0, that column is masked back to zero.
    xo = xo_ref[...]                                     # (gb*h*(wo+1), cin)
    yo = jnp.dot(xo, w1_ref[...], preferred_element_type=jnp.float32)
    yo = jnp.maximum(yo + b1_ref[...], 0.0).astype(y1o_s.dtype)
    y1o_s[...] = yo.reshape(gb, ho, 2, wo + 1, cmid)
    y1o_s[:, :, :, 0:1, :] = jnp.zeros((gb, ho, 2, 1, cmid), y1o_s.dtype)

    # ---- stride-2 residual input: even rows of the even-column view -------
    xds = xe.reshape(gb, ho, 2, wo, cin)[:, :, 0, :, :]
    xds_ref[...] = xds.reshape(m2, cin)

    # ---- build the 9-tap im2col block in VMEM ------------------------------
    ye5 = y1e_s[...]                 # (gb, ho, 2, wo,     cmid)
    yo5 = y1o_s[...]                 # (gb, ho, 2, wo + 1, cmid)

    def col_source(dj, t):
        # tap (.., dj) at output column s reads y1 column (2s + dj - 1)
        if dj == 0:
            return yo5[:, :, t, 0:wo, :]          # cols 2s-1 (zero at s = 0)
        if dj == 1:
            return ye5[:, :, t, :, :]             # cols 2s
        return yo5[:, :, t, 1:wo + 1, :]          # cols 2s+1

    for dj in range(3):
        src0 = col_source(dj, 0)                  # rows 2r
        src1 = col_source(dj, 1)                  # rows 2r+1
        k = 3 * 1 + dj                            # tap (di=1, dj): rows 2r
        col_s[:, :, :, k * cmid:(k + 1) * cmid] = src0
        k = 3 * 2 + dj                            # tap (di=2, dj): rows 2r+1
        col_s[:, :, :, k * cmid:(k + 1) * cmid] = src1
        k = 3 * 0 + dj                            # tap (di=0, dj): rows 2r-1
        col_s[:, 0:1, :, k * cmid:(k + 1) * cmid] = jnp.zeros(
            (gb, 1, wo, cmid), col_s.dtype)
        col_s[:, 1:, :, k * cmid:(k + 1) * cmid] = src1[:, :ho - 1]

    # ---- conv2 as one long-K matmul, folded BN + relu ----------------------
    y2 = jnp.dot(col_s[...].reshape(m2, 9 * cmid), w2_ref[...],
                 preferred_element_type=jnp.float32)
    y2_ref[...] = jnp.maximum(y2 + b2_ref[...], 0.0).astype(y2_ref.dtype)


def conv1_conv2(xe2d, xo2d, w1, b1, w2, b2, *, n, gb, h, wo):
    """Fused conv1+conv2 over batch groups; returns (y2, xds) both 2D bf16."""
    cin = xe2d.shape[1]
    cmid = w1.shape[1]
    ho = h // 2
    hw = ho * wo
    kernel = functools.partial(_conv12_kernel, gb=gb, h=h, wo=wo, cmid=cmid)
    return pl.pallas_call(
        kernel,
        grid=(n // gb,),
        in_specs=[
            pl.BlockSpec((gb * h * wo, cin), lambda i: (i, 0)),
            pl.BlockSpec((gb * h * (wo + 1), cin), lambda i: (i, 0)),
            pl.BlockSpec((cin, cmid), lambda i: (0, 0)),
            pl.BlockSpec((1, cmid), lambda i: (0, 0)),
            pl.BlockSpec((9 * cmid, cmid), lambda i: (0, 0)),
            pl.BlockSpec((1, cmid), lambda i: (0, 0)),
        ],
        out_specs=[
            pl.BlockSpec((gb * hw, cmid), lambda i: (i, 0)),
            pl.BlockSpec((gb * hw, cin), lambda i: (i, 0)),
        ],
        out_shape=[
            jax.ShapeDtypeStruct((n * hw, cmid), jnp.bfloat16),
            jax.ShapeDtypeStruct((n * hw, cin), jnp.bfloat16),
        ],
        scratch_shapes=[
            pltpu.VMEM((gb, ho, 2, wo, cmid), jnp.bfloat16),      # y1 even cols
            pltpu.VMEM((gb, ho, 2, wo + 1, cmid), jnp.bfloat16),  # y1 odd cols
            pltpu.VMEM((gb, ho, wo, 9 * cmid), jnp.bfloat16),     # im2col
        ],
        compiler_params=pltpu.CompilerParams(
            dimension_semantics=("parallel",)),
    )(xe2d, xo2d, w1, b1, w2, b2)


# ---------------------------------------------------------------------------
# Kernel 2: conv3 + downsample + residual + relu + global-avg-pool + fc, fused
# ---------------------------------------------------------------------------
def _tail_kernel(y2_ref, xds_ref, pool_ref, w3_ref, wd_ref, b_ref,
                 wfc_ref, bfc_ref, o_ref, acc_ref):
    """Grid = (parallel cout half, arbitrary cout tile within the half).

    The (M, 2048) bottleneck activations never touch HBM: each step computes a
    tn-wide channel slice, pools it with an MXU matmul and accumulates its fc
    contribution in a VMEM scratch.  Each parallel half writes its own partial
    (nb, ncls) result; the wrapper sums the two halves."""
    pp = pl.program_id(0)
    j = pl.program_id(1)

    act = jnp.dot(y2_ref[...], w3_ref[...], preferred_element_type=jnp.float32)
    act = act + jnp.dot(xds_ref[...], wd_ref[...],
                        preferred_element_type=jnp.float32)
    act = jnp.maximum(act + b_ref[...], 0.0)                  # (M, tn) f32
    # global average pool as a matmul: pool_ref is the (nb, M) block-diagonal
    # averaging matrix (entries 1/hw).
    pooled = jnp.dot(pool_ref[...], act, preferred_element_type=jnp.float32)

    @pl.when(j == 0)
    def _init():
        acc_ref[...] = jnp.where(
            pp == 0,
            jnp.broadcast_to(bfc_ref[...], acc_ref.shape),   # fc bias once
            jnp.zeros(acc_ref.shape, acc_ref.dtype))

    acc_ref[...] += jnp.dot(pooled, wfc_ref[...],
                            preferred_element_type=jnp.float32)

    @pl.when(j == pl.num_programs(1) - 1)
    def _store():
        o_ref[0] = acc_ref[...]


def bottleneck_tail(y2, xds, pool, w3, wd, b3d, wfc, bfc, *, tn=512, n_par=2):
    m, cmid = y2.shape
    cin = xds.shape[1]
    cout = w3.shape[1]
    nb = pool.shape[0]
    ncls = wfc.shape[1]
    tn = min(tn, cout // n_par)
    assert cout % (n_par * tn) == 0
    jp = cout // (n_par * tn)
    partial = pl.pallas_call(
        _tail_kernel,
        grid=(n_par, jp),
        in_specs=[
            pl.BlockSpec((m, cmid), lambda p, j: (0, 0)),
            pl.BlockSpec((m, cin), lambda p, j: (0, 0)),
            pl.BlockSpec((nb, m), lambda p, j: (0, 0)),
            pl.BlockSpec((cmid, tn), lambda p, j: (0, p * jp + j)),
            pl.BlockSpec((cin, tn), lambda p, j: (0, p * jp + j)),
            pl.BlockSpec((1, tn), lambda p, j: (0, p * jp + j)),
            pl.BlockSpec((tn, ncls), lambda p, j: (p * jp + j, 0)),
            pl.BlockSpec((1, ncls), lambda p, j: (0, 0)),
        ],
        out_specs=pl.BlockSpec((1, nb, ncls), lambda p, j: (p, 0, 0)),
        out_shape=jax.ShapeDtypeStruct((n_par, nb, ncls), jnp.float32),
        scratch_shapes=[pltpu.VMEM((nb, ncls), jnp.float32)],
        compiler_params=pltpu.CompilerParams(
            dimension_semantics=("parallel", "arbitrary")),
    )(y2, xds, pool, w3, wd, b3d, wfc, bfc)
    return partial.sum(axis=0)


# ---------------------------------------------------------------------------
# Forward pass of MainOutputLayer
# ---------------------------------------------------------------------------
def main_output_layer_forward(x_nchw, p):
    x = jnp.transpose(x_nchw, (0, 2, 3, 1)).astype(jnp.bfloat16)  # NCHW->NHWC
    n, h, w, cin = x.shape
    assert h % 2 == 0 and w % 2 == 0
    ho, wo = h // 2, w // 2
    hw = ho * wo

    # batch-group size: smallest divisor of n giving a conv2 matmul M >= 256
    divisors = [d for d in range(1, n + 1) if n % d == 0]
    gb = next((d for d in divisors if d * hw >= 256), divisors[-1])

    # only wrapper-side data prep: two column-parity views of x (xo gets one
    # zero column on the left = conv2's left padding, masked after conv1).
    xe = x[:, :, 0::2, :].reshape(n * h * wo, cin)
    xo = jnp.pad(x[:, :, 1::2, :], ((0, 0), (0, 0), (1, 0), (0, 0)))
    xo = xo.reshape(n * h * (wo + 1), cin)

    # conv1 + conv2 fused (y1 stays in VMEM); xds emitted as a by-product.
    y2, xds = conv1_conv2(xe, xo, p["w1"], p["b1"], p["w2"], p["b2"],
                          n=n, gb=gb, h=h, wo=wo)

    # per-batch global-average-pool matrix (block diagonal, entries 1/hw)
    pool = jnp.repeat(jnp.eye(n, dtype=jnp.float32), hw, axis=1) / hw

    # conv3 + downsample + residual + relu + avg-pool + fc, fused
    return bottleneck_tail(y2, xds, pool, p["w3"], p["wd"], p["b3d"],
                           p["wfc"], p["bfc"], tn=512, n_par=2)


# ---------------------------------------------------------------------------
# Pure-JAX reference (same bf16 rounding points, for verification)
# ---------------------------------------------------------------------------
def reference_forward(x_nchw, p):
    x = jnp.transpose(x_nchw, (0, 2, 3, 1)).astype(jnp.bfloat16)
    y1 = jnp.maximum(
        jnp.einsum("nhwc,cd->nhwd", x, p["w1"],
                   preferred_element_type=jnp.float32) + p["b1"][0],
        0.0).astype(jnp.bfloat16)
    y2 = jax.lax.conv_general_dilated(
        y1, p["w2_hwio"], (2, 2), ((1, 1), (1, 1)),
        dimension_numbers=("NHWC", "HWIO", "NHWC"),
        preferred_element_type=jnp.float32)
    y2 = jnp.maximum(y2 + p["b2"][0], 0.0).astype(jnp.bfloat16)
    xds = x[:, ::2, ::2, :]
    act = (jnp.einsum("nhwc,cd->nhwd", y2, p["w3"],
                      preferred_element_type=jnp.float32)
           + jnp.einsum("nhwc,cd->nhwd", xds, p["wd"],
                        preferred_element_type=jnp.float32)
           + p["b3d"][0])
    act = jnp.maximum(act, 0.0)
    pooled = jnp.mean(act, axis=(1, 2))
    return pooled @ p["wfc"] + p["bfc"][0]


# ---------------------------------------------------------------------------
# Deterministic parameter initialization + offline BN folding
# ---------------------------------------------------------------------------
def init_params(key, cin, cmid, cout, ncls):
    ks = jax.random.split(key, 10)

    def kaiming(k, shape, fan_in):
        return jax.random.normal(k, shape, jnp.float32) * np.sqrt(2.0 / fan_in)

    def bn(k, c):
        k1, k2 = jax.random.split(k)
        scale = 1.0 + 0.05 * jax.random.normal(k1, (c,), jnp.float32)
        bias = 0.05 * jax.random.normal(k2, (c,), jnp.float32)
        return scale, bias

    r = {}
    r["w1"] = kaiming(ks[0], (cin, cmid), cin)
    r["s1"], r["b1"] = bn(ks[1], cmid)
    r["w2"] = kaiming(ks[2], (3, 3, cmid, cmid), 9 * cmid)        # HWIO
    r["s2"], r["b2"] = bn(ks[3], cmid)
    r["w3"] = kaiming(ks[4], (cmid, cout), cmid)
    r["s3"], r["b3"] = bn(ks[5], cout)
    r["wd"] = kaiming(ks[6], (cin, cout), cin)
    r["sd"], r["bd"] = bn(ks[7], cout)
    # fc: nn.Linear(2048, 80), kaiming_normal_ weight; stored transposed
    r["wfc"] = kaiming(ks[8], (cout, ncls), cout)
    bound = 1.0 / np.sqrt(cout)
    r["bfc"] = jax.random.uniform(ks[9], (ncls,), jnp.float32, -bound, bound)
    return r


def fold_params(r):
    """Fold BN scales into the conv weights, cast matmul operands to bf16."""
    p = {}
    p["w1"] = (r["w1"] * r["s1"]).astype(jnp.bfloat16)
    p["b1"] = r["b1"].reshape(1, -1)
    w2 = (r["w2"] * r["s2"]).astype(jnp.bfloat16)                 # HWIO, folded
    p["w2_hwio"] = w2
    p["w2"] = w2.reshape(9 * w2.shape[2], w2.shape[3])            # (9*C, C)
    p["b2"] = r["b2"].reshape(1, -1)
    p["w3"] = (r["w3"] * r["s3"]).astype(jnp.bfloat16)
    p["wd"] = (r["wd"] * r["sd"]).astype(jnp.bfloat16)
    p["b3d"] = (r["b3"] + r["bd"]).reshape(1, -1)                 # combined
    p["wfc"] = r["wfc"]                                           # f32 (tiny)
    p["bfc"] = r["bfc"].reshape(1, -1)
    return p


if __name__ == "__main__":
    # Small stand-in for layer4 input (real: Cin=1024, 14x14, Cmid=512, N>=8).
    N, CIN, H, W = 2, 256, 16, 16
    CMID, COUT, NCLS = 128, 2048, 80     # fc is fixed at 2048 -> 80

    key = jax.random.PRNGKey(0)
    kx, kp = jax.random.split(key)
    x = jax.random.normal(kx, (N, CIN, H, W), jnp.float32)
    params = fold_params(init_params(kp, CIN, CMID, COUT, NCLS))

    out = jax.block_until_ready(jax.jit(main_output_layer_forward)(x, params))
    assert out.shape == (N, NCLS), out.shape

    ref = jax.block_until_ready(reference_forward(x, params))
    np.testing.assert_allclose(np.asarray(out), np.asarray(ref),
                               rtol=1e-2, atol=1e-2)

    print("KERNEL_OK")
</pallas_src>

<mosaic_0001>
module attributes {stable_mosaic.version = 11 : i64} {
  func.func @_conv12_kernel(%arg0: i32, %arg1: memref<256x256xbf16, #tpu.memory_space<vmem>>, %arg2: memref<288x256xbf16, #tpu.memory_space<vmem>>, %arg3: memref<256x128xbf16, #tpu.memory_space<vmem>>, %arg4: memref<1x128xf32, #tpu.memory_space<vmem>>, %arg5: memref<1152x128xbf16, #tpu.memory_space<vmem>>, %arg6: memref<1x128xf32, #tpu.memory_space<vmem>>, %arg7: memref<128x128xbf16, #tpu.memory_space<vmem>>, %arg8: memref<128x256xbf16, #tpu.memory_space<vmem>>, %arg9: memref<2x8x2x8x128xbf16, #tpu.memory_space<vmem>>, %arg10: memref<2x8x2x9x128xbf16, #tpu.memory_space<vmem>>, %arg11: memref<2x8x8x1152xbf16, #tpu.memory_space<vmem>>) attributes {dimension_semantics = [#tpu.dimension_semantics<parallel>], iteration_bounds = array<i64: 1>, scalar_prefetch = 0 : i64, scratch_operands = 3 : i64, tpu.core_type = #tpu.core_type<tc>, window_params = [{transform_indices = @transform_0, window_bounds = array<i64: 256, 256>}, {transform_indices = @transform_1, window_bounds = array<i64: 288, 256>}, {pipeline_mode = #tpu.pipeline_mode<synchronous>, transform_indices = @transform_2, window_bounds = array<i64: 256, 128>}, {pipeline_mode = #tpu.pipeline_mode<synchronous>, transform_indices = @transform_3, window_bounds = array<i64: 1, 128>}, {pipeline_mode = #tpu.pipeline_mode<synchronous>, transform_indices = @transform_4, window_bounds = array<i64: 1152, 128>}, {pipeline_mode = #tpu.pipeline_mode<synchronous>, transform_indices = @transform_5, window_bounds = array<i64: 1, 128>}, {transform_indices = @transform_6, window_bounds = array<i64: 128, 128>}, {transform_indices = @transform_7, window_bounds = array<i64: 128, 256>}]} {
    %c0 = arith.constant 0 : index
    %c0_0 = arith.constant 0 : index
    %0 = vector.load %arg1[%c0, %c0_0] : memref<256x256xbf16, #tpu.memory_space<vmem>>, vector<256x256xbf16>
    %c0_1 = arith.constant 0 : index
    %c0_2 = arith.constant 0 : index
    %1 = vector.load %arg3[%c0_1, %c0_2] : memref<256x128xbf16, #tpu.memory_space<vmem>>, vector<256x128xbf16>
    %cst = arith.constant dense<0.000000e+00> : vector<256x128xf32>
    %2 = tpu.matmul %0, %1, %cst {dimension_numbers = #tpu.dot_dimension_numbers<[1], [0], [0], [1], [0, 0, 1, 1], [], []>} : vector<256x256xbf16>, vector<256x128xbf16>, vector<256x128xf32> -> vector<256x128xf32>
    %c0_3 = arith.constant 0 : index
    %c0_4 = arith.constant 0 : index
    %3 = vector.load %arg4[%c0_3, %c0_4] : memref<1x128xf32, #tpu.memory_space<vmem>>, vector<1x128xf32>
    %4 = vector.broadcast %3 : vector<1x128xf32> to vector<256x128xf32>
    %5 = arith.addf %2, %4 : vector<256x128xf32>
    %cst_5 = arith.constant 0.000000e+00 : f32
    %6 = vector.broadcast %cst_5 : f32 to vector<256x128xf32>
    %7 = arith.maximumf %5, %6 : vector<256x128xf32>
    %8 = arith.truncf %7 : vector<256x128xf32> to vector<256x128xbf16>
    %9 = vector.shape_cast %8 : vector<256x128xbf16> to vector<2x8x2x8x128xbf16>
    %c0_6 = arith.constant 0 : index
    %c0_7 = arith.constant 0 : index
    %c0_8 = arith.constant 0 : index
    %c0_9 = arith.constant 0 : index
    %c0_10 = arith.constant 0 : index
    %10 = vector.load %arg9[%c0_6, %c0_7, %c0_8, %c0_9, %c0_10] : memref<2x8x2x8x128xbf16, #tpu.memory_space<vmem>>, vector<2x8x2x8x128xbf16>
    tpu.vector_store %arg9[%c0_6, %c0_7, %c0_8, %c0_9, %c0_10], %9 {strides = array<i32>} : memref<2x8x2x8x128xbf16, #tpu.memory_space<vmem>>, vector<2x8x2x8x128xbf16>,
    %c0_11 = arith.constant 0 : index
    %c0_12 = arith.constant 0 : index
    %11 = vector.load %arg2[%c0_11, %c0_12] : memref<288x256xbf16, #tpu.memory_space<vmem>>, vector<288x256xbf16>
    %c0_13 = arith.constant 0 : index
    %c0_14 = arith.constant 0 : index
    %12 = vector.load %arg3[%c0_13, %c0_14] : memref<256x128xbf16, #tpu.memory_space<vmem>>, vector<256x128xbf16>
    %cst_15 = arith.constant dense<0.000000e+00> : vector<288x128xf32>
    %13 = tpu.matmul %11, %12, %cst_15 {dimension_numbers = #tpu.dot_dimension_numbers<[1], [0], [0], [1], [0, 0, 1, 1], [], []>} : vector<288x256xbf16>, vector<256x128xbf16>, vector<288x128xf32> -> vector<288x128xf32>
    %c0_16 = arith.constant 0 : index
    %c0_17 = arith.constant 0 : index
    %14 = vector.load %arg4[%c0_16, %c0_17] : memref<1x128xf32, #tpu.memory_space<vmem>>, vector<1x128xf32>
    %15 = vector.broadcast %14 : vector<1x128xf32> to vector<288x128xf32>
    %16 = arith.addf %13, %15 : vector<288x128xf32>
    %cst_18 = arith.constant 0.000000e+00 : f32
    %17 = vector.broadcast %cst_18 : f32 to vector<288x128xf32>
    %18 = arith.maximumf %16, %17 : vector<288x128xf32>
    %19 = arith.truncf %18 : vector<288x128xf32> to vector<288x128xbf16>
    %20 = vector.shape_cast %19 : vector<288x128xbf16> to vector<2x8x2x9x128xbf16>
    %c0_19 = arith.constant 0 : index
    %c0_20 = arith.constant 0 : index
    %c0_21 = arith.constant 0 : index
    %c0_22 = arith.constant 0 : index
    %c0_23 = arith.constant 0 : index
    %21 = vector.load %arg10[%c0_19, %c0_20, %c0_21, %c0_22, %c0_23] : memref<2x8x2x9x128xbf16, #tpu.memory_space<vmem>>, vector<2x8x2x9x128xbf16>
    tpu.vector_store %arg10[%c0_19, %c0_20, %c0_21, %c0_22, %c0_23], %20 {strides = array<i32>} : memref<2x8x2x9x128xbf16, #tpu.memory_space<vmem>>, vector<2x8x2x9x128xbf16>,
    %cst_24 = arith.constant 0.000000e+00 : bf16
    %22 = vector.broadcast %cst_24 : bf16 to vector<2x8x2x1x128xbf16>
    %c0_25 = arith.constant 0 : index
    %c0_26 = arith.constant 0 : index
    %c0_27 = arith.constant 0 : index
    %c0_28 = arith.constant 0 : index
    %c0_29 = arith.constant 0 : index
    %23 = vector.load %arg10[%c0_25, %c0_26, %c0_27, %c0_28, %c0_29] : memref<2x8x2x9x128xbf16, #tpu.memory_space<vmem>>, vector<2x8x2x1x128xbf16>
    tpu.vector_store %arg10[%c0_25, %c0_26, %c0_27, %c0_28, %c0_29], %22 {strides = array<i32>} : memref<2x8x2x9x128xbf16, #tpu.memory_space<vmem>>, vector<2x8x2x1x128xbf16>,
    %24 = vector.shape_cast %0 : vector<256x256xbf16> to vector<2x8x2x8x256xbf16>
    %25 = vector.extract_strided_slice %24 {offsets = [0, 0, 0, 0, 0], sizes = [2, 8, 1, 8, 256], strides = [1, 1, 1, 1, 1]} : vector<2x8x2x8x256xbf16> to vector<2x8x1x8x256xbf16>
    %26 = vector.shape_cast %25 : vector<2x8x1x8x256xbf16> to vector<2x8x8x256xbf16>
    %27 = vector.shape_cast %26 : vector<2x8x8x256xbf16> to vector<128x256xbf16>
    %c0_30 = arith.constant 0 : index
    %c0_31 = arith.constant 0 : index
    %28 = vector.load %arg8[%c0_30, %c0_31] : memref<128x256xbf16, #tpu.memory_space<vmem>>, vector<128x256xbf16>
    tpu.vector_store %arg8[%c0_30, %c0_31], %27 {strides = array<i32>} : memref<128x256xbf16, #tpu.memory_space<vmem>>, vector<128x256xbf16>,
    %c0_32 = arith.constant 0 : index
    %c0_33 = arith.constant 0 : index
    %c0_34 = arith.constant 0 : index
    %c0_35 = arith.constant 0 : index
    %c0_36 = arith.constant 0 : index
    %29 = vector.load %arg9[%c0_32, %c0_33, %c0_34, %c0_35, %c0_36] : memref<2x8x2x8x128xbf16, #tpu.memory_space<vmem>>, vector<2x8x2x8x128xbf16>
    %c0_37 = arith.constant 0 : index
    %c0_38 = arith.constant 0 : index
    %c0_39 = arith.constant 0 : index
    %c0_40 = arith.constant 0 : index
    %c0_41 = arith.constant 0 : index
    %30 = vector.load %arg10[%c0_37, %c0_38, %c0_39, %c0_40, %c0_41] : memref<2x8x2x9x128xbf16, #tpu.memory_space<vmem>>, vector<2x8x2x9x128xbf16>
    %31 = vector.extract_strided_slice %30 {offsets = [0, 0, 0, 0, 0], sizes = [2, 8, 1, 8, 128], strides = [1, 1, 1, 1, 1]} : vector<2x8x2x9x128xbf16> to vector<2x8x1x8x128xbf16>
    %32 = vector.shape_cast %31 : vector<2x8x1x8x128xbf16> to vector<2x8x8x128xbf16>
    %33 = vector.extract_strided_slice %30 {offsets = [0, 0, 1, 0, 0], sizes = [2, 8, 1, 8, 128], strides = [1, 1, 1, 1, 1]} : vector<2x8x2x9x128xbf16> to vector<2x8x1x8x128xbf16>
    %34 = vector.shape_cast %33 : vector<2x8x1x8x128xbf16> to vector<2x8x8x128xbf16>
    %c0_42 = arith.constant 0 : index
    %c0_43 = arith.constant 0 : index
    %c0_44 = arith.constant 0 : index
    %c384 = arith.constant 384 : index
    %35 = vector.load %arg11[%c0_42, %c0_43, %c0_44, %c384] : memref<2x8x8x1152xbf16, #tpu.memory_space<vmem>>, vector<2x8x8x128xbf16>
    tpu.vector_store %arg11[%c0_42, %c0_43, %c0_44, %c384], %32 {strides = array<i32>} : memref<2x8x8x1152xbf16, #tpu.memory_space<vmem>>, vector<2x8x8x128xbf16>,
    %c0_45 = arith.constant 0 : index
    %c0_46 = arith.constant 0 : index
    %c0_47 = arith.constant 0 : index
    %c768 = arith.constant 768 : index
    %36 = vector.load %arg11[%c0_45, %c0_46, %c0_47, %c768] : memref<2x8x8x1152xbf16, #tpu.memory_space<vmem>>, vector<2x8x8x128xbf16>
    tpu.vector_store %arg11[%c0_45, %c0_46, %c0_47, %c768], %34 {strides = array<i32>} : memref<2x8x8x1152xbf16, #tpu.memory_space<vmem>>, vector<2x8x8x128xbf16>,
    %cst_48 = arith.constant 0.000000e+00 : bf16
    %37 = vector.broadcast %cst_48 : bf16 to vector<2x1x8x128xbf16>
    %c0_49 = arith.constant 0 : index
    %c0_50 = arith.constant 0 : index
    %c0_51 = arith.constant 0 : index
    %c0_52 = arith.constant 0 : index
    %38 = vector.load %arg11[%c0_49, %c0_50, %c0_51, %c0_52] : memref<2x8x8x1152xbf16, #tpu.memory_space<vmem>>, vector<2x1x8x128xbf16>
    tpu.vector_store %arg11[%c0_49, %c0_50, %c0_51, %c0_52], %37 {strides = array<i32>} : memref<2x8x8x1152xbf16, #tpu.memory_space<vmem>>, vector<2x1x8x128xbf16>,
    %39 = vector.extract_strided_slice %34 {offsets = [0, 0, 0, 0], sizes = [2, 7, 8, 128], strides = [1, 1, 1, 1]} : vector<2x8x8x128xbf16> to vector<2x7x8x128xbf16>
    %c0_53 = arith.constant 0 : index
    %c1 = arith.constant 1 : index
    %c0_54 = arith.constant 0 : index
    %c0_55 = arith.constant 0 : index
    %40 = vector.load %arg11[%c0_53, %c1, %c0_54, %c0_55] : memref<2x8x8x1152xbf16, #tpu.memory_space<vmem>>, vector<2x7x8x128xbf16>
    tpu.vector_store %arg11[%c0_53, %c1, %c0_54, %c0_55], %39 {strides = array<i32>} : memref<2x8x8x1152xbf16, #tpu.memory_space<vmem>>, vector<2x7x8x128xbf16>,
    %41 = vector.extract_strided_slice %29 {offsets = [0, 0, 0, 0, 0], sizes = [2, 8, 1, 8, 128], strides = [1, 1, 1, 1, 1]} : vector<2x8x2x8x128xbf16> to vector<2x8x1x8x128xbf16>
    %42 = vector.shape_cast %41 : vector<2x8x1x8x128xbf16> to vector<2x8x8x128xbf16>
    %43 = vector.extract_strided_slice %29 {offsets = [0, 0, 1, 0, 0], sizes = [2, 8, 1, 8, 128], strides = [1, 1, 1, 1, 1]} : vector<2x8x2x8x128xbf16> to vector<2x8x1x8x128xbf16>
    %44 = vector.shape_cast %43 : vector<2x8x1x8x128xbf16> to vector<2x8x8x128xbf16>
    %c0_56 = arith.constant 0 : index
    %c0_57 = arith.constant 0 : index
    %c0_58 = arith.constant 0 : index
    %c512 = arith.constant 512 : index
    %45 = vector.load %arg11[%c0_56, %c0_57, %c0_58, %c512] : memref<2x8x8x1152xbf16, #tpu.memory_space<vmem>>, vector<2x8x8x128xbf16>
    tpu.vector_store %arg11[%c0_56, %c0_57, %c0_58, %c512], %42 {strides = array<i32>} : memref<2x8x8x1152xbf16, #tpu.memory_space<vmem>>, vector<2x8x8x128xbf16>,
    %c0_59 = arith.constant 0 : index
    %c0_60 = arith.constant 0 : index
    %c0_61 = arith.constant 0 : index
    %c896 = arith.constant 896 : index
    %46 = vector.load %arg11[%c0_59, %c0_60, %c0_61, %c896] : memref<2x8x8x1152xbf16, #tpu.memory_space<vmem>>, vector<2x8x8x128xbf16>
    tpu.vector_store %arg11[%c0_59, %c0_60, %c0_61, %c896], %44 {strides = array<i32>} : memref<2x8x8x1152xbf16, #tpu.memory_space<vmem>>, vector<2x8x8x128xbf16>,
    %cst_62 = arith.constant 0.000000e+00 : bf16
    %47 = vector.broadcast %cst_62 : bf16 to vector<2x1x8x128xbf16>
    %c0_63 = arith.constant 0 : index
    %c0_64 = arith.constant 0 : index
    %c0_65 = arith.constant 0 : index
    %c128 = arith.constant 128 : index
    %48 = vector.load %arg11[%c0_63, %c0_64, %c0_65, %c128] : memref<2x8x8x1152xbf16, #tpu.memory_space<vmem>>, vector<2x1x8x128xbf16>
    tpu.vector_store %arg11[%c0_63, %c0_64, %c0_65, %c128], %47 {strides = array<i32>} : memref<2x8x8x1152xbf16, #tpu.memory_space<vmem>>, vector<2x1x8x128xbf16>,
    %49 = vector.extract_strided_slice %44 {offsets = [0, 0, 0, 0], sizes = [2, 7, 8, 128], strides = [1, 1, 1, 1]} : vector<2x8x8x128xbf16> to vector<2x7x8x128xbf16>
    %c0_66 = arith.constant 0 : index
    %c1_67 = arith.constant 1 : index
    %c0_68 = arith.constant 0 : index
    %c128_69 = arith.constant 128 : index
    %50 = vector.load %arg11[%c0_66, %c1_67, %c0_68, %c128_69] : memref<2x8x8x1152xbf16, #tpu.memory_space<vmem>>, vector<2x7x8x128xbf16>
    tpu.vector_store %arg11[%c0_66, %c1_67, %c0_68, %c128_69], %49 {strides = array<i32>} : memref<2x8x8x1152xbf16, #tpu.memory_space<vmem>>, vector<2x7x8x128xbf16>,
    %51 = vector.extract_strided_slice %30 {offsets = [0, 0, 0, 1, 0], sizes = [2, 8, 1, 8, 128], strides = [1, 1, 1, 1, 1]} : vector<2x8x2x9x128xbf16> to vector<2x8x1x8x128xbf16>
    %52 = vector.shape_cast %51 : vector<2x8x1x8x128xbf16> to vector<2x8x8x128xbf16>
    %53 = vector.extract_strided_slice %30 {offsets = [0, 0, 1, 1, 0], sizes = [2, 8, 1, 8, 128], strides = [1, 1, 1, 1, 1]} : vector<2x8x2x9x128xbf16> to vector<2x8x1x8x128xbf16>
    %54 = vector.shape_cast %53 : vector<2x8x1x8x128xbf16> to vector<2x8x8x128xbf16>
    %c0_70 = arith.constant 0 : index
    %c0_71 = arith.constant 0 : index
    %c0_72 = arith.constant 0 : index
    %c640 = arith.constant 640 : index
    %55 = vector.load %arg11[%c0_70, %c0_71, %c0_72, %c640] : memref<2x8x8x1152xbf16, #tpu.memory_space<vmem>>, vector<2x8x8x128xbf16>
    tpu.vector_store %arg11[%c0_70, %c0_71, %c0_72, %c640], %52 {strides = array<i32>} : memref<2x8x8x1152xbf16, #tpu.memory_space<vmem>>, vector<2x8x8x128xbf16>,
    %c0_73 = arith.constant 0 : index
    %c0_74 = arith.constant 0 : index
    %c0_75 = arith.constant 0 : index
    %c1024 = arith.constant 1024 : index
    %56 = vector.load %arg11[%c0_73, %c0_74, %c0_75, %c1024] : memref<2x8x8x1152xbf16, #tpu.memory_space<vmem>>, vector<2x8x8x128xbf16>
    tpu.vector_store %arg11[%c0_73, %c0_74, %c0_75, %c1024], %54 {strides = array<i32>} : memref<2x8x8x1152xbf16, #tpu.memory_space<vmem>>, vector<2x8x8x128xbf16>,
    %cst_76 = arith.constant 0.000000e+00 : bf16
    %57 = vector.broadcast %cst_76 : bf16 to vector<2x1x8x128xbf16>
    %c0_77 = arith.constant 0 : index
    %c0_78 = arith.constant 0 : index
    %c0_79 = arith.constant 0 : index
    %c256 = arith.constant 256 : index
    %58 = vector.load %arg11[%c0_77, %c0_78, %c0_79, %c256] : memref<2x8x8x1152xbf16, #tpu.memory_space<vmem>>, vector<2x1x8x128xbf16>
    tpu.vector_store %arg11[%c0_77, %c0_78, %c0_79, %c256], %57 {strides = array<i32>} : memref<2x8x8x1152xbf16, #tpu.memory_space<vmem>>, vector<2x1x8x128xbf16>,
    %59 = vector.extract_strided_slice %54 {offsets = [0, 0, 0, 0], sizes = [2, 7, 8, 128], strides = [1, 1, 1, 1]} : vector<2x8x8x128xbf16> to vector<2x7x8x128xbf16>
    %c0_80 = arith.constant 0 : index
    %c1_81 = arith.constant 1 : index
    %c0_82 = arith.constant 0 : index
    %c256_83 = arith.constant 256 : index
    %60 = vector.load %arg11[%c0_80, %c1_81, %c0_82, %c256_83] : memref<2x8x8x1152xbf16, #tpu.memory_space<vmem>>, vector<2x7x8x128xbf16>
    tpu.vector_store %arg11[%c0_80, %c1_81, %c0_82, %c256_83], %59 {strides = array<i32>} : memref<2x8x8x1152xbf16, #tpu.memory_space<vmem>>, vector<2x7x8x128xbf16>,
    %c0_84 = arith.constant 0 : index
    %c0_85 = arith.constant 0 : index
    %c0_86 = arith.constant 0 : index
    %c0_87 = arith.constant 0 : index
    %61 = vector.load %arg11[%c0_84, %c0_85, %c0_86, %c0_87] : memref<2x8x8x1152xbf16, #tpu.memory_space<vmem>>, vector<2x8x8x1152xbf16>
    %62 = vector.shape_cast %61 : vector<2x8x8x1152xbf16> to vector<128x1152xbf16>
    %c0_88 = arith.constant 0 : index
    %c0_89 = arith.constant 0 : index
    %63 = vector.load %arg5[%c0_88, %c0_89] : memref<1152x128xbf16, #tpu.memory_space<vmem>>, vector<1152x128xbf16>
    %cst_90 = arith.constant dense<0.000000e+00> : vector<128x128xf32>
    %64 = tpu.matmul %62, %63, %cst_90 {dimension_numbers = #tpu.dot_dimension_numbers<[1], [0], [0], [1], [0, 0, 1, 1], [], []>} : vector<128x1152xbf16>, vector<1152x128xbf16>, vector<128x128xf32> -> vector<128x128xf32>
    %c0_91 = arith.constant 0 : index
    %c0_92 = arith.constant 0 : index
    %65 = vector.load %arg6[%c0_91, %c0_92] : memref<1x128xf32, #tpu.memory_space<vmem>>, vector<1x128xf32>
    %66 = vector.broadcast %65 : vector<1x128xf32> to vector<128x128xf32>
    %67 = arith.addf %64, %66 : vector<128x128xf32>
    %cst_93 = arith.constant 0.000000e+00 : f32
    %68 = vector.broadcast %cst_93 : f32 to vector<128x128xf32>
    %69 = arith.maximumf %67, %68 : vector<128x128xf32>
    %70 = arith.truncf %69 : vector<128x128xf32> to vector<128x128xbf16>
    %c0_94 = arith.constant 0 : index
    %c0_95 = arith.constant 0 : index
    %71 = vector.load %arg7[%c0_94, %c0_95] : memref<128x128xbf16, #tpu.memory_space<vmem>>, vector<128x128xbf16>
    tpu.vector_store %arg7[%c0_94, %c0_95], %70 {strides = array<i32>} : memref<128x128xbf16, #tpu.memory_space<vmem>>, vector<128x128xbf16>,
    return
  }
  func.func @transform_0(%arg0: i32) -> (i32, i32) {
    %c0_i32 = arith.constant 0 : i32
    %c0_i32_0 = arith.constant 0 : i32
    return %arg0, %c0_i32 : i32, i32
  }
  func.func @transform_1(%arg0: i32) -> (i32, i32) {
    %c0_i32 = arith.constant 0 : i32
    %c0_i32_0 = arith.constant 0 : i32
    return %arg0, %c0_i32 : i32, i32
  }
  func.func @transform_2(%arg0: i32) -> (i32, i32) {
    %c0_i32 = arith.constant 0 : i32
    %c0_i32_0 = arith.constant 0 : i32
    %c0_i32_1 = arith.constant 0 : i32
    return %c0_i32, %c0_i32_0 : i32, i32
  }
  func.func @transform_3(%arg0: i32) -> (i32, i32) {
    %c0_i32 = arith.constant 0 : i32
    %c0_i32_0 = arith.constant 0 : i32
    %c0_i32_1 = arith.constant 0 : i32
    return %c0_i32, %c0_i32_0 : i32, i32
  }
  func.func @transform_4(%arg0: i32) -> (i32, i32) {
    %c0_i32 = arith.constant 0 : i32
    %c0_i32_0 = arith.constant 0 : i32
    %c0_i32_1 = arith.constant 0 : i32
    return %c0_i32, %c0_i32_0 : i32, i32
  }
  func.func @transform_5(%arg0: i32) -> (i32, i32) {
    %c0_i32 = arith.constant 0 : i32
    %c0_i32_0 = arith.constant 0 : i32
    %c0_i32_1 = arith.constant 0 : i32
    return %c0_i32, %c0_i32_0 : i32, i32
  }
  func.func @transform_6(%arg0: i32) -> (i32, i32) {
    %c0_i32 = arith.constant 0 : i32
    %c0_i32_0 = arith.constant 0 : i32
    return %arg0, %c0_i32 : i32, i32
  }
  func.func @transform_7(%arg0: i32) -> (i32, i32) {
    %c0_i32 = arith.constant 0 : i32
    %c0_i32_0 = arith.constant 0 : i32
    return %arg0, %c0_i32 : i32, i32
  }
}

module attributes {stable_mosaic.version = 11 : i64} {
  func.func @_tail_kernel(%arg0: i32, %arg1: i32, %arg2: memref<128x128xbf16, #tpu.memory_space<vmem>>, %arg3: memref<128x256xbf16, #tpu.memory_space<vmem>>, %arg4: memref<2x128xf32, #tpu.memory_space<vmem>>, %arg5: memref<128x512xbf16, #tpu.memory_space<vmem>>, %arg6: memref<256x512xbf16, #tpu.memory_space<vmem>>, %arg7: memref<1x512xf32, #tpu.memory_space<vmem>>, %arg8: memref<512x80xf32, #tpu.memory_space<vmem>>, %arg9: memref<1x80xf32, #tpu.memory_space<vmem>>, %arg10: memref<1x2x80xf32, #tpu.memory_space<vmem>>, %arg11: memref<2x80xf32, #tpu.memory_space<vmem>>) attributes {dimension_semantics = [#tpu.dimension_semantics<parallel>, #tpu.dimension_semantics<arbitrary>], iteration_bounds = array<i64: 2, 2>, scalar_prefetch = 0 : i64, scratch_operands = 1 : i64, tpu.core_type = #tpu.core_type<tc>, window_params = [{pipeline_mode = #tpu.pipeline_mode<synchronous>, transform_indices = @transform_0, window_bounds = array<i64: 128, 128>}, {pipeline_mode = #tpu.pipeline_mode<synchronous>, transform_indices = @transform_1, window_bounds = array<i64: 128, 256>}, {pipeline_mode = #tpu.pipeline_mode<synchronous>, transform_indices = @transform_2, window_bounds = array<i64: 2, 128>}, {transform_indices = @transform_3, window_bounds = array<i64: 128, 512>}, {transform_indices = @transform_4, window_bounds = array<i64: 256, 512>}, {transform_indices = @transform_5, window_bounds = array<i64: 1, 512>}, {transform_indices = @transform_6, window_bounds = array<i64: 512, 80>}, {pipeline_mode = #tpu.pipeline_mode<synchronous>, transform_indices = @transform_7, window_bounds = array<i64: 1, 80>}, {transform_indices = @transform_8, window_bounds = array<i64: 1, 2, 80>}]} {
    %c0 = arith.constant 0 : index
    %c0_0 = arith.constant 0 : index
    %0 = vector.load %arg2[%c0, %c0_0] : memref<128x128xbf16, #tpu.memory_space<vmem>>, vector<128x128xbf16>
    %c0_1 = arith.constant 0 : index
    %c0_2 = arith.constant 0 : index
    %1 = vector.load %arg5[%c0_1, %c0_2] : memref<128x512xbf16, #tpu.memory_space<vmem>>, vector<128x512xbf16>
    %cst = arith.constant dense<0.000000e+00> : vector<128x512xf32>
    %2 = tpu.matmul %0, %1, %cst {dimension_numbers = #tpu.dot_dimension_numbers<[1], [0], [0], [1], [0, 0, 1, 1], [], []>} : vector<128x128xbf16>, vector<128x512xbf16>, vector<128x512xf32> -> vector<128x512xf32>
    %c0_3 = arith.constant 0 : index
    %c0_4 = arith.constant 0 : index
    %3 = vector.load %arg3[%c0_3, %c0_4] : memref<128x256xbf16, #tpu.memory_space<vmem>>, vector<128x256xbf16>
    %c0_5 = arith.constant 0 : index
    %c0_6 = arith.constant 0 : index
    %4 = vector.load %arg6[%c0_5, %c0_6] : memref<256x512xbf16, #tpu.memory_space<vmem>>, vector<256x512xbf16>
    %cst_7 = arith.constant dense<0.000000e+00> : vector<128x512xf32>
    %5 = tpu.matmul %3, %4, %cst_7 {dimension_numbers = #tpu.dot_dimension_numbers<[1], [0], [0], [1], [0, 0, 1, 1], [], []>} : vector<128x256xbf16>, vector<256x512xbf16>, vector<128x512xf32> -> vector<128x512xf32>
    %6 = arith.addf %2, %5 : vector<128x512xf32>
    %c0_8 = arith.constant 0 : index
    %c0_9 = arith.constant 0 : index
    %7 = vector.load %arg7[%c0_8, %c0_9] : memref<1x512xf32, #tpu.memory_space<vmem>>, vector<1x512xf32>
    %8 = vector.broadcast %7 : vector<1x512xf32> to vector<128x512xf32>
    %9 = arith.addf %6, %8 : vector<128x512xf32>
    %cst_10 = arith.constant 0.000000e+00 : f32
    %10 = vector.broadcast %cst_10 : f32 to vector<128x512xf32>
    %11 = arith.maximumf %9, %10 : vector<128x512xf32>
    %c0_11 = arith.constant 0 : index
    %c0_12 = arith.constant 0 : index
    %12 = vector.load %arg4[%c0_11, %c0_12] : memref<2x128xf32, #tpu.memory_space<vmem>>, vector<2x128xf32>
    %cst_13 = arith.constant dense<0.000000e+00> : vector<2x512xf32>
    %13 = tpu.matmul %12, %11, %cst_13 {dimension_numbers = #tpu.dot_dimension_numbers<[1], [0], [0], [1], [0, 0, 1, 1], [], []>} : vector<2x128xf32>, vector<128x512xf32>, vector<2x512xf32> -> vector<2x512xf32>
    %c0_i32 = arith.constant 0 : i32
    %14 = arith.cmpi eq, %arg1, %c0_i32 : i32
    %15 = arith.extui %14 : i1 to i32
    %c0_i32_14 = arith.constant 0 : i32
    %16 = arith.cmpi ne, %15, %c0_i32_14 : i32
    scf.if %16 {
      %c0_i32_23 = arith.constant 0 : i32
      %25 = arith.cmpi eq, %arg0, %c0_i32_23 : i32
      %c0_24 = arith.constant 0 : index
      %c0_25 = arith.constant 0 : index
      %26 = vector.load %arg9[%c0_24, %c0_25] : memref<1x80xf32, #tpu.memory_space<vmem>>, vector<1x80xf32>
      %27 = vector.shape_cast %26 : vector<1x80xf32> to vector<1x80xf32>
      %28 = vector.broadcast %27 : vector<1x80xf32> to vector<2x80xf32>
      %cst_26 = arith.constant 0.000000e+00 : f32
      %29 = vector.broadcast %cst_26 : f32 to vector<2x80xf32>
      %30 = arith.select %25, %28, %29 : vector<2x80xf32>
      %c0_27 = arith.constant 0 : index
      %c0_28 = arith.constant 0 : index
      %31 = vector.load %arg11[%c0_27, %c0_28] : memref<2x80xf32, #tpu.memory_space<vmem>>, vector<2x80xf32>
      tpu.vector_store %arg11[%c0_27, %c0_28], %30 {strides = array<i32>} : memref<2x80xf32, #tpu.memory_space<vmem>>, vector<2x80xf32>,
    } else {
    }
    %c0_15 = arith.constant 0 : index
    %c0_16 = arith.constant 0 : index
    %17 = vector.load %arg11[%c0_15, %c0_16] : memref<2x80xf32, #tpu.memory_space<vmem>>, vector<2x80xf32>
    %c0_17 = arith.constant 0 : index
    %c0_18 = arith.constant 0 : index
    %18 = vector.load %arg8[%c0_17, %c0_18] : memref<512x80xf32, #tpu.memory_space<vmem>>, vector<512x80xf32>
    %cst_19 = arith.constant dense<0.000000e+00> : vector<2x80xf32>
    %19 = tpu.matmul %13, %18, %cst_19 {dimension_numbers = #tpu.dot_dimension_numbers<[1], [0], [0], [1], [0, 0, 1, 1], [], []>} : vector<2x512xf32>, vector<512x80xf32>, vector<2x80xf32> -> vector<2x80xf32>
    %20 = arith.addf %17, %19 : vector<2x80xf32>
    %c0_20 = arith.constant 0 : index
    %c0_21 = arith.constant 0 : index
    %21 = vector.load %arg11[%c0_20, %c0_21] : memref<2x80xf32, #tpu.memory_space<vmem>>, vector<2x80xf32>
    tpu.vector_store %arg11[%c0_20, %c0_21], %20 {strides = array<i32>} : memref<2x80xf32, #tpu.memory_space<vmem>>, vector<2x80xf32>,
    %c1_i32 = arith.constant 1 : i32
    %22 = arith.cmpi eq, %arg1, %c1_i32 : i32
    %23 = arith.extui %22 : i1 to i32
    %c0_i32_22 = arith.constant 0 : i32
    %24 = arith.cmpi ne, %23, %c0_i32_22 : i32
    scf.if %24 {
      %c0_23 = arith.constant 0 : index
      %c0_24 = arith.constant 0 : index
      %25 = vector.load %arg11[%c0_23, %c0_24] : memref<2x80xf32, #tpu.memory_space<vmem>>, vector<2x80xf32>
      %c0_25 = arith.constant 0 : index
      %c0_26 = arith.constant 0 : index
      %c0_27 = arith.constant 0 : index
      %26 = vector.load %arg10[%c0_25, %c0_26, %c0_27] : memref<1x2x80xf32, #tpu.memory_space<vmem>>, vector<1x2x80xf32>
      %27 = vector.shape_cast %26 : vector<1x2x80xf32> to vector<2x80xf32>
      %28 = vector.shape_cast %25 : vector<2x80xf32> to vector<1x2x80xf32>
      tpu.vector_store %arg10[%c0_25, %c0_26, %c0_27], %28 {strides = array<i32>} : memref<1x2x80xf32, #tpu.memory_space<vmem>>, vector<1x2x80xf32>,
    } else {
    }
    return
  }
  func.func @transform_0(%arg0: i32, %arg1: i32) -> (i32, i32) {
    %c0_i32 = arith.constant 0 : i32
    %c0_i32_0 = arith.constant 0 : i32
    %c0_i32_1 = arith.constant 0 : i32
    return %c0_i32, %c0_i32_0 : i32, i32
  }
  func.func @transform_1(%arg0: i32, %arg1: i32) -> (i32, i32) {
    %c0_i32 = arith.constant 0 : i32
    %c0_i32_0 = arith.constant 0 : i32
    %c0_i32_1 = arith.constant 0 : i32
    return %c0_i32, %c0_i32_0 : i32, i32
  }
  func.func @transform_2(%arg0: i32, %arg1: i32) -> (i32, i32) {
    %c0_i32 = arith.constant 0 : i32
    %c0_i32_0 = arith.constant 0 : i32
    %c0_i32_1 = arith.constant 0 : i32
    return %c0_i32, %c0_i32_0 : i32, i32
  }
  func.func @transform_3(%arg0: i32, %arg1: i32) -> (i32, i32) {
    %c2_i32 = arith.constant 2 : i32
    %0 = arith.muli %arg0, %c2_i32 : i32
    %1 = arith.addi %0, %arg1 : i32
    %c0_i32 = arith.constant 0 : i32
    %c0_i32_0 = arith.constant 0 : i32
    return %c0_i32, %1 : i32, i32
  }
  func.func @transform_4(%arg0: i32, %arg1: i32) -> (i32, i32) {
    %c2_i32 = arith.constant 2 : i32
    %0 = arith.muli %arg0, %c2_i32 : i32
    %1 = arith.addi %0, %arg1 : i32
    %c0_i32 = arith.constant 0 : i32
    %c0_i32_0 = arith.constant 0 : i32
    return %c0_i32, %1 : i32, i32
  }
  func.func @transform_5(%arg0: i32, %arg1: i32) -> (i32, i32) {
    %c2_i32 = arith.constant 2 : i32
    %0 = arith.muli %arg0, %c2_i32 : i32
    %1 = arith.addi %0, %arg1 : i32
    %c0_i32 = arith.constant 0 : i32
    %c0_i32_0 = arith.constant 0 : i32
    return %c0_i32, %1 : i32, i32
  }
  func.func @transform_6(%arg0: i32, %arg1: i32) -> (i32, i32) {
    %c2_i32 = arith.constant 2 : i32
    %0 = arith.muli %arg0, %c2_i32 : i32
    %1 = arith.addi %0, %arg1 : i32
    %c0_i32 = arith.constant 0 : i32
    %c0_i32_0 = arith.constant 0 : i32
    return %1, %c0_i32 : i32, i32
  }
  func.func @transform_7(%arg0: i32, %arg1: i32) -> (i32, i32) {
    %c0_i32 = arith.constant 0 : i32
    %c0_i32_0 = arith.constant 0 : i32
    %c0_i32_1 = arith.constant 0 : i32
    return %c0_i32, %c0_i32_0 : i32, i32
  }
  func.func @transform_8(%arg0: i32, %arg1: i32) -> (i32, i32, i32) {
    %c0_i32 = arith.constant 0 : i32
    %c0_i32_0 = arith.constant 0 : i32
    %c0_i32_1 = arith.constant 0 : i32
    return %arg0, %c0_i32, %c0_i32_0 : i32, i32, i32
  }
}

</mosaic_0001>

<llo_original>
// kernel: main_output_layer_forward.3
$region0: #{main_output_layer_forward.3}
  #allocation0 [shape = 'u32[]', space=smem, size = 0x4, offset = 0x4, fixed_abs, tag = 'smem constant byte address 0x4 - core index']
  #allocation1 [shape = 'u32[144,128]{1,0:T(1,128)}', space=vmem, size = 0x12000, scoped, tag = 'internal scratch']
  #allocation2 [shape = 'f32[2,80]{1,0:T(2,128)}', space=vmem, size = 0x400, scoped, tag = 'scratch operand']
  %s0 = inlined_call_operand.vmem [shape: bf16[128,128], index: 0, kind: input, shape index: {}]
  %s1 = inlined_call_operand.vmem [shape: bf16[128,256], index: 1, kind: input, shape index: {}]
  %s2 = inlined_call_operand.vmem [shape: f32[2,128], index: 2, kind: input, shape index: {}]
  %s3 = inlined_call_operand.vmem [shape: bf16[128,2048], index: 3, kind: input, shape index: {}]
  %s4 = inlined_call_operand.vmem [shape: bf16[256,2048], index: 4, kind: input, shape index: {}]
  %s5 = inlined_call_operand.vmem [shape: f32[1,2048], index: 5, kind: input, shape index: {}]
  %s6 = inlined_call_operand.vmem [shape: f32[2048,80], index: 6, kind: input, shape index: {}]
  %s7 = inlined_call_operand.vmem [shape: f32[1,80], index: 7, kind: input, shape index: {}]
  %s8 = inlined_call_operand.vmem [shape: f32[2,2,80], index: 8, kind: output, shape index: {}]
  %s9 = sld [smem:[#allocation0]]
  $region119: #{main_output_layer_forward.3} parent=0
    _
  %s11 = ssub.s32 1, %s9
  %s12 = scalar_select 0, %s11, %s9
  $region1: #{main_output_layer_forward.3} parent=0
    #allocation3 [shape = 'u8[262144]{0}', space=vmem, size = 0x40000, scoped, tag = 'input window, operand 3']
    #allocation4 [shape = 'u8[524288]{0}', space=vmem, size = 0x80000, scoped, tag = 'input window, operand 4']
    loop: start=0, step=1, limit=6
    $region2: #{main_output_layer_forward.3} parent=1 // loop_pre_header
      _
    $region3: #{main_output_layer_forward.3} parent=1 // loop_header
      %s14 = sphi 0, %s18
      %p15 = scmp.ge.s32.totalorder %s14, 6
      %s21 = sphi 0, %s33
      %s22 = sphi 0, %s29
      %s23 = sphi 0, %s21
      %s24 = sphi 0, %s22
      %s25 = sphi 0, %s23
      %s26 = sphi 0, %s24
      %s34 = sphi 0, %s34
      %s36 = sphi 0, %s34
      %s37 = sphi 0, %s36
      %s51 = sphi 0, %s37
      %s55 = sphi 0, %s55
      %s57 = sphi 0, %s55
      %s58 = sphi 0, %s57
      %s72 = sphi 0, %s58
      %s76 = sphi 0, %s76
      %s78 = sphi 0, %s76
      %s79 = sphi 0, %s78
      %s93 = sphi 0, %s79
      %s103 = sphi 0, %s105
      %s106 = sphi 0, %s103
      %s107 = sphi 0, %s106
      %s123 = sphi 0, %s107
      %s133 = sphi 0, %s135
      %s136 = sphi 0, %s133
      %s137 = sphi 0, %s136
      %s153 = sphi 0, %s137
      %s163 = sphi 0, %s165
      %s166 = sphi 0, %s163
      %s167 = sphi 0, %s166
      %s183 = sphi 0, %s167
      %s193 = sphi 0, %s195
      %s196 = sphi 0, %s193
      %s197 = sphi 0, %s196
      %s213 = sphi 0, %s197
      %s217 = sphi 0, %s217
      %s219 = sphi 0, %s217
      %s220 = sphi 0, %s219
      %s234 = sphi 0, %s220
      %s240 = sphi 0, %s242
      %s243 = sphi 0, %s240
      %s244 = sphi 0, %s243
      %s260 = sphi 0, %s244
    $region4: #{main_output_layer_forward.3} parent=1 // loop_header_branch
      %17 = sbr.rel (%p15) target = $region8
    $region5: #{main_output_layer_forward.3} parent=1 // loop_body
      %s19 = ssub.s32 %s14, 1
      %s20 = ssub.s32 %s14, 2
      %s27 = sadd.s32 1, %s22
      %p28 = scmp.ge.s32.totalorder %s27, 2
      %s29 = scalar_select %p28, 0, %s27
      %s30 = sadd.s32 1, %s21
      %s31 = scalar_select %p28, %s30, %s21
      %p32 = scmp.ge.s32.totalorder %s31, 2
      %s33 = scalar_select %p32, 0, %s31
      %s35 = sadd.s32 %s34, 1
      %p38 = scmp.eq.s32.totalorder %s14, 3
      %p39 = scmp.ne.s32.totalorder %s34, %s36
      %p40 = scmp.eq.s32.totalorder %s14, 0
      %p41 = por %p39, %p40
      %p42 = scmp.ne.s32.totalorder %s34, %s36
      %p43 = scmp.eq.s32.totalorder %s19, 3
      %p44 = por %p42, %p43
      %p45 = scmp.ne.s32.totalorder %s36, %s37
      %p46 = scmp.eq.s32.totalorder %s19, 0
      %p47 = por %p45, %p46
      %p48 = scmp.ne.s32.totalorder %s36, %s37
      %p49 = scmp.eq.s32.totalorder %s20, 3
      %p50 = por %p48, %p49
      %p52 = scmp.ne.s32.totalorder %s37, %s51
      %p53 = scmp.eq.s32.totalorder %s20, 0
      %p54 = por %p52, %p53
      %s56 = sadd.s32 %s55, 1
      %p59 = scmp.eq.s32.totalorder %s14, 3
      %p60 = scmp.ne.s32.totalorder %s55, %s57
      %p61 = scmp.eq.s32.totalorder %s14, 0
      %p62 = por %p60, %p61
      %p63 = scmp.ne.s32.totalorder %s55, %s57
      %p64 = scmp.eq.s32.totalorder %s19, 3
      %p65 = por %p63, %p64
      %p66 = scmp.ne.s32.totalorder %s57, %s58
      %p67 = scmp.eq.s32.totalorder %s19, 0
      %p68 = por %p66, %p67
      %p69 = scmp.ne.s32.totalorder %s57, %s58
      %p70 = scmp.eq.s32.totalorder %s20, 3
      %p71 = por %p69, %p70
      %p73 = scmp.ne.s32.totalorder %s58, %s72
      %p74 = scmp.eq.s32.totalorder %s20, 0
      %p75 = por %p73, %p74
      %s77 = sadd.s32 %s76, 1
      %p80 = scmp.eq.s32.totalorder %s14, 3
      %p81 = scmp.ne.s32.totalorder %s76, %s78
      %p82 = scmp.eq.s32.totalorder %s14, 0
      %p83 = por %p81, %p82
      %p84 = scmp.ne.s32.totalorder %s76, %s78
      %p85 = scmp.eq.s32.totalorder %s19, 3
      %p86 = por %p84, %p85
      %p87 = scmp.ne.s32.totalorder %s78, %s79
      %p88 = scmp.eq.s32.totalorder %s19, 0
      %p89 = por %p87, %p88
      %p90 = scmp.ne.s32.totalorder %s78, %s79
      %p91 = scmp.eq.s32.totalorder %s20, 3
      %p92 = por %p90, %p91
      %p94 = scmp.ne.s32.totalorder %s79, %s93
      %p95 = scmp.eq.s32.totalorder %s20, 0
      %p96 = por %p94, %p95
      %s97 = smul.u32 %s21, 2
      %s98 = sadd.s32 %s97, %s22
      %s99 = smul.u32 %s33, 2
      %s100 = sadd.s32 %s99, %s29
      %s101 = ssub.s32 %s98, %s100
      %p102 = scmp.eq.s32.totalorder %s101, 0
      %s104 = sadd.s32 %s103, 1
      %s105 = scalar_select %p102, %s103, %s104
      %p108 = pneg %p102
      %p109 = scmp.eq.s32.totalorder %s14, 3
      %p110 = por %p108, %p109
      %p111 = scmp.ne.s32.totalorder %s103, %s106
      %p112 = scmp.eq.s32.totalorder %s14, 0
      %p113 = por %p111, %p112
      %p114 = scmp.ne.s32.totalorder %s103, %s106
      %p115 = scmp.eq.s32.totalorder %s19, 3
      %p116 = por %p114, %p115
      %p117 = scmp.ne.s32.totalorder %s106, %s107
      %p118 = scmp.eq.s32.totalorder %s19, 0
      %p119 = por %p117, %p118
      %p120 = scmp.ne.s32.totalorder %s106, %s107
      %p121 = scmp.eq.s32.totalorder %s20, 3
      %p122 = por %p120, %p121
      %p124 = scmp.ne.s32.totalorder %s107, %s123
      %p125 = scmp.eq.s32.totalorder %s20, 0
      %p126 = por %p124, %p125
      %s127 = smul.u32 %s21, 2
      %s128 = sadd.s32 %s127, %s22
      %s129 = smul.u32 %s33, 2
      %s130 = sadd.s32 %s129, %s29
      %s131 = ssub.s32 %s128, %s130
      %p132 = scmp.eq.s32.totalorder %s131, 0
      %s134 = sadd.s32 %s133, 1
      %s135 = scalar_select %p132, %s133, %s134
      %p138 = pneg %p132
      %p139 = scmp.eq.s32.totalorder %s14, 3
      %p140 = por %p138, %p139
      %p141 = scmp.ne.s32.totalorder %s133, %s136
      %p142 = scmp.eq.s32.totalorder %s14, 0
      %p143 = por %p141, %p142
      %p144 = scmp.ne.s32.totalorder %s133, %s136
      %p145 = scmp.eq.s32.totalorder %s19, 3
      %p146 = por %p144, %p145
      %p147 = scmp.ne.s32.totalorder %s136, %s137
      %p148 = scmp.eq.s32.totalorder %s19, 0
      %p149 = por %p147, %p148
      %p150 = scmp.ne.s32.totalorder %s136, %s137
      %p151 = scmp.eq.s32.totalorder %s20, 3
      %p152 = por %p150, %p151
      %p154 = scmp.ne.s32.totalorder %s137, %s153
      %p155 = scmp.eq.s32.totalorder %s20, 0
      %p156 = por %p154, %p155
      %s157 = smul.u32 %s21, 2
      %s158 = sadd.s32 %s157, %s22
      %s159 = smul.u32 %s33, 2
      %s160 = sadd.s32 %s159, %s29
      %s161 = ssub.s32 %s158, %s160
      %p162 = scmp.eq.s32.totalorder %s161, 0
      %s164 = sadd.s32 %s163, 1
      %s165 = scalar_select %p162, %s163, %s164
      %p168 = pneg %p162
      %p169 = scmp.eq.s32.totalorder %s14, 3
      %p170 = por %p168, %p169
      %p171 = scmp.ne.s32.totalorder %s163, %s166
      %p172 = scmp.eq.s32.totalorder %s14, 0
      %p173 = por %p171, %p172
      %p174 = scmp.ne.s32.totalorder %s163, %s166
      %p175 = scmp.eq.s32.totalorder %s19, 3
      %p176 = por %p174, %p175
      %p177 = scmp.ne.s32.totalorder %s166, %s167
      %p178 = scmp.eq.s32.totalorder %s19, 0
      %p179 = por %p177, %p178
      %p180 = scmp.ne.s32.totalorder %s166, %s167
      %p181 = scmp.eq.s32.totalorder %s20, 3
      %p182 = por %p180, %p181
      %p184 = scmp.ne.s32.totalorder %s167, %s183
      %p185 = scmp.eq.s32.totalorder %s20, 0
      %p186 = por %p184, %p185
      %s187 = smul.u32 %s21, 2
      %s188 = sadd.s32 %s187, %s22
      %s189 = smul.u32 %s33, 2
      %s190 = sadd.s32 %s189, %s29
      %s191 = ssub.s32 %s188, %s190
      %p192 = scmp.eq.s32.totalorder %s191, 0
      %s194 = sadd.s32 %s193, 1
      %s195 = scalar_select %p192, %s193, %s194
      %p198 = pneg %p192
      %p199 = scmp.eq.s32.totalorder %s14, 3
      %p200 = por %p198, %p199
      %p201 = scmp.ne.s32.totalorder %s193, %s196
      %p202 = scmp.eq.s32.totalorder %s14, 0
      %p203 = por %p201, %p202
      %p204 = scmp.ne.s32.totalorder %s193, %s196
      %p205 = scmp.eq.s32.totalorder %s19, 3
      %p206 = por %p204, %p205
      %p207 = scmp.ne.s32.totalorder %s196, %s197
      %p208 = scmp.eq.s32.totalorder %s19, 0
      %p209 = por %p207, %p208
      %p210 = scmp.ne.s32.totalorder %s196, %s197
      %p211 = scmp.eq.s32.totalorder %s20, 3
      %p212 = por %p210, %p211
      %p214 = scmp.ne.s32.totalorder %s197, %s213
      %p215 = scmp.eq.s32.totalorder %s20, 0
      %p216 = por %p214, %p215
      %s218 = sadd.s32 %s217, 1
      %p221 = scmp.eq.s32.totalorder %s14, 3
      %p222 = scmp.ne.s32.totalorder %s217, %s219
      %p223 = scmp.eq.s32.totalorder %s14, 0
      %p224 = por %p222, %p223
      %p225 = scmp.ne.s32.totalorder %s217, %s219
      %p226 = scmp.eq.s32.totalorder %s19, 3
      %p227 = por %p225, %p226
      %p228 = scmp.ne.s32.totalorder %s219, %s220
      %p229 = scmp.eq.s32.totalorder %s19, 0
      %p230 = por %p228, %p229
      %p231 = scmp.ne.s32.totalorder %s219, %s220
      %p232 = scmp.eq.s32.totalorder %s20, 3
      %p233 = por %p231, %p232
      %p235 = scmp.ne.s32.totalorder %s220, %s234
      %p236 = scmp.eq.s32.totalorder %s20, 0
      %p237 = por %p235, %p236
      %s238 = ssub.s32 %s21, %s33
      %p239 = scmp.eq.s32.totalorder %s238, 0
      %s241 = sadd.s32 %s240, 1
      %s242 = scalar_select %p239, %s240, %s241
      %p245 = pneg %p239
      %p246 = scmp.eq.s32.totalorder %s14, 3
      %p247 = por %p245, %p246
      %p248 = scmp.ne.s32.totalorder %s240, %s243
      %p249 = scmp.eq.s32.totalorder %s14, 0
      %p250 = por %p248, %p249
      %p251 = scmp.ne.s32.totalorder %s240, %s243
      %p252 = scmp.eq.s32.totalorder %s19, 3
      %p253 = por %p251, %p252
      %p254 = scmp.ne.s32.totalorder %s243, %s244
      %p255 = scmp.eq.s32.totalorder %s19, 0
      %p256 = por %p254, %p255
      %p257 = scmp.ne.s32.totalorder %s243, %s244
      %p258 = scmp.eq.s32.totalorder %s20, 3
      %p259 = por %p257, %p258
      %p261 = scmp.ne.s32.totalorder %s244, %s260
      %p262 = scmp.eq.s32.totalorder %s20, 0
      %p263 = por %p261, %p262
      %p264 = scmp.le.s32.totalorder 1, %s14
      %p265 = scmp.lt.s32.totalorder %s14, 5
      %p266 = pnand %p264, %p265
      %p267 = pneg %p266
      // Predicated region
      $region9: #{main_output_layer_forward.3} parent=5 // pred_check
        _
      $region10: #{main_output_layer_forward.3} parent=5 // pred_check_branch
        %269 = sbr.rel (%p266) target = $region12
      $region11: #{main_output_layer_forward.3} parent=5 // pred_region
        %s270 = ssub.s32 %s14, 1
        // Predicated region
        $region13: #{main_output_layer_forward.3} parent=11 // pred_check
          %p271 = pneg %p47
        $region14: #{main_output_layer_forward.3} parent=11 // pred_check_branch
          %273 = sbr.rel (%p271) target = $region16
        $region15: #{main_output_layer_forward.3} parent=11 // pred_region
          _
        $region16: #{main_output_layer_forward.3} parent=11 // pred_fallthru
          _
        // Predicated region
        $region17: #{main_output_layer_forward.3} parent=11 // pred_check
          %p274 = pneg %p68
        $region18: #{main_output_layer_forward.3} parent=11 // pred_check_branch
          %276 = sbr.rel (%p274) target = $region20
        $region19: #{main_output_layer_forward.3} parent=11 // pred_region
          _
        $region20: #{main_output_layer_forward.3} parent=11 // pred_fallthru
          _
        // Predicated region
        $region21: #{main_output_layer_forward.3} parent=11 // pred_check
          %p277 = pneg %p89
        $region22: #{main_output_layer_forward.3} parent=11 // pred_check_branch
          %279 = sbr.rel (%p277) target = $region24
        $region23: #{main_output_layer_forward.3} parent=11 // pred_region
          _
        $region24: #{main_output_layer_forward.3} parent=11 // pred_fallthru
          _
        // Predicated region
        $region25: #{main_output_layer_forward.3} parent=11 // pred_check
          %p280 = pneg %p230
        $region26: #{main_output_layer_forward.3} parent=11 // pred_check_branch
          %282 = sbr.rel (%p280) target = $region28
        $region27: #{main_output_layer_forward.3} parent=11 // pred_region
          _
        $region28: #{main_output_layer_forward.3} parent=11 // pred_fallthru
          _
      $region12: #{main_output_layer_forward.3} parent=5 // pred_fallthru
        _
      %p283 = scmp.lt.s32.totalorder %s14, 4
      // Predicated region
      $region29: #{main_output_layer_forward.3} parent=5 // pred_check
        %p284 = pneg %p283
      $region30: #{main_output_layer_forward.3} parent=5 // pred_check_branch
        %286 = sbr.rel (%p284) target = $region32
      $region31: #{main_output_layer_forward.3} parent=5 // pred_region
        // Predicated region
        $region33: #{main_output_layer_forward.3} parent=31 // pred_check
          %p287 = pneg %p113
        $region34: #{main_output_layer_forward.3} parent=31 // pred_check_branch
          %289 = sbr.rel (%p287) target = $region36
        $region35: #{main_output_layer_forward.3} parent=31 // pred_region
          %s290 = sand.u32 %s103, 1
          %s291 = sand.u32 %s103, 1
          %s292 = smul.addr %s291, 256
          %s293 = scalar_lea.vmem [#allocation3], %s292
          %s294 = smul.u32 %s21, 2
          %s295 = sadd.s32 %s294, %s22
          %s296 = smul.u32 4, %s295
          %s297 = smul.addr %s296, 4
          %s298 = scalar_lea.vmem %s3, %s297
          // Predicated region
          $region37: #{main_output_layer_forward.3} parent=35 // pred_check
            _
          $region38: #{main_output_layer_forward.3} parent=35 // pred_check_branch
            %300 = sbr.rel (0) target = $region40
          $region39: #{main_output_layer_forward.3} parent=35 // pred_region
            // Predicated region
            $region41: #{main_output_layer_forward.3} parent=39 // pred_check
              _
            $region42: #{main_output_layer_forward.3} parent=39 // pred_check_branch
              %302 = sbr.rel (0) target = $region44
            $region43: #{main_output_layer_forward.3} parent=39 // pred_region
              loop: start=0, step=1, limit=1
              $region45: #{main_output_layer_forward.3} parent=43 // loop_pre_header
                _
              $region46: #{main_output_layer_forward.3} parent=43 // loop_header
                %s304 = sphi 0, %s308
                %p305 = scmp.ge.s32.totalorder %s304, 1
                %s309 = sphi %s298, %s298
                %s310 = sphi %s293, %s293
              $region47: #{main_output_layer_forward.3} parent=43 // loop_header_branch
                %307 = sbr.rel (%p305) target = $region51
              $region48: #{main_output_layer_forward.3} parent=43 // loop_body
                %v311 = vld [vmem:[%s309] sm:$0xff]
                %312 = vst [vmem:[%s310] sm:$0xff] %v311
                %v313 = vld [vmem:[%s309 + $0x8] sm:$0xff]
                %314 = vst [vmem:[%s310 + $0x8] sm:$0xff] %v313
                %v315 = vld [vmem:[%s309 + $0x40] sm:$0xff]
                %316 = vst [vmem:[%s310 + $0x10] sm:$0xff] %v315
                %v317 = vld [vmem:[%s309 + $0x48] sm:$0xff]
                %318 = vst [vmem:[%s310 + $0x18] sm:$0xff] %v317
                %v319 = vld [vmem:[%s309 + $0x80] sm:$0xff]
                %320 = vst [vmem:[%s310 + $0x20] sm:$0xff] %v319
                %v321 = vld [vmem:[%s309 + $0x88] sm:$0xff]
                %322 = vst [vmem:[%s310 + $0x28] sm:$0xff] %v321
                %v323 = vld [vmem:[%s309 + $0xc0] sm:$0xff]
                %324 = vst [vmem:[%s310 + $0x30] sm:$0xff] %v323
                %v325 = vld [vmem:[%s309 + $0xc8] sm:$0xff]
                %326 = vst [vmem:[%s310 + $0x38] sm:$0xff] %v325
                %v327 = vld [vmem:[%s309 + $0x100] sm:$0xff]
                %328 = vst [vmem:[%s310 + $0x40] sm:$0xff] %v327
                %v329 = vld [vmem:[%s309 + $0x108] sm:$0xff]
                %330 = vst [vmem:[%s310 + $0x48] sm:$0xff] %v329
                %v331 = vld [vmem:[%s309 + $0x140] sm:$0xff]
                %332 = vst [vmem:[%s310 + $0x50] sm:$0xff] %v331
                %v333 = vld [vmem:[%s309 + $0x148] sm:$0xff]
                %334 = vst [vmem:[%s310 + $0x58] sm:$0xff] %v333
                %v335 = vld [vmem:[%s309 + $0x180] sm:$0xff]
                %336 = vst [vmem:[%s310 + $0x60] sm:$0xff] %v335
                %v337 = vld [vmem:[%s309 + $0x188] sm:$0xff]
                %338 = vst [vmem:[%s310 + $0x68] sm:$0xff] %v337
                %v339 = vld [vmem:[%s309 + $0x1c0] sm:$0xff]
                %340 = vst [vmem:[%s310 + $0x70] sm:$0xff] %v339
                %v341 = vld [vmem:[%s309 + $0x1c8] sm:$0xff]
                %342 = vst [vmem:[%s310 + $0x78] sm:$0xff] %v341
                %v343 = vld [vmem:[%s309 + $0x200] sm:$0xff]
                %344 = vst [vmem:[%s310 + $0x80] sm:$0xff] %v343
                %v345 = vld [vmem:[%s309 + $0x208] sm:$0xff]
                %346 = vst [vmem:[%s310 + $0x88] sm:$0xff] %v345
                %v347 = vld [vmem:[%s309 + $0x240] sm:$0xff]
                %348 = vst [vmem:[%s310 + $0x90] sm:$0xff] %v347
                %v349 = vld [vmem:[%s309 + $0x248] sm:$0xff]
                %350 = vst [vmem:[%s310 + $0x98] sm:$0xff] %v349
                %v351 = vld [vmem:[%s309 + $0x280] sm:$0xff]
                %352 = vst [vmem:[%s310 + $0xa0] sm:$0xff] %v351
                %v353 = vld [vmem:[%s309 + $0x288] sm:$0xff]
                %354 = vst [vmem:[%s310 + $0xa8] sm:$0xff] %v353
                %v355 = vld [vmem:[%s309 + $0x2c0] sm:$0xff]
                %356 = vst [vmem:[%s310 + $0xb0] sm:$0xff] %v355
                %v357 = vld [vmem:[%s309 + $0x2c8] sm:$0xff]
                %358 = vst [vmem:[%s310 + $0xb8] sm:$0xff] %v357
                %v359 = vld [vmem:[%s309 + $0x300] sm:$0xff]
                %360 = vst [vmem:[%s310 + $0xc0] sm:$0xff] %v359
                %v361 = vld [vmem:[%s309 + $0x308] sm:$0xff]
                %362 = vst [vmem:[%s310 + $0xc8] sm:$0xff] %v361
                %v363 = vld [vmem:[%s309 + $0x340] sm:$0xff]
                %364 = vst [vmem:[%s310 + $0xd0] sm:$0xff] %v363
                %v365 = vld [vmem:[%s309 + $0x348] sm:$0xff]
                %366 = vst [vmem:[%s310 + $0xd8] sm:$0xff] %v365
                %v367 = vld [vmem:[%s309 + $0x380] sm:$0xff]
                %368 = vst [vmem:[%s310 + $0xe0] sm:$0xff] %v367
                %v369 = vld [vmem:[%s309 + $0x388] sm:$0xff]
                %370 = vst [vmem:[%s310 + $0xe8] sm:$0xff] %v369
                %v371 = vld [vmem:[%s309 + $0x3c0] sm:$0xff]
                %372 = vst [vmem:[%s310 + $0xf0] sm:$0xff] %v371
                %v373 = vld [vmem:[%s309 + $0x3c8] sm:$0xff]
                %374 = vst [vmem:[%s310 + $0xf8] sm:$0xff] %v373
              $region49: #{main_output_layer_forward.3} parent=43 // loop_footer
                %s308 = sadd.s32 1, %s304
              $region50: #{main_output_layer_forward.3} parent=43 // loop_footer_branch
                %303 = sbr.rel target = $region46
              $region51: #{main_output_layer_forward.3} parent=43 // loop_exit
                _
            $region44: #{main_output_layer_forward.3} parent=39 // pred_fallthru
              _
            // Predicated region
            $region52: #{main_output_layer_forward.3} parent=39 // pred_check
              _
            $region53: #{main_output_layer_forward.3} parent=39 // pred_check_branch
              %376 = sbr.rel target = $region55
            $region54: #{main_output_layer_forward.3} parent=39 // pred_region
              _
            $region55: #{main_output_layer_forward.3} parent=39 // pred_fallthru
              _
          $region40: #{main_output_layer_forward.3} parent=35 // pred_fallthru
            _
          %377 = vnop
        $region36: #{main_output_layer_forward.3} parent=31 // pred_fallthru
          _
        // Predicated region
        $region56: #{main_output_layer_forward.3} parent=31 // pred_check
          %p378 = pneg %p143
        $region57: #{main_output_layer_forward.3} parent=31 // pred_check_branch
          %380 = sbr.rel (%p378) target = $region59
        $region58: #{main_output_layer_forward.3} parent=31 // pred_region
          %s381 = sand.u32 %s133, 1
          %s382 = sand.u32 %s133, 1
          %s383 = smul.addr %s382, 512
          %s384 = scalar_lea.vmem [#allocation4], %s383
          %s385 = smul.u32 %s21, 2
          %s386 = sadd.s32 %s385, %s22
          %s387 = smul.u32 4, %s386
          %s388 = smul.addr %s387, 4
          %s389 = scalar_lea.vmem %s4, %s388
          // Predicated region
          $region60: #{main_output_layer_forward.3} parent=58 // pred_check
            _
          $region61: #{main_output_layer_forward.3} parent=58 // pred_check_branch
            %391 = sbr.rel (0) target = $region63
          $region62: #{main_output_layer_forward.3} parent=58 // pred_region
            // Predicated region
            $region64: #{main_output_layer_forward.3} parent=62 // pred_check
              _
            $region65: #{main_output_layer_forward.3} parent=62 // pred_check_branch
              %393 = sbr.rel (0) target = $region67
            $region66: #{main_output_layer_forward.3} parent=62 // pred_region
              loop: start=0, step=1, limit=1
              $region68: #{main_output_layer_forward.3} parent=66 // loop_pre_header
                _
              $region69: #{main_output_layer_forward.3} parent=66 // loop_header
                %s395 = sphi 0, %s399
                %p396 = scmp.ge.s32.totalorder %s395, 1
                %s400 = sphi %s389, %s389
                %s401 = sphi %s384, %s384
              $region70: #{main_output_layer_forward.3} parent=66 // loop_header_branch
                %398 = sbr.rel (%p396) target = $region74
              $region71: #{main_output_layer_forward.3} parent=66 // loop_body
                %v402 = vld [vmem:[%s400] sm:$0xff]
                %403 = vst [vmem:[%s401] sm:$0xff] %v402
                %v404 = vld [vmem:[%s400 + $0x8] sm:$0xff]
                %405 = vst [vmem:[%s401 + $0x8] sm:$0xff] %v404
                %v406 = vld [vmem:[%s400 + $0x40] sm:$0xff]
                %407 = vst [vmem:[%s401 + $0x10] sm:$0xff] %v406
                %v408 = vld [vmem:[%s400 + $0x48] sm:$0xff]
                %409 = vst [vmem:[%s401 + $0x18] sm:$0xff] %v408
                %v410 = vld [vmem:[%s400 + $0x80] sm:$0xff]
                %411 = vst [vmem:[%s401 + $0x20] sm:$0xff] %v410
                %v412 = vld [vmem:[%s400 + $0x88] sm:$0xff]
                %413 = vst [vmem:[%s401 + $0x28] sm:$0xff] %v412
                %v414 = vld [vmem:[%s400 + $0xc0] sm:$0xff]
                %415 = vst [vmem:[%s401 + $0x30] sm:$0xff] %v414
                %v416 = vld [vmem:[%s400 + $0xc8] sm:$0xff]
                %417 = vst [vmem:[%s401 + $0x38] sm:$0xff] %v416
                %v418 = vld [vmem:[%s400 + $0x100] sm:$0xff]
                %419 = vst [vmem:[%s401 + $0x40] sm:$0xff] %v418
                %v420 = vld [vmem:[%s400 + $0x108] sm:$0xff]
                %421 = vst [vmem:[%s401 + $0x48] sm:$0xff] %v420
                %v422 = vld [vmem:[%s400 + $0x140] sm:$0xff]
                %423 = vst [vmem:[%s401 + $0x50] sm:$0xff] %v422
                %v424 = vld [vmem:[%s400 + $0x148] sm:$0xff]
                %425 = vst [vmem:[%s401 + $0x58] sm:$0xff] %v424
                %v426 = vld [vmem:[%s400 + $0x180] sm:$0xff]
                %427 = vst [vmem:[%s401 + $0x60] sm:$0xff] %v426
                %v428 = vld [vmem:[%s400 + $0x188] sm:$0xff]
                %429 = vst [vmem:[%s401 + $0x68] sm:$0xff] %v428
                %v430 = vld [vmem:[%s400 + $0x1c0] sm:$0xff]
                %431 = vst [vmem:[%s401 + $0x70] sm:$0xff] %v430
                %v432 = vld [vmem:[%s400 + $0x1c8] sm:$0xff]
                %433 = vst [vmem:[%s401 + $0x78] sm:$0xff] %v432
                %v434 = vld [vmem:[%s400 + $0x200] sm:$0xff]
                %435 = vst [vmem:[%s401 + $0x80] sm:$0xff] %v434
                %v436 = vld [vmem:[%s400 + $0x208] sm:$0xff]
                %437 = vst [vmem:[%s401 + $0x88] sm:$0xff] %v436
                %v438 = vld [vmem:[%s400 + $0x240] sm:$0xff]
                %439 = vst [vmem:[%s401 + $0x90] sm:$0xff] %v438
                %v440 = vld [vmem:[%s400 + $0x248] sm:$0xff]
                %441 = vst [vmem:[%s401 + $0x98] sm:$0xff] %v440
                %v442 = vld [vmem:[%s400 + $0x280] sm:$0xff]
                %443 = vst [vmem:[%s401 + $0xa0] sm:$0xff] %v442
                %v444 = vld [vmem:[%s400 + $0x288] sm:$0xff]
                %445 = vst [vmem:[%s401 + $0xa8] sm:$0xff] %v444
                %v446 = vld [vmem:[%s400 + $0x2c0] sm:$0xff]
                %447 = vst [vmem:[%s401 + $0xb0] sm:$0xff] %v446
                %v448 = vld [vmem:[%s400 + $0x2c8] sm:$0xff]
                %449 = vst [vmem:[%s401 + $0xb8] sm:$0xff] %v448
                %v450 = vld [vmem:[%s400 + $0x300] sm:$0xff]
                %451 = vst [vmem:[%s401 + $0xc0] sm:$0xff] %v450
                %v452 = vld [vmem:[%s400 + $0x308] sm:$0xff]
                %453 = vst [vmem:[%s401 + $0xc8] sm:$0xff] %v452
                %v454 = vld [vmem:[%s400 + $0x340] sm:$0xff]
                %455 = vst [vmem:[%s401 + $0xd0] sm:$0xff] %v454
                %v456 = vld [vmem:[%s400 + $0x348] sm:$0xff]
                %457 = vst [vmem:[%s401 + $0xd8] sm:$0xff] %v456
                %v458 = vld [vmem:[%s400 + $0x380] sm:$0xff]
                %459 = vst [vmem:[%s401 + $0xe0] sm:$0xff] %v458
                %v460 = vld [vmem:[%s400 + $0x388] sm:$0xff]
                %461 = vst [vmem:[%s401 + $0xe8] sm:$0xff] %v460
                %v462 = vld [vmem:[%s400 + $0x3c0] sm:$0xff]
                %463 = vst [vmem:[%s401 + $0xf0] sm:$0xff] %v462
                %v464 = vld [vmem:[%s400 + $0x3c8] sm:$0xff]
                %465 = vst [vmem:[%s401 + $0xf8] sm:$0xff] %v464
                %v466 = vld [vmem:[%s400 + $0x400] sm:$0xff]
                %467 = vst [vmem:[%s401 + $0x100] sm:$0xff] %v466
                %v468 = vld [vmem:[%s400 + $0x408] sm:$0xff]
                %469 = vst [vmem:[%s401 + $0x108] sm:$0xff] %v468
                %v470 = vld [vmem:[%s400 + $0x440] sm:$0xff]
                %471 = vst [vmem:[%s401 + $0x110] sm:$0xff] %v470
                %v472 = vld [vmem:[%s400 + $0x448] sm:$0xff]
                %473 = vst [vmem:[%s401 + $0x118] sm:$0xff] %v472
                %v474 = vld [vmem:[%s400 + $0x480] sm:$0xff]
                %475 = vst [vmem:[%s401 + $0x120] sm:$0xff] %v474
                %v476 = vld [vmem:[%s400 + $0x488] sm:$0xff]
                %477 = vst [vmem:[%s401 + $0x128] sm:$0xff] %v476
                %v478 = vld [vmem:[%s400 + $0x4c0] sm:$0xff]
                %479 = vst [vmem:[%s401 + $0x130] sm:$0xff] %v478
                %v480 = vld [vmem:[%s400 + $0x4c8] sm:$0xff]
                %481 = vst [vmem:[%s401 + $0x138] sm:$0xff] %v480
                %v482 = vld [vmem:[%s400 + $0x500] sm:$0xff]
                %483 = vst [vmem:[%s401 + $0x140] sm:$0xff] %v482
                %v484 = vld [vmem:[%s400 + $0x508] sm:$0xff]
                %485 = vst [vmem:[%s401 + $0x148] sm:$0xff] %v484
                %v486 = vld [vmem:[%s400 + $0x540] sm:$0xff]
                %487 = vst [vmem:[%s401 + $0x150] sm:$0xff] %v486
                %v488 = vld [vmem:[%s400 + $0x548] sm:$0xff]
                %489 = vst [vmem:[%s401 + $0x158] sm:$0xff] %v488
                %v490 = vld [vmem:[%s400 + $0x580] sm:$0xff]
                %491 = vst [vmem:[%s401 + $0x160] sm:$0xff] %v490
                %v492 = vld [vmem:[%s400 + $0x588] sm:$0xff]
                %493 = vst [vmem:[%s401 + $0x168] sm:$0xff] %v492
                %v494 = vld [vmem:[%s400 + $0x5c0] sm:$0xff]
                %495 = vst [vmem:[%s401 + $0x170] sm:$0xff] %v494
                %v496 = vld [vmem:[%s400 + $0x5c8] sm:$0xff]
                %497 = vst [vmem:[%s401 + $0x178] sm:$0xff] %v496
                %v498 = vld [vmem:[%s400 + $0x600] sm:$0xff]
                %499 = vst [vmem:[%s401 + $0x180] sm:$0xff] %v498
                %v500 = vld [vmem:[%s400 + $0x608] sm:$0xff]
                %501 = vst [vmem:[%s401 + $0x188] sm:$0xff] %v500
                %v502 = vld [vmem:[%s400 + $0x640] sm:$0xff]
                %503 = vst [vmem:[%s401 + $0x190] sm:$0xff] %v502
                %v504 = vld [vmem:[%s400 + $0x648] sm:$0xff]
                %505 = vst [vmem:[%s401 + $0x198] sm:$0xff] %v504
                %v506 = vld [vmem:[%s400 + $0x680] sm:$0xff]
                %507 = vst [vmem:[%s401 + $0x1a0] sm:$0xff] %v506
                %v508 = vld [vmem:[%s400 + $0x688] sm:$0xff]
                %509 = vst [vmem:[%s401 + $0x1a8] sm:$0xff] %v508
                %v510 = vld [vmem:[%s400 + $0x6c0] sm:$0xff]
                %511 = vst [vmem:[%s401 + $0x1b0] sm:$0xff] %v510
                %v512 = vld [vmem:[%s400 + $0x6c8] sm:$0xff]
                %513 = vst [vmem:[%s401 + $0x1b8] sm:$0xff] %v512
                %v514 = vld [vmem:[%s400 + $0x700] sm:$0xff]
                %515 = vst [vmem:[%s401 + $0x1c0] sm:$0xff] %v514
                %v516 = vld [vmem:[%s400 + $0x708] sm:$0xff]
                %517 = vst [vmem:[%s401 + $0x1c8] sm:$0xff] %v516
                %v518 = vld [vmem:[%s400 + $0x740] sm:$0xff]
                %519 = vst [vmem:[%s401 + $0x1d0] sm:$0xff] %v518
                %v520 = vld [vmem:[%s400 + $0x748] sm:$0xff]
                %521 = vst [vmem:[%s401 + $0x1d8] sm:$0xff] %v520
                %v522 = vld [vmem:[%s400 + $0x780] sm:$0xff]
                %523 = vst [vmem:[%s401 + $0x1e0] sm:$0xff] %v522
                %v524 = vld [vmem:[%s400 + $0x788] sm:$0xff]
                %525 = vst [vmem:[%s401 + $0x1e8] sm:$0xff] %v524
                %v526 = vld [vmem:[%s400 + $0x7c0] sm:$0xff]
                %527 = vst [vmem:[%s401 + $0x1f0] sm:$0xff] %v526
                %v528 = vld [vmem:[%s400 + $0x7c8] sm:$0xff]
                %529 = vst [vmem:[%s401 + $0x1f8] sm:$0xff] %v528
              $region72: #{main_output_layer_forward.3} parent=66 // loop_footer
                %s399 = sadd.s32 1, %s395
              $region73: #{main_output_layer_forward.3} parent=66 // loop_footer_branch
                %394 = sbr.rel target = $region69
              $region74: #{main_output_layer_forward.3} parent=66 // loop_exit
                _
            $region67: #{main_output_layer_forward.3} parent=62 // pred_fallthru
              _
            // Predicated region
            $region75: #{main_output_layer_forward.3} parent=62 // pred_check
              _
            $region76: #{main_output_layer_forward.3} parent=62 // pred_check_branch
              %531 = sbr.rel target = $region78
            $region77: #{main_output_layer_forward.3} parent=62 // pred_region
              _
            $region78: #{main_output_layer_forward.3} parent=62 // pred_fallthru
              _
          $region63: #{main_output_layer_forward.3} parent=58 // pred_fallthru
            _
          %532 = vnop
        $region59: #{main_output_layer_forward.3} parent=31 // pred_fallthru
          _
        // Predicated region
        $region79: #{main_output_layer_forward.3} parent=31 // pred_check
          %p533 = pneg %p173
        $region80: #{main_output_layer_forward.3} parent=31 // pred_check_branch
          %535 = sbr.rel (%p533) target = $region82
        $region81: #{main_output_layer_forward.3} parent=31 // pred_region
          %s536 = smul.u32 %s21, 2
          %s537 = sadd.s32 %s536, %s22
          %s538 = smul.u32 4, %s537
          %p539 = scmp.lt.s32.totalorder %s538, 15
          %s540 = scalar_select %p539, %s538, 15
          %s541 = scalar_lea.vmem %s5, %s540
          %s542 = smul.u32 %s21, 2
          %s543 = sadd.s32 %s542, %s22
          %s544 = smul.u32 4, %s543
        $region82: #{main_output_layer_forward.3} parent=31 // pred_fallthru
          _
        // Predicated region
        $region83: #{main_output_layer_forward.3} parent=31 // pred_check
          %p545 = pneg %p203
        $region84: #{main_output_layer_forward.3} parent=31 // pred_check_branch
          %547 = sbr.rel (%p545) target = $region86
        $region85: #{main_output_layer_forward.3} parent=31 // pred_region
          %s548 = smul.u32 %s21, 2
          %s549 = sadd.s32 %s548, %s22
          %s550 = smul.u32 64, %s549
          %p551 = scmp.lt.s32.totalorder %s550, 255
          %s552 = scalar_select %p551, %s550, 255
          %s553 = smul.addr %s552, 8
          %s554 = scalar_lea.vmem %s6, %s553
          %s555 = smul.u32 %s21, 2
          %s556 = sadd.s32 %s555, %s22
          %s557 = smul.u32 64, %s556
        $region86: #{main_output_layer_forward.3} parent=31 // pred_fallthru
          _
      $region32: #{main_output_layer_forward.3} parent=5 // pred_fallthru
        _
      %p558 = scmp.le.s32.totalorder 1, %s14
      %p559 = scmp.lt.s32.totalorder %s14, 5
      %p560 = pnand %p558, %p559
      %p561 = pneg %p560
      // Predicated region
      $region87: #{main_output_layer_forward.3} parent=5 // pred_check
        _
      $region88: #{main_output_layer_forward.3} parent=5 // pred_check_branch
        %563 = sbr.rel (%p560) target = $region90
      $region89: #{main_output_layer_forward.3} parent=5 // pred_region
        %s564 = ssub.s32 %s14, 1
        %s565 = sand.u32 %s106, 1
        %s566 = sand.u32 %s106, 1
        %s567 = smul.addr %s566, 256
        %s568 = scalar_lea.vmem [#allocation3], %s567
        // Predicated region
        $region91: #{main_output_layer_forward.3} parent=89 // pred_check
          %p569 = pneg %p119
        $region92: #{main_output_layer_forward.3} parent=89 // pred_check_branch
          %571 = sbr.rel (%p569) target = $region94
        $region93: #{main_output_layer_forward.3} parent=89 // pred_region
          _
        $region94: #{main_output_layer_forward.3} parent=89 // pred_fallthru
          _
        %s572 = sand.u32 %s136, 1
        %s573 = sand.u32 %s136, 1
        %s574 = smul.addr %s573, 512
        %s575 = scalar_lea.vmem [#allocation4], %s574
        // Predicated region
        $region95: #{main_output_layer_forward.3} parent=89 // pred_check
          %p576 = pneg %p149
        $region96: #{main_output_layer_forward.3} parent=89 // pred_check_branch
          %578 = sbr.rel (%p576) target = $region98
        $region97: #{main_output_layer_forward.3} parent=89 // pred_region
          _
        $region98: #{main_output_layer_forward.3} parent=89 // pred_fallthru
          _
        %p579 = pneg %p47
        %p580 = pneg %p44
        %p581 = pneg %p68
        %p582 = pneg %p65
        %p583 = pneg %p89
        %p584 = pneg %p86
        %s585 = sand.u32 %s106, 1
        %s586 = sand.u32 %s106, 1
        %s587 = smul.addr %s586, 256
        %s588 = scalar_lea.vmem [#allocation3], %s587
        %p589 = pneg %p119
        %p590 = pneg %p116
        %s591 = sand.u32 %s136, 1
        %s592 = sand.u32 %s136, 1
        %s593 = smul.addr %s592, 512
        %s594 = scalar_lea.vmem [#allocation4], %s593
        %p595 = pneg %p149
        %p596 = pneg %p146
        %s597 = smul.u32 %s23, 2
        %s598 = sadd.s32 %s597, %s24
        %s599 = smul.u32 4, %s598
        %p600 = scmp.lt.s32.totalorder %s599, 15
        %s601 = scalar_select %p600, %s599, 15
        %s602 = scalar_lea.vmem %s5, %s601
        %p603 = pneg %p179
        %p604 = pneg %p176
        %s605 = smul.u32 %s23, 2
        %s606 = sadd.s32 %s605, %s24
        %s607 = smul.u32 64, %s606
        %p608 = scmp.lt.s32.totalorder %s607, 255
        %s609 = scalar_select %p608, %s607, 255
        %s610 = smul.addr %s609, 8
        %s611 = scalar_lea.vmem %s6, %s610
        %p612 = pneg %p209
        %p613 = pneg %p206
        %p614 = pneg %p230
        %p615 = pneg %p227
        %p616 = pneg %p256
        %p617 = pneg %p253
        %p618 = scmp.lt.s32.totalorder %s23, 1
        %s619 = scalar_select %p618, %s23, 1
        %s620 = smul.addr %s619, 2
        %s621 = scalar_lea.vmem %s8, %s620
        %s622 = smul.u32 %s23, 2
        %s623 = sadd.s32 %s622, %s24
        %s624 = smul.u32 4, %s623
        %s625 = smul.u32 %s23, 2
        %s626 = sadd.s32 %s625, %s24
        %s627 = smul.u32 4, %s626
        %s628 = smul.u32 %s23, 2
        %s629 = sadd.s32 %s628, %s24
        %s630 = smul.u32 4, %s629
        %p631 = scmp.lt.s32.totalorder %s630, 15
        %s632 = scalar_select %p631, %s630, 15
        %s633 = scalar_lea.vmem %s5, %s632
        %s634 = smul.u32 %s23, 2
        %s635 = sadd.s32 %s634, %s24
        %s636 = smul.u32 4, %s635
        %s637 = smul.u32 %s23, 2
        %s638 = sadd.s32 %s637, %s24
        %s639 = smul.u32 64, %s638
        %p640 = scmp.lt.s32.totalorder %s639, 255
        %s641 = scalar_select %p640, %s639, 255
        %s642 = smul.addr %s641, 8
        %s643 = scalar_lea.vmem %s6, %s642
        %s644 = smul.u32 %s23, 2
        %s645 = sadd.s32 %s644, %s24
        %s646 = smul.u32 64, %s645
        %p647 = scmp.lt.s32.totalorder %s23, 1
        %s648 = scalar_select %p647, %s23, 1
        %s649 = smul.addr %s648, 2
        %s650 = scalar_lea.vmem %s8, %s649
        %v652 = vld [vmem:[%s0] sm:$0xf]
        %v653 = vld [vmem:[%s0 + $0x4] sm:$0xf]
        %v654 = vld [vmem:[%s0 + $0x8] sm:$0xf]
        %v655 = vld [vmem:[%s0 + $0xc] sm:$0xf]
        %v656 = vld [vmem:[%s0 + $0x10] sm:$0xf]
        %v657 = vld [vmem:[%s0 + $0x14] sm:$0xf]
        %v658 = vld [vmem:[%s0 + $0x18] sm:$0xf]
        %v659 = vld [vmem:[%s0 + $0x1c] sm:$0xf]
        %v660 = vld [vmem:[%s0 + $0x20] sm:$0xf]
        %v661 = vld [vmem:[%s0 + $0x24] sm:$0xf]
        %v662 = vld [vmem:[%s0 + $0x28] sm:$0xf]
        %v663 = vld [vmem:[%s0 + $0x2c] sm:$0xf]
        %v664 = vld [vmem:[%s0 + $0x30] sm:$0xf]
        %v665 = vld [vmem:[%s0 + $0x34] sm:$0xf]
        %v666 = vld [vmem:[%s0 + $0x38] sm:$0xf]
        %v667 = vld [vmem:[%s0 + $0x3c] sm:$0xf]
        %v668 = vld [vmem:[%s568] sm:$0xff]
        %v669 = vld [vmem:[%s568 + $0x8] sm:$0xff]
        %v670 = vld [vmem:[%s568 + $0x10] sm:$0xff]
        %v671 = vld [vmem:[%s568 + $0x18] sm:$0xff]
        %v672 = vld [vmem:[%s568 + $0x20] sm:$0xff]
        %v673 = vld [vmem:[%s568 + $0x28] sm:$0xff]
        %v674 = vld [vmem:[%s568 + $0x30] sm:$0xff]
        %v675 = vld [vmem:[%s568 + $0x38] sm:$0xff]
        %v676 = vld [vmem:[%s568 + $0x40] sm:$0xff]
        %v677 = vld [vmem:[%s568 + $0x48] sm:$0xff]
        %v678 = vld [vmem:[%s568 + $0x50] sm:$0xff]
        %v679 = vld [vmem:[%s568 + $0x58] sm:$0xff]
        %v680 = vld [vmem:[%s568 + $0x60] sm:$0xff]
        %v681 = vld [vmem:[%s568 + $0x68] sm:$0xff]
        %v682 = vld [vmem:[%s568 + $0x70] sm:$0xff]
        %v683 = vld [vmem:[%s568 + $0x78] sm:$0xff]
        %v684 = vld [vmem:[%s568 + $0x80] sm:$0xff]
        %v685 = vld [vmem:[%s568 + $0x88] sm:$0xff]
        %v686 = vld [vmem:[%s568 + $0x90] sm:$0xff]
        %v687 = vld [vmem:[%s568 + $0x98] sm:$0xff]
        %v688 = vld [vmem:[%s568 + $0xa0] sm:$0xff]
        %v689 = vld [vmem:[%s568 + $0xa8] sm:$0xff]
        %v690 = vld [vmem:[%s568 + $0xb0] sm:$0xff]
        %v691 = vld [vmem:[%s568 + $0xb8] sm:$0xff]
        %v692 = vld [vmem:[%s568 + $0xc0] sm:$0xff]
        %v693 = vld [vmem:[%s568 + $0xc8] sm:$0xff]
        %v694 = vld [vmem:[%s568 + $0xd0] sm:$0xff]
        %v695 = vld [vmem:[%s568 + $0xd8] sm:$0xff]
        %v696 = vld [vmem:[%s568 + $0xe0] sm:$0xff]
        %v697 = vld [vmem:[%s568 + $0xe8] sm:$0xff]
        %v698 = vld [vmem:[%s568 + $0xf0] sm:$0xff]
        %v699 = vld [vmem:[%s568 + $0xf8] sm:$0xff]
        %v700 = vld [vmem:[%s1] sm:$0xff]
        %v701 = vld [vmem:[%s1 + $0x8] sm:$0xff]
        %v702 = vld [vmem:[%s1 + $0x10] sm:$0xff]
        %v703 = vld [vmem:[%s1 + $0x18] sm:$0xff]
        %v704 = vld [vmem:[%s1 + $0x20] sm:$0xff]
        %v705 = vld [vmem:[%s1 + $0x28] sm:$0xff]
        %v706 = vld [vmem:[%s1 + $0x30] sm:$0xff]
        %v707 = vld [vmem:[%s1 + $0x38] sm:$0xff]
        %v708 = vld [vmem:[%s1 + $0x40] sm:$0xff]
        %v709 = vld [vmem:[%s1 + $0x48] sm:$0xff]
        %v710 = vld [vmem:[%s1 + $0x50] sm:$0xff]
        %v711 = vld [vmem:[%s1 + $0x58] sm:$0xff]
        %v712 = vld [vmem:[%s1 + $0x60] sm:$0xff]
        %v713 = vld [vmem:[%s1 + $0x68] sm:$0xff]
        %v714 = vld [vmem:[%s1 + $0x70] sm:$0xff]
        %v715 = vld [vmem:[%s1 + $0x78] sm:$0xff]
        %v716 = vld [vmem:[%s575] sm:$0xff]
        %v717 = vld [vmem:[%s575 + $0x8] sm:$0xff]
        %v718 = vld [vmem:[%s575 + $0x10] sm:$0xff]
        %v719 = vld [vmem:[%s575 + $0x18] sm:$0xff]
        %v720 = vld [vmem:[%s575 + $0x20] sm:$0xff]
        %v721 = vld [vmem:[%s575 + $0x28] sm:$0xff]
        %v722 = vld [vmem:[%s575 + $0x30] sm:$0xff]
        %v723 = vld [vmem:[%s575 + $0x38] sm:$0xff]
        %v724 = vld [vmem:[%s575 + $0x40] sm:$0xff]
        %v725 = vld [vmem:[%s575 + $0x48] sm:$0xff]
        %v726 = vld [vmem:[%s575 + $0x50] sm:$0xff]
        %v727 = vld [vmem:[%s575 + $0x58] sm:$0xff]
        %v728 = vld [vmem:[%s575 + $0x60] sm:$0xff]
        %v729 = vld [vmem:[%s575 + $0x68] sm:$0xff]
        %v730 = vld [vmem:[%s575 + $0x70] sm:$0xff]
        %v731 = vld [vmem:[%s575 + $0x78] sm:$0xff]
        %v732 = vld [vmem:[%s575 + $0x80] sm:$0xff]
        %v733 = vld [vmem:[%s575 + $0x88] sm:$0xff]
        %v734 = vld [vmem:[%s575 + $0x90] sm:$0xff]
        %v735 = vld [vmem:[%s575 + $0x98] sm:$0xff]
        %v736 = vld [vmem:[%s575 + $0xa0] sm:$0xff]
        %v737 = vld [vmem:[%s575 + $0xa8] sm:$0xff]
        %v738 = vld [vmem:[%s575 + $0xb0] sm:$0xff]
        %v739 = vld [vmem:[%s575 + $0xb8] sm:$0xff]
        %v740 = vld [vmem:[%s575 + $0xc0] sm:$0xff]
        %v741 = vld [vmem:[%s575 + $0xc8] sm:$0xff]
        %v742 = vld [vmem:[%s575 + $0xd0] sm:$0xff]
        %v743 = vld [vmem:[%s575 + $0xd8] sm:$0xff]
        %v744 = vld [vmem:[%s575 + $0xe0] sm:$0xff]
        %v745 = vld [vmem:[%s575 + $0xe8] sm:$0xff]
        %v746 = vld [vmem:[%s575 + $0xf0] sm:$0xff]
        %v747 = vld [vmem:[%s575 + $0xf8] sm:$0xff]
        %v748 = vld [vmem:[%s575 + $0x100] sm:$0xff]
        %v749 = vld [vmem:[%s575 + $0x108] sm:$0xff]
        %v750 = vld [vmem:[%s575 + $0x110] sm:$0xff]
        %v751 = vld [vmem:[%s575 + $0x118] sm:$0xff]
        %v752 = vld [vmem:[%s575 + $0x120] sm:$0xff]
        %v753 = vld [vmem:[%s575 + $0x128] sm:$0xff]
        %v754 = vld [vmem:[%s575 + $0x130] sm:$0xff]
        %v755 = vld [vmem:[%s575 + $0x138] sm:$0xff]
        %v756 = vld [vmem:[%s575 + $0x140] sm:$0xff]
        %v757 = vld [vmem:[%s575 + $0x148] sm:$0xff]
        %v758 = vld [vmem:[%s575 + $0x150] sm:$0xff]
        %v759 = vld [vmem:[%s575 + $0x158] sm:$0xff]
        %v760 = vld [vmem:[%s575 + $0x160] sm:$0xff]
        %v761 = vld [vmem:[%s575 + $0x168] sm:$0xff]
        %v762 = vld [vmem:[%s575 + $0x170] sm:$0xff]
        %v763 = vld [vmem:[%s575 + $0x178] sm:$0xff]
        %v764 = vld [vmem:[%s575 + $0x180] sm:$0xff]
        %v765 = vld [vmem:[%s575 + $0x188] sm:$0xff]
        %v766 = vld [vmem:[%s575 + $0x190] sm:$0xff]
        %v767 = vld [vmem:[%s575 + $0x198] sm:$0xff]
        %v768 = vld [vmem:[%s575 + $0x1a0] sm:$0xff]
        %v769 = vld [vmem:[%s575 + $0x1a8] sm:$0xff]
        %v770 = vld [vmem:[%s575 + $0x1b0] sm:$0xff]
        %v771 = vld [vmem:[%s575 + $0x1b8] sm:$0xff]
        %v772 = vld [vmem:[%s575 + $0x1c0] sm:$0xff]
        %v773 = vld [vmem:[%s575 + $0x1c8] sm:$0xff]
        %v774 = vld [vmem:[%s575 + $0x1d0] sm:$0xff]
        %v775 = vld [vmem:[%s575 + $0x1d8] sm:$0xff]
        %v776 = vld [vmem:[%s575 + $0x1e0] sm:$0xff]
        %v777 = vld [vmem:[%s575 + $0x1e8] sm:$0xff]
        %v778 = vld [vmem:[%s575 + $0x1f0] sm:$0xff]
        %v779 = vld [vmem:[%s575 + $0x1f8] sm:$0xff]
        %v796 = vunpack.c.l.b16 %v700
        %v797 = vunpack.c.h.b16 %v700
        %v798 = vunpack.c.l.b16 %v701
        %v799 = vunpack.c.h.b16 %v701
        %v800 = vunpack.c.l.b16 %v702
        %v801 = vunpack.c.h.b16 %v702
        %v802 = vunpack.c.l.b16 %v703
        %v803 = vunpack.c.h.b16 %v703
        %v804 = vunpack.c.l.b16 %v704
        %v805 = vunpack.c.h.b16 %v704
        %v806 = vunpack.c.l.b16 %v705
        %v807 = vunpack.c.h.b16 %v705
        %v808 = vunpack.c.l.b16 %v706
        %v809 = vunpack.c.h.b16 %v706
        %v810 = vunpack.c.l.b16 %v707
        %v811 = vunpack.c.h.b16 %v707
        %v812 = vunpack.c.l.b16 %v708
        %v813 = vunpack.c.h.b16 %v708
        %v814 = vunpack.c.l.b16 %v709
        %v815 = vunpack.c.h.b16 %v709
        %v816 = vunpack.c.l.b16 %v710
        %v817 = vunpack.c.h.b16 %v710
        %v818 = vunpack.c.l.b16 %v711
        %v819 = vunpack.c.h.b16 %v711
        %v820 = vunpack.c.l.b16 %v712
        %v821 = vunpack.c.h.b16 %v712
        %v822 = vunpack.c.l.b16 %v713
        %v823 = vunpack.c.h.b16 %v713
        %v824 = vunpack.c.l.b16 %v714
        %v825 = vunpack.c.h.b16 %v714
        %v826 = vunpack.c.l.b16 %v715
        %v827 = vunpack.c.h.b16 %v715
        %v828 = vpack.c.b16 %v798, %v796
        %v829 = vpack.c.b16 %v799, %v797
        %v830 = vpack.c.b16 %v802, %v800
        %v831 = vpack.c.b16 %v803, %v801
        %v832 = vpack.c.b16 %v806, %v804
        %v833 = vpack.c.b16 %v807, %v805
        %v834 = vpack.c.b16 %v810, %v808
        %v835 = vpack.c.b16 %v811, %v809
        %v836 = vpack.c.b16 %v814, %v812
        %v837 = vpack.c.b16 %v815, %v813
        %v838 = vpack.c.b16 %v818, %v816
        %v839 = vpack.c.b16 %v819, %v817
        %v840 = vpack.c.b16 %v822, %v820
        %v841 = vpack.c.b16 %v823, %v821
        %v842 = vpack.c.b16 %v826, %v824
        %v843 = vpack.c.b16 %v827, %v825
        %v924 = vunpack.c.l.b16 %v716
        %v925 = vunpack.c.h.b16 %v716
        %v926 = vunpack.c.l.b16 %v717
        %v927 = vunpack.c.h.b16 %v717
        %v928 = vunpack.c.l.b16 %v718
        %v929 = vunpack.c.h.b16 %v718
        %v930 = vunpack.c.l.b16 %v719
        %v931 = vunpack.c.h.b16 %v719
        %v932 = vunpack.c.l.b16 %v720
        %v933 = vunpack.c.h.b16 %v720
        %v934 = vunpack.c.l.b16 %v721
        %v935 = vunpack.c.h.b16 %v721
        %v936 = vunpack.c.l.b16 %v722
        %v937 = vunpack.c.h.b16 %v722
        %v938 = vunpack.c.l.b16 %v723
        %v939 = vunpack.c.h.b16 %v723
        %v940 = vunpack.c.l.b16 %v724
        %v941 = vunpack.c.h.b16 %v724
        %v942 = vunpack.c.l.b16 %v725
        %v943 = vunpack.c.h.b16 %v725
        %v944 = vunpack.c.l.b16 %v726
        %v945 = vunpack.c.h.b16 %v726
        %v946 = vunpack.c.l.b16 %v727
        %v947 = vunpack.c.h.b16 %v727
        %v948 = vunpack.c.l.b16 %v728
        %v949 = vunpack.c.h.b16 %v728
        %v950 = vunpack.c.l.b16 %v729
        %v951 = vunpack.c.h.b16 %v729
        %v952 = vunpack.c.l.b16 %v730
        %v953 = vunpack.c.h.b16 %v730
        %v954 = vunpack.c.l.b16 %v731
        %v955 = vunpack.c.h.b16 %v731
        %v956 = vunpack.c.l.b16 %v732
        %v957 = vunpack.c.h.b16 %v732
        %v958 = vunpack.c.l.b16 %v733
        %v959 = vunpack.c.h.b16 %v733
        %v960 = vunpack.c.l.b16 %v734
        %v961 = vunpack.c.h.b16 %v734
        %v962 = vunpack.c.l.b16 %v735
        %v963 = vunpack.c.h.b16 %v735
        %v964 = vunpack.c.l.b16 %v736
        %v965 = vunpack.c.h.b16 %v736
        %v966 = vunpack.c.l.b16 %v737
        %v967 = vunpack.c.h.b16 %v737
        %v968 = vunpack.c.l.b16 %v738
        %v969 = vunpack.c.h.b16 %v738
        %v970 = vunpack.c.l.b16 %v739
        %v971 = vunpack.c.h.b16 %v739
        %v972 = vunpack.c.l.b16 %v740
        %v973 = vunpack.c.h.b16 %v740
        %v974 = vunpack.c.l.b16 %v741
        %v975 = vunpack.c.h.b16 %v741
        %v976 = vunpack.c.l.b16 %v742
        %v977 = vunpack.c.h.b16 %v742
        %v978 = vunpack.c.l.b16 %v743
        %v979 = vunpack.c.h.b16 %v743
        %v980 = vunpack.c.l.b16 %v744
        %v981 = vunpack.c.h.b16 %v744
        %v982 = vunpack.c.l.b16 %v745
        %v983 = vunpack.c.h.b16 %v745
        %v984 = vunpack.c.l.b16 %v746
        %v985 = vunpack.c.h.b16 %v746
        %v986 = vunpack.c.l.b16 %v747
        %v987 = vunpack.c.h.b16 %v747
        %v988 = vunpack.c.l.b16 %v748
        %v989 = vunpack.c.h.b16 %v748
        %v990 = vunpack.c.l.b16 %v749
        %v991 = vunpack.c.h.b16 %v749
        %v992 = vunpack.c.l.b16 %v750
        %v993 = vunpack.c.h.b16 %v750
        %v994 = vunpack.c.l.b16 %v751
        %v995 = vunpack.c.h.b16 %v751
        %v996 = vunpack.c.l.b16 %v752
        %v997 = vunpack.c.h.b16 %v752
        %v998 = vunpack.c.l.b16 %v753
        %v999 = vunpack.c.h.b16 %v753
        %v1000 = vunpack.c.l.b16 %v754
        %v1001 = vunpack.c.h.b16 %v754
        %v1002 = vunpack.c.l.b16 %v755
        %v1003 = vunpack.c.h.b16 %v755
        %v1004 = vunpack.c.l.b16 %v756
        %v1005 = vunpack.c.h.b16 %v756
        %v1006 = vunpack.c.l.b16 %v757
        %v1007 = vunpack.c.h.b16 %v757
        %v1008 = vunpack.c.l.b16 %v758
        %v1009 = vunpack.c.h.b16 %v758
        %v1010 = vunpack.c.l.b16 %v759
        %v1011 = vunpack.c.h.b16 %v759
        %v1012 = vunpack.c.l.b16 %v760
        %v1013 = vunpack.c.h.b16 %v760
        %v1014 = vunpack.c.l.b16 %v761
        %v1015 = vunpack.c.h.b16 %v761
        %v1016 = vunpack.c.l.b16 %v762
        %v1017 = vunpack.c.h.b16 %v762
        %v1018 = vunpack.c.l.b16 %v763
        %v1019 = vunpack.c.h.b16 %v763
        %v1020 = vunpack.c.l.b16 %v764
        %v1021 = vunpack.c.h.b16 %v764
        %v1022 = vunpack.c.l.b16 %v765
        %v1023 = vunpack.c.h.b16 %v765
        %v1024 = vunpack.c.l.b16 %v766
        %v1025 = vunpack.c.h.b16 %v766
        %v1026 = vunpack.c.l.b16 %v767
        %v1027 = vunpack.c.h.b16 %v767
        %v1028 = vunpack.c.l.b16 %v768
        %v1029 = vunpack.c.h.b16 %v768
        %v1030 = vunpack.c.l.b16 %v769
        %v1031 = vunpack.c.h.b16 %v769
        %v1032 = vunpack.c.l.b16 %v770
        %v1033 = vunpack.c.h.b16 %v770
        %v1034 = vunpack.c.l.b16 %v771
        %v1035 = vunpack.c.h.b16 %v771
        %v1036 = vunpack.c.l.b16 %v772
        %v1037 = vunpack.c.h.b16 %v772
        %v1038 = vunpack.c.l.b16 %v773
        %v1039 = vunpack.c.h.b16 %v773
        %v1040 = vunpack.c.l.b16 %v774
        %v1041 = vunpack.c.h.b16 %v774
        %v1042 = vunpack.c.l.b16 %v775
        %v1043 = vunpack.c.h.b16 %v775
        %v1044 = vunpack.c.l.b16 %v776
        %v1045 = vunpack.c.h.b16 %v776
        %v1046 = vunpack.c.l.b16 %v777
        %v1047 = vunpack.c.h.b16 %v777
        %v1048 = vunpack.c.l.b16 %v778
        %v1049 = vunpack.c.h.b16 %v778
        %v1050 = vunpack.c.l.b16 %v779
        %v1051 = vunpack.c.h.b16 %v779
        %v1052 = vpack.c.b16 %v928, %v924
        %v1053 = vpack.c.b16 %v929, %v925
        %v1054 = vpack.c.b16 %v930, %v926
        %v1055 = vpack.c.b16 %v931, %v927
        %v1056 = vpack.c.b16 %v936, %v932
        %v1057 = vpack.c.b16 %v937, %v933
        %v1058 = vpack.c.b16 %v938, %v934
        %v1059 = vpack.c.b16 %v939, %v935
        %v1060 = vpack.c.b16 %v944, %v940
        %v1061 = vpack.c.b16 %v945, %v941
        %v1062 = vpack.c.b16 %v946, %v942
        %v1063 = vpack.c.b16 %v947, %v943
        %v1064 = vpack.c.b16 %v952, %v948
        %v1065 = vpack.c.b16 %v953, %v949
        %v1066 = vpack.c.b16 %v954, %v950
        %v1067 = vpack.c.b16 %v955, %v951
        %v1068 = vpack.c.b16 %v960, %v956
        %v1069 = vpack.c.b16 %v961, %v957
        %v1070 = vpack.c.b16 %v962, %v958
        %v1071 = vpack.c.b16 %v963, %v959
        %v1072 = vpack.c.b16 %v968, %v964
        %v1073 = vpack.c.b16 %v969, %v965
        %v1074 = vpack.c.b16 %v970, %v966
        %v1075 = vpack.c.b16 %v971, %v967
        %v1076 = vpack.c.b16 %v976, %v972
        %v1077 = vpack.c.b16 %v977, %v973
        %v1078 = vpack.c.b16 %v978, %v974
        %v1079 = vpack.c.b16 %v979, %v975
        %v1080 = vpack.c.b16 %v984, %v980
        %v1081 = vpack.c.b16 %v985, %v981
        %v1082 = vpack.c.b16 %v986, %v982
        %v1083 = vpack.c.b16 %v987, %v983
        %v1084 = vpack.c.b16 %v992, %v988
        %v1085 = vpack.c.b16 %v993, %v989
        %v1086 = vpack.c.b16 %v994, %v990
        %v1087 = vpack.c.b16 %v995, %v991
        %v1088 = vpack.c.b16 %v1000, %v996
        %v1089 = vpack.c.b16 %v1001, %v997
        %v1090 = vpack.c.b16 %v1002, %v998
        %v1091 = vpack.c.b16 %v1003, %v999
        %v1092 = vpack.c.b16 %v1008, %v1004
        %v1093 = vpack.c.b16 %v1009, %v1005
        %v1094 = vpack.c.b16 %v1010, %v1006
        %v1095 = vpack.c.b16 %v1011, %v1007
        %v1096 = vpack.c.b16 %v1016, %v1012
        %v1097 = vpack.c.b16 %v1017, %v1013
        %v1098 = vpack.c.b16 %v1018, %v1014
        %v1099 = vpack.c.b16 %v1019, %v1015
        %v1100 = vpack.c.b16 %v1024, %v1020
        %v1101 = vpack.c.b16 %v1025, %v1021
        %v1102 = vpack.c.b16 %v1026, %v1022
        %v1103 = vpack.c.b16 %v1027, %v1023
        %v1104 = vpack.c.b16 %v1032, %v1028
        %v1105 = vpack.c.b16 %v1033, %v1029
        %v1106 = vpack.c.b16 %v1034, %v1030
        %v1107 = vpack.c.b16 %v1035, %v1031
        %v1108 = vpack.c.b16 %v1040, %v1036
        %v1109 = vpack.c.b16 %v1041, %v1037
        %v1110 = vpack.c.b16 %v1042, %v1038
        %v1111 = vpack.c.b16 %v1043, %v1039
        %v1112 = vpack.c.b16 %v1048, %v1044
        %v1113 = vpack.c.b16 %v1049, %v1045
        %v1114 = vpack.c.b16 %v1050, %v1046
        %v1115 = vpack.c.b16 %v1051, %v1047
        %1180 = vmatprep.subr.bf16.mxu0 %v1081
        %1181 = vmatpush1.bf16.msra.mxu0 %v1080
        %1182 = vmatprep.subr.bf16.mxu0 %v1077
        %1183 = vmatpush1.bf16.msra.mxu0 %v1076
        %1184 = vmatprep.subr.bf16.mxu0 %v1073
        %1185 = vmatpush1.bf16.msra.mxu0 %v1072
        %1186 = vmatprep.subr.bf16.mxu0 %v1069
        %1187 = vmatpush1.bf16.msra.mxu0 %v1068
        %1188 = vmatprep.subr.bf16.mxu0 %v1065
        %1189 = vmatpush1.bf16.msra.mxu0 %v1064
        %1190 = vmatprep.subr.bf16.mxu0 %v1061
        %1191 = vmatpush1.bf16.msra.mxu0 %v1060
        %1192 = vmatprep.subr.bf16.mxu0 %v1057
        %1193 = vmatpush1.bf16.msra.mxu0 %v1056
        %1194 = vmatprep.subr.bf16.mxu0 %v1053
        %1195 = vmatpush1.bf16.msra.mxu0 %v1052
        %1196 = vmatprep.subr.bf16.mxu0 %v1113
        %1197 = vmatpush2.bf16.msra.mxu0 %v1112
        %1198 = vmatprep.subr.bf16.mxu0 %v1109
        %1199 = vmatpush2.bf16.msra.mxu0 %v1108
        %1200 = vmatprep.subr.bf16.mxu0 %v1105
        %1201 = vmatpush2.bf16.msra.mxu0 %v1104
        %1202 = vmatprep.subr.bf16.mxu0 %v1101
        %1203 = vmatpush2.bf16.msra.mxu0 %v1100
        %1204 = vmatprep.subr.bf16.mxu0 %v1097
        %1205 = vmatpush2.bf16.msra.mxu0 %v1096
        %1206 = vmatprep.subr.bf16.mxu0 %v1093
        %1207 = vmatpush2.bf16.msra.mxu0 %v1092
        %1208 = vmatprep.subr.bf16.mxu0 %v1089
        %1209 = vmatpush2.bf16.msra.mxu0 %v1088
        %1210 = vmatprep.subr.bf16.mxu0 %v1085
        %1211 = vmatpush2.bf16.msra.mxu0 %v1084
        %1212 = vmatprep.mubr.bf16.mxu0 %v829
        %1213 = vmatmul.mubr.bf16.gmra.mxu0 %v828
        %v1214 = vpop.f32.mrf.mxu0
        %v1215 = vadd.f32 0.0, %v1214
        %v1216 = vpop.f32.mrf.mxu0
        %v1217 = vadd.f32 0.0, %v1216
        %v1218 = vpop.f32.mrf.mxu0
        %v1219 = vadd.f32 0.0, %v1218
        %v1220 = vpop.f32.mrf.mxu0
        %v1221 = vadd.f32 0.0, %v1220
        %1222 = vmatprep.mubr.bf16.mxu0 %v831
        %1223 = vmatmul.mubr.bf16.gmra.mxu0 %v830
        %v1224 = vpop.f32.mrf.mxu0
        %v1225 = vadd.f32 0.0, %v1224
        %v1226 = vpop.f32.mrf.mxu0
        %v1227 = vadd.f32 0.0, %v1226
        %v1228 = vpop.f32.mrf.mxu0
        %v1229 = vadd.f32 0.0, %v1228
        %v1230 = vpop.f32.mrf.mxu0
        %v1231 = vadd.f32 0.0, %v1230
        %1232 = vmatprep.mubr.bf16.mxu0 %v833
        %1233 = vmatmul.mubr.bf16.gmra.mxu0 %v832
        %v1234 = vpop.f32.mrf.mxu0
        %v1235 = vadd.f32 0.0, %v1234
        %v1236 = vpop.f32.mrf.mxu0
        %v1237 = vadd.f32 0.0, %v1236
        %v1238 = vpop.f32.mrf.mxu0
        %v1239 = vadd.f32 0.0, %v1238
        %v1240 = vpop.f32.mrf.mxu0
        %v1241 = vadd.f32 0.0, %v1240
        %1242 = vmatprep.mubr.bf16.mxu0 %v835
        %1243 = vmatmul.mubr.bf16.gmra.mxu0 %v834
        %v1244 = vpop.f32.mrf.mxu0
        %v1245 = vadd.f32 0.0, %v1244
        %v1246 = vpop.f32.mrf.mxu0
        %v1247 = vadd.f32 0.0, %v1246
        %v1248 = vpop.f32.mrf.mxu0
        %v1249 = vadd.f32 0.0, %v1248
        %v1250 = vpop.f32.mrf.mxu0
        %v1251 = vadd.f32 0.0, %v1250
        %1252 = vmatprep.mubr.bf16.mxu0 %v837
        %1253 = vmatmul.mubr.bf16.gmra.mxu0 %v836
        %v1254 = vpop.f32.mrf.mxu0
        %v1255 = vadd.f32 0.0, %v1254
        %v1256 = vpop.f32.mrf.mxu0
        %v1257 = vadd.f32 0.0, %v1256
        %v1258 = vpop.f32.mrf.mxu0
        %v1259 = vadd.f32 0.0, %v1258
        %v1260 = vpop.f32.mrf.mxu0
        %v1261 = vadd.f32 0.0, %v1260
        %1262 = vmatprep.mubr.bf16.mxu0 %v839
        %1263 = vmatmul.mubr.bf16.gmra.mxu0 %v838
        %v1264 = vpop.f32.mrf.mxu0
        %v1265 = vadd.f32 0.0, %v1264
        %v1266 = vpop.f32.mrf.mxu0
        %v1267 = vadd.f32 0.0, %v1266
        %v1268 = vpop.f32.mrf.mxu0
        %v1269 = vadd.f32 0.0, %v1268
        %v1270 = vpop.f32.mrf.mxu0
        %v1271 = vadd.f32 0.0, %v1270
        %1272 = vmatprep.mubr.bf16.mxu0 %v841
        %1273 = vmatmul.mubr.bf16.gmra.mxu0 %v840
        %v1274 = vpop.f32.mrf.mxu0
        %v1275 = vadd.f32 0.0, %v1274
        %v1276 = vpop.f32.mrf.mxu0
        %v1277 = vadd.f32 0.0, %v1276
        %v1278 = vpop.f32.mrf.mxu0
        %v1279 = vadd.f32 0.0, %v1278
        %v1280 = vpop.f32.mrf.mxu0
        %v1281 = vadd.f32 0.0, %v1280
        %1282 = vmatprep.mubr.bf16.mxu0 %v843
        %1283 = vmatmul.mubr.bf16.gmra.mxu0 %v842
        %v1284 = vpop.f32.mrf.mxu0
        %v1285 = vadd.f32 0.0, %v1284
        %v1286 = vpop.f32.mrf.mxu0
        %v1287 = vadd.f32 0.0, %v1286
        %v1288 = vpop.f32.mrf.mxu0
        %v1289 = vadd.f32 0.0, %v1288
        %v1290 = vpop.f32.mrf.mxu0
        %v1291 = vadd.f32 0.0, %v1290
        %1292 = vdwg.mxu0
        %1293 = vmatprep.subr.bf16.mxu0 %v1083
        %1294 = vmatpush1.bf16.msra.mxu0 %v1082
        %1295 = vmatprep.subr.bf16.mxu0 %v1079
        %1296 = vmatpush1.bf16.msra.mxu0 %v1078
        %1297 = vmatprep.subr.bf16.mxu0 %v1075
        %1298 = vmatpush1.bf16.msra.mxu0 %v1074
        %1299 = vmatprep.subr.bf16.mxu0 %v1071
        %1300 = vmatpush1.bf16.msra.mxu0 %v1070
        %1301 = vmatprep.subr.bf16.mxu0 %v1067
        %1302 = vmatpush1.bf16.msra.mxu0 %v1066
        %1303 = vmatprep.subr.bf16.mxu0 %v1063
        %1304 = vmatpush1.bf16.msra.mxu0 %v1062
        %1305 = vmatprep.subr.bf16.mxu0 %v1059
        %1306 = vmatpush1.bf16.msra.mxu0 %v1058
        %1307 = vmatprep.subr.bf16.mxu0 %v1055
        %1308 = vmatpush1.bf16.msra.mxu0 %v1054
        %1309 = vmatprep.subr.bf16.mxu0 %v1115
        %1310 = vmatpush2.bf16.msra.mxu0 %v1114
        %1311 = vmatprep.subr.bf16.mxu0 %v1111
        %1312 = vmatpush2.bf16.msra.mxu0 %v1110
        %1313 = vmatprep.subr.bf16.mxu0 %v1107
        %1314 = vmatpush2.bf16.msra.mxu0 %v1106
        %1315 = vmatprep.subr.bf16.mxu0 %v1103
        %1316 = vmatpush2.bf16.msra.mxu0 %v1102
        %1317 = vmatprep.subr.bf16.mxu0 %v1099
        %1318 = vmatpush2.bf16.msra.mxu0 %v1098
        %1319 = vmatprep.subr.bf16.mxu0 %v1095
        %1320 = vmatpush2.bf16.msra.mxu0 %v1094
        %1321 = vmatprep.subr.bf16.mxu0 %v1091
        %1322 = vmatpush2.bf16.msra.mxu0 %v1090
        %1323 = vmatprep.subr.bf16.mxu0 %v1087
        %1324 = vmatpush2.bf16.msra.mxu0 %v1086
        %1325 = vmatprep.mubr.bf16.mxu0 %v829
        %1326 = vmatmul.mubr.bf16.gmra.mxu0 %v828
        %v1327 = vpop.f32.mrf.mxu0
        %v1328 = vadd.f32 0.0, %v1327
        %v1329 = vpop.f32.mrf.mxu0
        %v1330 = vadd.f32 0.0, %v1329
        %v1331 = vpop.f32.mrf.mxu0
        %v1332 = vadd.f32 0.0, %v1331
        %v1333 = vpop.f32.mrf.mxu0
        %v1334 = vadd.f32 0.0, %v1333
        %1335 = vmatprep.mubr.bf16.mxu0 %v831
        %1336 = vmatmul.mubr.bf16.gmra.mxu0 %v830
        %v1337 = vpop.f32.mrf.mxu0
        %v1338 = vadd.f32 0.0, %v1337
        %v1339 = vpop.f32.mrf.mxu0
        %v1340 = vadd.f32 0.0, %v1339
        %v1341 = vpop.f32.mrf.mxu0
        %v1342 = vadd.f32 0.0, %v1341
        %v1343 = vpop.f32.mrf.mxu0
        %v1344 = vadd.f32 0.0, %v1343
        %1345 = vmatprep.mubr.bf16.mxu0 %v833
        %1346 = vmatmul.mubr.bf16.gmra.mxu0 %v832
        %v1347 = vpop.f32.mrf.mxu0
        %v1348 = vadd.f32 0.0, %v1347
        %v1349 = vpop.f32.mrf.mxu0
        %v1350 = vadd.f32 0.0, %v1349
        %v1351 = vpop.f32.mrf.mxu0
        %v1352 = vadd.f32 0.0, %v1351
        %v1353 = vpop.f32.mrf.mxu0
        %v1354 = vadd.f32 0.0, %v1353
        %1355 = vmatprep.mubr.bf16.mxu0 %v835
        %1356 = vmatmul.mubr.bf16.gmra.mxu0 %v834
        %v1357 = vpop.f32.mrf.mxu0
        %v1358 = vadd.f32 0.0, %v1357
        %v1359 = vpop.f32.mrf.mxu0
        %v1360 = vadd.f32 0.0, %v1359
        %v1361 = vpop.f32.mrf.mxu0
        %v1362 = vadd.f32 0.0, %v1361
        %v1363 = vpop.f32.mrf.mxu0
        %v1364 = vadd.f32 0.0, %v1363
        %1365 = vmatprep.mubr.bf16.mxu0 %v837
        %1366 = vmatmul.mubr.bf16.gmra.mxu0 %v836
        %v1367 = vpop.f32.mrf.mxu0
        %v1368 = vadd.f32 0.0, %v1367
        %v1369 = vpop.f32.mrf.mxu0
        %v1370 = vadd.f32 0.0, %v1369
        %v1371 = vpop.f32.mrf.mxu0
        %v1372 = vadd.f32 0.0, %v1371
        %v1373 = vpop.f32.mrf.mxu0
        %v1374 = vadd.f32 0.0, %v1373
        %1375 = vmatprep.mubr.bf16.mxu0 %v839
        %1376 = vmatmul.mubr.bf16.gmra.mxu0 %v838
        %v1377 = vpop.f32.mrf.mxu0
        %v1378 = vadd.f32 0.0, %v1377
        %v1379 = vpop.f32.mrf.mxu0
        %v1380 = vadd.f32 0.0, %v1379
        %v1381 = vpop.f32.mrf.mxu0
        %v1382 = vadd.f32 0.0, %v1381
        %v1383 = vpop.f32.mrf.mxu0
        %v1384 = vadd.f32 0.0, %v1383
        %1385 = vmatprep.mubr.bf16.mxu0 %v841
        %1386 = vmatmul.mubr.bf16.gmra.mxu0 %v840
        %v1387 = vpop.f32.mrf.mxu0
        %v1388 = vadd.f32 0.0, %v1387
        %v1389 = vpop.f32.mrf.mxu0
        %v1390 = vadd.f32 0.0, %v1389
        %v1391 = vpop.f32.mrf.mxu0
        %v1392 = vadd.f32 0.0, %v1391
        %v1393 = vpop.f32.mrf.mxu0
        %v1394 = vadd.f32 0.0, %v1393
        %1395 = vmatprep.mubr.bf16.mxu0 %v843
        %1396 = vmatmul.mubr.bf16.gmra.mxu0 %v842
        %v1397 = vpop.f32.mrf.mxu0
        %v1398 = vadd.f32 0.0, %v1397
        %v1399 = vpop.f32.mrf.mxu0
        %v1400 = vadd.f32 0.0, %v1399
        %v1401 = vpop.f32.mrf.mxu0
        %v1402 = vadd.f32 0.0, %v1401
        %v1403 = vpop.f32.mrf.mxu0
        %v1404 = vadd.f32 0.0, %v1403
        %1405 = vdwg.mxu0
        %v1422 = vunpack.c.l.b16 %v652
        %v1423 = vunpack.c.l.b16 %v653
        %v1424 = vunpack.c.l.b16 %v654
        %v1425 = vunpack.c.l.b16 %v655
        %v1426 = vunpack.c.l.b16 %v656
        %v1427 = vunpack.c.l.b16 %v657
        %v1428 = vunpack.c.l.b16 %v658
        %v1429 = vunpack.c.l.b16 %v659
        %v1430 = vunpack.c.l.b16 %v660
        %v1431 = vunpack.c.l.b16 %v661
        %v1432 = vunpack.c.l.b16 %v662
        %v1433 = vunpack.c.l.b16 %v663
        %v1434 = vunpack.c.l.b16 %v664
        %v1435 = vunpack.c.l.b16 %v665
        %v1436 = vunpack.c.l.b16 %v666
        %v1437 = vunpack.c.l.b16 %v667
        %v1438 = vpack.c.b16 %v1423, %v1422
        %v1439 = vpack.c.b16 %v1425, %v1424
        %v1440 = vpack.c.b16 %v1427, %v1426
        %v1441 = vpack.c.b16 %v1429, %v1428
        %v1442 = vpack.c.b16 %v1431, %v1430
        %v1443 = vpack.c.b16 %v1433, %v1432
        %v1444 = vpack.c.b16 %v1435, %v1434
        %v1445 = vpack.c.b16 %v1437, %v1436
        %v1486 = vunpack.c.l.b16 %v668
        %v1487 = vunpack.c.h.b16 %v668
        %v1488 = vunpack.c.l.b16 %v669
        %v1489 = vunpack.c.h.b16 %v669
        %v1490 = vunpack.c.l.b16 %v670
        %v1491 = vunpack.c.h.b16 %v670
        %v1492 = vunpack.c.l.b16 %v671
        %v1493 = vunpack.c.h.b16 %v671
        %v1494 = vunpack.c.l.b16 %v672
        %v1495 = vunpack.c.h.b16 %v672
        %v1496 = vunpack.c.l.b16 %v673
        %v1497 = vunpack.c.h.b16 %v673
        %v1498 = vunpack.c.l.b16 %v674
        %v1499 = vunpack.c.h.b16 %v674
        %v1500 = vunpack.c.l.b16 %v675
        %v1501 = vunpack.c.h.b16 %v675
        %v1502 = vunpack.c.l.b16 %v676
        %v1503 = vunpack.c.h.b16 %v676
        %v1504 = vunpack.c.l.b16 %v677
        %v1505 = vunpack.c.h.b16 %v677
        %v1506 = vunpack.c.l.b16 %v678
        %v1507 = vunpack.c.h.b16 %v678
        %v1508 = vunpack.c.l.b16 %v679
        %v1509 = vunpack.c.h.b16 %v679
        %v1510 = vunpack.c.l.b16 %v680
        %v1511 = vunpack.c.h.b16 %v680
        %v1512 = vunpack.c.l.b16 %v681
        %v1513 = vunpack.c.h.b16 %v681
        %v1514 = vunpack.c.l.b16 %v682
        %v1515 = vunpack.c.h.b16 %v682
        %v1516 = vunpack.c.l.b16 %v683
        %v1517 = vunpack.c.h.b16 %v683
        %v1518 = vunpack.c.l.b16 %v684
        %v1519 = vunpack.c.h.b16 %v684
        %v1520 = vunpack.c.l.b16 %v685
        %v1521 = vunpack.c.h.b16 %v685
        %v1522 = vunpack.c.l.b16 %v686
        %v1523 = vunpack.c.h.b16 %v686
        %v1524 = vunpack.c.l.b16 %v687
        %v1525 = vunpack.c.h.b16 %v687
        %v1526 = vunpack.c.l.b16 %v688
        %v1527 = vunpack.c.h.b16 %v688
        %v1528 = vunpack.c.l.b16 %v689
        %v1529 = vunpack.c.h.b16 %v689
        %v1530 = vunpack.c.l.b16 %v690
        %v1531 = vunpack.c.h.b16 %v690
        %v1532 = vunpack.c.l.b16 %v691
        %v1533 = vunpack.c.h.b16 %v691
        %v1534 = vunpack.c.l.b16 %v692
        %v1535 = vunpack.c.h.b16 %v692
        %v1536 = vunpack.c.l.b16 %v693
        %v1537 = vunpack.c.h.b16 %v693
        %v1538 = vunpack.c.l.b16 %v694
        %v1539 = vunpack.c.h.b16 %v694
        %v1540 = vunpack.c.l.b16 %v695
        %v1541 = vunpack.c.h.b16 %v695
        %v1542 = vunpack.c.l.b16 %v696
        %v1543 = vunpack.c.h.b16 %v696
        %v1544 = vunpack.c.l.b16 %v697
        %v1545 = vunpack.c.h.b16 %v697
        %v1546 = vunpack.c.l.b16 %v698
        %v1547 = vunpack.c.h.b16 %v698
        %v1548 = vunpack.c.l.b16 %v699
        %v1549 = vunpack.c.h.b16 %v699
        %v1550 = vpack.c.b16 %v1490, %v1486
        %v1551 = vpack.c.b16 %v1491, %v1487
        %v1552 = vpack.c.b16 %v1492, %v1488
        %v1553 = vpack.c.b16 %v1493, %v1489
        %v1554 = vpack.c.b16 %v1498, %v1494
        %v1555 = vpack.c.b16 %v1499, %v1495
        %v1556 = vpack.c.b16 %v1500, %v1496
        %v1557 = vpack.c.b16 %v1501, %v1497
        %v1558 = vpack.c.b16 %v1506, %v1502
        %v1559 = vpack.c.b16 %v1507, %v1503
        %v1560 = vpack.c.b16 %v1508, %v1504
        %v1561 = vpack.c.b16 %v1509, %v1505
        %v1562 = vpack.c.b16 %v1514, %v1510
        %v1563 = vpack.c.b16 %v1515, %v1511
        %v1564 = vpack.c.b16 %v1516, %v1512
        %v1565 = vpack.c.b16 %v1517, %v1513
        %v1566 = vpack.c.b16 %v1522, %v1518
        %v1567 = vpack.c.b16 %v1523, %v1519
        %v1568 = vpack.c.b16 %v1524, %v1520
        %v1569 = vpack.c.b16 %v1525, %v1521
        %v1570 = vpack.c.b16 %v1530, %v1526
        %v1571 = vpack.c.b16 %v1531, %v1527
        %v1572 = vpack.c.b16 %v1532, %v1528
        %v1573 = vpack.c.b16 %v1533, %v1529
        %v1574 = vpack.c.b16 %v1538, %v1534
        %v1575 = vpack.c.b16 %v1539, %v1535
        %v1576 = vpack.c.b16 %v1540, %v1536
        %v1577 = vpack.c.b16 %v1541, %v1537
        %v1578 = vpack.c.b16 %v1546, %v1542
        %v1579 = vpack.c.b16 %v1547, %v1543
        %v1580 = vpack.c.b16 %v1548, %v1544
        %v1581 = vpack.c.b16 %v1549, %v1545
        %1614 = vmatprep.subr.bf16.mxu0 %v1579
        %1615 = vmatpush1.bf16.msra.mxu0 %v1578
        %1616 = vmatprep.subr.bf16.mxu0 %v1575
        %1617 = vmatpush1.bf16.msra.mxu0 %v1574
        %1618 = vmatprep.subr.bf16.mxu0 %v1571
        %1619 = vmatpush1.bf16.msra.mxu0 %v1570
        %1620 = vmatprep.subr.bf16.mxu0 %v1567
        %1621 = vmatpush1.bf16.msra.mxu0 %v1566
        %1622 = vmatprep.subr.bf16.mxu0 %v1563
        %1623 = vmatpush1.bf16.msra.mxu0 %v1562
        %1624 = vmatprep.subr.bf16.mxu0 %v1559
        %1625 = vmatpush1.bf16.msra.mxu0 %v1558
        %1626 = vmatprep.subr.bf16.mxu0 %v1555
        %1627 = vmatpush1.bf16.msra.mxu0 %v1554
        %1628 = vmatprep.subr.bf16.mxu0 %v1551
        %1629 = vmatpush1.bf16.msra.mxu0 %v1550
        %1630 = vmatprep.subr.bf16.mxu0 0
        %1631 = vmatpush2.bf16.msra.mxu0 0
        %1632 = vmatprep.subr.bf16.mxu0 0
        %1633 = vmatpush2.bf16.msra.mxu0 0
        %1634 = vmatprep.subr.bf16.mxu0 0
        %1635 = vmatpush2.bf16.msra.mxu0 0
        %1636 = vmatprep.subr.bf16.mxu0 0
        %1637 = vmatpush2.bf16.msra.mxu0 0
        %1638 = vmatprep.subr.bf16.mxu0 0
        %1639 = vmatpush2.bf16.msra.mxu0 0
        %1640 = vmatprep.subr.bf16.mxu0 0
        %1641 = vmatpush2.bf16.msra.mxu0 0
        %1642 = vmatprep.subr.bf16.mxu0 0
        %1643 = vmatpush2.bf16.msra.mxu0 0
        %1644 = vmatprep.subr.bf16.mxu0 0
        %1645 = vmatpush2.bf16.msra.mxu0 0
        %1646 = vmatprep.mubr.bf16.mxu0 0
        %1647 = vmatmul.mubr.bf16.gmra.mxu0 %v1438
        %v1648 = vpop.f32.mrf.mxu0
        %v1649 = vadd.f32 %v1215, %v1648
        %v1650 = vpop.f32.mrf.mxu0
        %v1651 = vadd.f32 %v1217, %v1650
        %v1652 = vpop.f32.mrf.mxu0
        %v1653 = vadd.f32 %v1219, %v1652
        %v1654 = vpop.f32.mrf.mxu0
        %v1655 = vadd.f32 %v1221, %v1654
        %1656 = vmatprep.mubr.bf16.mxu0 0
        %1657 = vmatmul.mubr.bf16.gmra.mxu0 %v1439
        %v1658 = vpop.f32.mrf.mxu0
        %v1659 = vadd.f32 %v1225, %v1658
        %v1660 = vpop.f32.mrf.mxu0
        %v1661 = vadd.f32 %v1227, %v1660
        %v1662 = vpop.f32.mrf.mxu0
        %v1663 = vadd.f32 %v1229, %v1662
        %v1664 = vpop.f32.mrf.mxu0
        %v1665 = vadd.f32 %v1231, %v1664
        %1666 = vmatprep.mubr.bf16.mxu0 0
        %1667 = vmatmul.mubr.bf16.gmra.mxu0 %v1440
        %v1668 = vpop.f32.mrf.mxu0
        %v1669 = vadd.f32 %v1235, %v1668
        %v1670 = vpop.f32.mrf.mxu0
        %v1671 = vadd.f32 %v1237, %v1670
        %v1672 = vpop.f32.mrf.mxu0
        %v1673 = vadd.f32 %v1239, %v1672
        %v1674 = vpop.f32.mrf.mxu0
        %v1675 = vadd.f32 %v1241, %v1674
        %1676 = vmatprep.mubr.bf16.mxu0 0
        %1677 = vmatmul.mubr.bf16.gmra.mxu0 %v1441
        %v1678 = vpop.f32.mrf.mxu0
        %v1679 = vadd.f32 %v1245, %v1678
        %v1680 = vpop.f32.mrf.mxu0
        %v1681 = vadd.f32 %v1247, %v1680
        %v1682 = vpop.f32.mrf.mxu0
        %v1683 = vadd.f32 %v1249, %v1682
        %v1684 = vpop.f32.mrf.mxu0
        %v1685 = vadd.f32 %v1251, %v1684
        %1686 = vmatprep.mubr.bf16.mxu0 0
        %1687 = vmatmul.mubr.bf16.gmra.mxu0 %v1442
        %v1688 = vpop.f32.mrf.mxu0
        %v1689 = vadd.f32 %v1255, %v1688
        %v1690 = vpop.f32.mrf.mxu0
        %v1691 = vadd.f32 %v1257, %v1690
        %v1692 = vpop.f32.mrf.mxu0
        %v1693 = vadd.f32 %v1259, %v1692
        %v1694 = vpop.f32.mrf.mxu0
        %v1695 = vadd.f32 %v1261, %v1694
        %1696 = vmatprep.mubr.bf16.mxu0 0
        %1697 = vmatmul.mubr.bf16.gmra.mxu0 %v1443
        %v1698 = vpop.f32.mrf.mxu0
        %v1699 = vadd.f32 %v1265, %v1698
        %v1700 = vpop.f32.mrf.mxu0
        %v1701 = vadd.f32 %v1267, %v1700
        %v1702 = vpop.f32.mrf.mxu0
        %v1703 = vadd.f32 %v1269, %v1702
        %v1704 = vpop.f32.mrf.mxu0
        %v1705 = vadd.f32 %v1271, %v1704
        %1706 = vmatprep.mubr.bf16.mxu0 0
        %1707 = vmatmul.mubr.bf16.gmra.mxu0 %v1444
        %v1708 = vpop.f32.mrf.mxu0
        %v1709 = vadd.f32 %v1275, %v1708
        %v1710 = vpop.f32.mrf.mxu0
        %v1711 = vadd.f32 %v1277, %v1710
        %v1712 = vpop.f32.mrf.mxu0
        %v1713 = vadd.f32 %v1279, %v1712
        %v1714 = vpop.f32.mrf.mxu0
        %v1715 = vadd.f32 %v1281, %v1714
        %1716 = vmatprep.mubr.bf16.mxu0 0
        %1717 = vmatmul.mubr.bf16.gmra.mxu0 %v1445
        %v1718 = vpop.f32.mrf.mxu0
        %v1719 = vadd.f32 %v1285, %v1718
        %v1720 = vpop.f32.mrf.mxu0
        %v1721 = vadd.f32 %v1287, %v1720
        %v1722 = vpop.f32.mrf.mxu0
        %v1723 = vadd.f32 %v1289, %v1722
        %v1724 = vpop.f32.mrf.mxu0
        %v1725 = vadd.f32 %v1291, %v1724
        %1726 = vdwg.mxu0
        %1727 = vmatprep.subr.bf16.mxu0 %v1581
        %1728 = vmatpush1.bf16.msra.mxu0 %v1580
        %1729 = vmatprep.subr.bf16.mxu0 %v1577
        %1730 = vmatpush1.bf16.msra.mxu0 %v1576
        %1731 = vmatprep.subr.bf16.mxu0 %v1573
        %1732 = vmatpush1.bf16.msra.mxu0 %v1572
        %1733 = vmatprep.subr.bf16.mxu0 %v1569
        %1734 = vmatpush1.bf16.msra.mxu0 %v1568
        %1735 = vmatprep.subr.bf16.mxu0 %v1565
        %1736 = vmatpush1.bf16.msra.mxu0 %v1564
        %1737 = vmatprep.subr.bf16.mxu0 %v1561
        %1738 = vmatpush1.bf16.msra.mxu0 %v1560
        %1739 = vmatprep.subr.bf16.mxu0 %v1557
        %1740 = vmatpush1.bf16.msra.mxu0 %v1556
        %1741 = vmatprep.subr.bf16.mxu0 %v1553
        %1742 = vmatpush1.bf16.msra.mxu0 %v1552
        %1743 = vmatprep.subr.bf16.mxu0 0
        %1744 = vmatpush2.bf16.msra.mxu0 0
        %1745 = vmatprep.subr.bf16.mxu0 0
        %1746 = vmatpush2.bf16.msra.mxu0 0
        %1747 = vmatprep.subr.bf16.mxu0 0
        %1748 = vmatpush2.bf16.msra.mxu0 0
        %1749 = vmatprep.subr.bf16.mxu0 0
        %1750 = vmatpush2.bf16.msra.mxu0 0
        %1751 = vmatprep.subr.bf16.mxu0 0
        %1752 = vmatpush2.bf16.msra.mxu0 0
        %1753 = vmatprep.subr.bf16.mxu0 0
        %1754 = vmatpush2.bf16.msra.mxu0 0
        %1755 = vmatprep.subr.bf16.mxu0 0
        %1756 = vmatpush2.bf16.msra.mxu0 0
        %1757 = vmatprep.subr.bf16.mxu0 0
        %1758 = vmatpush2.bf16.msra.mxu0 0
        %1759 = vmatprep.mubr.bf16.mxu0 0
        %1760 = vmatmul.mubr.bf16.gmra.mxu0 %v1438
        %v1761 = vpop.f32.mrf.mxu0
        %v1762 = vadd.f32 %v1328, %v1761
        %v1763 = vpop.f32.mrf.mxu0
        %v1764 = vadd.f32 %v1330, %v1763
        %v1765 = vpop.f32.mrf.mxu0
        %v1766 = vadd.f32 %v1332, %v1765
        %v1767 = vpop.f32.mrf.mxu0
        %v1768 = vadd.f32 %v1334, %v1767
        %1769 = vmatprep.mubr.bf16.mxu0 0
        %1770 = vmatmul.mubr.bf16.gmra.mxu0 %v1439
        %v1771 = vpop.f32.mrf.mxu0
        %v1772 = vadd.f32 %v1338, %v1771
        %v1773 = vpop.f32.mrf.mxu0
        %v1774 = vadd.f32 %v1340, %v1773
        %v1775 = vpop.f32.mrf.mxu0
        %v1776 = vadd.f32 %v1342, %v1775
        %v1777 = vpop.f32.mrf.mxu0
        %v1778 = vadd.f32 %v1344, %v1777
        %1779 = vmatprep.mubr.bf16.mxu0 0
        %1780 = vmatmul.mubr.bf16.gmra.mxu0 %v1440
        %v1781 = vpop.f32.mrf.mxu0
        %v1782 = vadd.f32 %v1348, %v1781
        %v1783 = vpop.f32.mrf.mxu0
        %v1784 = vadd.f32 %v1350, %v1783
        %v1785 = vpop.f32.mrf.mxu0
        %v1786 = vadd.f32 %v1352, %v1785
        %v1787 = vpop.f32.mrf.mxu0
        %v1788 = vadd.f32 %v1354, %v1787
        %1789 = vmatprep.mubr.bf16.mxu0 0
        %1790 = vmatmul.mubr.bf16.gmra.mxu0 %v1441
        %v1791 = vpop.f32.mrf.mxu0
        %v1792 = vadd.f32 %v1358, %v1791
        %v1793 = vpop.f32.mrf.mxu0
        %v1794 = vadd.f32 %v1360, %v1793
        %v1795 = vpop.f32.mrf.mxu0
        %v1796 = vadd.f32 %v1362, %v1795
        %v1797 = vpop.f32.mrf.mxu0
        %v1798 = vadd.f32 %v1364, %v1797
        %1799 = vmatprep.mubr.bf16.mxu0 0
        %1800 = vmatmul.mubr.bf16.gmra.mxu0 %v1442
        %v1801 = vpop.f32.mrf.mxu0
        %v1802 = vadd.f32 %v1368, %v1801
        %v1803 = vpop.f32.mrf.mxu0
        %v1804 = vadd.f32 %v1370, %v1803
        %v1805 = vpop.f32.mrf.mxu0
        %v1806 = vadd.f32 %v1372, %v1805
        %v1807 = vpop.f32.mrf.mxu0
        %v1808 = vadd.f32 %v1374, %v1807
        %1809 = vmatprep.mubr.bf16.mxu0 0
        %1810 = vmatmul.mubr.bf16.gmra.mxu0 %v1443
        %v1811 = vpop.f32.mrf.mxu0
        %v1812 = vadd.f32 %v1378, %v1811
        %v1813 = vpop.f32.mrf.mxu0
        %v1814 = vadd.f32 %v1380, %v1813
        %v1815 = vpop.f32.mrf.mxu0
        %v1816 = vadd.f32 %v1382, %v1815
        %v1817 = vpop.f32.mrf.mxu0
        %v1818 = vadd.f32 %v1384, %v1817
        %1819 = vmatprep.mubr.bf16.mxu0 0
        %1820 = vmatmul.mubr.bf16.gmra.mxu0 %v1444
        %v1821 = vpop.f32.mrf.mxu0
        %v1822 = vadd.f32 %v1388, %v1821
        %v1823 = vpop.f32.mrf.mxu0
        %v1824 = vadd.f32 %v1390, %v1823
        %v1825 = vpop.f32.mrf.mxu0
        %v1826 = vadd.f32 %v1392, %v1825
        %v1827 = vpop.f32.mrf.mxu0
        %v1828 = vadd.f32 %v1394, %v1827
        %1829 = vmatprep.mubr.bf16.mxu0 0
        %1830 = vmatmul.mubr.bf16.gmra.mxu0 %v1445
        %v1831 = vpop.f32.mrf.mxu0
        %v1832 = vadd.f32 %v1398, %v1831
        %v1833 = vpop.f32.mrf.mxu0
        %v1834 = vadd.f32 %v1400, %v1833
        %v1835 = vpop.f32.mrf.mxu0
        %v1836 = vadd.f32 %v1402, %v1835
        %v1837 = vpop.f32.mrf.mxu0
        %v1838 = vadd.f32 %v1404, %v1837
        %1839 = vdwg.mxu0
        %v1840 = vld [vmem:[%s633] sm:$0xf]
        %v1842 = vlaneseq
        %v1843 = vshrl.u32 %v1842, 7
        %v1844 = vsub.s32 0, %v1843
        %v1845 = vrot.slane %v1840, %v1844
        %v1846 = vlaneseq
        %v1847 = vshrl.u32 %v1846, 7
        %v1848 = vsub.s32 1, %v1847
        %v1849 = vrot.slane %v1840, %v1848
        %v1850 = vlaneseq
        %v1851 = vshrl.u32 %v1850, 7
        %v1852 = vsub.s32 2, %v1851
        %v1853 = vrot.slane %v1840, %v1852
        %v1854 = vlaneseq
        %v1855 = vshrl.u32 %v1854, 7
        %v1856 = vsub.s32 3, %v1855
        %v1857 = vrot.slane %v1840, %v1856
        %v1862 = vadd.f32 %v1649, %v1845
        %v1863 = vadd.f32 %v1651, %v1849
        %v1864 = vadd.f32 %v1762, %v1853
        %v1865 = vadd.f32 %v1764, %v1857
        %v1866 = vadd.f32 %v1653, %v1845
        %v1867 = vadd.f32 %v1655, %v1849
        %v1868 = vadd.f32 %v1766, %v1853
        %v1869 = vadd.f32 %v1768, %v1857
        %v1870 = vadd.f32 %v1659, %v1845
        %v1871 = vadd.f32 %v1661, %v1849
        %v1872 = vadd.f32 %v1772, %v1853
        %v1873 = vadd.f32 %v1774, %v1857
        %v1874 = vadd.f32 %v1663, %v1845
        %v1875 = vadd.f32 %v1665, %v1849
        %v1876 = vadd.f32 %v1776, %v1853
        %v1877 = vadd.f32 %v1778, %v1857
        %v1878 = vadd.f32 %v1669, %v1845
        %v1879 = vadd.f32 %v1671, %v1849
        %v1880 = vadd.f32 %v1782, %v1853
        %v1881 = vadd.f32 %v1784, %v1857
        %v1882 = vadd.f32 %v1673, %v1845
        %v1883 = vadd.f32 %v1675, %v1849
        %v1884 = vadd.f32 %v1786, %v1853
        %v1885 = vadd.f32 %v1788, %v1857
        %v1886 = vadd.f32 %v1679, %v1845
        %v1887 = vadd.f32 %v1681, %v1849
        %v1888 = vadd.f32 %v1792, %v1853
        %v1889 = vadd.f32 %v1794, %v1857
        %v1890 = vadd.f32 %v1683, %v1845
        %v1891 = vadd.f32 %v1685, %v1849
        %v1892 = vadd.f32 %v1796, %v1853
        %v1893 = vadd.f32 %v1798, %v1857
        %v1894 = vadd.f32 %v1689, %v1845
        %v1895 = vadd.f32 %v1691, %v1849
        %v1896 = vadd.f32 %v1802, %v1853
        %v1897 = vadd.f32 %v1804, %v1857
        %v1898 = vadd.f32 %v1693, %v1845
        %v1899 = vadd.f32 %v1695, %v1849
        %v1900 = vadd.f32 %v1806, %v1853
        %v1901 = vadd.f32 %v1808, %v1857
        %v1902 = vadd.f32 %v1699, %v1845
        %v1903 = vadd.f32 %v1701, %v1849
        %v1904 = vadd.f32 %v1812, %v1853
        %v1905 = vadd.f32 %v1814, %v1857
        %v1906 = vadd.f32 %v1703, %v1845
        %v1907 = vadd.f32 %v1705, %v1849
        %v1908 = vadd.f32 %v1816, %v1853
        %v1909 = vadd.f32 %v1818, %v1857
        %v1910 = vadd.f32 %v1709, %v1845
        %v1911 = vadd.f32 %v1711, %v1849
        %v1912 = vadd.f32 %v1822, %v1853
        %v1913 = vadd.f32 %v1824, %v1857
        %v1914 = vadd.f32 %v1713, %v1845
        %v1915 = vadd.f32 %v1715, %v1849
        %v1916 = vadd.f32 %v1826, %v1853
        %v1917 = vadd.f32 %v1828, %v1857
        %v1918 = vadd.f32 %v1719, %v1845
        %v1919 = vadd.f32 %v1721, %v1849
        %v1920 = vadd.f32 %v1832, %v1853
        %v1921 = vadd.f32 %v1834, %v1857
        %v1922 = vadd.f32 %v1723, %v1845
        %v1923 = vadd.f32 %v1725, %v1849
        %v1924 = vadd.f32 %v1836, %v1853
        %v1925 = vadd.f32 %v1838, %v1857
        %v1926 = vmax.f32 %v1862, 0.0
        %v1927 = vmax.f32 %v1863, 0.0
        %v1928 = vmax.f32 %v1864, 0.0
        %v1929 = vmax.f32 %v1865, 0.0
        %v1930 = vmax.f32 %v1866, 0.0
        %v1931 = vmax.f32 %v1867, 0.0
        %v1932 = vmax.f32 %v1868, 0.0
        %v1933 = vmax.f32 %v1869, 0.0
        %v1934 = vmax.f32 %v1870, 0.0
        %v1935 = vmax.f32 %v1871, 0.0
        %v1936 = vmax.f32 %v1872, 0.0
        %v1937 = vmax.f32 %v1873, 0.0
        %v1938 = vmax.f32 %v1874, 0.0
        %v1939 = vmax.f32 %v1875, 0.0
        %v1940 = vmax.f32 %v1876, 0.0
        %v1941 = vmax.f32 %v1877, 0.0
        %v1942 = vmax.f32 %v1878, 0.0
        %v1943 = vmax.f32 %v1879, 0.0
        %v1944 = vmax.f32 %v1880, 0.0
        %v1945 = vmax.f32 %v1881, 0.0
        %v1946 = vmax.f32 %v1882, 0.0
        %v1947 = vmax.f32 %v1883, 0.0
        %v1948 = vmax.f32 %v1884, 0.0
        %v1949 = vmax.f32 %v1885, 0.0
        %v1950 = vmax.f32 %v1886, 0.0
        %v1951 = vmax.f32 %v1887, 0.0
        %v1952 = vmax.f32 %v1888, 0.0
        %v1953 = vmax.f32 %v1889, 0.0
        %v1954 = vmax.f32 %v1890, 0.0
        %v1955 = vmax.f32 %v1891, 0.0
        %v1956 = vmax.f32 %v1892, 0.0
        %v1957 = vmax.f32 %v1893, 0.0
        %v1958 = vmax.f32 %v1894, 0.0
        %v1959 = vmax.f32 %v1895, 0.0
        %v1960 = vmax.f32 %v1896, 0.0
        %v1961 = vmax.f32 %v1897, 0.0
        %v1962 = vmax.f32 %v1898, 0.0
        %v1963 = vmax.f32 %v1899, 0.0
        %v1964 = vmax.f32 %v1900, 0.0
        %v1965 = vmax.f32 %v1901, 0.0
        %v1966 = vmax.f32 %v1902, 0.0
        %v1967 = vmax.f32 %v1903, 0.0
        %v1968 = vmax.f32 %v1904, 0.0
        %v1969 = vmax.f32 %v1905, 0.0
        %v1970 = vmax.f32 %v1906, 0.0
        %v1971 = vmax.f32 %v1907, 0.0
        %v1972 = vmax.f32 %v1908, 0.0
        %v1973 = vmax.f32 %v1909, 0.0
        %v1974 = vmax.f32 %v1910, 0.0
        %v1975 = vmax.f32 %v1911, 0.0
        %v1976 = vmax.f32 %v1912, 0.0
        %v1977 = vmax.f32 %v1913, 0.0
        %v1978 = vmax.f32 %v1914, 0.0
        %v1979 = vmax.f32 %v1915, 0.0
        %v1980 = vmax.f32 %v1916, 0.0
        %v1981 = vmax.f32 %v1917, 0.0
        %v1982 = vmax.f32 %v1918, 0.0
        %v1983 = vmax.f32 %v1919, 0.0
        %v1984 = vmax.f32 %v1920, 0.0
        %v1985 = vmax.f32 %v1921, 0.0
        %v1986 = vmax.f32 %v1922, 0.0
        %v1987 = vmax.f32 %v1923, 0.0
        %v1988 = vmax.f32 %v1924, 0.0
        %v1989 = vmax.f32 %v1925, 0.0
        %v1990 = vld [vmem:[%s2] sm:$0x3]
        %1991 = vmatprep.subr.mxu0 %v1987
        %1992 = vmatpush1.msra.mxu0 %v1986
        %1993 = vmatprep.subr.mxu0 %v1983
        %1994 = vmatpush1.msra.mxu0 %v1982
        %1995 = vmatprep.subr.mxu0 %v1979
        %1996 = vmatpush1.msra.mxu0 %v1978
        %1997 = vmatprep.subr.mxu0 %v1975
        %1998 = vmatpush1.msra.mxu0 %v1974
        %1999 = vmatprep.subr.mxu0 %v1971
        %2000 = vmatpush1.msra.mxu0 %v1970
        %2001 = vmatprep.subr.mxu0 %v1967
        %2002 = vmatpush1.msra.mxu0 %v1966
        %2003 = vmatprep.subr.mxu0 %v1963
        %2004 = vmatpush1.msra.mxu0 %v1962
        %2005 = vmatprep.subr.mxu0 %v1959
        %2006 = vmatpush1.msra.mxu0 %v1958
        %2007 = vmatprep.subr.mxu0 %v1955
        %2008 = vmatpush1.msra.mxu0 %v1954
        %2009 = vmatprep.subr.mxu0 %v1951
        %2010 = vmatpush1.msra.mxu0 %v1950
        %2011 = vmatprep.subr.mxu0 %v1947
        %2012 = vmatpush1.msra.mxu0 %v1946
        %2013 = vmatprep.subr.mxu0 %v1943
        %2014 = vmatpush1.msra.mxu0 %v1942
        %2015 = vmatprep.subr.mxu0 %v1939
        %2016 = vmatpush1.msra.mxu0 %v1938
        %2017 = vmatprep.subr.mxu0 %v1935
        %2018 = vmatpush1.msra.mxu0 %v1934
        %2019 = vmatprep.subr.mxu0 %v1931
        %2020 = vmatpush1.msra.mxu0 %v1930
        %2021 = vmatprep.subr.mxu0 %v1927
        %2022 = vmatpush1.msra.mxu0 %v1926
        %2023 = vmatprep.subr.mxu0 0.0
        %2024 = vmatpush2.msra.mxu0 0.0
        %2025 = vmatprep.subr.mxu0 0.0
        %2026 = vmatpush2.msra.mxu0 0.0
        %2027 = vmatprep.subr.mxu0 0.0
        %2028 = vmatpush2.msra.mxu0 0.0
        %2029 = vmatprep.subr.mxu0 0.0
        %2030 = vmatpush2.msra.mxu0 0.0
        %2031 = vmatprep.subr.mxu0 0.0
        %2032 = vmatpush2.msra.mxu0 0.0
        %2033 = vmatprep.subr.mxu0 0.0
        %2034 = vmatpush2.msra.mxu0 0.0
        %2035 = vmatprep.subr.mxu0 0.0
        %2036 = vmatpush2.msra.mxu0 0.0
        %2037 = vmatprep.subr.mxu0 0.0
        %2038 = vmatpush2.msra.mxu0 0.0
        %2039 = vmatprep.subr.mxu0 0.0
        %2040 = vmatpush2.msra.mxu0 0.0
        %2041 = vmatprep.subr.mxu0 0.0
        %2042 = vmatpush2.msra.mxu0 0.0
        %2043 = vmatprep.subr.mxu0 0.0
        %2044 = vmatpush2.msra.mxu0 0.0
        %2045 = vmatprep.subr.mxu0 0.0
        %2046 = vmatpush2.msra.mxu0 0.0
        %2047 = vmatprep.subr.mxu0 0.0
        %2048 = vmatpush2.msra.mxu0 0.0
        %2049 = vmatprep.subr.mxu0 0.0
        %2050 = vmatpush2.msra.mxu0 0.0
        %2051 = vmatprep.subr.mxu0 0.0
        %2052 = vmatpush2.msra.mxu0 0.0
        %2053 = vmatprep.subr.mxu0 0.0
        %2054 = vmatpush2.msra.mxu0 0.0
        %2055 = vmatprep.mubr.f32.mxu0 0.0
        %2056 = vmatmul.mubr.f32.gmra.mxu0 %v1990
        %v2057 = vpop.f32.mrf.mxu0
        %v2058 = vadd.f32 0.0, %v2057
        %v2059 = vpop.f32.mrf.mxu0
        %v2060 = vadd.f32 0.0, %v2059
        %2061 = vdwg.mxu0
        %2062 = vmatprep.subr.mxu0 %v1989
        %2063 = vmatpush1.msra.mxu0 %v1988
        %2064 = vmatprep.subr.mxu0 %v1985
        %2065 = vmatpush1.msra.mxu0 %v1984
        %2066 = vmatprep.subr.mxu0 %v1981
        %2067 = vmatpush1.msra.mxu0 %v1980
        %2068 = vmatprep.subr.mxu0 %v1977
        %2069 = vmatpush1.msra.mxu0 %v1976
        %2070 = vmatprep.subr.mxu0 %v1973
        %2071 = vmatpush1.msra.mxu0 %v1972
        %2072 = vmatprep.subr.mxu0 %v1969
        %2073 = vmatpush1.msra.mxu0 %v1968
        %2074 = vmatprep.subr.mxu0 %v1965
        %2075 = vmatpush1.msra.mxu0 %v1964
        %2076 = vmatprep.subr.mxu0 %v1961
        %2077 = vmatpush1.msra.mxu0 %v1960
        %2078 = vmatprep.subr.mxu0 %v1957
        %2079 = vmatpush1.msra.mxu0 %v1956
        %2080 = vmatprep.subr.mxu0 %v1953
        %2081 = vmatpush1.msra.mxu0 %v1952
        %2082 = vmatprep.subr.mxu0 %v1949
        %2083 = vmatpush1.msra.mxu0 %v1948
        %2084 = vmatprep.subr.mxu0 %v1945
        %2085 = vmatpush1.msra.mxu0 %v1944
        %2086 = vmatprep.subr.mxu0 %v1941
        %2087 = vmatpush1.msra.mxu0 %v1940
        %2088 = vmatprep.subr.mxu0 %v1937
        %2089 = vmatpush1.msra.mxu0 %v1936
        %2090 = vmatprep.subr.mxu0 %v1933
        %2091 = vmatpush1.msra.mxu0 %v1932
        %2092 = vmatprep.subr.mxu0 %v1929
        %2093 = vmatpush1.msra.mxu0 %v1928
        %2094 = vmatprep.subr.mxu0 0.0
        %2095 = vmatpush2.msra.mxu0 0.0
        %2096 = vmatprep.subr.mxu0 0.0
        %2097 = vmatpush2.msra.mxu0 0.0
        %2098 = vmatprep.subr.mxu0 0.0
        %2099 = vmatpush2.msra.mxu0 0.0
        %2100 = vmatprep.subr.mxu0 0.0
        %2101 = vmatpush2.msra.mxu0 0.0
        %2102 = vmatprep.subr.mxu0 0.0
        %2103 = vmatpush2.msra.mxu0 0.0
        %2104 = vmatprep.subr.mxu0 0.0
        %2105 = vmatpush2.msra.mxu0 0.0
        %2106 = vmatprep.subr.mxu0 0.0
        %2107 = vmatpush2.msra.mxu0 0.0
        %2108 = vmatprep.subr.mxu0 0.0
        %2109 = vmatpush2.msra.mxu0 0.0
        %2110 = vmatprep.subr.mxu0 0.0
        %2111 = vmatpush2.msra.mxu0 0.0
        %2112 = vmatprep.subr.mxu0 0.0
        %2113 = vmatpush2.msra.mxu0 0.0
        %2114 = vmatprep.subr.mxu0 0.0
        %2115 = vmatpush2.msra.mxu0 0.0
        %2116 = vmatprep.subr.mxu0 0.0
        %2117 = vmatpush2.msra.mxu0 0.0
        %2118 = vmatprep.subr.mxu0 0.0
        %2119 = vmatpush2.msra.mxu0 0.0
        %2120 = vmatprep.subr.mxu0 0.0
        %2121 = vmatpush2.msra.mxu0 0.0
        %2122 = vmatprep.subr.mxu0 0.0
        %2123 = vmatpush2.msra.mxu0 0.0
        %2124 = vmatprep.subr.mxu0 0.0
        %2125 = vmatpush2.msra.mxu0 0.0
        %2126 = vmatprep.mubr.f32.mxu0 0.0
        %2127 = vmatmul.mubr.f32.gmra.mxu0 %v1990
        %v2128 = vpop.f32.mrf.mxu0
        %v2129 = vadd.f32 0.0, %v2128
        %v2130 = vpop.f32.mrf.mxu0
        %v2131 = vadd.f32 0.0, %v2130
        %2132 = vdwg.mxu0
        %p2133 = scmp.eq.s32.totalorder %s24, 0
        // Predicated region
        $region99: #{main_output_layer_forward.3} parent=89 // pred_check
          %p2134 = pneg %p2133
        $region100: #{main_output_layer_forward.3} parent=89 // pred_check_branch
          %2136 = sbr.rel (%p2134) target = $region102
        $region101: #{main_output_layer_forward.3} parent=89 // pred_region
          %p2137 = scmp.eq.s32.totalorder %s23, 0
          %v2138 = vld [vmem:[%s7] sm:$0x1]
          %v2140 = vlaneseq
          %v2141 = vshrl.u32 %v2140, 7
          %v2142 = vsub.s32 0, %v2141
          %v2143 = vrot.slane %v2138, %v2142
          %s2145 = scalar_select %p2137, 1, 0
          %v2146 = vstv %s2145
          %vm2147 = vcmp.eq.s32.totalorder %v2146, 1
          %v2148 = vsel %vm2147, %v2143, 0.0
          %vm2149 = vcmask 648192
          %2150 = vst.msk [vmem:[#allocation2] sm:$0x3] %vm2149, %v2148
        $region102: #{main_output_layer_forward.3} parent=89 // pred_fallthru
          _
        %v2151 = vld [vmem:[#allocation2] sm:$0x3]
        %v2152 = vld [vmem:[%s643] sm:$0xff]
        %v2153 = vld [vmem:[%s643 + $0x8] sm:$0xff]
        %v2154 = vld [vmem:[%s643 + $0x10] sm:$0xff]
        %v2155 = vld [vmem:[%s643 + $0x18] sm:$0xff]
        %v2156 = vld [vmem:[%s643 + $0x20] sm:$0xff]
        %v2157 = vld [vmem:[%s643 + $0x28] sm:$0xff]
        %v2158 = vld [vmem:[%s643 + $0x30] sm:$0xff]
        %v2159 = vld [vmem:[%s643 + $0x38] sm:$0xff]
        %v2160 = vld [vmem:[%s643 + $0x40] sm:$0xff]
        %v2161 = vld [vmem:[%s643 + $0x48] sm:$0xff]
        %v2162 = vld [vmem:[%s643 + $0x50] sm:$0xff]
        %v2163 = vld [vmem:[%s643 + $0x58] sm:$0xff]
        %v2164 = vld [vmem:[%s643 + $0x60] sm:$0xff]
        %v2165 = vld [vmem:[%s643 + $0x68] sm:$0xff]
        %v2166 = vld [vmem:[%s643 + $0x70] sm:$0xff]
        %v2167 = vld [vmem:[%s643 + $0x78] sm:$0xff]
        %v2168 = vld [vmem:[%s643 + $0x80] sm:$0xff]
        %v2169 = vld [vmem:[%s643 + $0x88] sm:$0xff]
        %v2170 = vld [vmem:[%s643 + $0x90] sm:$0xff]
        %v2171 = vld [vmem:[%s643 + $0x98] sm:$0xff]
        %v2172 = vld [vmem:[%s643 + $0xa0] sm:$0xff]
        %v2173 = vld [vmem:[%s643 + $0xa8] sm:$0xff]
        %v2174 = vld [vmem:[%s643 + $0xb0] sm:$0xff]
        %v2175 = vld [vmem:[%s643 + $0xb8] sm:$0xff]
        %v2176 = vld [vmem:[%s643 + $0xc0] sm:$0xff]
        %v2177 = vld [vmem:[%s643 + $0xc8] sm:$0xff]
        %v2178 = vld [vmem:[%s643 + $0xd0] sm:$0xff]
        %v2179 = vld [vmem:[%s643 + $0xd8] sm:$0xff]
        %v2180 = vld [vmem:[%s643 + $0xe0] sm:$0xff]
        %v2181 = vld [vmem:[%s643 + $0xe8] sm:$0xff]
        %v2182 = vld [vmem:[%s643 + $0xf0] sm:$0xff]
        %v2183 = vld [vmem:[%s643 + $0xf8] sm:$0xff]
        %v2184 = vld [vmem:[%s643 + $0x100] sm:$0xff]
        %v2185 = vld [vmem:[%s643 + $0x108] sm:$0xff]
        %v2186 = vld [vmem:[%s643 + $0x110] sm:$0xff]
        %v2187 = vld [vmem:[%s643 + $0x118] sm:$0xff]
        %v2188 = vld [vmem:[%s643 + $0x120] sm:$0xff]
        %v2189 = vld [vmem:[%s643 + $0x128] sm:$0xff]
        %v2190 = vld [vmem:[%s643 + $0x130] sm:$0xff]
        %v2191 = vld [vmem:[%s643 + $0x138] sm:$0xff]
        %v2192 = vld [vmem:[%s643 + $0x140] sm:$0xff]
        %v2193 = vld [vmem:[%s643 + $0x148] sm:$0xff]
        %v2194 = vld [vmem:[%s643 + $0x150] sm:$0xff]
        %v2195 = vld [vmem:[%s643 + $0x158] sm:$0xff]
        %v2196 = vld [vmem:[%s643 + $0x160] sm:$0xff]
        %v2197 = vld [vmem:[%s643 + $0x168] sm:$0xff]
        %v2198 = vld [vmem:[%s643 + $0x170] sm:$0xff]
        %v2199 = vld [vmem:[%s643 + $0x178] sm:$0xff]
        %v2200 = vld [vmem:[%s643 + $0x180] sm:$0xff]
        %v2201 = vld [vmem:[%s643 + $0x188] sm:$0xff]
        %v2202 = vld [vmem:[%s643 + $0x190] sm:$0xff]
        %v2203 = vld [vmem:[%s643 + $0x198] sm:$0xff]
        %v2204 = vld [vmem:[%s643 + $0x1a0] sm:$0xff]
        %v2205 = vld [vmem:[%s643 + $0x1a8] sm:$0xff]
        %v2206 = vld [vmem:[%s643 + $0x1b0] sm:$0xff]
        %v2207 = vld [vmem:[%s643 + $0x1b8] sm:$0xff]
        %v2208 = vld [vmem:[%s643 + $0x1c0] sm:$0xff]
        %v2209 = vld [vmem:[%s643 + $0x1c8] sm:$0xff]
        %v2210 = vld [vmem:[%s643 + $0x1d0] sm:$0xff]
        %v2211 = vld [vmem:[%s643 + $0x1d8] sm:$0xff]
        %v2212 = vld [vmem:[%s643 + $0x1e0] sm:$0xff]
        %v2213 = vld [vmem:[%s643 + $0x1e8] sm:$0xff]
        %v2214 = vld [vmem:[%s643 + $0x1f0] sm:$0xff]
        %v2215 = vld [vmem:[%s643 + $0x1f8] sm:$0xff]
        %2216 = vmatprep.subr.mxu0 0.0
        %2217 = vmatpush1.msra.mxu0 %v2167
        %2218 = vmatprep.subr.mxu0 0.0
        %2219 = vmatpush1.msra.mxu0 %v2166
        %2220 = vmatprep.subr.mxu0 0.0
        %2221 = vmatpush1.msra.mxu0 %v2165
        %2222 = vmatprep.subr.mxu0 0.0
        %2223 = vmatpush1.msra.mxu0 %v2164
        %2224 = vmatprep.subr.mxu0 0.0
        %2225 = vmatpush1.msra.mxu0 %v2163
        %2226 = vmatprep.subr.mxu0 0.0
        %2227 = vmatpush1.msra.mxu0 %v2162
        %2228 = vmatprep.subr.mxu0 0.0
        %2229 = vmatpush1.msra.mxu0 %v2161
        %2230 = vmatprep.subr.mxu0 0.0
        %2231 = vmatpush1.msra.mxu0 %v2160
        %2232 = vmatprep.subr.mxu0 0.0
        %2233 = vmatpush1.msra.mxu0 %v2159
        %2234 = vmatprep.subr.mxu0 0.0
        %2235 = vmatpush1.msra.mxu0 %v2158
        %2236 = vmatprep.subr.mxu0 0.0
        %2237 = vmatpush1.msra.mxu0 %v2157
        %2238 = vmatprep.subr.mxu0 0.0
        %2239 = vmatpush1.msra.mxu0 %v2156
        %2240 = vmatprep.subr.mxu0 0.0
        %2241 = vmatpush1.msra.mxu0 %v2155
        %2242 = vmatprep.subr.mxu0 0.0
        %2243 = vmatpush1.msra.mxu0 %v2154
        %2244 = vmatprep.subr.mxu0 0.0
        %2245 = vmatpush1.msra.mxu0 %v2153
        %2246 = vmatprep.subr.mxu0 0.0
        %2247 = vmatpush1.msra.mxu0 %v2152
        %2248 = vmatprep.subr.mxu0 0.0
        %2249 = vmatpush2.msra.mxu0 %v2183
        %2250 = vmatprep.subr.mxu0 0.0
        %2251 = vmatpush2.msra.mxu0 %v2182
        %2252 = vmatprep.subr.mxu0 0.0
        %2253 = vmatpush2.msra.mxu0 %v2181
        %2254 = vmatprep.subr.mxu0 0.0
        %2255 = vmatpush2.msra.mxu0 %v2180
        %2256 = vmatprep.subr.mxu0 0.0
        %2257 = vmatpush2.msra.mxu0 %v2179
        %2258 = vmatprep.subr.mxu0 0.0
        %2259 = vmatpush2.msra.mxu0 %v2178
        %2260 = vmatprep.subr.mxu0 0.0
        %2261 = vmatpush2.msra.mxu0 %v2177
        %2262 = vmatprep.subr.mxu0 0.0
        %2263 = vmatpush2.msra.mxu0 %v2176
        %2264 = vmatprep.subr.mxu0 0.0
        %2265 = vmatpush2.msra.mxu0 %v2175
        %2266 = vmatprep.subr.mxu0 0.0
        %2267 = vmatpush2.msra.mxu0 %v2174
        %2268 = vmatprep.subr.mxu0 0.0
        %2269 = vmatpush2.msra.mxu0 %v2173
        %2270 = vmatprep.subr.mxu0 0.0
        %2271 = vmatpush2.msra.mxu0 %v2172
        %2272 = vmatprep.subr.mxu0 0.0
        %2273 = vmatpush2.msra.mxu0 %v2171
        %2274 = vmatprep.subr.mxu0 0.0
        %2275 = vmatpush2.msra.mxu0 %v2170
        %2276 = vmatprep.subr.mxu0 0.0
        %2277 = vmatpush2.msra.mxu0 %v2169
        %2278 = vmatprep.subr.mxu0 0.0
        %2279 = vmatpush2.msra.mxu0 %v2168
        %2280 = vmatprep.mubr.f32.mxu0 %v2060
        %2281 = vmatmul.mubr.f32.gmra.mxu0 %v2058
        %v2282 = vpop.f32.mrf.mxu0
        %v2283 = vadd.f32 0.0, %v2282
        %v2284 = vpop.f32.mrf.mxu0
        %2285 = vdwg.mxu0
        %2286 = vmatprep.subr.mxu0 0.0
        %2287 = vmatpush1.msra.mxu0 %v2199
        %2288 = vmatprep.subr.mxu0 0.0
        %2289 = vmatpush1.msra.mxu0 %v2198
        %2290 = vmatprep.subr.mxu0 0.0
        %2291 = vmatpush1.msra.mxu0 %v2197
        %2292 = vmatprep.subr.mxu0 0.0
        %2293 = vmatpush1.msra.mxu0 %v2196
        %2294 = vmatprep.subr.mxu0 0.0
        %2295 = vmatpush1.msra.mxu0 %v2195
        %2296 = vmatprep.subr.mxu0 0.0
        %2297 = vmatpush1.msra.mxu0 %v2194
        %2298 = vmatprep.subr.mxu0 0.0
        %2299 = vmatpush1.msra.mxu0 %v2193
        %2300 = vmatprep.subr.mxu0 0.0
        %2301 = vmatpush1.msra.mxu0 %v2192
        %2302 = vmatprep.subr.mxu0 0.0
        %2303 = vmatpush1.msra.mxu0 %v2191
        %2304 = vmatprep.subr.mxu0 0.0
        %2305 = vmatpush1.msra.mxu0 %v2190
        %2306 = vmatprep.subr.mxu0 0.0
        %2307 = vmatpush1.msra.mxu0 %v2189
        %2308 = vmatprep.subr.mxu0 0.0
        %2309 = vmatpush1.msra.mxu0 %v2188
        %2310 = vmatprep.subr.mxu0 0.0
        %2311 = vmatpush1.msra.mxu0 %v2187
        %2312 = vmatprep.subr.mxu0 0.0
        %2313 = vmatpush1.msra.mxu0 %v2186
        %2314 = vmatprep.subr.mxu0 0.0
        %2315 = vmatpush1.msra.mxu0 %v2185
        %2316 = vmatprep.subr.mxu0 0.0
        %2317 = vmatpush1.msra.mxu0 %v2184
        %2318 = vmatprep.subr.mxu0 0.0
        %2319 = vmatpush2.msra.mxu0 %v2215
        %2320 = vmatprep.subr.mxu0 0.0
        %2321 = vmatpush2.msra.mxu0 %v2214
        %2322 = vmatprep.subr.mxu0 0.0
        %2323 = vmatpush2.msra.mxu0 %v2213
        %2324 = vmatprep.subr.mxu0 0.0
        %2325 = vmatpush2.msra.mxu0 %v2212
        %2326 = vmatprep.subr.mxu0 0.0
        %2327 = vmatpush2.msra.mxu0 %v2211
        %2328 = vmatprep.subr.mxu0 0.0
        %2329 = vmatpush2.msra.mxu0 %v2210
        %2330 = vmatprep.subr.mxu0 0.0
        %2331 = vmatpush2.msra.mxu0 %v2209
        %2332 = vmatprep.subr.mxu0 0.0
        %2333 = vmatpush2.msra.mxu0 %v2208
        %2334 = vmatprep.subr.mxu0 0.0
        %2335 = vmatpush2.msra.mxu0 %v2207
        %2336 = vmatprep.subr.mxu0 0.0
        %2337 = vmatpush2.msra.mxu0 %v2206
        %2338 = vmatprep.subr.mxu0 0.0
        %2339 = vmatpush2.msra.mxu0 %v2205
        %2340 = vmatprep.subr.mxu0 0.0
        %2341 = vmatpush2.msra.mxu0 %v2204
        %2342 = vmatprep.subr.mxu0 0.0
        %2343 = vmatpush2.msra.mxu0 %v2203
        %2344 = vmatprep.subr.mxu0 0.0
        %2345 = vmatpush2.msra.mxu0 %v2202
        %2346 = vmatprep.subr.mxu0 0.0
        %2347 = vmatpush2.msra.mxu0 %v2201
        %2348 = vmatprep.subr.mxu0 0.0
        %2349 = vmatpush2.msra.mxu0 %v2200
        %2350 = vmatprep.mubr.f32.mxu0 %v2131
        %2351 = vmatmul.mubr.f32.gmra.mxu0 %v2129
        %v2352 = vpop.f32.mrf.mxu0
        %v2353 = vadd.f32 %v2283, %v2352
        %v2354 = vpop.f32.mrf.mxu0
        %2355 = vdwg.mxu0
        %v2356 = vadd.f32 %v2151, %v2353
        %vm2357 = vcmask 648192
        %2358 = vst.msk [vmem:[#allocation2] sm:$0x3] %vm2357, %v2356
        %p2359 = scmp.eq.s32.totalorder %s24, 1
        // Predicated region
        $region103: #{main_output_layer_forward.3} parent=89 // pred_check
          %p2360 = pneg %p2359
        $region104: #{main_output_layer_forward.3} parent=89 // pred_check_branch
          %2362 = sbr.rel (%p2360) target = $region106
        $region105: #{main_output_layer_forward.3} parent=89 // pred_region
          %v2363 = vld [vmem:[#allocation2] sm:$0x3]
          %2364 = vst.msk [vmem:[%s650] sm:$0x3] %vm2357, %v2363
        $region106: #{main_output_layer_forward.3} parent=89 // pred_fallthru
          _
        %p2365 = scmp.lt.s32.totalorder %s23, 1
        %s2366 = scalar_select %p2365, %s23, 1
        %s2367 = smul.addr %s2366, 2
        %s2368 = scalar_lea.vmem %s8, %s2367
        // Predicated region
        $region107: #{main_output_layer_forward.3} parent=89 // pred_check
          %p2369 = pneg %p253
        $region108: #{main_output_layer_forward.3} parent=89 // pred_check_branch
          %2371 = sbr.rel (%p2369) target = $region110
        $region109: #{main_output_layer_forward.3} parent=89 // pred_region
          _
        $region110: #{main_output_layer_forward.3} parent=89 // pred_fallthru
          _
      $region90: #{main_output_layer_forward.3} parent=5 // pred_fallthru
        _
      %p2372 = scmp.le.s32.totalorder 2, %s14
      // Predicated region
      $region111: #{main_output_layer_forward.3} parent=5 // pred_check
        %p2373 = pneg %p2372
      $region112: #{main_output_layer_forward.3} parent=5 // pred_check_branch
        %2375 = sbr.rel (%p2373) target = $region114
      $region113: #{main_output_layer_forward.3} parent=5 // pred_region
        %s2376 = ssub.s32 %s14, 2
        // Predicated region
        $region115: #{main_output_layer_forward.3} parent=113 // pred_check
          %p2377 = pneg %p259
        $region116: #{main_output_layer_forward.3} parent=113 // pred_check_branch
          %2379 = sbr.rel (%p2377) target = $region118
        $region117: #{main_output_layer_forward.3} parent=113 // pred_region
          %p2380 = scmp.lt.s32.totalorder %s25, 1
          %s2381 = scalar_select %p2380, %s25, 1
          %s2382 = smul.addr %s2381, 2
          %s2383 = scalar_lea.vmem %s8, %s2382
        $region118: #{main_output_layer_forward.3} parent=113 // pred_fallthru
          _
      $region114: #{main_output_layer_forward.3} parent=5 // pred_fallthru
        _
    $region6: #{main_output_layer_forward.3} parent=1 // loop_footer
      %s18 = sadd.s32 1, %s14
    $region7: #{main_output_layer_forward.3} parent=1 // loop_footer_branch
      %13 = sbr.rel target = $region3
    $region8: #{main_output_layer_forward.3} parent=1 // loop_exit
      _

// kernel: main_output_layer_forward.2
$region0: #{main_output_layer_forward.2}
  #allocation0 [shape = 'u32[]', space=smem, size = 0x4, offset = 0x4, fixed_abs, tag = 'smem constant byte address 0x4 - core index']
  #allocation1 [shape = 'u32[144,128]{1,0:T(1,128)}', space=vmem, size = 0x12000, scoped, tag = 'internal scratch']
  #allocation2 [shape = 'bf16[2,8,2,8,128]{4,3,2,1,0:T(8,128)(2,1)}', space=vmem, size = 0x10000, scoped, tag = 'scratch operand']
  #allocation3 [shape = 'bf16[2,8,2,9,128]{4,3,2,1,0:T(8,128)(2,1)}', space=vmem, size = 0x20000, scoped, tag = 'scratch operand']
  #allocation4 [shape = 'bf16[2,8,8,1152]{3,2,1,0:T(8,128)(2,1)}', space=vmem, size = 0x48000, scoped, tag = 'scratch operand']
  %s0 = inlined_call_operand.vmem [shape: bf16[256,256], index: 0, kind: input, shape index: {}]
  %s1 = inlined_call_operand.vmem [shape: bf16[288,256], index: 1, kind: input, shape index: {}]
  %s2 = inlined_call_operand.vmem [shape: bf16[256,128], index: 2, kind: input, shape index: {}]
  %s3 = inlined_call_operand.vmem [shape: f32[1,128], index: 3, kind: input, shape index: {}]
  %s4 = inlined_call_operand.vmem [shape: bf16[1152,128], index: 4, kind: input, shape index: {}]
  %s5 = inlined_call_operand.vmem [shape: f32[1,128], index: 5, kind: input, shape index: {}]
  %s6 = inlined_call_operand.vmem [shape: bf16[128,128], index: 6, kind: output, shape index: {0}]
  %s7 = inlined_call_operand.vmem [shape: bf16[128,256], index: 7, kind: output, shape index: {1}]
  %8 = xla_tuple %s6, %s7
  %s9 = sld [smem:[#allocation0]]
  $region42: #{main_output_layer_forward.2} parent=0
    _
  %s11 = ssub.s32 1, %s9
  %s12 = scalar_select 0, %s11, %s9
  // Predicated region
  $region2: #{main_output_layer_forward.2} parent=0 // pred_check
    _
  $region3: #{main_output_layer_forward.2} parent=0 // pred_check_branch
    %14 = sbr.rel (0) target = $region5
  $region4: #{main_output_layer_forward.2} parent=0 // pred_region
    _
  $region5: #{main_output_layer_forward.2} parent=0 // pred_fallthru
    _
  // Predicated region
  $region6: #{main_output_layer_forward.2} parent=0 // pred_check
    _
  $region7: #{main_output_layer_forward.2} parent=0 // pred_check_branch
    %16 = sbr.rel (0) target = $region9
  $region8: #{main_output_layer_forward.2} parent=0 // pred_region
    _
  $region9: #{main_output_layer_forward.2} parent=0 // pred_fallthru
    _
  // Predicated region
  $region10: #{main_output_layer_forward.2} parent=0 // pred_check
    _
  $region11: #{main_output_layer_forward.2} parent=0 // pred_check_branch
    %18 = sbr.rel (0) target = $region13
  $region12: #{main_output_layer_forward.2} parent=0 // pred_region
    _
  $region13: #{main_output_layer_forward.2} parent=0 // pred_fallthru
    _
  // Predicated region
  $region14: #{main_output_layer_forward.2} parent=0 // pred_check
    _
  $region15: #{main_output_layer_forward.2} parent=0 // pred_check_branch
    %20 = sbr.rel (0) target = $region17
  $region16: #{main_output_layer_forward.2} parent=0 // pred_region
    _
  $region17: #{main_output_layer_forward.2} parent=0 // pred_fallthru
    _
  // Predicated region
  $region18: #{main_output_layer_forward.2} parent=0 // pred_check
    _
  $region19: #{main_output_layer_forward.2} parent=0 // pred_check_branch
    %22 = sbr.rel (0) target = $region21
  $region20: #{main_output_layer_forward.2} parent=0 // pred_region
    _
  $region21: #{main_output_layer_forward.2} parent=0 // pred_fallthru
    _
  // Predicated region
  $region22: #{main_output_layer_forward.2} parent=0 // pred_check
    _
  $region23: #{main_output_layer_forward.2} parent=0 // pred_check_branch
    %24 = sbr.rel (0) target = $region25
  $region24: #{main_output_layer_forward.2} parent=0 // pred_region
    _
  $region25: #{main_output_layer_forward.2} parent=0 // pred_fallthru
    _
  %v26 = vld [vmem:[%s0] sm:$0xff]
  %v27 = vld [vmem:[%s0 + $0x8] sm:$0xff]
  %v28 = vld [vmem:[%s0 + $0x10] sm:$0xff]
  %v29 = vld [vmem:[%s0 + $0x18] sm:$0xff]
  %v30 = vld [vmem:[%s0 + $0x20] sm:$0xff]
  %v31 = vld [vmem:[%s0 + $0x28] sm:$0xff]
  %v32 = vld [vmem:[%s0 + $0x30] sm:$0xff]
  %v33 = vld [vmem:[%s0 + $0x38] sm:$0xff]
  %v34 = vld [vmem:[%s0 + $0x40] sm:$0xff]
  %v35 = vld [vmem:[%s0 + $0x48] sm:$0xff]
  %v36 = vld [vmem:[%s0 + $0x50] sm:$0xff]
  %v37 = vld [vmem:[%s0 + $0x58] sm:$0xff]
  %v38 = vld [vmem:[%s0 + $0x60] sm:$0xff]
  %v39 = vld [vmem:[%s0 + $0x68] sm:$0xff]
  %v40 = vld [vmem:[%s0 + $0x70] sm:$0xff]
  %v41 = vld [vmem:[%s0 + $0x78] sm:$0xff]
  %v42 = vld [vmem:[%s0 + $0x80] sm:$0xff]
  %v43 = vld [vmem:[%s0 + $0x88] sm:$0xff]
  %v44 = vld [vmem:[%s0 + $0x90] sm:$0xff]
  %v45 = vld [vmem:[%s0 + $0x98] sm:$0xff]
  %v46 = vld [vmem:[%s0 + $0xa0] sm:$0xff]
  %v47 = vld [vmem:[%s0 + $0xa8] sm:$0xff]
  %v48 = vld [vmem:[%s0 + $0xb0] sm:$0xff]
  %v49 = vld [vmem:[%s0 + $0xb8] sm:$0xff]
  %v50 = vld [vmem:[%s0 + $0xc0] sm:$0xff]
  %v51 = vld [vmem:[%s0 + $0xc8] sm:$0xff]
  %v52 = vld [vmem:[%s0 + $0xd0] sm:$0xff]
  %v53 = vld [vmem:[%s0 + $0xd8] sm:$0xff]
  %v54 = vld [vmem:[%s0 + $0xe0] sm:$0xff]
  %v55 = vld [vmem:[%s0 + $0xe8] sm:$0xff]
  %v56 = vld [vmem:[%s0 + $0xf0] sm:$0xff]
  %v57 = vld [vmem:[%s0 + $0xf8] sm:$0xff]
  %v58 = vld [vmem:[%s2] sm:$0xf]
  %v59 = vld [vmem:[%s2 + $0x4] sm:$0xf]
  %v60 = vld [vmem:[%s2 + $0x8] sm:$0xf]
  %v61 = vld [vmem:[%s2 + $0xc] sm:$0xf]
  %v62 = vld [vmem:[%s2 + $0x10] sm:$0xf]
  %v63 = vld [vmem:[%s2 + $0x14] sm:$0xf]
  %v64 = vld [vmem:[%s2 + $0x18] sm:$0xf]
  %v65 = vld [vmem:[%s2 + $0x1c] sm:$0xf]
  %v66 = vld [vmem:[%s2 + $0x20] sm:$0xf]
  %v67 = vld [vmem:[%s2 + $0x24] sm:$0xf]
  %v68 = vld [vmem:[%s2 + $0x28] sm:$0xf]
  %v69 = vld [vmem:[%s2 + $0x2c] sm:$0xf]
  %v70 = vld [vmem:[%s2 + $0x30] sm:$0xf]
  %v71 = vld [vmem:[%s2 + $0x34] sm:$0xf]
  %v72 = vld [vmem:[%s2 + $0x38] sm:$0xf]
  %v73 = vld [vmem:[%s2 + $0x3c] sm:$0xf]
  %v74 = vld [vmem:[%s2 + $0x40] sm:$0xf]
  %v75 = vld [vmem:[%s2 + $0x44] sm:$0xf]
  %v76 = vld [vmem:[%s2 + $0x48] sm:$0xf]
  %v77 = vld [vmem:[%s2 + $0x4c] sm:$0xf]
  %v78 = vld [vmem:[%s2 + $0x50] sm:$0xf]
  %v79 = vld [vmem:[%s2 + $0x54] sm:$0xf]
  %v80 = vld [vmem:[%s2 + $0x58] sm:$0xf]
  %v81 = vld [vmem:[%s2 + $0x5c] sm:$0xf]
  %v82 = vld [vmem:[%s2 + $0x60] sm:$0xf]
  %v83 = vld [vmem:[%s2 + $0x64] sm:$0xf]
  %v84 = vld [vmem:[%s2 + $0x68] sm:$0xf]
  %v85 = vld [vmem:[%s2 + $0x6c] sm:$0xf]
  %v86 = vld [vmem:[%s2 + $0x70] sm:$0xf]
  %v87 = vld [vmem:[%s2 + $0x74] sm:$0xf]
  %v88 = vld [vmem:[%s2 + $0x78] sm:$0xf]
  %v89 = vld [vmem:[%s2 + $0x7c] sm:$0xf]
  %v90 = vld [vmem:[%s3] sm:$0x1]
  %v92 = vlaneseq
  %v93 = vshrl.u32 %v92, 7
  %v94 = vsub.s32 0, %v93
  %v95 = vrot.slane %v90, %v94
  %v129 = vunpack.c.l.b16 %v26
  %v130 = vunpack.c.h.b16 %v26
  %v131 = vunpack.c.l.b16 %v27
  %v132 = vunpack.c.h.b16 %v27
  %v133 = vunpack.c.l.b16 %v28
  %v134 = vunpack.c.h.b16 %v28
  %v135 = vunpack.c.l.b16 %v29
  %v136 = vunpack.c.h.b16 %v29
  %v137 = vunpack.c.l.b16 %v30
  %v138 = vunpack.c.h.b16 %v30
  %v139 = vunpack.c.l.b16 %v31
  %v140 = vunpack.c.h.b16 %v31
  %v141 = vunpack.c.l.b16 %v32
  %v142 = vunpack.c.h.b16 %v32
  %v143 = vunpack.c.l.b16 %v33
  %v144 = vunpack.c.h.b16 %v33
  %v145 = vunpack.c.l.b16 %v34
  %v146 = vunpack.c.h.b16 %v34
  %v147 = vunpack.c.l.b16 %v35
  %v148 = vunpack.c.h.b16 %v35
  %v149 = vunpack.c.l.b16 %v36
  %v150 = vunpack.c.h.b16 %v36
  %v151 = vunpack.c.l.b16 %v37
  %v152 = vunpack.c.h.b16 %v37
  %v153 = vunpack.c.l.b16 %v38
  %v154 = vunpack.c.h.b16 %v38
  %v155 = vunpack.c.l.b16 %v39
  %v156 = vunpack.c.h.b16 %v39
  %v157 = vunpack.c.l.b16 %v40
  %v158 = vunpack.c.h.b16 %v40
  %v159 = vunpack.c.l.b16 %v41
  %v160 = vunpack.c.h.b16 %v41
  %v161 = vunpack.c.l.b16 %v42
  %v162 = vunpack.c.h.b16 %v42
  %v163 = vunpack.c.l.b16 %v43
  %v164 = vunpack.c.h.b16 %v43
  %v165 = vunpack.c.l.b16 %v44
  %v166 = vunpack.c.h.b16 %v44
  %v167 = vunpack.c.l.b16 %v45
  %v168 = vunpack.c.h.b16 %v45
  %v169 = vunpack.c.l.b16 %v46
  %v170 = vunpack.c.h.b16 %v46
  %v171 = vunpack.c.l.b16 %v47
  %v172 = vunpack.c.h.b16 %v47
  %v173 = vunpack.c.l.b16 %v48
  %v174 = vunpack.c.h.b16 %v48
  %v175 = vunpack.c.l.b16 %v49
  %v176 = vunpack.c.h.b16 %v49
  %v177 = vunpack.c.l.b16 %v50
  %v178 = vunpack.c.h.b16 %v50
  %v179 = vunpack.c.l.b16 %v51
  %v180 = vunpack.c.h.b16 %v51
  %v181 = vunpack.c.l.b16 %v52
  %v182 = vunpack.c.h.b16 %v52
  %v183 = vunpack.c.l.b16 %v53
  %v184 = vunpack.c.h.b16 %v53
  %v185 = vunpack.c.l.b16 %v54
  %v186 = vunpack.c.h.b16 %v54
  %v187 = vunpack.c.l.b16 %v55
  %v188 = vunpack.c.h.b16 %v55
  %v189 = vunpack.c.l.b16 %v56
  %v190 = vunpack.c.h.b16 %v56
  %v191 = vunpack.c.l.b16 %v57
  %v192 = vunpack.c.h.b16 %v57
  %v193 = vpack.c.b16 %v131, %v129
  %v194 = vpack.c.b16 %v132, %v130
  %v195 = vpack.c.b16 %v135, %v133
  %v196 = vpack.c.b16 %v136, %v134
  %v197 = vpack.c.b16 %v139, %v137
  %v198 = vpack.c.b16 %v140, %v138
  %v199 = vpack.c.b16 %v143, %v141
  %v200 = vpack.c.b16 %v144, %v142
  %v201 = vpack.c.b16 %v147, %v145
  %v202 = vpack.c.b16 %v148, %v146
  %v203 = vpack.c.b16 %v151, %v149
  %v204 = vpack.c.b16 %v152, %v150
  %v205 = vpack.c.b16 %v155, %v153
  %v206 = vpack.c.b16 %v156, %v154
  %v207 = vpack.c.b16 %v159, %v157
  %v208 = vpack.c.b16 %v160, %v158
  %v209 = vpack.c.b16 %v163, %v161
  %v210 = vpack.c.b16 %v164, %v162
  %v211 = vpack.c.b16 %v167, %v165
  %v212 = vpack.c.b16 %v168, %v166
  %v213 = vpack.c.b16 %v171, %v169
  %v214 = vpack.c.b16 %v172, %v170
  %v215 = vpack.c.b16 %v175, %v173
  %v216 = vpack.c.b16 %v176, %v174
  %v217 = vpack.c.b16 %v179, %v177
  %v218 = vpack.c.b16 %v180, %v178
  %v219 = vpack.c.b16 %v183, %v181
  %v220 = vpack.c.b16 %v184, %v182
  %v221 = vpack.c.b16 %v187, %v185
  %v222 = vpack.c.b16 %v188, %v186
  %v223 = vpack.c.b16 %v191, %v189
  %v224 = vpack.c.b16 %v192, %v190
  %v289 = vunpack.c.l.b16 %v58
  %v290 = vunpack.c.l.b16 %v59
  %v291 = vunpack.c.l.b16 %v60
  %v292 = vunpack.c.l.b16 %v61
  %v293 = vunpack.c.l.b16 %v62
  %v294 = vunpack.c.l.b16 %v63
  %v295 = vunpack.c.l.b16 %v64
  %v296 = vunpack.c.l.b16 %v65
  %v297 = vunpack.c.l.b16 %v66
  %v298 = vunpack.c.l.b16 %v67
  %v299 = vunpack.c.l.b16 %v68
  %v300 = vunpack.c.l.b16 %v69
  %v301 = vunpack.c.l.b16 %v70
  %v302 = vunpack.c.l.b16 %v71
  %v303 = vunpack.c.l.b16 %v72
  %v304 = vunpack.c.l.b16 %v73
  %v305 = vunpack.c.l.b16 %v74
  %v306 = vunpack.c.l.b16 %v75
  %v307 = vunpack.c.l.b16 %v76
  %v308 = vunpack.c.l.b16 %v77
  %v309 = vunpack.c.l.b16 %v78
  %v310 = vunpack.c.l.b16 %v79
  %v311 = vunpack.c.l.b16 %v80
  %v312 = vunpack.c.l.b16 %v81
  %v313 = vunpack.c.l.b16 %v82
  %v314 = vunpack.c.l.b16 %v83
  %v315 = vunpack.c.l.b16 %v84
  %v316 = vunpack.c.l.b16 %v85
  %v317 = vunpack.c.l.b16 %v86
  %v318 = vunpack.c.l.b16 %v87
  %v319 = vunpack.c.l.b16 %v88
  %v320 = vunpack.c.l.b16 %v89
  %v321 = vpack.c.b16 %v290, %v289
  %v322 = vpack.c.b16 %v292, %v291
  %v323 = vpack.c.b16 %v294, %v293
  %v324 = vpack.c.b16 %v296, %v295
  %v325 = vpack.c.b16 %v298, %v297
  %v326 = vpack.c.b16 %v300, %v299
  %v327 = vpack.c.b16 %v302, %v301
  %v328 = vpack.c.b16 %v304, %v303
  %v329 = vpack.c.b16 %v306, %v305
  %v330 = vpack.c.b16 %v308, %v307
  %v331 = vpack.c.b16 %v310, %v309
  %v332 = vpack.c.b16 %v312, %v311
  %v333 = vpack.c.b16 %v314, %v313
  %v334 = vpack.c.b16 %v316, %v315
  %v335 = vpack.c.b16 %v318, %v317
  %v336 = vpack.c.b16 %v320, %v319
  %353 = vmatprep.subr.bf16.mxu0 0
  %354 = vmatpush1.bf16.msra.mxu0 %v328
  %355 = vmatprep.subr.bf16.mxu0 0
  %356 = vmatpush1.bf16.msra.mxu0 %v327
  %357 = vmatprep.subr.bf16.mxu0 0
  %358 = vmatpush1.bf16.msra.mxu0 %v326
  %359 = vmatprep.subr.bf16.mxu0 0
  %360 = vmatpush1.bf16.msra.mxu0 %v325
  %361 = vmatprep.subr.bf16.mxu0 0
  %362 = vmatpush1.bf16.msra.mxu0 %v324
  %363 = vmatprep.subr.bf16.mxu0 0
  %364 = vmatpush1.bf16.msra.mxu0 %v323
  %365 = vmatprep.subr.bf16.mxu0 0
  %366 = vmatpush1.bf16.msra.mxu0 %v322
  %367 = vmatprep.subr.bf16.mxu0 0
  %368 = vmatpush1.bf16.msra.mxu0 %v321
  %369 = vmatprep.subr.bf16.mxu0 0
  %370 = vmatpush2.bf16.msra.mxu0 %v336
  %371 = vmatprep.subr.bf16.mxu0 0
  %372 = vmatpush2.bf16.msra.mxu0 %v335
  %373 = vmatprep.subr.bf16.mxu0 0
  %374 = vmatpush2.bf16.msra.mxu0 %v334
  %375 = vmatprep.subr.bf16.mxu0 0
  %376 = vmatpush2.bf16.msra.mxu0 %v333
  %377 = vmatprep.subr.bf16.mxu0 0
  %378 = vmatpush2.bf16.msra.mxu0 %v332
  %379 = vmatprep.subr.bf16.mxu0 0
  %380 = vmatpush2.bf16.msra.mxu0 %v331
  %381 = vmatprep.subr.bf16.mxu0 0
  %382 = vmatpush2.bf16.msra.mxu0 %v330
  %383 = vmatprep.subr.bf16.mxu0 0
  %384 = vmatpush2.bf16.msra.mxu0 %v329
  %385 = vmatprep.mubr.bf16.mxu0 %v194
  %386 = vmatmul.mubr.bf16.gmra.mxu0 %v193
  %v387 = vpop.f32.mrf.mxu0
  %v388 = vadd.f32 %v95, %v387
  %v389 = vpop.f32.mrf.mxu0
  %v390 = vpop.f32.mrf.mxu0
  %v391 = vadd.f32 %v95, %v390
  %v392 = vpop.f32.mrf.mxu0
  %393 = vmatprep.mubr.bf16.mxu0 %v196
  %394 = vmatmul.mubr.bf16.gmra.mxu0 %v195
  %v395 = vpop.f32.mrf.mxu0
  %v396 = vadd.f32 %v95, %v395
  %v397 = vpop.f32.mrf.mxu0
  %v398 = vpop.f32.mrf.mxu0
  %v399 = vadd.f32 %v95, %v398
  %v400 = vpop.f32.mrf.mxu0
  %401 = vmatprep.mubr.bf16.mxu0 %v198
  %402 = vmatmul.mubr.bf16.gmra.mxu0 %v197
  %v403 = vpop.f32.mrf.mxu0
  %v404 = vadd.f32 %v95, %v403
  %v405 = vpop.f32.mrf.mxu0
  %v406 = vpop.f32.mrf.mxu0
  %v407 = vadd.f32 %v95, %v406
  %v408 = vpop.f32.mrf.mxu0
  %409 = vmatprep.mubr.bf16.mxu0 %v200
  %410 = vmatmul.mubr.bf16.gmra.mxu0 %v199
  %v411 = vpop.f32.mrf.mxu0
  %v412 = vadd.f32 %v95, %v411
  %v413 = vpop.f32.mrf.mxu0
  %v414 = vpop.f32.mrf.mxu0
  %v415 = vadd.f32 %v95, %v414
  %v416 = vpop.f32.mrf.mxu0
  %417 = vmatprep.mubr.bf16.mxu0 %v202
  %418 = vmatmul.mubr.bf16.gmra.mxu0 %v201
  %v419 = vpop.f32.mrf.mxu0
  %v420 = vadd.f32 %v95, %v419
  %v421 = vpop.f32.mrf.mxu0
  %v422 = vpop.f32.mrf.mxu0
  %v423 = vadd.f32 %v95, %v422
  %v424 = vpop.f32.mrf.mxu0
  %425 = vmatprep.mubr.bf16.mxu0 %v204
  %426 = vmatmul.mubr.bf16.gmra.mxu0 %v203
  %v427 = vpop.f32.mrf.mxu0
  %v428 = vadd.f32 %v95, %v427
  %v429 = vpop.f32.mrf.mxu0
  %v430 = vpop.f32.mrf.mxu0
  %v431 = vadd.f32 %v95, %v430
  %v432 = vpop.f32.mrf.mxu0
  %433 = vmatprep.mubr.bf16.mxu0 %v206
  %434 = vmatmul.mubr.bf16.gmra.mxu0 %v205
  %v435 = vpop.f32.mrf.mxu0
  %v436 = vadd.f32 %v95, %v435
  %v437 = vpop.f32.mrf.mxu0
  %v438 = vpop.f32.mrf.mxu0
  %v439 = vadd.f32 %v95, %v438
  %v440 = vpop.f32.mrf.mxu0
  %441 = vmatprep.mubr.bf16.mxu0 %v208
  %442 = vmatmul.mubr.bf16.gmra.mxu0 %v207
  %v443 = vpop.f32.mrf.mxu0
  %v444 = vadd.f32 %v95, %v443
  %v445 = vpop.f32.mrf.mxu0
  %v446 = vpop.f32.mrf.mxu0
  %v447 = vadd.f32 %v95, %v446
  %v448 = vpop.f32.mrf.mxu0
  %449 = vmatprep.mubr.bf16.mxu0 %v210
  %450 = vmatmul.mubr.bf16.gmra.mxu0 %v209
  %v451 = vpop.f32.mrf.mxu0
  %v452 = vadd.f32 %v95, %v451
  %v453 = vpop.f32.mrf.mxu0
  %v454 = vpop.f32.mrf.mxu0
  %v455 = vadd.f32 %v95, %v454
  %v456 = vpop.f32.mrf.mxu0
  %457 = vmatprep.mubr.bf16.mxu0 %v212
  %458 = vmatmul.mubr.bf16.gmra.mxu0 %v211
  %v459 = vpop.f32.mrf.mxu0
  %v460 = vadd.f32 %v95, %v459
  %v461 = vpop.f32.mrf.mxu0
  %v462 = vpop.f32.mrf.mxu0
  %v463 = vadd.f32 %v95, %v462
  %v464 = vpop.f32.mrf.mxu0
  %465 = vmatprep.mubr.bf16.mxu0 %v214
  %466 = vmatmul.mubr.bf16.gmra.mxu0 %v213
  %v467 = vpop.f32.mrf.mxu0
  %v468 = vadd.f32 %v95, %v467
  %v469 = vpop.f32.mrf.mxu0
  %v470 = vpop.f32.mrf.mxu0
  %v471 = vadd.f32 %v95, %v470
  %v472 = vpop.f32.mrf.mxu0
  %473 = vmatprep.mubr.bf16.mxu0 %v216
  %474 = vmatmul.mubr.bf16.gmra.mxu0 %v215
  %v475 = vpop.f32.mrf.mxu0
  %v476 = vadd.f32 %v95, %v475
  %v477 = vpop.f32.mrf.mxu0
  %v478 = vpop.f32.mrf.mxu0
  %v479 = vadd.f32 %v95, %v478
  %v480 = vpop.f32.mrf.mxu0
  %481 = vmatprep.mubr.bf16.mxu0 %v218
  %482 = vmatmul.mubr.bf16.gmra.mxu0 %v217
  %v483 = vpop.f32.mrf.mxu0
  %v484 = vadd.f32 %v95, %v483
  %v485 = vpop.f32.mrf.mxu0
  %v486 = vpop.f32.mrf.mxu0
  %v487 = vadd.f32 %v95, %v486
  %v488 = vpop.f32.mrf.mxu0
  %489 = vmatprep.mubr.bf16.mxu0 %v220
  %490 = vmatmul.mubr.bf16.gmra.mxu0 %v219
  %v491 = vpop.f32.mrf.mxu0
  %v492 = vadd.f32 %v95, %v491
  %v493 = vpop.f32.mrf.mxu0
  %v494 = vpop.f32.mrf.mxu0
  %v495 = vadd.f32 %v95, %v494
  %v496 = vpop.f32.mrf.mxu0
  %497 = vmatprep.mubr.bf16.mxu0 %v222
  %498 = vmatmul.mubr.bf16.gmra.mxu0 %v221
  %v499 = vpop.f32.mrf.mxu0
  %v500 = vadd.f32 %v95, %v499
  %v501 = vpop.f32.mrf.mxu0
  %v502 = vpop.f32.mrf.mxu0
  %v503 = vadd.f32 %v95, %v502
  %v504 = vpop.f32.mrf.mxu0
  %505 = vmatprep.mubr.bf16.mxu0 %v224
  %506 = vmatmul.mubr.bf16.gmra.mxu0 %v223
  %v507 = vpop.f32.mrf.mxu0
  %v508 = vadd.f32 %v95, %v507
  %v509 = vpop.f32.mrf.mxu0
  %v510 = vpop.f32.mrf.mxu0
  %v511 = vadd.f32 %v95, %v510
  %v512 = vpop.f32.mrf.mxu0
  %513 = vdwg.mxu0
  %v514 = vmax.f32 %v388, 0.0
  %v515 = vmax.f32 %v391, 0.0
  %v516 = vmax.f32 %v396, 0.0
  %v517 = vmax.f32 %v399, 0.0
  %v518 = vmax.f32 %v404, 0.0
  %v519 = vmax.f32 %v407, 0.0
  %v520 = vmax.f32 %v412, 0.0
  %v521 = vmax.f32 %v415, 0.0
  %v522 = vmax.f32 %v420, 0.0
  %v523 = vmax.f32 %v423, 0.0
  %v524 = vmax.f32 %v428, 0.0
  %v525 = vmax.f32 %v431, 0.0
  %v526 = vmax.f32 %v436, 0.0
  %v527 = vmax.f32 %v439, 0.0
  %v528 = vmax.f32 %v444, 0.0
  %v529 = vmax.f32 %v447, 0.0
  %v530 = vmax.f32 %v452, 0.0
  %v531 = vmax.f32 %v455, 0.0
  %v532 = vmax.f32 %v460, 0.0
  %v533 = vmax.f32 %v463, 0.0
  %v534 = vmax.f32 %v468, 0.0
  %v535 = vmax.f32 %v471, 0.0
  %v536 = vmax.f32 %v476, 0.0
  %v537 = vmax.f32 %v479, 0.0
  %v538 = vmax.f32 %v484, 0.0
  %v539 = vmax.f32 %v487, 0.0
  %v540 = vmax.f32 %v492, 0.0
  %v541 = vmax.f32 %v495, 0.0
  %v542 = vmax.f32 %v500, 0.0
  %v543 = vmax.f32 %v503, 0.0
  %v544 = vmax.f32 %v508, 0.0
  %v545 = vmax.f32 %v511, 0.0
  %v546 = vpack.c.bf16 %v515, %v514
  %v547 = vpack.c.bf16 %v517, %v516
  %v548 = vpack.c.bf16 %v519, %v518
  %v549 = vpack.c.bf16 %v521, %v520
  %v550 = vpack.c.bf16 %v523, %v522
  %v551 = vpack.c.bf16 %v525, %v524
  %v552 = vpack.c.bf16 %v527, %v526
  %v553 = vpack.c.bf16 %v529, %v528
  %v554 = vpack.c.bf16 %v531, %v530
  %v555 = vpack.c.bf16 %v533, %v532
  %v556 = vpack.c.bf16 %v535, %v534
  %v557 = vpack.c.bf16 %v537, %v536
  %v558 = vpack.c.bf16 %v539, %v538
  %v559 = vpack.c.bf16 %v541, %v540
  %v560 = vpack.c.bf16 %v543, %v542
  %v561 = vpack.c.bf16 %v545, %v544
  %v578 = vunpack.c.l.b16 %v546
  %v579 = vunpack.c.h.b16 %v546
  %v580 = vunpack.c.l.b16 %v547
  %v581 = vunpack.c.h.b16 %v547
  %v582 = vunpack.c.l.b16 %v548
  %v583 = vunpack.c.h.b16 %v548
  %v584 = vunpack.c.l.b16 %v549
  %v585 = vunpack.c.h.b16 %v549
  %v586 = vunpack.c.l.b16 %v550
  %v587 = vunpack.c.h.b16 %v550
  %v588 = vunpack.c.l.b16 %v551
  %v589 = vunpack.c.h.b16 %v551
  %v590 = vunpack.c.l.b16 %v552
  %v591 = vunpack.c.h.b16 %v552
  %v592 = vunpack.c.l.b16 %v553
  %v593 = vunpack.c.h.b16 %v553
  %v594 = vunpack.c.l.b16 %v554
  %v595 = vunpack.c.h.b16 %v554
  %v596 = vunpack.c.l.b16 %v555
  %v597 = vunpack.c.h.b16 %v555
  %v598 = vunpack.c.l.b16 %v556
  %v599 = vunpack.c.h.b16 %v556
  %v600 = vunpack.c.l.b16 %v557
  %v601 = vunpack.c.h.b16 %v557
  %v602 = vunpack.c.l.b16 %v558
  %v603 = vunpack.c.h.b16 %v558
  %v604 = vunpack.c.l.b16 %v559
  %v605 = vunpack.c.h.b16 %v559
  %v606 = vunpack.c.l.b16 %v560
  %v607 = vunpack.c.h.b16 %v560
  %v608 = vunpack.c.l.b16 %v561
  %v609 = vunpack.c.h.b16 %v561
  %v610 = vpack.c.b16 %v578, %v578
  %v611 = vpack.c.b16 %v579, %v579
  %v612 = vpack.c.b16 %v580, %v580
  %v613 = vpack.c.b16 %v581, %v581
  %v614 = vpack.c.b16 %v582, %v582
  %v615 = vpack.c.b16 %v583, %v583
  %v616 = vpack.c.b16 %v584, %v584
  %v617 = vpack.c.b16 %v585, %v585
  %v618 = vpack.c.b16 %v586, %v586
  %v619 = vpack.c.b16 %v587, %v587
  %v620 = vpack.c.b16 %v588, %v588
  %v621 = vpack.c.b16 %v589, %v589
  %v622 = vpack.c.b16 %v590, %v590
  %v623 = vpack.c.b16 %v591, %v591
  %v624 = vpack.c.b16 %v592, %v592
  %v625 = vpack.c.b16 %v593, %v593
  %v626 = vpack.c.b16 %v594, %v594
  %v627 = vpack.c.b16 %v595, %v595
  %v628 = vpack.c.b16 %v596, %v596
  %v629 = vpack.c.b16 %v597, %v597
  %v630 = vpack.c.b16 %v598, %v598
  %v631 = vpack.c.b16 %v599, %v599
  %v632 = vpack.c.b16 %v600, %v600
  %v633 = vpack.c.b16 %v601, %v601
  %v634 = vpack.c.b16 %v602, %v602
  %v635 = vpack.c.b16 %v603, %v603
  %v636 = vpack.c.b16 %v604, %v604
  %v637 = vpack.c.b16 %v605, %v605
  %v638 = vpack.c.b16 %v606, %v606
  %v639 = vpack.c.b16 %v607, %v607
  %v640 = vpack.c.b16 %v608, %v608
  %v641 = vpack.c.b16 %v609, %v609
  %674 = vst [vmem:[#allocation2] sm:$0xf] %v610
  %675 = vst [vmem:[#allocation2 + $0x4] sm:$0xf] %v611
  %676 = vst [vmem:[#allocation2 + $0x8] sm:$0xf] %v612
  %677 = vst [vmem:[#allocation2 + $0xc] sm:$0xf] %v613
  %678 = vst [vmem:[#allocation2 + $0x10] sm:$0xf] %v614
  %679 = vst [vmem:[#allocation2 + $0x14] sm:$0xf] %v615
  %680 = vst [vmem:[#allocation2 + $0x18] sm:$0xf] %v616
  %681 = vst [vmem:[#allocation2 + $0x1c] sm:$0xf] %v617
  %682 = vst [vmem:[#allocation2 + $0x20] sm:$0xf] %v618
  %683 = vst [vmem:[#allocation2 + $0x24] sm:$0xf] %v619
  %684 = vst [vmem:[#allocation2 + $0x28] sm:$0xf] %v620
  %685 = vst [vmem:[#allocation2 + $0x2c] sm:$0xf] %v621
  %686 = vst [vmem:[#allocation2 + $0x30] sm:$0xf] %v622
  %687 = vst [vmem:[#allocation2 + $0x34] sm:$0xf] %v623
  %688 = vst [vmem:[#allocation2 + $0x38] sm:$0xf] %v624
  %689 = vst [vmem:[#allocation2 + $0x3c] sm:$0xf] %v625
  %690 = vst [vmem:[#allocation2 + $0x40] sm:$0xf] %v626
  %691 = vst [vmem:[#allocation2 + $0x44] sm:$0xf] %v627
  %692 = vst [vmem:[#allocation2 + $0x48] sm:$0xf] %v628
  %693 = vst [vmem:[#allocation2 + $0x4c] sm:$0xf] %v629
  %694 = vst [vmem:[#allocation2 + $0x50] sm:$0xf] %v630
  %695 = vst [vmem:[#allocation2 + $0x54] sm:$0xf] %v631
  %696 = vst [vmem:[#allocation2 + $0x58] sm:$0xf] %v632
  %697 = vst [vmem:[#allocation2 + $0x5c] sm:$0xf] %v633
  %698 = vst [vmem:[#allocation2 + $0x60] sm:$0xf] %v634
  %699 = vst [vmem:[#allocation2 + $0x64] sm:$0xf] %v635
  %700 = vst [vmem:[#allocation2 + $0x68] sm:$0xf] %v636
  %701 = vst [vmem:[#allocation2 + $0x6c] sm:$0xf] %v637
  %702 = vst [vmem:[#allocation2 + $0x70] sm:$0xf] %v638
  %703 = vst [vmem:[#allocation2 + $0x74] sm:$0xf] %v639
  %704 = vst [vmem:[#allocation2 + $0x78] sm:$0xf] %v640
  %705 = vst [vmem:[#allocation2 + $0x7c] sm:$0xf] %v641
  %v706 = vld [vmem:[%s1] sm:$0xff]
  %v707 = vld [vmem:[%s1 + $0x8] sm:$0xff]
  %v708 = vld [vmem:[%s1 + $0x10] sm:$0xff]
  %v709 = vld [vmem:[%s1 + $0x18] sm:$0xff]
  %v710 = vld [vmem:[%s1 + $0x20] sm:$0xff]
  %v711 = vld [vmem:[%s1 + $0x28] sm:$0xff]
  %v712 = vld [vmem:[%s1 + $0x30] sm:$0xff]
  %v713 = vld [vmem:[%s1 + $0x38] sm:$0xff]
  %v714 = vld [vmem:[%s1 + $0x40] sm:$0xff]
  %v715 = vld [vmem:[%s1 + $0x48] sm:$0xff]
  %v716 = vld [vmem:[%s1 + $0x50] sm:$0xff]
  %v717 = vld [vmem:[%s1 + $0x58] sm:$0xff]
  %v718 = vld [vmem:[%s1 + $0x60] sm:$0xff]
  %v719 = vld [vmem:[%s1 + $0x68] sm:$0xff]
  %v720 = vld [vmem:[%s1 + $0x70] sm:$0xff]
  %v721 = vld [vmem:[%s1 + $0x78] sm:$0xff]
  %v722 = vld [vmem:[%s1 + $0x80] sm:$0xff]
  %v723 = vld [vmem:[%s1 + $0x88] sm:$0xff]
  %v724 = vld [vmem:[%s1 + $0x90] sm:$0xff]
  %v725 = vld [vmem:[%s1 + $0x98] sm:$0xff]
  %v726 = vld [vmem:[%s1 + $0xa0] sm:$0xff]
  %v727 = vld [vmem:[%s1 + $0xa8] sm:$0xff]
  %v728 = vld [vmem:[%s1 + $0xb0] sm:$0xff]
  %v729 = vld [vmem:[%s1 + $0xb8] sm:$0xff]
  %v730 = vld [vmem:[%s1 + $0xc0] sm:$0xff]
  %v731 = vld [vmem:[%s1 + $0xc8] sm:$0xff]
  %v732 = vld [vmem:[%s1 + $0xd0] sm:$0xff]
  %v733 = vld [vmem:[%s1 + $0xd8] sm:$0xff]
  %v734 = vld [vmem:[%s1 + $0xe0] sm:$0xff]
  %v735 = vld [vmem:[%s1 + $0xe8] sm:$0xff]
  %v736 = vld [vmem:[%s1 + $0xf0] sm:$0xff]
  %v737 = vld [vmem:[%s1 + $0xf8] sm:$0xff]
  %v738 = vld [vmem:[%s1 + $0x100] sm:$0xff]
  %v739 = vld [vmem:[%s1 + $0x108] sm:$0xff]
  %v740 = vld [vmem:[%s1 + $0x110] sm:$0xff]
  %v741 = vld [vmem:[%s1 + $0x118] sm:$0xff]
  %v742 = vld [vmem:[%s2] sm:$0xf]
  %v743 = vld [vmem:[%s2 + $0x4] sm:$0xf]
  %v744 = vld [vmem:[%s2 + $0x8] sm:$0xf]
  %v745 = vld [vmem:[%s2 + $0xc] sm:$0xf]
  %v746 = vld [vmem:[%s2 + $0x10] sm:$0xf]
  %v747 = vld [vmem:[%s2 + $0x14] sm:$0xf]
  %v748 = vld [vmem:[%s2 + $0x18] sm:$0xf]
  %v749 = vld [vmem:[%s2 + $0x1c] sm:$0xf]
  %v750 = vld [vmem:[%s2 + $0x20] sm:$0xf]
  %v751 = vld [vmem:[%s2 + $0x24] sm:$0xf]
  %v752 = vld [vmem:[%s2 + $0x28] sm:$0xf]
  %v753 = vld [vmem:[%s2 + $0x2c] sm:$0xf]
  %v754 = vld [vmem:[%s2 + $0x30] sm:$0xf]
  %v755 = vld [vmem:[%s2 + $0x34] sm:$0xf]
  %v756 = vld [vmem:[%s2 + $0x38] sm:$0xf]
  %v757 = vld [vmem:[%s2 + $0x3c] sm:$0xf]
  %v758 = vld [vmem:[%s2 + $0x40] sm:$0xf]
  %v759 = vld [vmem:[%s2 + $0x44] sm:$0xf]
  %v760 = vld [vmem:[%s2 + $0x48] sm:$0xf]
  %v761 = vld [vmem:[%s2 + $0x4c] sm:$0xf]
  %v762 = vld [vmem:[%s2 + $0x50] sm:$0xf]
  %v763 = vld [vmem:[%s2 + $0x54] sm:$0xf]
  %v764 = vld [vmem:[%s2 + $0x58] sm:$0xf]
  %v765 = vld [vmem:[%s2 + $0x5c] sm:$0xf]
  %v766 = vld [vmem:[%s2 + $0x60] sm:$0xf]
  %v767 = vld [vmem:[%s2 + $0x64] sm:$0xf]
  %v768 = vld [vmem:[%s2 + $0x68] sm:$0xf]
  %v769 = vld [vmem:[%s2 + $0x6c] sm:$0xf]
  %v770 = vld [vmem:[%s2 + $0x70] sm:$0xf]
  %v771 = vld [vmem:[%s2 + $0x74] sm:$0xf]
  %v772 = vld [vmem:[%s2 + $0x78] sm:$0xf]
  %v773 = vld [vmem:[%s2 + $0x7c] sm:$0xf]
  %v774 = vld [vmem:[%s3] sm:$0x1]
  %v776 = vlaneseq
  %v777 = vshrl.u32 %v776, 7
  %v778 = vsub.s32 0, %v777
  %v779 = vrot.slane %v774, %v778
  %v817 = vunpack.c.l.b16 %v706
  %v818 = vunpack.c.h.b16 %v706
  %v819 = vunpack.c.l.b16 %v707
  %v820 = vunpack.c.h.b16 %v707
  %v821 = vunpack.c.l.b16 %v708
  %v822 = vunpack.c.h.b16 %v708
  %v823 = vunpack.c.l.b16 %v709
  %v824 = vunpack.c.h.b16 %v709
  %v825 = vunpack.c.l.b16 %v710
  %v826 = vunpack.c.h.b16 %v710
  %v827 = vunpack.c.l.b16 %v711
  %v828 = vunpack.c.h.b16 %v711
  %v829 = vunpack.c.l.b16 %v712
  %v830 = vunpack.c.h.b16 %v712
  %v831 = vunpack.c.l.b16 %v713
  %v832 = vunpack.c.h.b16 %v713
  %v833 = vunpack.c.l.b16 %v714
  %v834 = vunpack.c.h.b16 %v714
  %v835 = vunpack.c.l.b16 %v715
  %v836 = vunpack.c.h.b16 %v715
  %v837 = vunpack.c.l.b16 %v716
  %v838 = vunpack.c.h.b16 %v716
  %v839 = vunpack.c.l.b16 %v717
  %v840 = vunpack.c.h.b16 %v717
  %v841 = vunpack.c.l.b16 %v718
  %v842 = vunpack.c.h.b16 %v718
  %v843 = vunpack.c.l.b16 %v719
  %v844 = vunpack.c.h.b16 %v719
  %v845 = vunpack.c.l.b16 %v720
  %v846 = vunpack.c.h.b16 %v720
  %v847 = vunpack.c.l.b16 %v721
  %v848 = vunpack.c.h.b16 %v721
  %v849 = vunpack.c.l.b16 %v722
  %v850 = vunpack.c.h.b16 %v722
  %v851 = vunpack.c.l.b16 %v723
  %v852 = vunpack.c.h.b16 %v723
  %v853 = vunpack.c.l.b16 %v724
  %v854 = vunpack.c.h.b16 %v724
  %v855 = vunpack.c.l.b16 %v725
  %v856 = vunpack.c.h.b16 %v725
  %v857 = vunpack.c.l.b16 %v726
  %v858 = vunpack.c.h.b16 %v726
  %v859 = vunpack.c.l.b16 %v727
  %v860 = vunpack.c.h.b16 %v727
  %v861 = vunpack.c.l.b16 %v728
  %v862 = vunpack.c.h.b16 %v728
  %v863 = vunpack.c.l.b16 %v729
  %v864 = vunpack.c.h.b16 %v729
  %v865 = vunpack.c.l.b16 %v730
  %v866 = vunpack.c.h.b16 %v730
  %v867 = vunpack.c.l.b16 %v731
  %v868 = vunpack.c.h.b16 %v731
  %v869 = vunpack.c.l.b16 %v732
  %v870 = vunpack.c.h.b16 %v732
  %v871 = vunpack.c.l.b16 %v733
  %v872 = vunpack.c.h.b16 %v733
  %v873 = vunpack.c.l.b16 %v734
  %v874 = vunpack.c.h.b16 %v734
  %v875 = vunpack.c.l.b16 %v735
  %v876 = vunpack.c.h.b16 %v735
  %v877 = vunpack.c.l.b16 %v736
  %v878 = vunpack.c.h.b16 %v736
  %v879 = vunpack.c.l.b16 %v737
  %v880 = vunpack.c.h.b16 %v737
  %v881 = vunpack.c.l.b16 %v738
  %v882 = vunpack.c.h.b16 %v738
  %v883 = vunpack.c.l.b16 %v739
  %v884 = vunpack.c.h.b16 %v739
  %v885 = vunpack.c.l.b16 %v740
  %v886 = vunpack.c.h.b16 %v740
  %v887 = vunpack.c.l.b16 %v741
  %v888 = vunpack.c.h.b16 %v741
  %v889 = vpack.c.b16 %v819, %v817
  %v890 = vpack.c.b16 %v820, %v818
  %v891 = vpack.c.b16 %v823, %v821
  %v892 = vpack.c.b16 %v824, %v822
  %v893 = vpack.c.b16 %v827, %v825
  %v894 = vpack.c.b16 %v828, %v826
  %v895 = vpack.c.b16 %v831, %v829
  %v896 = vpack.c.b16 %v832, %v830
  %v897 = vpack.c.b16 %v835, %v833
  %v898 = vpack.c.b16 %v836, %v834
  %v899 = vpack.c.b16 %v839, %v837
  %v900 = vpack.c.b16 %v840, %v838
  %v901 = vpack.c.b16 %v843, %v841
  %v902 = vpack.c.b16 %v844, %v842
  %v903 = vpack.c.b16 %v847, %v845
  %v904 = vpack.c.b16 %v848, %v846
  %v905 = vpack.c.b16 %v851, %v849
  %v906 = vpack.c.b16 %v852, %v850
  %v907 = vpack.c.b16 %v855, %v853
  %v908 = vpack.c.b16 %v856, %v854
  %v909 = vpack.c.b16 %v859, %v857
  %v910 = vpack.c.b16 %v860, %v858
  %v911 = vpack.c.b16 %v863, %v861
  %v912 = vpack.c.b16 %v864, %v862
  %v913 = vpack.c.b16 %v867, %v865
  %v914 = vpack.c.b16 %v868, %v866
  %v915 = vpack.c.b16 %v871, %v869
  %v916 = vpack.c.b16 %v872, %v870
  %v917 = vpack.c.b16 %v875, %v873
  %v918 = vpack.c.b16 %v876, %v874
  %v919 = vpack.c.b16 %v879, %v877
  %v920 = vpack.c.b16 %v880, %v878
  %v921 = vpack.c.b16 %v883, %v881
  %v922 = vpack.c.b16 %v884, %v882
  %v923 = vpack.c.b16 %v887, %v885
  %v924 = vpack.c.b16 %v888, %v886
  %v993 = vunpack.c.l.b16 %v742
  %v994 = vunpack.c.l.b16 %v743
  %v995 = vunpack.c.l.b16 %v744
  %v996 = vunpack.c.l.b16 %v745
  %v997 = vunpack.c.l.b16 %v746
  %v998 = vunpack.c.l.b16 %v747
  %v999 = vunpack.c.l.b16 %v748
  %v1000 = vunpack.c.l.b16 %v749
  %v1001 = vunpack.c.l.b16 %v750
  %v1002 = vunpack.c.l.b16 %v751
  %v1003 = vunpack.c.l.b16 %v752
  %v1004 = vunpack.c.l.b16 %v753
  %v1005 = vunpack.c.l.b16 %v754
  %v1006 = vunpack.c.l.b16 %v755
  %v1007 = vunpack.c.l.b16 %v756
  %v1008 = vunpack.c.l.b16 %v757
  %v1009 = vunpack.c.l.b16 %v758
  %v1010 = vunpack.c.l.b16 %v759
  %v1011 = vunpack.c.l.b16 %v760
  %v1012 = vunpack.c.l.b16 %v761
  %v1013 = vunpack.c.l.b16 %v762
  %v1014 = vunpack.c.l.b16 %v763
  %v1015 = vunpack.c.l.b16 %v764
  %v1016 = vunpack.c.l.b16 %v765
  %v1017 = vunpack.c.l.b16 %v766
  %v1018 = vunpack.c.l.b16 %v767
  %v1019 = vunpack.c.l.b16 %v768
  %v1020 = vunpack.c.l.b16 %v769
  %v1021 = vunpack.c.l.b16 %v770
  %v1022 = vunpack.c.l.b16 %v771
  %v1023 = vunpack.c.l.b16 %v772
  %v1024 = vunpack.c.l.b16 %v773
  %v1025 = vpack.c.b16 %v994, %v993
  %v1026 = vpack.c.b16 %v996, %v995
  %v1027 = vpack.c.b16 %v998, %v997
  %v1028 = vpack.c.b16 %v1000, %v999
  %v1029 = vpack.c.b16 %v1002, %v1001
  %v1030 = vpack.c.b16 %v1004, %v1003
  %v1031 = vpack.c.b16 %v1006, %v1005
  %v1032 = vpack.c.b16 %v1008, %v1007
  %v1033 = vpack.c.b16 %v1010, %v1009
  %v1034 = vpack.c.b16 %v1012, %v1011
  %v1035 = vpack.c.b16 %v1014, %v1013
  %v1036 = vpack.c.b16 %v1016, %v1015
  %v1037 = vpack.c.b16 %v1018, %v1017
  %v1038 = vpack.c.b16 %v1020, %v1019
  %v1039 = vpack.c.b16 %v1022, %v1021
  %v1040 = vpack.c.b16 %v1024, %v1023
  %1057 = vmatprep.subr.bf16.mxu0 0
  %1058 = vmatpush1.bf16.msra.mxu0 %v1032
  %1059 = vmatprep.subr.bf16.mxu0 0
  %1060 = vmatpush1.bf16.msra.mxu0 %v1031
  %1061 = vmatprep.subr.bf16.mxu0 0
  %1062 = vmatpush1.bf16.msra.mxu0 %v1030
  %1063 = vmatprep.subr.bf16.mxu0 0
  %1064 = vmatpush1.bf16.msra.mxu0 %v1029
  %1065 = vmatprep.subr.bf16.mxu0 0
  %1066 = vmatpush1.bf16.msra.mxu0 %v1028
  %1067 = vmatprep.subr.bf16.mxu0 0
  %1068 = vmatpush1.bf16.msra.mxu0 %v1027
  %1069 = vmatprep.subr.bf16.mxu0 0
  %1070 = vmatpush1.bf16.msra.mxu0 %v1026
  %1071 = vmatprep.subr.bf16.mxu0 0
  %1072 = vmatpush1.bf16.msra.mxu0 %v1025
  %1073 = vmatprep.subr.bf16.mxu0 0
  %1074 = vmatpush2.bf16.msra.mxu0 %v1040
  %1075 = vmatprep.subr.bf16.mxu0 0
  %1076 = vmatpush2.bf16.msra.mxu0 %v1039
  %1077 = vmatprep.subr.bf16.mxu0 0
  %1078 = vmatpush2.bf16.msra.mxu0 %v1038
  %1079 = vmatprep.subr.bf16.mxu0 0
  %1080 = vmatpush2.bf16.msra.mxu0 %v1037
  %1081 = vmatprep.subr.bf16.mxu0 0
  %1082 = vmatpush2.bf16.msra.mxu0 %v1036
  %1083 = vmatprep.subr.bf16.mxu0 0
  %1084 = vmatpush2.bf16.msra.mxu0 %v1035
  %1085 = vmatprep.subr.bf16.mxu0 0
  %1086 = vmatpush2.bf16.msra.mxu0 %v1034
  %1087 = vmatprep.subr.bf16.mxu0 0
  %1088 = vmatpush2.bf16.msra.mxu0 %v1033
  %1089 = vmatprep.mubr.bf16.mxu0 %v890
  %1090 = vmatmul.mubr.bf16.gmra.mxu0 %v889
  %v1091 = vpop.f32.mrf.mxu0
  %v1092 = vadd.f32 %v779, %v1091
  %v1093 = vpop.f32.mrf.mxu0
  %v1094 = vpop.f32.mrf.mxu0
  %v1095 = vadd.f32 %v779, %v1094
  %v1096 = vpop.f32.mrf.mxu0
  %1097 = vmatprep.mubr.bf16.mxu0 %v892
  %1098 = vmatmul.mubr.bf16.gmra.mxu0 %v891
  %v1099 = vpop.f32.mrf.mxu0
  %v1100 = vadd.f32 %v779, %v1099
  %v1101 = vpop.f32.mrf.mxu0
  %v1102 = vpop.f32.mrf.mxu0
  %v1103 = vadd.f32 %v779, %v1102
  %v1104 = vpop.f32.mrf.mxu0
  %1105 = vmatprep.mubr.bf16.mxu0 %v894
  %1106 = vmatmul.mubr.bf16.gmra.mxu0 %v893
  %v1107 = vpop.f32.mrf.mxu0
  %v1108 = vadd.f32 %v779, %v1107
  %v1109 = vpop.f32.mrf.mxu0
  %v1110 = vpop.f32.mrf.mxu0
  %v1111 = vadd.f32 %v779, %v1110
  %v1112 = vpop.f32.mrf.mxu0
  %1113 = vmatprep.mubr.bf16.mxu0 %v896
  %1114 = vmatmul.mubr.bf16.gmra.mxu0 %v895
  %v1115 = vpop.f32.mrf.mxu0
  %v1116 = vadd.f32 %v779, %v1115
  %v1117 = vpop.f32.mrf.mxu0
  %v1118 = vpop.f32.mrf.mxu0
  %v1119 = vadd.f32 %v779, %v1118
  %v1120 = vpop.f32.mrf.mxu0
  %1121 = vmatprep.mubr.bf16.mxu0 %v898
  %1122 = vmatmul.mubr.bf16.gmra.mxu0 %v897
  %v1123 = vpop.f32.mrf.mxu0
  %v1124 = vadd.f32 %v779, %v1123
  %v1125 = vpop.f32.mrf.mxu0
  %v1126 = vpop.f32.mrf.mxu0
  %v1127 = vadd.f32 %v779, %v1126
  %v1128 = vpop.f32.mrf.mxu0
  %1129 = vmatprep.mubr.bf16.mxu0 %v900
  %1130 = vmatmul.mubr.bf16.gmra.mxu0 %v899
  %v1131 = vpop.f32.mrf.mxu0
  %v1132 = vadd.f32 %v779, %v1131
  %v1133 = vpop.f32.mrf.mxu0
  %v1134 = vpop.f32.mrf.mxu0
  %v1135 = vadd.f32 %v779, %v1134
  %v1136 = vpop.f32.mrf.mxu0
  %1137 = vmatprep.mubr.bf16.mxu0 %v902
  %1138 = vmatmul.mubr.bf16.gmra.mxu0 %v901
  %v1139 = vpop.f32.mrf.mxu0
  %v1140 = vadd.f32 %v779, %v1139
  %v1141 = vpop.f32.mrf.mxu0
  %v1142 = vpop.f32.mrf.mxu0
  %v1143 = vadd.f32 %v779, %v1142
  %v1144 = vpop.f32.mrf.mxu0
  %1145 = vmatprep.mubr.bf16.mxu0 %v904
  %1146 = vmatmul.mubr.bf16.gmra.mxu0 %v903
  %v1147 = vpop.f32.mrf.mxu0
  %v1148 = vadd.f32 %v779, %v1147
  %v1149 = vpop.f32.mrf.mxu0
  %v1150 = vpop.f32.mrf.mxu0
  %v1151 = vadd.f32 %v779, %v1150
  %v1152 = vpop.f32.mrf.mxu0
  %1153 = vmatprep.mubr.bf16.mxu0 %v906
  %1154 = vmatmul.mubr.bf16.gmra.mxu0 %v905
  %v1155 = vpop.f32.mrf.mxu0
  %v1156 = vadd.f32 %v779, %v1155
  %v1157 = vpop.f32.mrf.mxu0
  %v1158 = vpop.f32.mrf.mxu0
  %v1159 = vadd.f32 %v779, %v1158
  %v1160 = vpop.f32.mrf.mxu0
  %1161 = vmatprep.mubr.bf16.mxu0 %v908
  %1162 = vmatmul.mubr.bf16.gmra.mxu0 %v907
  %v1163 = vpop.f32.mrf.mxu0
  %v1164 = vadd.f32 %v779, %v1163
  %v1165 = vpop.f32.mrf.mxu0
  %v1166 = vpop.f32.mrf.mxu0
  %v1167 = vadd.f32 %v779, %v1166
  %v1168 = vpop.f32.mrf.mxu0
  %1169 = vmatprep.mubr.bf16.mxu0 %v910
  %1170 = vmatmul.mubr.bf16.gmra.mxu0 %v909
  %v1171 = vpop.f32.mrf.mxu0
  %v1172 = vadd.f32 %v779, %v1171
  %v1173 = vpop.f32.mrf.mxu0
  %v1174 = vpop.f32.mrf.mxu0
  %v1175 = vadd.f32 %v779, %v1174
  %v1176 = vpop.f32.mrf.mxu0
  %1177 = vmatprep.mubr.bf16.mxu0 %v912
  %1178 = vmatmul.mubr.bf16.gmra.mxu0 %v911
  %v1179 = vpop.f32.mrf.mxu0
  %v1180 = vadd.f32 %v779, %v1179
  %v1181 = vpop.f32.mrf.mxu0
  %v1182 = vpop.f32.mrf.mxu0
  %v1183 = vadd.f32 %v779, %v1182
  %v1184 = vpop.f32.mrf.mxu0
  %1185 = vmatprep.mubr.bf16.mxu0 %v914
  %1186 = vmatmul.mubr.bf16.gmra.mxu0 %v913
  %v1187 = vpop.f32.mrf.mxu0
  %v1188 = vadd.f32 %v779, %v1187
  %v1189 = vpop.f32.mrf.mxu0
  %v1190 = vpop.f32.mrf.mxu0
  %v1191 = vadd.f32 %v779, %v1190
  %v1192 = vpop.f32.mrf.mxu0
  %1193 = vmatprep.mubr.bf16.mxu0 %v916
  %1194 = vmatmul.mubr.bf16.gmra.mxu0 %v915
  %v1195 = vpop.f32.mrf.mxu0
  %v1196 = vadd.f32 %v779, %v1195
  %v1197 = vpop.f32.mrf.mxu0
  %v1198 = vpop.f32.mrf.mxu0
  %v1199 = vadd.f32 %v779, %v1198
  %v1200 = vpop.f32.mrf.mxu0
  %1201 = vmatprep.mubr.bf16.mxu0 %v918
  %1202 = vmatmul.mubr.bf16.gmra.mxu0 %v917
  %v1203 = vpop.f32.mrf.mxu0
  %v1204 = vadd.f32 %v779, %v1203
  %v1205 = vpop.f32.mrf.mxu0
  %v1206 = vpop.f32.mrf.mxu0
  %v1207 = vadd.f32 %v779, %v1206
  %v1208 = vpop.f32.mrf.mxu0
  %1209 = vmatprep.mubr.bf16.mxu0 %v920
  %1210 = vmatmul.mubr.bf16.gmra.mxu0 %v919
  %v1211 = vpop.f32.mrf.mxu0
  %v1212 = vadd.f32 %v779, %v1211
  %v1213 = vpop.f32.mrf.mxu0
  %v1214 = vpop.f32.mrf.mxu0
  %v1215 = vadd.f32 %v779, %v1214
  %v1216 = vpop.f32.mrf.mxu0
  %1217 = vmatprep.mubr.bf16.mxu0 %v922
  %1218 = vmatmul.mubr.bf16.gmra.mxu0 %v921
  %v1219 = vpop.f32.mrf.mxu0
  %v1220 = vadd.f32 %v779, %v1219
  %v1221 = vpop.f32.mrf.mxu0
  %v1222 = vpop.f32.mrf.mxu0
  %v1223 = vadd.f32 %v779, %v1222
  %v1224 = vpop.f32.mrf.mxu0
  %1225 = vmatprep.mubr.bf16.mxu0 %v924
  %1226 = vmatmul.mubr.bf16.gmra.mxu0 %v923
  %v1227 = vpop.f32.mrf.mxu0
  %v1228 = vadd.f32 %v779, %v1227
  %v1229 = vpop.f32.mrf.mxu0
  %v1230 = vpop.f32.mrf.mxu0
  %v1231 = vadd.f32 %v779, %v1230
  %v1232 = vpop.f32.mrf.mxu0
  %1233 = vdwg.mxu0
  %v1234 = vmax.f32 %v1092, 0.0
  %v1235 = vmax.f32 %v1095, 0.0
  %v1236 = vmax.f32 %v1100, 0.0
  %v1237 = vmax.f32 %v1103, 0.0
  %v1238 = vmax.f32 %v1108, 0.0
  %v1239 = vmax.f32 %v1111, 0.0
  %v1240 = vmax.f32 %v1116, 0.0
  %v1241 = vmax.f32 %v1119, 0.0
  %v1242 = vmax.f32 %v1124, 0.0
  %v1243 = vmax.f32 %v1127, 0.0
  %v1244 = vmax.f32 %v1132, 0.0
  %v1245 = vmax.f32 %v1135, 0.0
  %v1246 = vmax.f32 %v1140, 0.0
  %v1247 = vmax.f32 %v1143, 0.0
  %v1248 = vmax.f32 %v1148, 0.0
  %v1249 = vmax.f32 %v1151, 0.0
  %v1250 = vmax.f32 %v1156, 0.0
  %v1251 = vmax.f32 %v1159, 0.0
  %v1252 = vmax.f32 %v1164, 0.0
  %v1253 = vmax.f32 %v1167, 0.0
  %v1254 = vmax.f32 %v1172, 0.0
  %v1255 = vmax.f32 %v1175, 0.0
  %v1256 = vmax.f32 %v1180, 0.0
  %v1257 = vmax.f32 %v1183, 0.0
  %v1258 = vmax.f32 %v1188, 0.0
  %v1259 = vmax.f32 %v1191, 0.0
  %v1260 = vmax.f32 %v1196, 0.0
  %v1261 = vmax.f32 %v1199, 0.0
  %v1262 = vmax.f32 %v1204, 0.0
  %v1263 = vmax.f32 %v1207, 0.0
  %v1264 = vmax.f32 %v1212, 0.0
  %v1265 = vmax.f32 %v1215, 0.0
  %v1266 = vmax.f32 %v1220, 0.0
  %v1267 = vmax.f32 %v1223, 0.0
  %v1268 = vmax.f32 %v1228, 0.0
  %v1269 = vmax.f32 %v1231, 0.0
  %v1270 = vpack.c.bf16 %v1235, %v1234
  %v1271 = vpack.c.bf16 %v1237, %v1236
  %v1272 = vpack.c.bf16 %v1239, %v1238
  %v1273 = vpack.c.bf16 %v1241, %v1240
  %v1274 = vpack.c.bf16 %v1243, %v1242
  %v1275 = vpack.c.bf16 %v1245, %v1244
  %v1276 = vpack.c.bf16 %v1247, %v1246
  %v1277 = vpack.c.bf16 %v1249, %v1248
  %v1278 = vpack.c.bf16 %v1251, %v1250
  %v1279 = vpack.c.bf16 %v1253, %v1252
  %v1280 = vpack.c.bf16 %v1255, %v1254
  %v1281 = vpack.c.bf16 %v1257, %v1256
  %v1282 = vpack.c.bf16 %v1259, %v1258
  %v1283 = vpack.c.bf16 %v1261, %v1260
  %v1284 = vpack.c.bf16 %v1263, %v1262
  %v1285 = vpack.c.bf16 %v1265, %v1264
  %v1286 = vpack.c.bf16 %v1267, %v1266
  %v1287 = vpack.c.bf16 %v1269, %v1268
  %v1306 = vcombine.high %v1270, %v1270
  %v1308 = vunpack.c.l.s4 1966171168
  %v1309 = vunpack.c.0.s8 %v1308
  %v1310 = vlaneseq
  %v1311 = vshrl.u32 %v1310, 7
  %v1312 = vsub.s32 %v1309, %v1311
  %v1313 = vrot.slane %v1270, %v1312
  %v1315 = vunpack.c.l.s4 1966171168
  %v1316 = vunpack.c.0.s8 %v1315
  %v1317 = vlaneseq
  %v1318 = vshrl.u32 %v1317, 7
  %v1319 = vsub.s32 %v1316, %v1318
  %v1320 = vrot.slane %v1306, %v1319
  %v1321 = vcombine.high %v1313, %v1313
  %v1322 = vcombine.high %v1320, %v1320
  %v1324 = vunpack.c.l.s4 1966171168
  %v1325 = vunpack.c.0.s8 %v1324
  %v1326 = vlaneseq
  %v1327 = vshrl.u32 %v1326, 7
  %v1328 = vsub.s32 %v1325, %v1327
  %v1329 = vrot.slane %v1313, %v1328
  %v1331 = vunpack.c.l.s4 1966171168
  %v1332 = vunpack.c.0.s8 %v1331
  %v1333 = vlaneseq
  %v1334 = vshrl.u32 %v1333, 7
  %v1335 = vsub.s32 %v1332, %v1334
  %v1336 = vrot.slane %v1320, %v1335
  %v1338 = vunpack.c.l.s4 1966171168
  %v1339 = vunpack.c.0.s8 %v1338
  %v1340 = vlaneseq
  %v1341 = vshrl.u32 %v1340, 7
  %v1342 = vsub.s32 %v1339, %v1341
  %v1343 = vrot.slane %v1321, %v1342
  %v1345 = vunpack.c.l.s4 1966171168
  %v1346 = vunpack.c.0.s8 %v1345
  %v1347 = vlaneseq
  %v1348 = vshrl.u32 %v1347, 7
  %v1349 = vsub.s32 %v1346, %v1348
  %v1350 = vrot.slane %v1322, %v1349
  %v1351 = vcombine.high %v1329, %v1329
  %v1352 = vcombine.high %v1336, %v1336
  %v1353 = vcombine.high %v1343, %v1343
  %v1354 = vcombine.high %v1350, %v1350
  %v1355 = vcombine.high %v1271, %v1271
  %v1357 = vunpack.c.l.s4 1966171168
  %v1358 = vunpack.c.0.s8 %v1357
  %v1359 = vlaneseq
  %v1360 = vshrl.u32 %v1359, 7
  %v1361 = vsub.s32 %v1358, %v1360
  %v1362 = vrot.slane %v1271, %v1361
  %v1364 = vunpack.c.l.s4 1966171168
  %v1365 = vunpack.c.0.s8 %v1364
  %v1366 = vlaneseq
  %v1367 = vshrl.u32 %v1366, 7
  %v1368 = vsub.s32 %v1365, %v1367
  %v1369 = vrot.slane %v1355, %v1368
  %v1370 = vcombine.high %v1362, %v1362
  %v1371 = vcombine.high %v1369, %v1369
  %v1373 = vunpack.c.l.s4 1966171168
  %v1374 = vunpack.c.0.s8 %v1373
  %v1375 = vlaneseq
  %v1376 = vshrl.u32 %v1375, 7
  %v1377 = vsub.s32 %v1374, %v1376
  %v1378 = vrot.slane %v1362, %v1377
  %v1380 = vunpack.c.l.s4 1966171168
  %v1381 = vunpack.c.0.s8 %v1380
  %v1382 = vlaneseq
  %v1383 = vshrl.u32 %v1382, 7
  %v1384 = vsub.s32 %v1381, %v1383
  %v1385 = vrot.slane %v1369, %v1384
  %v1387 = vunpack.c.l.s4 1966171168
  %v1388 = vunpack.c.0.s8 %v1387
  %v1389 = vlaneseq
  %v1390 = vshrl.u32 %v1389, 7
  %v1391 = vsub.s32 %v1388, %v1390
  %v1392 = vrot.slane %v1370, %v1391
  %v1394 = vunpack.c.l.s4 1966171168
  %v1395 = vunpack.c.0.s8 %v1394
  %v1396 = vlaneseq
  %v1397 = vshrl.u32 %v1396, 7
  %v1398 = vsub.s32 %v1395, %v1397
  %v1399 = vrot.slane %v1371, %v1398
  %v1400 = vcombine.high %v1378, %v1378
  %v1401 = vcombine.high %v1385, %v1385
  %v1402 = vcombine.high %v1392, %v1392
  %v1403 = vcombine.high %v1399, %v1399
  %v1404 = vcombine.high %v1272, %v1272
  %v1406 = vunpack.c.l.s4 1966171168
  %v1407 = vunpack.c.0.s8 %v1406
  %v1408 = vlaneseq
  %v1409 = vshrl.u32 %v1408, 7
  %v1410 = vsub.s32 %v1407, %v1409
  %v1411 = vrot.slane %v1272, %v1410
  %v1413 = vunpack.c.l.s4 1966171168
  %v1414 = vunpack.c.0.s8 %v1413
  %v1415 = vlaneseq
  %v1416 = vshrl.u32 %v1415, 7
  %v1417 = vsub.s32 %v1414, %v1416
  %v1418 = vrot.slane %v1404, %v1417
  %v1419 = vcombine.high %v1411, %v1411
  %v1420 = vcombine.high %v1418, %v1418
  %v1422 = vunpack.c.l.s4 1966171168
  %v1423 = vunpack.c.0.s8 %v1422
  %v1424 = vlaneseq
  %v1425 = vshrl.u32 %v1424, 7
  %v1426 = vsub.s32 %v1423, %v1425
  %v1427 = vrot.slane %v1411, %v1426
  %v1429 = vunpack.c.l.s4 1966171168
  %v1430 = vunpack.c.0.s8 %v1429
  %v1431 = vlaneseq
  %v1432 = vshrl.u32 %v1431, 7
  %v1433 = vsub.s32 %v1430, %v1432
  %v1434 = vrot.slane %v1418, %v1433
  %v1436 = vunpack.c.l.s4 1966171168
  %v1437 = vunpack.c.0.s8 %v1436
  %v1438 = vlaneseq
  %v1439 = vshrl.u32 %v1438, 7
  %v1440 = vsub.s32 %v1437, %v1439
  %v1441 = vrot.slane %v1419, %v1440
  %v1443 = vunpack.c.l.s4 1966171168
  %v1444 = vunpack.c.0.s8 %v1443
  %v1445 = vlaneseq
  %v1446 = vshrl.u32 %v1445, 7
  %v1447 = vsub.s32 %v1444, %v1446
  %v1448 = vrot.slane %v1420, %v1447
  %v1449 = vcombine.high %v1427, %v1427
  %v1450 = vcombine.high %v1434, %v1434
  %v1451 = vcombine.high %v1441, %v1441
  %v1452 = vcombine.high %v1448, %v1448
  %v1453 = vcombine.high %v1273, %v1273
  %v1455 = vunpack.c.l.s4 1966171168
  %v1456 = vunpack.c.0.s8 %v1455
  %v1457 = vlaneseq
  %v1458 = vshrl.u32 %v1457, 7
  %v1459 = vsub.s32 %v1456, %v1458
  %v1460 = vrot.slane %v1273, %v1459
  %v1462 = vunpack.c.l.s4 1966171168
  %v1463 = vunpack.c.0.s8 %v1462
  %v1464 = vlaneseq
  %v1465 = vshrl.u32 %v1464, 7
  %v1466 = vsub.s32 %v1463, %v1465
  %v1467 = vrot.slane %v1453, %v1466
  %v1468 = vcombine.high %v1460, %v1460
  %v1469 = vcombine.high %v1467, %v1467
  %v1471 = vunpack.c.l.s4 1966171168
  %v1472 = vunpack.c.0.s8 %v1471
  %v1473 = vlaneseq
  %v1474 = vshrl.u32 %v1473, 7
  %v1475 = vsub.s32 %v1472, %v1474
  %v1476 = vrot.slane %v1460, %v1475
  %v1478 = vunpack.c.l.s4 1966171168
  %v1479 = vunpack.c.0.s8 %v1478
  %v1480 = vlaneseq
  %v1481 = vshrl.u32 %v1480, 7
  %v1482 = vsub.s32 %v1479, %v1481
  %v1483 = vrot.slane %v1467, %v1482
  %v1485 = vunpack.c.l.s4 1966171168
  %v1486 = vunpack.c.0.s8 %v1485
  %v1487 = vlaneseq
  %v1488 = vshrl.u32 %v1487, 7
  %v1489 = vsub.s32 %v1486, %v1488
  %v1490 = vrot.slane %v1468, %v1489
  %v1492 = vunpack.c.l.s4 1966171168
  %v1493 = vunpack.c.0.s8 %v1492
  %v1494 = vlaneseq
  %v1495 = vshrl.u32 %v1494, 7
  %v1496 = vsub.s32 %v1493, %v1495
  %v1497 = vrot.slane %v1469, %v1496
  %v1498 = vcombine.high %v1476, %v1476
  %v1499 = vcombine.high %v1483, %v1483
  %v1500 = vcombine.high %v1490, %v1490
  %v1501 = vcombine.high %v1497, %v1497
  %v1502 = vcombine.high %v1274, %v1274
  %v1504 = vunpack.c.l.s4 1966171168
  %v1505 = vunpack.c.0.s8 %v1504
  %v1506 = vlaneseq
  %v1507 = vshrl.u32 %v1506, 7
  %v1508 = vsub.s32 %v1505, %v1507
  %v1509 = vrot.slane %v1274, %v1508
  %v1511 = vunpack.c.l.s4 1966171168
  %v1512 = vunpack.c.0.s8 %v1511
  %v1513 = vlaneseq
  %v1514 = vshrl.u32 %v1513, 7
  %v1515 = vsub.s32 %v1512, %v1514
  %v1516 = vrot.slane %v1502, %v1515
  %v1517 = vcombine.high %v1509, %v1509
  %v1518 = vcombine.high %v1516, %v1516
  %v1520 = vunpack.c.l.s4 1966171168
  %v1521 = vunpack.c.0.s8 %v1520
  %v1522 = vlaneseq
  %v1523 = vshrl.u32 %v1522, 7
  %v1524 = vsub.s32 %v1521, %v1523
  %v1525 = vrot.slane %v1509, %v1524
  %v1527 = vunpack.c.l.s4 1966171168
  %v1528 = vunpack.c.0.s8 %v1527
  %v1529 = vlaneseq
  %v1530 = vshrl.u32 %v1529, 7
  %v1531 = vsub.s32 %v1528, %v1530
  %v1532 = vrot.slane %v1516, %v1531
  %v1534 = vunpack.c.l.s4 1966171168
  %v1535 = vunpack.c.0.s8 %v1534
  %v1536 = vlaneseq
  %v1537 = vshrl.u32 %v1536, 7
  %v1538 = vsub.s32 %v1535, %v1537
  %v1539 = vrot.slane %v1517, %v1538
  %v1541 = vunpack.c.l.s4 1966171168
  %v1542 = vunpack.c.0.s8 %v1541
  %v1543 = vlaneseq
  %v1544 = vshrl.u32 %v1543, 7
  %v1545 = vsub.s32 %v1542, %v1544
  %v1546 = vrot.slane %v1518, %v1545
  %v1547 = vcombine.high %v1525, %v1525
  %v1548 = vcombine.high %v1532, %v1532
  %v1549 = vcombine.high %v1539, %v1539
  %v1550 = vcombine.high %v1546, %v1546
  %v1551 = vcombine.high %v1275, %v1275
  %v1553 = vunpack.c.l.s4 1966171168
  %v1554 = vunpack.c.0.s8 %v1553
  %v1555 = vlaneseq
  %v1556 = vshrl.u32 %v1555, 7
  %v1557 = vsub.s32 %v1554, %v1556
  %v1558 = vrot.slane %v1275, %v1557
  %v1560 = vunpack.c.l.s4 1966171168
  %v1561 = vunpack.c.0.s8 %v1560
  %v1562 = vlaneseq
  %v1563 = vshrl.u32 %v1562, 7
  %v1564 = vsub.s32 %v1561, %v1563
  %v1565 = vrot.slane %v1551, %v1564
  %v1566 = vcombine.high %v1558, %v1558
  %v1567 = vcombine.high %v1565, %v1565
  %v1569 = vunpack.c.l.s4 1966171168
  %v1570 = vunpack.c.0.s8 %v1569
  %v1571 = vlaneseq
  %v1572 = vshrl.u32 %v1571, 7
  %v1573 = vsub.s32 %v1570, %v1572
  %v1574 = vrot.slane %v1558, %v1573
  %v1576 = vunpack.c.l.s4 1966171168
  %v1577 = vunpack.c.0.s8 %v1576
  %v1578 = vlaneseq
  %v1579 = vshrl.u32 %v1578, 7
  %v1580 = vsub.s32 %v1577, %v1579
  %v1581 = vrot.slane %v1565, %v1580
  %v1583 = vunpack.c.l.s4 1966171168
  %v1584 = vunpack.c.0.s8 %v1583
  %v1585 = vlaneseq
  %v1586 = vshrl.u32 %v1585, 7
  %v1587 = vsub.s32 %v1584, %v1586
  %v1588 = vrot.slane %v1566, %v1587
  %v1590 = vunpack.c.l.s4 1966171168
  %v1591 = vunpack.c.0.s8 %v1590
  %v1592 = vlaneseq
  %v1593 = vshrl.u32 %v1592, 7
  %v1594 = vsub.s32 %v1591, %v1593
  %v1595 = vrot.slane %v1567, %v1594
  %v1596 = vcombine.high %v1574, %v1574
  %v1597 = vcombine.high %v1581, %v1581
  %v1598 = vcombine.high %v1588, %v1588
  %v1599 = vcombine.high %v1595, %v1595
  %v1600 = vcombine.high %v1276, %v1276
  %v1602 = vunpack.c.l.s4 1966171168
  %v1603 = vunpack.c.0.s8 %v1602
  %v1604 = vlaneseq
  %v1605 = vshrl.u32 %v1604, 7
  %v1606 = vsub.s32 %v1603, %v1605
  %v1607 = vrot.slane %v1276, %v1606
  %v1609 = vunpack.c.l.s4 1966171168
  %v1610 = vunpack.c.0.s8 %v1609
  %v1611 = vlaneseq
  %v1612 = vshrl.u32 %v1611, 7
  %v1613 = vsub.s32 %v1610, %v1612
  %v1614 = vrot.slane %v1600, %v1613
  %v1615 = vcombine.high %v1607, %v1607
  %v1616 = vcombine.high %v1614, %v1614
  %v1618 = vunpack.c.l.s4 1966171168
  %v1619 = vunpack.c.0.s8 %v1618
  %v1620 = vlaneseq
  %v1621 = vshrl.u32 %v1620, 7
  %v1622 = vsub.s32 %v1619, %v1621
  %v1623 = vrot.slane %v1607, %v1622
  %v1625 = vunpack.c.l.s4 1966171168
  %v1626 = vunpack.c.0.s8 %v1625
  %v1627 = vlaneseq
  %v1628 = vshrl.u32 %v1627, 7
  %v1629 = vsub.s32 %v1626, %v1628
  %v1630 = vrot.slane %v1614, %v1629
  %v1632 = vunpack.c.l.s4 1966171168
  %v1633 = vunpack.c.0.s8 %v1632
  %v1634 = vlaneseq
  %v1635 = vshrl.u32 %v1634, 7
  %v1636 = vsub.s32 %v1633, %v1635
  %v1637 = vrot.slane %v1615, %v1636
  %v1639 = vunpack.c.l.s4 1966171168
  %v1640 = vunpack.c.0.s8 %v1639
  %v1641 = vlaneseq
  %v1642 = vshrl.u32 %v1641, 7
  %v1643 = vsub.s32 %v1640, %v1642
  %v1644 = vrot.slane %v1616, %v1643
  %v1645 = vcombine.high %v1623, %v1623
  %v1646 = vcombine.high %v1630, %v1630
  %v1647 = vcombine.high %v1637, %v1637
  %v1648 = vcombine.high %v1644, %v1644
  %v1649 = vcombine.high %v1277, %v1277
  %v1651 = vunpack.c.l.s4 1966171168
  %v1652 = vunpack.c.0.s8 %v1651
  %v1653 = vlaneseq
  %v1654 = vshrl.u32 %v1653, 7
  %v1655 = vsub.s32 %v1652, %v1654
  %v1656 = vrot.slane %v1277, %v1655
  %v1658 = vunpack.c.l.s4 1966171168
  %v1659 = vunpack.c.0.s8 %v1658
  %v1660 = vlaneseq
  %v1661 = vshrl.u32 %v1660, 7
  %v1662 = vsub.s32 %v1659, %v1661
  %v1663 = vrot.slane %v1649, %v1662
  %v1664 = vcombine.high %v1656, %v1656
  %v1665 = vcombine.high %v1663, %v1663
  %v1667 = vunpack.c.l.s4 1966171168
  %v1668 = vunpack.c.0.s8 %v1667
  %v1669 = vlaneseq
  %v1670 = vshrl.u32 %v1669, 7
  %v1671 = vsub.s32 %v1668, %v1670
  %v1672 = vrot.slane %v1656, %v1671
  %v1674 = vunpack.c.l.s4 1966171168
  %v1675 = vunpack.c.0.s8 %v1674
  %v1676 = vlaneseq
  %v1677 = vshrl.u32 %v1676, 7
  %v1678 = vsub.s32 %v1675, %v1677
  %v1679 = vrot.slane %v1663, %v1678
  %v1681 = vunpack.c.l.s4 1966171168
  %v1682 = vunpack.c.0.s8 %v1681
  %v1683 = vlaneseq
  %v1684 = vshrl.u32 %v1683, 7
  %v1685 = vsub.s32 %v1682, %v1684
  %v1686 = vrot.slane %v1664, %v1685
  %v1688 = vunpack.c.l.s4 1966171168
  %v1689 = vunpack.c.0.s8 %v1688
  %v1690 = vlaneseq
  %v1691 = vshrl.u32 %v1690, 7
  %v1692 = vsub.s32 %v1689, %v1691
  %v1693 = vrot.slane %v1665, %v1692
  %v1694 = vcombine.high %v1672, %v1672
  %v1695 = vcombine.high %v1679, %v1679
  %v1696 = vcombine.high %v1686, %v1686
  %v1697 = vcombine.high %v1693, %v1693
  %v1698 = vcombine.high %v1278, %v1278
  %v1700 = vunpack.c.l.s4 1966171168
  %v1701 = vunpack.c.0.s8 %v1700
  %v1702 = vlaneseq
  %v1703 = vshrl.u32 %v1702, 7
  %v1704 = vsub.s32 %v1701, %v1703
  %v1705 = vrot.slane %v1278, %v1704
  %v1707 = vunpack.c.l.s4 1966171168
  %v1708 = vunpack.c.0.s8 %v1707
  %v1709 = vlaneseq
  %v1710 = vshrl.u32 %v1709, 7
  %v1711 = vsub.s32 %v1708, %v1710
  %v1712 = vrot.slane %v1698, %v1711
  %v1713 = vcombine.high %v1705, %v1705
  %v1714 = vcombine.high %v1712, %v1712
  %v1716 = vunpack.c.l.s4 1966171168
  %v1717 = vunpack.c.0.s8 %v1716
  %v1718 = vlaneseq
  %v1719 = vshrl.u32 %v1718, 7
  %v1720 = vsub.s32 %v1717, %v1719
  %v1721 = vrot.slane %v1705, %v1720
  %v1723 = vunpack.c.l.s4 1966171168
  %v1724 = vunpack.c.0.s8 %v1723
  %v1725 = vlaneseq
  %v1726 = vshrl.u32 %v1725, 7
  %v1727 = vsub.s32 %v1724, %v1726
  %v1728 = vrot.slane %v1712, %v1727
  %v1730 = vunpack.c.l.s4 1966171168
  %v1731 = vunpack.c.0.s8 %v1730
  %v1732 = vlaneseq
  %v1733 = vshrl.u32 %v1732, 7
  %v1734 = vsub.s32 %v1731, %v1733
  %v1735 = vrot.slane %v1713, %v1734
  %v1737 = vunpack.c.l.s4 1966171168
  %v1738 = vunpack.c.0.s8 %v1737
  %v1739 = vlaneseq
  %v1740 = vshrl.u32 %v1739, 7
  %v1741 = vsub.s32 %v1738, %v1740
  %v1742 = vrot.slane %v1714, %v1741
  %v1743 = vcombine.high %v1721, %v1721
  %v1744 = vcombine.high %v1728, %v1728
  %v1745 = vcombine.high %v1735, %v1735
  %v1746 = vcombine.high %v1742, %v1742
  %v1747 = vcombine.high %v1279, %v1279
  %v1749 = vunpack.c.l.s4 1966171168
  %v1750 = vunpack.c.0.s8 %v1749
  %v1751 = vlaneseq
  %v1752 = vshrl.u32 %v1751, 7
  %v1753 = vsub.s32 %v1750, %v1752
  %v1754 = vrot.slane %v1279, %v1753
  %v1756 = vunpack.c.l.s4 1966171168
  %v1757 = vunpack.c.0.s8 %v1756
  %v1758 = vlaneseq
  %v1759 = vshrl.u32 %v1758, 7
  %v1760 = vsub.s32 %v1757, %v1759
  %v1761 = vrot.slane %v1747, %v1760
  %v1762 = vcombine.high %v1754, %v1754
  %v1763 = vcombine.high %v1761, %v1761
  %v1765 = vunpack.c.l.s4 1966171168
  %v1766 = vunpack.c.0.s8 %v1765
  %v1767 = vlaneseq
  %v1768 = vshrl.u32 %v1767, 7
  %v1769 = vsub.s32 %v1766, %v1768
  %v1770 = vrot.slane %v1754, %v1769
  %v1772 = vunpack.c.l.s4 1966171168
  %v1773 = vunpack.c.0.s8 %v1772
  %v1774 = vlaneseq
  %v1775 = vshrl.u32 %v1774, 7
  %v1776 = vsub.s32 %v1773, %v1775
  %v1777 = vrot.slane %v1761, %v1776
  %v1779 = vunpack.c.l.s4 1966171168
  %v1780 = vunpack.c.0.s8 %v1779
  %v1781 = vlaneseq
  %v1782 = vshrl.u32 %v1781, 7
  %v1783 = vsub.s32 %v1780, %v1782
  %v1784 = vrot.slane %v1762, %v1783
  %v1786 = vunpack.c.l.s4 1966171168
  %v1787 = vunpack.c.0.s8 %v1786
  %v1788 = vlaneseq
  %v1789 = vshrl.u32 %v1788, 7
  %v1790 = vsub.s32 %v1787, %v1789
  %v1791 = vrot.slane %v1763, %v1790
  %v1792 = vcombine.high %v1770, %v1770
  %v1793 = vcombine.high %v1777, %v1777
  %v1794 = vcombine.high %v1784, %v1784
  %v1795 = vcombine.high %v1791, %v1791
  %v1796 = vcombine.high %v1280, %v1280
  %v1798 = vunpack.c.l.s4 1966171168
  %v1799 = vunpack.c.0.s8 %v1798
  %v1800 = vlaneseq
  %v1801 = vshrl.u32 %v1800, 7
  %v1802 = vsub.s32 %v1799, %v1801
  %v1803 = vrot.slane %v1280, %v1802
  %v1805 = vunpack.c.l.s4 1966171168
  %v1806 = vunpack.c.0.s8 %v1805
  %v1807 = vlaneseq
  %v1808 = vshrl.u32 %v1807, 7
  %v1809 = vsub.s32 %v1806, %v1808
  %v1810 = vrot.slane %v1796, %v1809
  %v1811 = vcombine.high %v1803, %v1803
  %v1812 = vcombine.high %v1810, %v1810
  %v1814 = vunpack.c.l.s4 1966171168
  %v1815 = vunpack.c.0.s8 %v1814
  %v1816 = vlaneseq
  %v1817 = vshrl.u32 %v1816, 7
  %v1818 = vsub.s32 %v1815, %v1817
  %v1819 = vrot.slane %v1803, %v1818
  %v1821 = vunpack.c.l.s4 1966171168
  %v1822 = vunpack.c.0.s8 %v1821
  %v1823 = vlaneseq
  %v1824 = vshrl.u32 %v1823, 7
  %v1825 = vsub.s32 %v1822, %v1824
  %v1826 = vrot.slane %v1810, %v1825
  %v1828 = vunpack.c.l.s4 1966171168
  %v1829 = vunpack.c.0.s8 %v1828
  %v1830 = vlaneseq
  %v1831 = vshrl.u32 %v1830, 7
  %v1832 = vsub.s32 %v1829, %v1831
  %v1833 = vrot.slane %v1811, %v1832
  %v1835 = vunpack.c.l.s4 1966171168
  %v1836 = vunpack.c.0.s8 %v1835
  %v1837 = vlaneseq
  %v1838 = vshrl.u32 %v1837, 7
  %v1839 = vsub.s32 %v1836, %v1838
  %v1840 = vrot.slane %v1812, %v1839
  %v1841 = vcombine.high %v1819, %v1819
  %v1842 = vcombine.high %v1826, %v1826
  %v1843 = vcombine.high %v1833, %v1833
  %v1844 = vcombine.high %v1840, %v1840
  %v1845 = vcombine.high %v1281, %v1281
  %v1847 = vunpack.c.l.s4 1966171168
  %v1848 = vunpack.c.0.s8 %v1847
  %v1849 = vlaneseq
  %v1850 = vshrl.u32 %v1849, 7
  %v1851 = vsub.s32 %v1848, %v1850
  %v1852 = vrot.slane %v1281, %v1851
  %v1854 = vunpack.c.l.s4 1966171168
  %v1855 = vunpack.c.0.s8 %v1854
  %v1856 = vlaneseq
  %v1857 = vshrl.u32 %v1856, 7
  %v1858 = vsub.s32 %v1855, %v1857
  %v1859 = vrot.slane %v1845, %v1858
  %v1860 = vcombine.high %v1852, %v1852
  %v1861 = vcombine.high %v1859, %v1859
  %v1863 = vunpack.c.l.s4 1966171168
  %v1864 = vunpack.c.0.s8 %v1863
  %v1865 = vlaneseq
  %v1866 = vshrl.u32 %v1865, 7
  %v1867 = vsub.s32 %v1864, %v1866
  %v1868 = vrot.slane %v1852, %v1867
  %v1870 = vunpack.c.l.s4 1966171168
  %v1871 = vunpack.c.0.s8 %v1870
  %v1872 = vlaneseq
  %v1873 = vshrl.u32 %v1872, 7
  %v1874 = vsub.s32 %v1871, %v1873
  %v1875 = vrot.slane %v1859, %v1874
  %v1877 = vunpack.c.l.s4 1966171168
  %v1878 = vunpack.c.0.s8 %v1877
  %v1879 = vlaneseq
  %v1880 = vshrl.u32 %v1879, 7
  %v1881 = vsub.s32 %v1878, %v1880
  %v1882 = vrot.slane %v1860, %v1881
  %v1884 = vunpack.c.l.s4 1966171168
  %v1885 = vunpack.c.0.s8 %v1884
  %v1886 = vlaneseq
  %v1887 = vshrl.u32 %v1886, 7
  %v1888 = vsub.s32 %v1885, %v1887
  %v1889 = vrot.slane %v1861, %v1888
  %v1890 = vcombine.high %v1868, %v1868
  %v1891 = vcombine.high %v1875, %v1875
  %v1892 = vcombine.high %v1882, %v1882
  %v1893 = vcombine.high %v1889, %v1889
  %v1894 = vcombine.high %v1282, %v1282
  %v1896 = vunpack.c.l.s4 1966171168
  %v1897 = vunpack.c.0.s8 %v1896
  %v1898 = vlaneseq
  %v1899 = vshrl.u32 %v1898, 7
  %v1900 = vsub.s32 %v1897, %v1899
  %v1901 = vrot.slane %v1282, %v1900
  %v1903 = vunpack.c.l.s4 1966171168
  %v1904 = vunpack.c.0.s8 %v1903
  %v1905 = vlaneseq
  %v1906 = vshrl.u32 %v1905, 7
  %v1907 = vsub.s32 %v1904, %v1906
  %v1908 = vrot.slane %v1894, %v1907
  %v1909 = vcombine.high %v1901, %v1901
  %v1910 = vcombine.high %v1908, %v1908
  %v1912 = vunpack.c.l.s4 1966171168
  %v1913 = vunpack.c.0.s8 %v1912
  %v1914 = vlaneseq
  %v1915 = vshrl.u32 %v1914, 7
  %v1916 = vsub.s32 %v1913, %v1915
  %v1917 = vrot.slane %v1901, %v1916
  %v1919 = vunpack.c.l.s4 1966171168
  %v1920 = vunpack.c.0.s8 %v1919
  %v1921 = vlaneseq
  %v1922 = vshrl.u32 %v1921, 7
  %v1923 = vsub.s32 %v1920, %v1922
  %v1924 = vrot.slane %v1908, %v1923
  %v1926 = vunpack.c.l.s4 1966171168
  %v1927 = vunpack.c.0.s8 %v1926
  %v1928 = vlaneseq
  %v1929 = vshrl.u32 %v1928, 7
  %v1930 = vsub.s32 %v1927, %v1929
  %v1931 = vrot.slane %v1909, %v1930
  %v1933 = vunpack.c.l.s4 1966171168
  %v1934 = vunpack.c.0.s8 %v1933
  %v1935 = vlaneseq
  %v1936 = vshrl.u32 %v1935, 7
  %v1937 = vsub.s32 %v1934, %v1936
  %v1938 = vrot.slane %v1910, %v1937
  %v1939 = vcombine.high %v1917, %v1917
  %v1940 = vcombine.high %v1924, %v1924
  %v1941 = vcombine.high %v1931, %v1931
  %v1942 = vcombine.high %v1938, %v1938
  %v1943 = vcombine.high %v1283, %v1283
  %v1945 = vunpack.c.l.s4 1966171168
  %v1946 = vunpack.c.0.s8 %v1945
  %v1947 = vlaneseq
  %v1948 = vshrl.u32 %v1947, 7
  %v1949 = vsub.s32 %v1946, %v1948
  %v1950 = vrot.slane %v1283, %v1949
  %v1952 = vunpack.c.l.s4 1966171168
  %v1953 = vunpack.c.0.s8 %v1952
  %v1954 = vlaneseq
  %v1955 = vshrl.u32 %v1954, 7
  %v1956 = vsub.s32 %v1953, %v1955
  %v1957 = vrot.slane %v1943, %v1956
  %v1958 = vcombine.high %v1950, %v1950
  %v1959 = vcombine.high %v1957, %v1957
  %v1961 = vunpack.c.l.s4 1966171168
  %v1962 = vunpack.c.0.s8 %v1961
  %v1963 = vlaneseq
  %v1964 = vshrl.u32 %v1963, 7
  %v1965 = vsub.s32 %v1962, %v1964
  %v1966 = vrot.slane %v1950, %v1965
  %v1968 = vunpack.c.l.s4 1966171168
  %v1969 = vunpack.c.0.s8 %v1968
  %v1970 = vlaneseq
  %v1971 = vshrl.u32 %v1970, 7
  %v1972 = vsub.s32 %v1969, %v1971
  %v1973 = vrot.slane %v1957, %v1972
  %v1975 = vunpack.c.l.s4 1966171168
  %v1976 = vunpack.c.0.s8 %v1975
  %v1977 = vlaneseq
  %v1978 = vshrl.u32 %v1977, 7
  %v1979 = vsub.s32 %v1976, %v1978
  %v1980 = vrot.slane %v1958, %v1979
  %v1982 = vunpack.c.l.s4 1966171168
  %v1983 = vunpack.c.0.s8 %v1982
  %v1984 = vlaneseq
  %v1985 = vshrl.u32 %v1984, 7
  %v1986 = vsub.s32 %v1983, %v1985
  %v1987 = vrot.slane %v1959, %v1986
  %v1988 = vcombine.high %v1966, %v1966
  %v1989 = vcombine.high %v1973, %v1973
  %v1990 = vcombine.high %v1980, %v1980
  %v1991 = vcombine.high %v1987, %v1987
  %v1992 = vcombine.high %v1284, %v1284
  %v1994 = vunpack.c.l.s4 1966171168
  %v1995 = vunpack.c.0.s8 %v1994
  %v1996 = vlaneseq
  %v1997 = vshrl.u32 %v1996, 7
  %v1998 = vsub.s32 %v1995, %v1997
  %v1999 = vrot.slane %v1284, %v1998
  %v2001 = vunpack.c.l.s4 1966171168
  %v2002 = vunpack.c.0.s8 %v2001
  %v2003 = vlaneseq
  %v2004 = vshrl.u32 %v2003, 7
  %v2005 = vsub.s32 %v2002, %v2004
  %v2006 = vrot.slane %v1992, %v2005
  %v2007 = vcombine.high %v1999, %v1999
  %v2008 = vcombine.high %v2006, %v2006
  %v2010 = vunpack.c.l.s4 1966171168
  %v2011 = vunpack.c.0.s8 %v2010
  %v2012 = vlaneseq
  %v2013 = vshrl.u32 %v2012, 7
  %v2014 = vsub.s32 %v2011, %v2013
  %v2015 = vrot.slane %v1999, %v2014
  %v2017 = vunpack.c.l.s4 1966171168
  %v2018 = vunpack.c.0.s8 %v2017
  %v2019 = vlaneseq
  %v2020 = vshrl.u32 %v2019, 7
  %v2021 = vsub.s32 %v2018, %v2020
  %v2022 = vrot.slane %v2006, %v2021
  %v2024 = vunpack.c.l.s4 1966171168
  %v2025 = vunpack.c.0.s8 %v2024
  %v2026 = vlaneseq
  %v2027 = vshrl.u32 %v2026, 7
  %v2028 = vsub.s32 %v2025, %v2027
  %v2029 = vrot.slane %v2007, %v2028
  %v2031 = vunpack.c.l.s4 1966171168
  %v2032 = vunpack.c.0.s8 %v2031
  %v2033 = vlaneseq
  %v2034 = vshrl.u32 %v2033, 7
  %v2035 = vsub.s32 %v2032, %v2034
  %v2036 = vrot.slane %v2008, %v2035
  %v2037 = vcombine.high %v2015, %v2015
  %v2038 = vcombine.high %v2022, %v2022
  %v2039 = vcombine.high %v2029, %v2029
  %v2040 = vcombine.high %v2036, %v2036
  %v2041 = vcombine.high %v1285, %v1285
  %v2043 = vunpack.c.l.s4 1966171168
  %v2044 = vunpack.c.0.s8 %v2043
  %v2045 = vlaneseq
  %v2046 = vshrl.u32 %v2045, 7
  %v2047 = vsub.s32 %v2044, %v2046
  %v2048 = vrot.slane %v1285, %v2047
  %v2050 = vunpack.c.l.s4 1966171168
  %v2051 = vunpack.c.0.s8 %v2050
  %v2052 = vlaneseq
  %v2053 = vshrl.u32 %v2052, 7
  %v2054 = vsub.s32 %v2051, %v2053
  %v2055 = vrot.slane %v2041, %v2054
  %v2056 = vcombine.high %v2048, %v2048
  %v2057 = vcombine.high %v2055, %v2055
  %v2059 = vunpack.c.l.s4 1966171168
  %v2060 = vunpack.c.0.s8 %v2059
  %v2061 = vlaneseq
  %v2062 = vshrl.u32 %v2061, 7
  %v2063 = vsub.s32 %v2060, %v2062
  %v2064 = vrot.slane %v2048, %v2063
  %v2066 = vunpack.c.l.s4 1966171168
  %v2067 = vunpack.c.0.s8 %v2066
  %v2068 = vlaneseq
  %v2069 = vshrl.u32 %v2068, 7
  %v2070 = vsub.s32 %v2067, %v2069
  %v2071 = vrot.slane %v2055, %v2070
  %v2073 = vunpack.c.l.s4 1966171168
  %v2074 = vunpack.c.0.s8 %v2073
  %v2075 = vlaneseq
  %v2076 = vshrl.u32 %v2075, 7
  %v2077 = vsub.s32 %v2074, %v2076
  %v2078 = vrot.slane %v2056, %v2077
  %v2080 = vunpack.c.l.s4 1966171168
  %v2081 = vunpack.c.0.s8 %v2080
  %v2082 = vlaneseq
  %v2083 = vshrl.u32 %v2082, 7
  %v2084 = vsub.s32 %v2081, %v2083
  %v2085 = vrot.slane %v2057, %v2084
  %v2086 = vcombine.high %v2064, %v2064
  %v2087 = vcombine.high %v2071, %v2071
  %v2088 = vcombine.high %v2078, %v2078
  %v2089 = vcombine.high %v2085, %v2085
  %v2090 = vcombine.high %v1286, %v1286
  %v2092 = vunpack.c.l.s4 1966171168
  %v2093 = vunpack.c.0.s8 %v2092
  %v2094 = vlaneseq
  %v2095 = vshrl.u32 %v2094, 7
  %v2096 = vsub.s32 %v2093, %v2095
  %v2097 = vrot.slane %v1286, %v2096
  %v2099 = vunpack.c.l.s4 1966171168
  %v2100 = vunpack.c.0.s8 %v2099
  %v2101 = vlaneseq
  %v2102 = vshrl.u32 %v2101, 7
  %v2103 = vsub.s32 %v2100, %v2102
  %v2104 = vrot.slane %v2090, %v2103
  %v2105 = vcombine.high %v2097, %v2097
  %v2106 = vcombine.high %v2104, %v2104
  %v2108 = vunpack.c.l.s4 1966171168
  %v2109 = vunpack.c.0.s8 %v2108
  %v2110 = vlaneseq
  %v2111 = vshrl.u32 %v2110, 7
  %v2112 = vsub.s32 %v2109, %v2111
  %v2113 = vrot.slane %v2097, %v2112
  %v2115 = vunpack.c.l.s4 1966171168
  %v2116 = vunpack.c.0.s8 %v2115
  %v2117 = vlaneseq
  %v2118 = vshrl.u32 %v2117, 7
  %v2119 = vsub.s32 %v2116, %v2118
  %v2120 = vrot.slane %v2104, %v2119
  %v2122 = vunpack.c.l.s4 1966171168
  %v2123 = vunpack.c.0.s8 %v2122
  %v2124 = vlaneseq
  %v2125 = vshrl.u32 %v2124, 7
  %v2126 = vsub.s32 %v2123, %v2125
  %v2127 = vrot.slane %v2105, %v2126
  %v2129 = vunpack.c.l.s4 1966171168
  %v2130 = vunpack.c.0.s8 %v2129
  %v2131 = vlaneseq
  %v2132 = vshrl.u32 %v2131, 7
  %v2133 = vsub.s32 %v2130, %v2132
  %v2134 = vrot.slane %v2106, %v2133
  %v2135 = vcombine.high %v2113, %v2113
  %v2136 = vcombine.high %v2120, %v2120
  %v2137 = vcombine.high %v2127, %v2127
  %v2138 = vcombine.high %v2134, %v2134
  %v2139 = vcombine.high %v1287, %v1287
  %v2141 = vunpack.c.l.s4 1966171168
  %v2142 = vunpack.c.0.s8 %v2141
  %v2143 = vlaneseq
  %v2144 = vshrl.u32 %v2143, 7
  %v2145 = vsub.s32 %v2142, %v2144
  %v2146 = vrot.slane %v1287, %v2145
  %v2148 = vunpack.c.l.s4 1966171168
  %v2149 = vunpack.c.0.s8 %v2148
  %v2150 = vlaneseq
  %v2151 = vshrl.u32 %v2150, 7
  %v2152 = vsub.s32 %v2149, %v2151
  %v2153 = vrot.slane %v2139, %v2152
  %v2154 = vcombine.high %v2146, %v2146
  %v2155 = vcombine.high %v2153, %v2153
  %v2157 = vunpack.c.l.s4 1966171168
  %v2158 = vunpack.c.0.s8 %v2157
  %v2159 = vlaneseq
  %v2160 = vshrl.u32 %v2159, 7
  %v2161 = vsub.s32 %v2158, %v2160
  %v2162 = vrot.slane %v2146, %v2161
  %v2164 = vunpack.c.l.s4 1966171168
  %v2165 = vunpack.c.0.s8 %v2164
  %v2166 = vlaneseq
  %v2167 = vshrl.u32 %v2166, 7
  %v2168 = vsub.s32 %v2165, %v2167
  %v2169 = vrot.slane %v2153, %v2168
  %v2171 = vunpack.c.l.s4 1966171168
  %v2172 = vunpack.c.0.s8 %v2171
  %v2173 = vlaneseq
  %v2174 = vshrl.u32 %v2173, 7
  %v2175 = vsub.s32 %v2172, %v2174
  %v2176 = vrot.slane %v2154, %v2175
  %v2178 = vunpack.c.l.s4 1966171168
  %v2179 = vunpack.c.0.s8 %v2178
  %v2180 = vlaneseq
  %v2181 = vshrl.u32 %v2180, 7
  %v2182 = vsub.s32 %v2179, %v2181
  %v2183 = vrot.slane %v2155, %v2182
  %v2184 = vcombine.high %v2162, %v2162
  %v2185 = vcombine.high %v2169, %v2169
  %v2186 = vcombine.high %v2176, %v2176
  %v2187 = vcombine.high %v2183, %v2183
  %v2188 = vunpack.i.l.s16 %v1329
  %v2189 = vunpack.i.h.s16 %v1329
  %v2190 = vunpack.i.l.s16 %v1343
  %v2191 = vunpack.i.h.s16 %v1343
  %v2192 = vunpack.i.l.s16 %v1351
  %v2193 = vunpack.i.h.s16 %v1351
  %v2194 = vunpack.i.l.s16 %v1353
  %v2195 = vunpack.i.h.s16 %v1353
  %v2196 = vunpack.i.l.s16 %v1336
  %v2197 = vunpack.i.h.s16 %v1336
  %v2198 = vunpack.i.l.s16 %v1350
  %v2199 = vunpack.i.h.s16 %v1350
  %v2200 = vunpack.i.l.s16 %v1352
  %v2201 = vunpack.i.h.s16 %v1352
  %v2202 = vunpack.i.l.s16 %v1354
  %v2203 = vunpack.i.h.s16 %v1354
  %v2204 = vunpack.i.l.s16 %v1378
  %v2205 = vunpack.i.h.s16 %v1378
  %v2206 = vunpack.i.l.s16 %v1392
  %v2207 = vunpack.i.h.s16 %v1392
  %v2208 = vunpack.i.l.s16 %v1400
  %v2209 = vunpack.i.h.s16 %v1400
  %v2210 = vunpack.i.l.s16 %v1402
  %v2211 = vunpack.i.h.s16 %v1402
  %v2212 = vunpack.i.l.s16 %v1385
  %v2213 = vunpack.i.h.s16 %v1385
  %v2214 = vunpack.i.l.s16 %v1399
  %v2215 = vunpack.i.h.s16 %v1399
  %v2216 = vunpack.i.l.s16 %v1401
  %v2217 = vunpack.i.h.s16 %v1401
  %v2218 = vunpack.i.l.s16 %v1403
  %v2219 = vunpack.i.h.s16 %v1403
  %v2220 = vunpack.i.l.s16 %v1427
  %v2221 = vunpack.i.h.s16 %v1427
  %v2222 = vunpack.i.l.s16 %v1441
  %v2223 = vunpack.i.h.s16 %v1441
  %v2224 = vunpack.i.l.s16 %v1449
  %v2225 = vunpack.i.h.s16 %v1449
  %v2226 = vunpack.i.l.s16 %v1451
  %v2227 = vunpack.i.h.s16 %v1451
  %v2228 = vunpack.i.l.s16 %v1434
  %v2229 = vunpack.i.h.s16 %v1434
  %v2230 = vunpack.i.l.s16 %v1448
  %v2231 = vunpack.i.h.s16 %v1448
  %v2232 = vunpack.i.l.s16 %v1450
  %v2233 = vunpack.i.h.s16 %v1450
  %v2234 = vunpack.i.l.s16 %v1452
  %v2235 = vunpack.i.h.s16 %v1452
  %v2236 = vunpack.i.l.s16 %v1476
  %v2237 = vunpack.i.h.s16 %v1476
  %v2238 = vunpack.i.l.s16 %v1490
  %v2239 = vunpack.i.h.s16 %v1490
  %v2240 = vunpack.i.l.s16 %v1498
  %v2241 = vunpack.i.h.s16 %v1498
  %v2242 = vunpack.i.l.s16 %v1500
  %v2243 = vunpack.i.h.s16 %v1500
  %v2244 = vunpack.i.l.s16 %v1483
  %v2245 = vunpack.i.h.s16 %v1483
  %v2246 = vunpack.i.l.s16 %v1497
  %v2247 = vunpack.i.h.s16 %v1497
  %v2248 = vunpack.i.l.s16 %v1499
  %v2249 = vunpack.i.h.s16 %v1499
  %v2250 = vunpack.i.l.s16 %v1501
  %v2251 = vunpack.i.h.s16 %v1501
  %v2252 = vunpack.i.l.s16 %v1525
  %v2253 = vunpack.i.h.s16 %v1525
  %v2254 = vunpack.i.l.s16 %v1539
  %v2255 = vunpack.i.h.s16 %v1539
  %v2256 = vunpack.i.l.s16 %v1547
  %v2257 = vunpack.i.h.s16 %v1547
  %v2258 = vunpack.i.l.s16 %v1549
  %v2259 = vunpack.i.h.s16 %v1549
  %v2260 = vunpack.i.l.s16 %v1532
  %v2261 = vunpack.i.h.s16 %v1532
  %v2262 = vunpack.i.l.s16 %v1546
  %v2263 = vunpack.i.h.s16 %v1546
  %v2264 = vunpack.i.l.s16 %v1548
  %v2265 = vunpack.i.h.s16 %v1548
  %v2266 = vunpack.i.l.s16 %v1550
  %v2267 = vunpack.i.h.s16 %v1550
  %v2268 = vunpack.i.l.s16 %v1574
  %v2269 = vunpack.i.h.s16 %v1574
  %v2270 = vunpack.i.l.s16 %v1588
  %v2271 = vunpack.i.h.s16 %v1588
  %v2272 = vunpack.i.l.s16 %v1596
  %v2273 = vunpack.i.h.s16 %v1596
  %v2274 = vunpack.i.l.s16 %v1598
  %v2275 = vunpack.i.h.s16 %v1598
  %v2276 = vunpack.i.l.s16 %v1581
  %v2277 = vunpack.i.h.s16 %v1581
  %v2278 = vunpack.i.l.s16 %v1595
  %v2279 = vunpack.i.h.s16 %v1595
  %v2280 = vunpack.i.l.s16 %v1597
  %v2281 = vunpack.i.h.s16 %v1597
  %v2282 = vunpack.i.l.s16 %v1599
  %v2283 = vunpack.i.h.s16 %v1599
  %v2284 = vunpack.i.l.s16 %v1623
  %v2285 = vunpack.i.h.s16 %v1623
  %v2286 = vunpack.i.l.s16 %v1637
  %v2287 = vunpack.i.h.s16 %v1637
  %v2288 = vunpack.i.l.s16 %v1645
  %v2289 = vunpack.i.h.s16 %v1645
  %v2290 = vunpack.i.l.s16 %v1647
  %v2291 = vunpack.i.h.s16 %v1647
  %v2292 = vunpack.i.l.s16 %v1630
  %v2293 = vunpack.i.h.s16 %v1630
  %v2294 = vunpack.i.l.s16 %v1644
  %v2295 = vunpack.i.h.s16 %v1644
  %v2296 = vunpack.i.l.s16 %v1646
  %v2297 = vunpack.i.h.s16 %v1646
  %v2298 = vunpack.i.l.s16 %v1648
  %v2299 = vunpack.i.h.s16 %v1648
  %v2300 = vunpack.i.l.s16 %v1672
  %v2301 = vunpack.i.h.s16 %v1672
  %v2302 = vunpack.i.l.s16 %v1686
  %v2303 = vunpack.i.h.s16 %v1686
  %v2304 = vunpack.i.l.s16 %v1694
  %v2305 = vunpack.i.h.s16 %v1694
  %v2306 = vunpack.i.l.s16 %v1696
  %v2307 = vunpack.i.h.s16 %v1696
  %v2308 = vunpack.i.l.s16 %v1679
  %v2309 = vunpack.i.h.s16 %v1679
  %v2310 = vunpack.i.l.s16 %v1693
  %v2311 = vunpack.i.h.s16 %v1693
  %v2312 = vunpack.i.l.s16 %v1695
  %v2313 = vunpack.i.h.s16 %v1695
  %v2314 = vunpack.i.l.s16 %v1697
  %v2315 = vunpack.i.h.s16 %v1697
  %v2316 = vunpack.i.l.s16 %v1721
  %v2317 = vunpack.i.h.s16 %v1721
  %v2318 = vunpack.i.l.s16 %v1735
  %v2319 = vunpack.i.h.s16 %v1735
  %v2320 = vunpack.i.l.s16 %v1743
  %v2321 = vunpack.i.h.s16 %v1743
  %v2322 = vunpack.i.l.s16 %v1745
  %v2323 = vunpack.i.h.s16 %v1745
  %v2324 = vunpack.i.l.s16 %v1728
  %v2325 = vunpack.i.h.s16 %v1728
  %v2326 = vunpack.i.l.s16 %v1742
  %v2327 = vunpack.i.h.s16 %v1742
  %v2328 = vunpack.i.l.s16 %v1744
  %v2329 = vunpack.i.h.s16 %v1744
  %v2330 = vunpack.i.l.s16 %v1746
  %v2331 = vunpack.i.h.s16 %v1746
  %v2332 = vunpack.i.l.s16 %v1770
  %v2333 = vunpack.i.h.s16 %v1770
  %v2334 = vunpack.i.l.s16 %v1784
  %v2335 = vunpack.i.h.s16 %v1784
  %v2336 = vunpack.i.l.s16 %v1792
  %v2337 = vunpack.i.h.s16 %v1792
  %v2338 = vunpack.i.l.s16 %v1794
  %v2339 = vunpack.i.h.s16 %v1794
  %v2340 = vunpack.i.l.s16 %v1777
  %v2341 = vunpack.i.h.s16 %v1777
  %v2342 = vunpack.i.l.s16 %v1791
  %v2343 = vunpack.i.h.s16 %v1791
  %v2344 = vunpack.i.l.s16 %v1793
  %v2345 = vunpack.i.h.s16 %v1793
  %v2346 = vunpack.i.l.s16 %v1795
  %v2347 = vunpack.i.h.s16 %v1795
  %v2348 = vunpack.i.l.s16 %v1819
  %v2349 = vunpack.i.h.s16 %v1819
  %v2350 = vunpack.i.l.s16 %v1833
  %v2351 = vunpack.i.h.s16 %v1833
  %v2352 = vunpack.i.l.s16 %v1841
  %v2353 = vunpack.i.h.s16 %v1841
  %v2354 = vunpack.i.l.s16 %v1843
  %v2355 = vunpack.i.h.s16 %v1843
  %v2356 = vunpack.i.l.s16 %v1826
  %v2357 = vunpack.i.h.s16 %v1826
  %v2358 = vunpack.i.l.s16 %v1840
  %v2359 = vunpack.i.h.s16 %v1840
  %v2360 = vunpack.i.l.s16 %v1842
  %v2361 = vunpack.i.h.s16 %v1842
  %v2362 = vunpack.i.l.s16 %v1844
  %v2363 = vunpack.i.h.s16 %v1844
  %v2364 = vunpack.i.l.s16 %v1868
  %v2365 = vunpack.i.h.s16 %v1868
  %v2366 = vunpack.i.l.s16 %v1882
  %v2367 = vunpack.i.h.s16 %v1882
  %v2368 = vunpack.i.l.s16 %v1890
  %v2369 = vunpack.i.h.s16 %v1890
  %v2370 = vunpack.i.l.s16 %v1892
  %v2371 = vunpack.i.h.s16 %v1892
  %v2372 = vunpack.i.l.s16 %v1875
  %v2373 = vunpack.i.h.s16 %v1875
  %v2374 = vunpack.i.l.s16 %v1889
  %v2375 = vunpack.i.h.s16 %v1889
  %v2376 = vunpack.i.l.s16 %v1891
  %v2377 = vunpack.i.h.s16 %v1891
  %v2378 = vunpack.i.l.s16 %v1893
  %v2379 = vunpack.i.h.s16 %v1893
  %v2380 = vunpack.i.l.s16 %v1917
  %v2381 = vunpack.i.h.s16 %v1917
  %v2382 = vunpack.i.l.s16 %v1931
  %v2383 = vunpack.i.h.s16 %v1931
  %v2384 = vunpack.i.l.s16 %v1939
  %v2385 = vunpack.i.h.s16 %v1939
  %v2386 = vunpack.i.l.s16 %v1941
  %v2387 = vunpack.i.h.s16 %v1941
  %v2388 = vunpack.i.l.s16 %v1924
  %v2389 = vunpack.i.h.s16 %v1924
  %v2390 = vunpack.i.l.s16 %v1938
  %v2391 = vunpack.i.h.s16 %v1938
  %v2392 = vunpack.i.l.s16 %v1940
  %v2393 = vunpack.i.h.s16 %v1940
  %v2394 = vunpack.i.l.s16 %v1942
  %v2395 = vunpack.i.h.s16 %v1942
  %v2396 = vunpack.i.l.s16 %v1966
  %v2397 = vunpack.i.h.s16 %v1966
  %v2398 = vunpack.i.l.s16 %v1980
  %v2399 = vunpack.i.h.s16 %v1980
  %v2400 = vunpack.i.l.s16 %v1988
  %v2401 = vunpack.i.h.s16 %v1988
  %v2402 = vunpack.i.l.s16 %v1990
  %v2403 = vunpack.i.h.s16 %v1990
  %v2404 = vunpack.i.l.s16 %v1973
  %v2405 = vunpack.i.h.s16 %v1973
  %v2406 = vunpack.i.l.s16 %v1987
  %v2407 = vunpack.i.h.s16 %v1987
  %v2408 = vunpack.i.l.s16 %v1989
  %v2409 = vunpack.i.h.s16 %v1989
  %v2410 = vunpack.i.l.s16 %v1991
  %v2411 = vunpack.i.h.s16 %v1991
  %v2412 = vunpack.i.l.s16 %v2015
  %v2413 = vunpack.i.h.s16 %v2015
  %v2414 = vunpack.i.l.s16 %v2029
  %v2415 = vunpack.i.h.s16 %v2029
  %v2416 = vunpack.i.l.s16 %v2037
  %v2417 = vunpack.i.h.s16 %v2037
  %v2418 = vunpack.i.l.s16 %v2039
  %v2419 = vunpack.i.h.s16 %v2039
  %v2420 = vunpack.i.l.s16 %v2022
  %v2421 = vunpack.i.h.s16 %v2022
  %v2422 = vunpack.i.l.s16 %v2036
  %v2423 = vunpack.i.h.s16 %v2036
  %v2424 = vunpack.i.l.s16 %v2038
  %v2425 = vunpack.i.h.s16 %v2038
  %v2426 = vunpack.i.l.s16 %v2040
  %v2427 = vunpack.i.h.s16 %v2040
  %v2428 = vunpack.i.l.s16 %v2064
  %v2429 = vunpack.i.h.s16 %v2064
  %v2430 = vunpack.i.l.s16 %v2078
  %v2431 = vunpack.i.h.s16 %v2078
  %v2432 = vunpack.i.l.s16 %v2086
  %v2433 = vunpack.i.h.s16 %v2086
  %v2434 = vunpack.i.l.s16 %v2088
  %v2435 = vunpack.i.h.s16 %v2088
  %v2436 = vunpack.i.l.s16 %v2071
  %v2437 = vunpack.i.h.s16 %v2071
  %v2438 = vunpack.i.l.s16 %v2085
  %v2439 = vunpack.i.h.s16 %v2085
  %v2440 = vunpack.i.l.s16 %v2087
  %v2441 = vunpack.i.h.s16 %v2087
  %v2442 = vunpack.i.l.s16 %v2089
  %v2443 = vunpack.i.h.s16 %v2089
  %v2444 = vunpack.i.l.s16 %v2113
  %v2445 = vunpack.i.h.s16 %v2113
  %v2446 = vunpack.i.l.s16 %v2127
  %v2447 = vunpack.i.h.s16 %v2127
  %v2448 = vunpack.i.l.s16 %v2135
  %v2449 = vunpack.i.h.s16 %v2135
  %v2450 = vunpack.i.l.s16 %v2137
  %v2451 = vunpack.i.h.s16 %v2137
  %v2452 = vunpack.i.l.s16 %v2120
  %v2453 = vunpack.i.h.s16 %v2120
  %v2454 = vunpack.i.l.s16 %v2134
  %v2455 = vunpack.i.h.s16 %v2134
  %v2456 = vunpack.i.l.s16 %v2136
  %v2457 = vunpack.i.h.s16 %v2136
  %v2458 = vunpack.i.l.s16 %v2138
  %v2459 = vunpack.i.h.s16 %v2138
  %v2460 = vunpack.i.l.s16 %v2162
  %v2461 = vunpack.i.h.s16 %v2162
  %v2462 = vunpack.i.l.s16 %v2176
  %v2463 = vunpack.i.h.s16 %v2176
  %v2464 = vunpack.i.l.s16 %v2184
  %v2465 = vunpack.i.h.s16 %v2184
  %v2466 = vunpack.i.l.s16 %v2186
  %v2467 = vunpack.i.h.s16 %v2186
  %v2468 = vunpack.i.l.s16 %v2169
  %v2469 = vunpack.i.h.s16 %v2169
  %v2470 = vunpack.i.l.s16 %v2183
  %v2471 = vunpack.i.h.s16 %v2183
  %v2472 = vunpack.i.l.s16 %v2185
  %v2473 = vunpack.i.h.s16 %v2185
  %v2474 = vunpack.i.l.s16 %v2187
  %v2475 = vunpack.i.h.s16 %v2187
  %v2476 = vpack.i.b16 %v2189, %v2188
  %v2477 = vpack.i.b16 %v2191, %v2190
  %v2478 = vpack.i.b16 %v2193, %v2192
  %v2479 = vpack.i.b16 %v2195, %v2194
  %v2481 = vpack.i.b16 %v2198, %v2197
  %v2482 = vpack.i.b16 %v2200, %v2199
  %v2483 = vpack.i.b16 %v2202, %v2201
  %v2484 = vpack.i.b16 %v2204, %v2203
  %v2486 = vpack.i.b16 %v2207, %v2206
  %v2487 = vpack.i.b16 %v2209, %v2208
  %v2488 = vpack.i.b16 %v2211, %v2210
  %v2489 = vpack.i.b16 %v2213, %v2212
  %v2491 = vpack.i.b16 %v2216, %v2215
  %v2492 = vpack.i.b16 %v2218, %v2217
  %v2493 = vpack.i.b16 %v2220, %v2219
  %v2494 = vpack.i.b16 %v2222, %v2221
  %v2496 = vpack.i.b16 %v2225, %v2224
  %v2497 = vpack.i.b16 %v2227, %v2226
  %v2498 = vpack.i.b16 %v2229, %v2228
  %v2499 = vpack.i.b16 %v2231, %v2230
  %v2501 = vpack.i.b16 %v2234, %v2233
  %v2502 = vpack.i.b16 %v2236, %v2235
  %v2503 = vpack.i.b16 %v2238, %v2237
  %v2504 = vpack.i.b16 %v2240, %v2239
  %v2506 = vpack.i.b16 %v2243, %v2242
  %v2507 = vpack.i.b16 %v2245, %v2244
  %v2508 = vpack.i.b16 %v2247, %v2246
  %v2509 = vpack.i.b16 %v2249, %v2248
  %v2511 = vpack.i.b16 %v2252, %v2251
  %v2512 = vpack.i.b16 %v2254, %v2253
  %v2513 = vpack.i.b16 %v2256, %v2255
  %v2514 = vpack.i.b16 %v2258, %v2257
  %v2516 = vpack.i.b16 %v2261, %v2260
  %v2517 = vpack.i.b16 %v2263, %v2262
  %v2518 = vpack.i.b16 %v2265, %v2264
  %v2519 = vpack.i.b16 %v2267, %v2266
  %v2521 = vpack.i.b16 %v2270, %v2269
  %v2522 = vpack.i.b16 %v2272, %v2271
  %v2523 = vpack.i.b16 %v2274, %v2273
  %v2524 = vpack.i.b16 %v2276, %v2275
  %v2526 = vpack.i.b16 %v2279, %v2278
  %v2527 = vpack.i.b16 %v2281, %v2280
  %v2528 = vpack.i.b16 %v2283, %v2282
  %v2529 = vpack.i.b16 %v2285, %v2284
  %v2531 = vpack.i.b16 %v2288, %v2287
  %v2532 = vpack.i.b16 %v2290, %v2289
  %v2533 = vpack.i.b16 %v2292, %v2291
  %v2534 = vpack.i.b16 %v2294, %v2293
  %v2536 = vpack.i.b16 %v2297, %v2296
  %v2537 = vpack.i.b16 %v2299, %v2298
  %v2538 = vpack.i.b16 %v2301, %v2300
  %v2539 = vpack.i.b16 %v2303, %v2302
  %v2541 = vpack.i.b16 %v2306, %v2305
  %v2542 = vpack.i.b16 %v2308, %v2307
  %v2543 = vpack.i.b16 %v2310, %v2309
  %v2544 = vpack.i.b16 %v2312, %v2311
  %v2546 = vpack.i.b16 %v2315, %v2314
  %v2547 = vpack.i.b16 %v2317, %v2316
  %v2548 = vpack.i.b16 %v2319, %v2318
  %v2549 = vpack.i.b16 %v2321, %v2320
  %v2551 = vpack.i.b16 %v2324, %v2323
  %v2552 = vpack.i.b16 %v2326, %v2325
  %v2553 = vpack.i.b16 %v2328, %v2327
  %v2554 = vpack.i.b16 %v2330, %v2329
  %v2556 = vpack.i.b16 %v2333, %v2332
  %v2557 = vpack.i.b16 %v2335, %v2334
  %v2558 = vpack.i.b16 %v2337, %v2336
  %v2559 = vpack.i.b16 %v2339, %v2338
  %v2561 = vpack.i.b16 %v2342, %v2341
  %v2562 = vpack.i.b16 %v2344, %v2343
  %v2563 = vpack.i.b16 %v2346, %v2345
  %v2564 = vpack.i.b16 %v2348, %v2347
  %v2566 = vpack.i.b16 %v2351, %v2350
  %v2567 = vpack.i.b16 %v2353, %v2352
  %v2568 = vpack.i.b16 %v2355, %v2354
  %v2569 = vpack.i.b16 %v2357, %v2356
  %v2571 = vpack.i.b16 %v2360, %v2359
  %v2572 = vpack.i.b16 %v2362, %v2361
  %v2573 = vpack.i.b16 %v2364, %v2363
  %v2574 = vpack.i.b16 %v2366, %v2365
  %v2576 = vpack.i.b16 %v2369, %v2368
  %v2577 = vpack.i.b16 %v2371, %v2370
  %v2578 = vpack.i.b16 %v2373, %v2372
  %v2579 = vpack.i.b16 %v2375, %v2374
  %v2581 = vpack.i.b16 %v2378, %v2377
  %v2582 = vpack.i.b16 %v2380, %v2379
  %v2583 = vpack.i.b16 %v2382, %v2381
  %v2584 = vpack.i.b16 %v2384, %v2383
  %v2586 = vpack.i.b16 %v2387, %v2386
  %v2587 = vpack.i.b16 %v2389, %v2388
  %v2588 = vpack.i.b16 %v2391, %v2390
  %v2589 = vpack.i.b16 %v2393, %v2392
  %v2591 = vpack.i.b16 %v2396, %v2395
  %v2592 = vpack.i.b16 %v2398, %v2397
  %v2593 = vpack.i.b16 %v2400, %v2399
  %v2594 = vpack.i.b16 %v2402, %v2401
  %v2596 = vpack.i.b16 %v2405, %v2404
  %v2597 = vpack.i.b16 %v2407, %v2406
  %v2598 = vpack.i.b16 %v2409, %v2408
  %v2599 = vpack.i.b16 %v2411, %v2410
  %v2601 = vpack.i.b16 %v2414, %v2413
  %v2602 = vpack.i.b16 %v2416, %v2415
  %v2603 = vpack.i.b16 %v2418, %v2417
  %v2604 = vpack.i.b16 %v2420, %v2419
  %v2606 = vpack.i.b16 %v2423, %v2422
  %v2607 = vpack.i.b16 %v2425, %v2424
  %v2608 = vpack.i.b16 %v2427, %v2426
  %v2609 = vpack.i.b16 %v2429, %v2428
  %v2611 = vpack.i.b16 %v2432, %v2431
  %v2612 = vpack.i.b16 %v2434, %v2433
  %v2613 = vpack.i.b16 %v2436, %v2435
  %v2614 = vpack.i.b16 %v2438, %v2437
  %v2616 = vpack.i.b16 %v2441, %v2440
  %v2617 = vpack.i.b16 %v2443, %v2442
  %v2618 = vpack.i.b16 %v2445, %v2444
  %v2619 = vpack.i.b16 %v2447, %v2446
  %v2621 = vpack.i.b16 %v2450, %v2449
  %v2622 = vpack.i.b16 %v2452, %v2451
  %v2623 = vpack.i.b16 %v2454, %v2453
  %v2624 = vpack.i.b16 %v2456, %v2455
  %v2626 = vpack.i.b16 %v2459, %v2458
  %v2627 = vpack.i.b16 %v2461, %v2460
  %v2628 = vpack.i.b16 %v2463, %v2462
  %v2629 = vpack.i.b16 %v2465, %v2464
  %v2631 = vpack.i.b16 %v2468, %v2467
  %v2632 = vpack.i.b16 %v2470, %v2469
  %v2633 = vpack.i.b16 %v2472, %v2471
  %v2634 = vpack.i.b16 %v2474, %v2473
  %v2636 = vcombine.low %v2476, %v2478
  %v2637 = vcombine.low %v2477, %v2479
  %v2639 = vunpack.c.l.s4 1935823168
  %v2640 = vunpack.c.0.s8 %v2639
  %v2641 = vlaneseq
  %v2642 = vshrl.u32 %v2641, 7
  %v2643 = vsub.s32 %v2640, %v2642
  %v2644 = vrot.slane %v2636, %v2643
  %v2646 = vunpack.c.l.s4 1935823168
  %v2647 = vunpack.c.0.s8 %v2646
  %v2648 = vlaneseq
  %v2649 = vshrl.u32 %v2648, 7
  %v2650 = vsub.s32 %v2647, %v2649
  %v2651 = vrot.slane %v2637, %v2650
  %v2652 = vcombine.low %v2644, %v2651
  %v2654 = vunpack.c.l.s4 1935823168
  %v2655 = vunpack.c.0.s8 %v2654
  %v2656 = vlaneseq
  %v2657 = vshrl.u32 %v2656, 7
  %v2658 = vsub.s32 %v2655, %v2657
  %v2659 = vrot.slane %v2652, %v2658
  %v2661 = vunpack.c.l.s4 1935823168
  %v2662 = vunpack.c.0.s8 %v2661
  %v2663 = vlaneseq
  %v2664 = vshrl.u32 %v2663, 7
  %v2665 = vsub.s32 %v2662, %v2664
  %v2666 = vrot.slane %v2196, %v2665
  %v2668 = vunpack.c.l.s4 1935823168
  %v2669 = vunpack.c.0.s8 %v2668
  %v2670 = vlaneseq
  %v2671 = vshrl.u32 %v2670, 7
  %v2672 = vsub.s32 %v2669, %v2671
  %v2673 = vrot.slane %v2666, %v2672
  %v2674 = vcombine.low %v2481, %v2483
  %v2675 = vcombine.low %v2482, %v2484
  %v2677 = vunpack.c.l.s4 1935823168
  %v2678 = vunpack.c.0.s8 %v2677
  %v2679 = vlaneseq
  %v2680 = vshrl.u32 %v2679, 7
  %v2681 = vsub.s32 %v2678, %v2680
  %v2682 = vrot.slane %v2674, %v2681
  %v2684 = vunpack.c.l.s4 1935823168
  %v2685 = vunpack.c.0.s8 %v2684
  %v2686 = vlaneseq
  %v2687 = vshrl.u32 %v2686, 7
  %v2688 = vsub.s32 %v2685, %v2687
  %v2689 = vrot.slane %v2675, %v2688
  %v2690 = vcombine.low %v2682, %v2689
  %v2692 = vunpack.c.l.s4 1935823168
  %v2693 = vunpack.c.0.s8 %v2692
  %v2694 = vlaneseq
  %v2695 = vshrl.u32 %v2694, 7
  %v2696 = vsub.s32 %v2693, %v2695
  %v2697 = vrot.slane %v2690, %v2696
  %v2699 = vunpack.c.l.s4 1935823168
  %v2700 = vunpack.c.0.s8 %v2699
  %v2701 = vlaneseq
  %v2702 = vshrl.u32 %v2701, 7
  %v2703 = vsub.s32 %v2700, %v2702
  %v2704 = vrot.slane %v2205, %v2703
  %v2706 = vunpack.c.l.s4 1935823168
  %v2707 = vunpack.c.0.s8 %v2706
  %v2708 = vlaneseq
  %v2709 = vshrl.u32 %v2708, 7
  %v2710 = vsub.s32 %v2707, %v2709
  %v2711 = vrot.slane %v2704, %v2710
  %v2712 = vcombine.low %v2486, %v2488
  %v2713 = vcombine.low %v2487, %v2489
  %v2715 = vunpack.c.l.s4 1935823168
  %v2716 = vunpack.c.0.s8 %v2715
  %v2717 = vlaneseq
  %v2718 = vshrl.u32 %v2717, 7
  %v2719 = vsub.s32 %v2716, %v2718
  %v2720 = vrot.slane %v2712, %v2719
  %v2722 = vunpack.c.l.s4 1935823168
  %v2723 = vunpack.c.0.s8 %v2722
  %v2724 = vlaneseq
  %v2725 = vshrl.u32 %v2724, 7
  %v2726 = vsub.s32 %v2723, %v2725
  %v2727 = vrot.slane %v2713, %v2726
  %v2728 = vcombine.low %v2720, %v2727
  %v2730 = vunpack.c.l.s4 1935823168
  %v2731 = vunpack.c.0.s8 %v2730
  %v2732 = vlaneseq
  %v2733 = vshrl.u32 %v2732, 7
  %v2734 = vsub.s32 %v2731, %v2733
  %v2735 = vrot.slane %v2728, %v2734
  %v2737 = vunpack.c.l.s4 1935823168
  %v2738 = vunpack.c.0.s8 %v2737
  %v2739 = vlaneseq
  %v2740 = vshrl.u32 %v2739, 7
  %v2741 = vsub.s32 %v2738, %v2740
  %v2742 = vrot.slane %v2214, %v2741
  %v2744 = vunpack.c.l.s4 1935823168
  %v2745 = vunpack.c.0.s8 %v2744
  %v2746 = vlaneseq
  %v2747 = vshrl.u32 %v2746, 7
  %v2748 = vsub.s32 %v2745, %v2747
  %v2749 = vrot.slane %v2742, %v2748
  %v2750 = vcombine.low %v2491, %v2493
  %v2751 = vcombine.low %v2492, %v2494
  %v2753 = vunpack.c.l.s4 1935823168
  %v2754 = vunpack.c.0.s8 %v2753
  %v2755 = vlaneseq
  %v2756 = vshrl.u32 %v2755, 7
  %v2757 = vsub.s32 %v2754, %v2756
  %v2758 = vrot.slane %v2750, %v2757
  %v2760 = vunpack.c.l.s4 1935823168
  %v2761 = vunpack.c.0.s8 %v2760
  %v2762 = vlaneseq
  %v2763 = vshrl.u32 %v2762, 7
  %v2764 = vsub.s32 %v2761, %v2763
  %v2765 = vrot.slane %v2751, %v2764
  %v2766 = vcombine.low %v2758, %v2765
  %v2768 = vunpack.c.l.s4 1935823168
  %v2769 = vunpack.c.0.s8 %v2768
  %v2770 = vlaneseq
  %v2771 = vshrl.u32 %v2770, 7
  %v2772 = vsub.s32 %v2769, %v2771
  %v2773 = vrot.slane %v2766, %v2772
  %v2775 = vunpack.c.l.s4 1935823168
  %v2776 = vunpack.c.0.s8 %v2775
  %v2777 = vlaneseq
  %v2778 = vshrl.u32 %v2777, 7
  %v2779 = vsub.s32 %v2776, %v2778
  %v2780 = vrot.slane %v2223, %v2779
  %v2782 = vunpack.c.l.s4 1935823168
  %v2783 = vunpack.c.0.s8 %v2782
  %v2784 = vlaneseq
  %v2785 = vshrl.u32 %v2784, 7
  %v2786 = vsub.s32 %v2783, %v2785
  %v2787 = vrot.slane %v2780, %v2786
  %v2788 = vcombine.low %v2496, %v2498
  %v2789 = vcombine.low %v2497, %v2499
  %v2791 = vunpack.c.l.s4 1935823168
  %v2792 = vunpack.c.0.s8 %v2791
  %v2793 = vlaneseq
  %v2794 = vshrl.u32 %v2793, 7
  %v2795 = vsub.s32 %v2792, %v2794
  %v2796 = vrot.slane %v2788, %v2795
  %v2798 = vunpack.c.l.s4 1935823168
  %v2799 = vunpack.c.0.s8 %v2798
  %v2800 = vlaneseq
  %v2801 = vshrl.u32 %v2800, 7
  %v2802 = vsub.s32 %v2799, %v2801
  %v2803 = vrot.slane %v2789, %v2802
  %v2804 = vcombine.low %v2796, %v2803
  %v2806 = vunpack.c.l.s4 1935823168
  %v2807 = vunpack.c.0.s8 %v2806
  %v2808 = vlaneseq
  %v2809 = vshrl.u32 %v2808, 7
  %v2810 = vsub.s32 %v2807, %v2809
  %v2811 = vrot.slane %v2804, %v2810
  %v2813 = vunpack.c.l.s4 1935823168
  %v2814 = vunpack.c.0.s8 %v2813
  %v2815 = vlaneseq
  %v2816 = vshrl.u32 %v2815, 7
  %v2817 = vsub.s32 %v2814, %v2816
  %v2818 = vrot.slane %v2232, %v2817
  %v2820 = vunpack.c.l.s4 1935823168
  %v2821 = vunpack.c.0.s8 %v2820
  %v2822 = vlaneseq
  %v2823 = vshrl.u32 %v2822, 7
  %v2824 = vsub.s32 %v2821, %v2823
  %v2825 = vrot.slane %v2818, %v2824
  %v2826 = vcombine.low %v2501, %v2503
  %v2827 = vcombine.low %v2502, %v2504
  %v2829 = vunpack.c.l.s4 1935823168
  %v2830 = vunpack.c.0.s8 %v2829
  %v2831 = vlaneseq
  %v2832 = vshrl.u32 %v2831, 7
  %v2833 = vsub.s32 %v2830, %v2832
  %v2834 = vrot.slane %v2826, %v2833
  %v2836 = vunpack.c.l.s4 1935823168
  %v2837 = vunpack.c.0.s8 %v2836
  %v2838 = vlaneseq
  %v2839 = vshrl.u32 %v2838, 7
  %v2840 = vsub.s32 %v2837, %v2839
  %v2841 = vrot.slane %v2827, %v2840
  %v2842 = vcombine.low %v2834, %v2841
  %v2844 = vunpack.c.l.s4 1935823168
  %v2845 = vunpack.c.0.s8 %v2844
  %v2846 = vlaneseq
  %v2847 = vshrl.u32 %v2846, 7
  %v2848 = vsub.s32 %v2845, %v2847
  %v2849 = vrot.slane %v2842, %v2848
  %v2851 = vunpack.c.l.s4 1935823168
  %v2852 = vunpack.c.0.s8 %v2851
  %v2853 = vlaneseq
  %v2854 = vshrl.u32 %v2853, 7
  %v2855 = vsub.s32 %v2852, %v2854
  %v2856 = vrot.slane %v2241, %v2855
  %v2858 = vunpack.c.l.s4 1935823168
  %v2859 = vunpack.c.0.s8 %v2858
  %v2860 = vlaneseq
  %v2861 = vshrl.u32 %v2860, 7
  %v2862 = vsub.s32 %v2859, %v2861
  %v2863 = vrot.slane %v2856, %v2862
  %v2864 = vcombine.low %v2506, %v2508
  %v2865 = vcombine.low %v2507, %v2509
  %v2867 = vunpack.c.l.s4 1935823168
  %v2868 = vunpack.c.0.s8 %v2867
  %v2869 = vlaneseq
  %v2870 = vshrl.u32 %v2869, 7
  %v2871 = vsub.s32 %v2868, %v2870
  %v2872 = vrot.slane %v2864, %v2871
  %v2874 = vunpack.c.l.s4 1935823168
  %v2875 = vunpack.c.0.s8 %v2874
  %v2876 = vlaneseq
  %v2877 = vshrl.u32 %v2876, 7
  %v2878 = vsub.s32 %v2875, %v2877
  %v2879 = vrot.slane %v2865, %v2878
  %v2880 = vcombine.low %v2872, %v2879
  %v2882 = vunpack.c.l.s4 1935823168
  %v2883 = vunpack.c.0.s8 %v2882
  %v2884 = vlaneseq
  %v2885 = vshrl.u32 %v2884, 7
  %v2886 = vsub.s32 %v2883, %v2885
  %v2887 = vrot.slane %v2880, %v2886
  %v2889 = vunpack.c.l.s4 1935823168
  %v2890 = vunpack.c.0.s8 %v2889
  %v2891 = vlaneseq
  %v2892 = vshrl.u32 %v2891, 7
  %v2893 = vsub.s32 %v2890, %v2892
  %v2894 = vrot.slane %v2250, %v2893
  %v2896 = vunpack.c.l.s4 1935823168
  %v2897 = vunpack.c.0.s8 %v2896
  %v2898 = vlaneseq
  %v2899 = vshrl.u32 %v2898, 7
  %v2900 = vsub.s32 %v2897, %v2899
  %v2901 = vrot.slane %v2894, %v2900
  %v2902 = vcombine.low %v2511, %v2513
  %v2903 = vcombine.low %v2512, %v2514
  %v2905 = vunpack.c.l.s4 1935823168
  %v2906 = vunpack.c.0.s8 %v2905
  %v2907 = vlaneseq
  %v2908 = vshrl.u32 %v2907, 7
  %v2909 = vsub.s32 %v2906, %v2908
  %v2910 = vrot.slane %v2902, %v2909
  %v2912 = vunpack.c.l.s4 1935823168
  %v2913 = vunpack.c.0.s8 %v2912
  %v2914 = vlaneseq
  %v2915 = vshrl.u32 %v2914, 7
  %v2916 = vsub.s32 %v2913, %v2915
  %v2917 = vrot.slane %v2903, %v2916
  %v2918 = vcombine.low %v2910, %v2917
  %v2920 = vunpack.c.l.s4 1935823168
  %v2921 = vunpack.c.0.s8 %v2920
  %v2922 = vlaneseq
  %v2923 = vshrl.u32 %v2922, 7
  %v2924 = vsub.s32 %v2921, %v2923
  %v2925 = vrot.slane %v2918, %v2924
  %v2927 = vunpack.c.l.s4 1935823168
  %v2928 = vunpack.c.0.s8 %v2927
  %v2929 = vlaneseq
  %v2930 = vshrl.u32 %v2929, 7
  %v2931 = vsub.s32 %v2928, %v2930
  %v2932 = vrot.slane %v2259, %v2931
  %v2934 = vunpack.c.l.s4 1935823168
  %v2935 = vunpack.c.0.s8 %v2934
  %v2936 = vlaneseq
  %v2937 = vshrl.u32 %v2936, 7
  %v2938 = vsub.s32 %v2935, %v2937
  %v2939 = vrot.slane %v2932, %v2938
  %v2940 = vcombine.low %v2516, %v2518
  %v2941 = vcombine.low %v2517, %v2519
  %v2943 = vunpack.c.l.s4 1935823168
  %v2944 = vunpack.c.0.s8 %v2943
  %v2945 = vlaneseq
  %v2946 = vshrl.u32 %v2945, 7
  %v2947 = vsub.s32 %v2944, %v2946
  %v2948 = vrot.slane %v2940, %v2947
  %v2950 = vunpack.c.l.s4 1935823168
  %v2951 = vunpack.c.0.s8 %v2950
  %v2952 = vlaneseq
  %v2953 = vshrl.u32 %v2952, 7
  %v2954 = vsub.s32 %v2951, %v2953
  %v2955 = vrot.slane %v2941, %v2954
  %v2956 = vcombine.low %v2948, %v2955
  %v2958 = vunpack.c.l.s4 1935823168
  %v2959 = vunpack.c.0.s8 %v2958
  %v2960 = vlaneseq
  %v2961 = vshrl.u32 %v2960, 7
  %v2962 = vsub.s32 %v2959, %v2961
  %v2963 = vrot.slane %v2956, %v2962
  %v2965 = vunpack.c.l.s4 1935823168
  %v2966 = vunpack.c.0.s8 %v2965
  %v2967 = vlaneseq
  %v2968 = vshrl.u32 %v2967, 7
  %v2969 = vsub.s32 %v2966, %v2968
  %v2970 = vrot.slane %v2268, %v2969
  %v2972 = vunpack.c.l.s4 1935823168
  %v2973 = vunpack.c.0.s8 %v2972
  %v2974 = vlaneseq
  %v2975 = vshrl.u32 %v2974, 7
  %v2976 = vsub.s32 %v2973, %v2975
  %v2977 = vrot.slane %v2970, %v2976
  %v2978 = vcombine.low %v2521, %v2523
  %v2979 = vcombine.low %v2522, %v2524
  %v2981 = vunpack.c.l.s4 1935823168
  %v2982 = vunpack.c.0.s8 %v2981
  %v2983 = vlaneseq
  %v2984 = vshrl.u32 %v2983, 7
  %v2985 = vsub.s32 %v2982, %v2984
  %v2986 = vrot.slane %v2978, %v2985
  %v2988 = vunpack.c.l.s4 1935823168
  %v2989 = vunpack.c.0.s8 %v2988
  %v2990 = vlaneseq
  %v2991 = vshrl.u32 %v2990, 7
  %v2992 = vsub.s32 %v2989, %v2991
  %v2993 = vrot.slane %v2979, %v2992
  %v2994 = vcombine.low %v2986, %v2993
  %v2996 = vunpack.c.l.s4 1935823168
  %v2997 = vunpack.c.0.s8 %v2996
  %v2998 = vlaneseq
  %v2999 = vshrl.u32 %v2998, 7
  %v3000 = vsub.s32 %v2997, %v2999
  %v3001 = vrot.slane %v2994, %v3000
  %v3003 = vunpack.c.l.s4 1935823168
  %v3004 = vunpack.c.0.s8 %v3003
  %v3005 = vlaneseq
  %v3006 = vshrl.u32 %v3005, 7
  %v3007 = vsub.s32 %v3004, %v3006
  %v3008 = vrot.slane %v2277, %v3007
  %v3010 = vunpack.c.l.s4 1935823168
  %v3011 = vunpack.c.0.s8 %v3010
  %v3012 = vlaneseq
  %v3013 = vshrl.u32 %v3012, 7
  %v3014 = vsub.s32 %v3011, %v3013
  %v3015 = vrot.slane %v3008, %v3014
  %v3016 = vcombine.low %v2526, %v2528
  %v3017 = vcombine.low %v2527, %v2529
  %v3019 = vunpack.c.l.s4 1935823168
  %v3020 = vunpack.c.0.s8 %v3019
  %v3021 = vlaneseq
  %v3022 = vshrl.u32 %v3021, 7
  %v3023 = vsub.s32 %v3020, %v3022
  %v3024 = vrot.slane %v3016, %v3023
  %v3026 = vunpack.c.l.s4 1935823168
  %v3027 = vunpack.c.0.s8 %v3026
  %v3028 = vlaneseq
  %v3029 = vshrl.u32 %v3028, 7
  %v3030 = vsub.s32 %v3027, %v3029
  %v3031 = vrot.slane %v3017, %v3030
  %v3032 = vcombine.low %v3024, %v3031
  %v3034 = vunpack.c.l.s4 1935823168
  %v3035 = vunpack.c.0.s8 %v3034
  %v3036 = vlaneseq
  %v3037 = vshrl.u32 %v3036, 7
  %v3038 = vsub.s32 %v3035, %v3037
  %v3039 = vrot.slane %v3032, %v3038
  %v3041 = vunpack.c.l.s4 1935823168
  %v3042 = vunpack.c.0.s8 %v3041
  %v3043 = vlaneseq
  %v3044 = vshrl.u32 %v3043, 7
  %v3045 = vsub.s32 %v3042, %v3044
  %v3046 = vrot.slane %v2286, %v3045
  %v3048 = vunpack.c.l.s4 1935823168
  %v3049 = vunpack.c.0.s8 %v3048
  %v3050 = vlaneseq
  %v3051 = vshrl.u32 %v3050, 7
  %v3052 = vsub.s32 %v3049, %v3051
  %v3053 = vrot.slane %v3046, %v3052
  %v3054 = vcombine.low %v2531, %v2533
  %v3055 = vcombine.low %v2532, %v2534
  %v3057 = vunpack.c.l.s4 1935823168
  %v3058 = vunpack.c.0.s8 %v3057
  %v3059 = vlaneseq
  %v3060 = vshrl.u32 %v3059, 7
  %v3061 = vsub.s32 %v3058, %v3060
  %v3062 = vrot.slane %v3054, %v3061
  %v3064 = vunpack.c.l.s4 1935823168
  %v3065 = vunpack.c.0.s8 %v3064
  %v3066 = vlaneseq
  %v3067 = vshrl.u32 %v3066, 7
  %v3068 = vsub.s32 %v3065, %v3067
  %v3069 = vrot.slane %v3055, %v3068
  %v3070 = vcombine.low %v3062, %v3069
  %v3072 = vunpack.c.l.s4 1935823168
  %v3073 = vunpack.c.0.s8 %v3072
  %v3074 = vlaneseq
  %v3075 = vshrl.u32 %v3074, 7
  %v3076 = vsub.s32 %v3073, %v3075
  %v3077 = vrot.slane %v3070, %v3076
  %v3079 = vunpack.c.l.s4 1935823168
  %v3080 = vunpack.c.0.s8 %v3079
  %v3081 = vlaneseq
  %v3082 = vshrl.u32 %v3081, 7
  %v3083 = vsub.s32 %v3080, %v3082
  %v3084 = vrot.slane %v2295, %v3083
  %v3086 = vunpack.c.l.s4 1935823168
  %v3087 = vunpack.c.0.s8 %v3086
  %v3088 = vlaneseq
  %v3089 = vshrl.u32 %v3088, 7
  %v3090 = vsub.s32 %v3087, %v3089
  %v3091 = vrot.slane %v3084, %v3090
  %v3092 = vcombine.low %v2536, %v2538
  %v3093 = vcombine.low %v2537, %v2539
  %v3095 = vunpack.c.l.s4 1935823168
  %v3096 = vunpack.c.0.s8 %v3095
  %v3097 = vlaneseq
  %v3098 = vshrl.u32 %v3097, 7
  %v3099 = vsub.s32 %v3096, %v3098
  %v3100 = vrot.slane %v3092, %v3099
  %v3102 = vunpack.c.l.s4 1935823168
  %v3103 = vunpack.c.0.s8 %v3102
  %v3104 = vlaneseq
  %v3105 = vshrl.u32 %v3104, 7
  %v3106 = vsub.s32 %v3103, %v3105
  %v3107 = vrot.slane %v3093, %v3106
  %v3108 = vcombine.low %v3100, %v3107
  %v3110 = vunpack.c.l.s4 1935823168
  %v3111 = vunpack.c.0.s8 %v3110
  %v3112 = vlaneseq
  %v3113 = vshrl.u32 %v3112, 7
  %v3114 = vsub.s32 %v3111, %v3113
  %v3115 = vrot.slane %v3108, %v3114
  %v3117 = vunpack.c.l.s4 1935823168
  %v3118 = vunpack.c.0.s8 %v3117
  %v3119 = vlaneseq
  %v3120 = vshrl.u32 %v3119, 7
  %v3121 = vsub.s32 %v3118, %v3120
  %v3122 = vrot.slane %v2304, %v3121
  %v3124 = vunpack.c.l.s4 1935823168
  %v3125 = vunpack.c.0.s8 %v3124
  %v3126 = vlaneseq
  %v3127 = vshrl.u32 %v3126, 7
  %v3128 = vsub.s32 %v3125, %v3127
  %v3129 = vrot.slane %v3122, %v3128
  %v3130 = vcombine.low %v2541, %v2543
  %v3131 = vcombine.low %v2542, %v2544
  %v3133 = vunpack.c.l.s4 1935823168
  %v3134 = vunpack.c.0.s8 %v3133
  %v3135 = vlaneseq
  %v3136 = vshrl.u32 %v3135, 7
  %v3137 = vsub.s32 %v3134, %v3136
  %v3138 = vrot.slane %v3130, %v3137
  %v3140 = vunpack.c.l.s4 1935823168
  %v3141 = vunpack.c.0.s8 %v3140
  %v3142 = vlaneseq
  %v3143 = vshrl.u32 %v3142, 7
  %v3144 = vsub.s32 %v3141, %v3143
  %v3145 = vrot.slane %v3131, %v3144
  %v3146 = vcombine.low %v3138, %v3145
  %v3148 = vunpack.c.l.s4 1935823168
  %v3149 = vunpack.c.0.s8 %v3148
  %v3150 = vlaneseq
  %v3151 = vshrl.u32 %v3150, 7
  %v3152 = vsub.s32 %v3149, %v3151
  %v3153 = vrot.slane %v3146, %v3152
  %v3155 = vunpack.c.l.s4 1935823168
  %v3156 = vunpack.c.0.s8 %v3155
  %v3157 = vlaneseq
  %v3158 = vshrl.u32 %v3157, 7
  %v3159 = vsub.s32 %v3156, %v3158
  %v3160 = vrot.slane %v2313, %v3159
  %v3162 = vunpack.c.l.s4 1935823168
  %v3163 = vunpack.c.0.s8 %v3162
  %v3164 = vlaneseq
  %v3165 = vshrl.u32 %v3164, 7
  %v3166 = vsub.s32 %v3163, %v3165
  %v3167 = vrot.slane %v3160, %v3166
  %v3168 = vcombine.low %v2546, %v2548
  %v3169 = vcombine.low %v2547, %v2549
  %v3171 = vunpack.c.l.s4 1935823168
  %v3172 = vunpack.c.0.s8 %v3171
  %v3173 = vlaneseq
  %v3174 = vshrl.u32 %v3173, 7
  %v3175 = vsub.s32 %v3172, %v3174
  %v3176 = vrot.slane %v3168, %v3175
  %v3178 = vunpack.c.l.s4 1935823168
  %v3179 = vunpack.c.0.s8 %v3178
  %v3180 = vlaneseq
  %v3181 = vshrl.u32 %v3180, 7
  %v3182 = vsub.s32 %v3179, %v3181
  %v3183 = vrot.slane %v3169, %v3182
  %v3184 = vcombine.low %v3176, %v3183
  %v3186 = vunpack.c.l.s4 1935823168
  %v3187 = vunpack.c.0.s8 %v3186
  %v3188 = vlaneseq
  %v3189 = vshrl.u32 %v3188, 7
  %v3190 = vsub.s32 %v3187, %v3189
  %v3191 = vrot.slane %v3184, %v3190
  %v3193 = vunpack.c.l.s4 1935823168
  %v3194 = vunpack.c.0.s8 %v3193
  %v3195 = vlaneseq
  %v3196 = vshrl.u32 %v3195, 7
  %v3197 = vsub.s32 %v3194, %v3196
  %v3198 = vrot.slane %v2322, %v3197
  %v3200 = vunpack.c.l.s4 1935823168
  %v3201 = vunpack.c.0.s8 %v3200
  %v3202 = vlaneseq
  %v3203 = vshrl.u32 %v3202, 7
  %v3204 = vsub.s32 %v3201, %v3203
  %v3205 = vrot.slane %v3198, %v3204
  %v3206 = vcombine.low %v2551, %v2553
  %v3207 = vcombine.low %v2552, %v2554
  %v3209 = vunpack.c.l.s4 1935823168
  %v3210 = vunpack.c.0.s8 %v3209
  %v3211 = vlaneseq
  %v3212 = vshrl.u32 %v3211, 7
  %v3213 = vsub.s32 %v3210, %v3212
  %v3214 = vrot.slane %v3206, %v3213
  %v3216 = vunpack.c.l.s4 1935823168
  %v3217 = vunpack.c.0.s8 %v3216
  %v3218 = vlaneseq
  %v3219 = vshrl.u32 %v3218, 7
  %v3220 = vsub.s32 %v3217, %v3219
  %v3221 = vrot.slane %v3207, %v3220
  %v3222 = vcombine.low %v3214, %v3221
  %v3224 = vunpack.c.l.s4 1935823168
  %v3225 = vunpack.c.0.s8 %v3224
  %v3226 = vlaneseq
  %v3227 = vshrl.u32 %v3226, 7
  %v3228 = vsub.s32 %v3225, %v3227
  %v3229 = vrot.slane %v3222, %v3228
  %v3231 = vunpack.c.l.s4 1935823168
  %v3232 = vunpack.c.0.s8 %v3231
  %v3233 = vlaneseq
  %v3234 = vshrl.u32 %v3233, 7
  %v3235 = vsub.s32 %v3232, %v3234
  %v3236 = vrot.slane %v2331, %v3235
  %v3238 = vunpack.c.l.s4 1935823168
  %v3239 = vunpack.c.0.s8 %v3238
  %v3240 = vlaneseq
  %v3241 = vshrl.u32 %v3240, 7
  %v3242 = vsub.s32 %v3239, %v3241
  %v3243 = vrot.slane %v3236, %v3242
  %v3244 = vcombine.low %v2556, %v2558
  %v3245 = vcombine.low %v2557, %v2559
  %v3247 = vunpack.c.l.s4 1935823168
  %v3248 = vunpack.c.0.s8 %v3247
  %v3249 = vlaneseq
  %v3250 = vshrl.u32 %v3249, 7
  %v3251 = vsub.s32 %v3248, %v3250
  %v3252 = vrot.slane %v3244, %v3251
  %v3254 = vunpack.c.l.s4 1935823168
  %v3255 = vunpack.c.0.s8 %v3254
  %v3256 = vlaneseq
  %v3257 = vshrl.u32 %v3256, 7
  %v3258 = vsub.s32 %v3255, %v3257
  %v3259 = vrot.slane %v3245, %v3258
  %v3260 = vcombine.low %v3252, %v3259
  %v3262 = vunpack.c.l.s4 1935823168
  %v3263 = vunpack.c.0.s8 %v3262
  %v3264 = vlaneseq
  %v3265 = vshrl.u32 %v3264, 7
  %v3266 = vsub.s32 %v3263, %v3265
  %v3267 = vrot.slane %v3260, %v3266
  %v3269 = vunpack.c.l.s4 1935823168
  %v3270 = vunpack.c.0.s8 %v3269
  %v3271 = vlaneseq
  %v3272 = vshrl.u32 %v3271, 7
  %v3273 = vsub.s32 %v3270, %v3272
  %v3274 = vrot.slane %v2340, %v3273
  %v3276 = vunpack.c.l.s4 1935823168
  %v3277 = vunpack.c.0.s8 %v3276
  %v3278 = vlaneseq
  %v3279 = vshrl.u32 %v3278, 7
  %v3280 = vsub.s32 %v3277, %v3279
  %v3281 = vrot.slane %v3274, %v3280
  %v3282 = vcombine.low %v2561, %v2563
  %v3283 = vcombine.low %v2562, %v2564
  %v3285 = vunpack.c.l.s4 1935823168
  %v3286 = vunpack.c.0.s8 %v3285
  %v3287 = vlaneseq
  %v3288 = vshrl.u32 %v3287, 7
  %v3289 = vsub.s32 %v3286, %v3288
  %v3290 = vrot.slane %v3282, %v3289
  %v3292 = vunpack.c.l.s4 1935823168
  %v3293 = vunpack.c.0.s8 %v3292
  %v3294 = vlaneseq
  %v3295 = vshrl.u32 %v3294, 7
  %v3296 = vsub.s32 %v3293, %v3295
  %v3297 = vrot.slane %v3283, %v3296
  %v3298 = vcombine.low %v3290, %v3297
  %v3300 = vunpack.c.l.s4 1935823168
  %v3301 = vunpack.c.0.s8 %v3300
  %v3302 = vlaneseq
  %v3303 = vshrl.u32 %v3302, 7
  %v3304 = vsub.s32 %v3301, %v3303
  %v3305 = vrot.slane %v3298, %v3304
  %v3307 = vunpack.c.l.s4 1935823168
  %v3308 = vunpack.c.0.s8 %v3307
  %v3309 = vlaneseq
  %v3310 = vshrl.u32 %v3309, 7
  %v3311 = vsub.s32 %v3308, %v3310
  %v3312 = vrot.slane %v2349, %v3311
  %v3314 = vunpack.c.l.s4 1935823168
  %v3315 = vunpack.c.0.s8 %v3314
  %v3316 = vlaneseq
  %v3317 = vshrl.u32 %v3316, 7
  %v3318 = vsub.s32 %v3315, %v3317
  %v3319 = vrot.slane %v3312, %v3318
  %v3320 = vcombine.low %v2566, %v2568
  %v3321 = vcombine.low %v2567, %v2569
  %v3323 = vunpack.c.l.s4 1935823168
  %v3324 = vunpack.c.0.s8 %v3323
  %v3325 = vlaneseq
  %v3326 = vshrl.u32 %v3325, 7
  %v3327 = vsub.s32 %v3324, %v3326
  %v3328 = vrot.slane %v3320, %v3327
  %v3330 = vunpack.c.l.s4 1935823168
  %v3331 = vunpack.c.0.s8 %v3330
  %v3332 = vlaneseq
  %v3333 = vshrl.u32 %v3332, 7
  %v3334 = vsub.s32 %v3331, %v3333
  %v3335 = vrot.slane %v3321, %v3334
  %v3336 = vcombine.low %v3328, %v3335
  %v3338 = vunpack.c.l.s4 1935823168
  %v3339 = vunpack.c.0.s8 %v3338
  %v3340 = vlaneseq
  %v3341 = vshrl.u32 %v3340, 7
  %v3342 = vsub.s32 %v3339, %v3341
  %v3343 = vrot.slane %v3336, %v3342
  %v3345 = vunpack.c.l.s4 1935823168
  %v3346 = vunpack.c.0.s8 %v3345
  %v3347 = vlaneseq
  %v3348 = vshrl.u32 %v3347, 7
  %v3349 = vsub.s32 %v3346, %v3348
  %v3350 = vrot.slane %v2358, %v3349
  %v3352 = vunpack.c.l.s4 1935823168
  %v3353 = vunpack.c.0.s8 %v3352
  %v3354 = vlaneseq
  %v3355 = vshrl.u32 %v3354, 7
  %v3356 = vsub.s32 %v3353, %v3355
  %v3357 = vrot.slane %v3350, %v3356
  %v3358 = vcombine.low %v2571, %v2573
  %v3359 = vcombine.low %v2572, %v2574
  %v3361 = vunpack.c.l.s4 1935823168
  %v3362 = vunpack.c.0.s8 %v3361
  %v3363 = vlaneseq
  %v3364 = vshrl.u32 %v3363, 7
  %v3365 = vsub.s32 %v3362, %v3364
  %v3366 = vrot.slane %v3358, %v3365
  %v3368 = vunpack.c.l.s4 1935823168
  %v3369 = vunpack.c.0.s8 %v3368
  %v3370 = vlaneseq
  %v3371 = vshrl.u32 %v3370, 7
  %v3372 = vsub.s32 %v3369, %v3371
  %v3373 = vrot.slane %v3359, %v3372
  %v3374 = vcombine.low %v3366, %v3373
  %v3376 = vunpack.c.l.s4 1935823168
  %v3377 = vunpack.c.0.s8 %v3376
  %v3378 = vlaneseq
  %v3379 = vshrl.u32 %v3378, 7
  %v3380 = vsub.s32 %v3377, %v3379
  %v3381 = vrot.slane %v3374, %v3380
  %v3383 = vunpack.c.l.s4 1935823168
  %v3384 = vunpack.c.0.s8 %v3383
  %v3385 = vlaneseq
  %v3386 = vshrl.u32 %v3385, 7
  %v3387 = vsub.s32 %v3384, %v3386
  %v3388 = vrot.slane %v2367, %v3387
  %v3390 = vunpack.c.l.s4 1935823168
  %v3391 = vunpack.c.0.s8 %v3390
  %v3392 = vlaneseq
  %v3393 = vshrl.u32 %v3392, 7
  %v3394 = vsub.s32 %v3391, %v3393
  %v3395 = vrot.slane %v3388, %v3394
  %v3396 = vcombine.low %v2576, %v2578
  %v3397 = vcombine.low %v2577, %v2579
  %v3399 = vunpack.c.l.s4 1935823168
  %v3400 = vunpack.c.0.s8 %v3399
  %v3401 = vlaneseq
  %v3402 = vshrl.u32 %v3401, 7
  %v3403 = vsub.s32 %v3400, %v3402
  %v3404 = vrot.slane %v3396, %v3403
  %v3406 = vunpack.c.l.s4 1935823168
  %v3407 = vunpack.c.0.s8 %v3406
  %v3408 = vlaneseq
  %v3409 = vshrl.u32 %v3408, 7
  %v3410 = vsub.s32 %v3407, %v3409
  %v3411 = vrot.slane %v3397, %v3410
  %v3412 = vcombine.low %v3404, %v3411
  %v3414 = vunpack.c.l.s4 1935823168
  %v3415 = vunpack.c.0.s8 %v3414
  %v3416 = vlaneseq
  %v3417 = vshrl.u32 %v3416, 7
  %v3418 = vsub.s32 %v3415, %v3417
  %v3419 = vrot.slane %v3412, %v3418
  %v3421 = vunpack.c.l.s4 1935823168
  %v3422 = vunpack.c.0.s8 %v3421
  %v3423 = vlaneseq
  %v3424 = vshrl.u32 %v3423, 7
  %v3425 = vsub.s32 %v3422, %v3424
  %v3426 = vrot.slane %v2376, %v3425
  %v3428 = vunpack.c.l.s4 1935823168
  %v3429 = vunpack.c.0.s8 %v3428
  %v3430 = vlaneseq
  %v3431 = vshrl.u32 %v3430, 7
  %v3432 = vsub.s32 %v3429, %v3431
  %v3433 = vrot.slane %v3426, %v3432
  %v3434 = vcombine.low %v2581, %v2583
  %v3435 = vcombine.low %v2582, %v2584
  %v3437 = vunpack.c.l.s4 1935823168
  %v3438 = vunpack.c.0.s8 %v3437
  %v3439 = vlaneseq
  %v3440 = vshrl.u32 %v3439, 7
  %v3441 = vsub.s32 %v3438, %v3440
  %v3442 = vrot.slane %v3434, %v3441
  %v3444 = vunpack.c.l.s4 1935823168
  %v3445 = vunpack.c.0.s8 %v3444
  %v3446 = vlaneseq
  %v3447 = vshrl.u32 %v3446, 7
  %v3448 = vsub.s32 %v3445, %v3447
  %v3449 = vrot.slane %v3435, %v3448
  %v3450 = vcombine.low %v3442, %v3449
  %v3452 = vunpack.c.l.s4 1935823168
  %v3453 = vunpack.c.0.s8 %v3452
  %v3454 = vlaneseq
  %v3455 = vshrl.u32 %v3454, 7
  %v3456 = vsub.s32 %v3453, %v3455
  %v3457 = vrot.slane %v3450, %v3456
  %v3459 = vunpack.c.l.s4 1935823168
  %v3460 = vunpack.c.0.s8 %v3459
  %v3461 = vlaneseq
  %v3462 = vshrl.u32 %v3461, 7
  %v3463 = vsub.s32 %v3460, %v3462
  %v3464 = vrot.slane %v2385, %v3463
  %v3466 = vunpack.c.l.s4 1935823168
  %v3467 = vunpack.c.0.s8 %v3466
  %v3468 = vlaneseq
  %v3469 = vshrl.u32 %v3468, 7
  %v3470 = vsub.s32 %v3467, %v3469
  %v3471 = vrot.slane %v3464, %v3470
  %v3472 = vcombine.low %v2586, %v2588
  %v3473 = vcombine.low %v2587, %v2589
  %v3475 = vunpack.c.l.s4 1935823168
  %v3476 = vunpack.c.0.s8 %v3475
  %v3477 = vlaneseq
  %v3478 = vshrl.u32 %v3477, 7
  %v3479 = vsub.s32 %v3476, %v3478
  %v3480 = vrot.slane %v3472, %v3479
  %v3482 = vunpack.c.l.s4 1935823168
  %v3483 = vunpack.c.0.s8 %v3482
  %v3484 = vlaneseq
  %v3485 = vshrl.u32 %v3484, 7
  %v3486 = vsub.s32 %v3483, %v3485
  %v3487 = vrot.slane %v3473, %v3486
  %v3488 = vcombine.low %v3480, %v3487
  %v3490 = vunpack.c.l.s4 1935823168
  %v3491 = vunpack.c.0.s8 %v3490
  %v3492 = vlaneseq
  %v3493 = vshrl.u32 %v3492, 7
  %v3494 = vsub.s32 %v3491, %v3493
  %v3495 = vrot.slane %v3488, %v3494
  %v3497 = vunpack.c.l.s4 1935823168
  %v3498 = vunpack.c.0.s8 %v3497
  %v3499 = vlaneseq
  %v3500 = vshrl.u32 %v3499, 7
  %v3501 = vsub.s32 %v3498, %v3500
  %v3502 = vrot.slane %v2394, %v3501
  %v3504 = vunpack.c.l.s4 1935823168
  %v3505 = vunpack.c.0.s8 %v3504
  %v3506 = vlaneseq
  %v3507 = vshrl.u32 %v3506, 7
  %v3508 = vsub.s32 %v3505, %v3507
  %v3509 = vrot.slane %v3502, %v3508
  %v3510 = vcombine.low %v2591, %v2593
  %v3511 = vcombine.low %v2592, %v2594
  %v3513 = vunpack.c.l.s4 1935823168
  %v3514 = vunpack.c.0.s8 %v3513
  %v3515 = vlaneseq
  %v3516 = vshrl.u32 %v3515, 7
  %v3517 = vsub.s32 %v3514, %v3516
  %v3518 = vrot.slane %v3510, %v3517
  %v3520 = vunpack.c.l.s4 1935823168
  %v3521 = vunpack.c.0.s8 %v3520
  %v3522 = vlaneseq
  %v3523 = vshrl.u32 %v3522, 7
  %v3524 = vsub.s32 %v3521, %v3523
  %v3525 = vrot.slane %v3511, %v3524
  %v3526 = vcombine.low %v3518, %v3525
  %v3528 = vunpack.c.l.s4 1935823168
  %v3529 = vunpack.c.0.s8 %v3528
  %v3530 = vlaneseq
  %v3531 = vshrl.u32 %v3530, 7
  %v3532 = vsub.s32 %v3529, %v3531
  %v3533 = vrot.slane %v3526, %v3532
  %v3535 = vunpack.c.l.s4 1935823168
  %v3536 = vunpack.c.0.s8 %v3535
  %v3537 = vlaneseq
  %v3538 = vshrl.u32 %v3537, 7
  %v3539 = vsub.s32 %v3536, %v3538
  %v3540 = vrot.slane %v2403, %v3539
  %v3542 = vunpack.c.l.s4 1935823168
  %v3543 = vunpack.c.0.s8 %v3542
  %v3544 = vlaneseq
  %v3545 = vshrl.u32 %v3544, 7
  %v3546 = vsub.s32 %v3543, %v3545
  %v3547 = vrot.slane %v3540, %v3546
  %v3548 = vcombine.low %v2596, %v2598
  %v3549 = vcombine.low %v2597, %v2599
  %v3551 = vunpack.c.l.s4 1935823168
  %v3552 = vunpack.c.0.s8 %v3551
  %v3553 = vlaneseq
  %v3554 = vshrl.u32 %v3553, 7
  %v3555 = vsub.s32 %v3552, %v3554
  %v3556 = vrot.slane %v3548, %v3555
  %v3558 = vunpack.c.l.s4 1935823168
  %v3559 = vunpack.c.0.s8 %v3558
  %v3560 = vlaneseq
  %v3561 = vshrl.u32 %v3560, 7
  %v3562 = vsub.s32 %v3559, %v3561
  %v3563 = vrot.slane %v3549, %v3562
  %v3564 = vcombine.low %v3556, %v3563
  %v3566 = vunpack.c.l.s4 1935823168
  %v3567 = vunpack.c.0.s8 %v3566
  %v3568 = vlaneseq
  %v3569 = vshrl.u32 %v3568, 7
  %v3570 = vsub.s32 %v3567, %v3569
  %v3571 = vrot.slane %v3564, %v3570
  %v3573 = vunpack.c.l.s4 1935823168
  %v3574 = vunpack.c.0.s8 %v3573
  %v3575 = vlaneseq
  %v3576 = vshrl.u32 %v3575, 7
  %v3577 = vsub.s32 %v3574, %v3576
  %v3578 = vrot.slane %v2412, %v3577
  %v3580 = vunpack.c.l.s4 1935823168
  %v3581 = vunpack.c.0.s8 %v3580
  %v3582 = vlaneseq
  %v3583 = vshrl.u32 %v3582, 7
  %v3584 = vsub.s32 %v3581, %v3583
  %v3585 = vrot.slane %v3578, %v3584
  %v3586 = vcombine.low %v2601, %v2603
  %v3587 = vcombine.low %v2602, %v2604
  %v3589 = vunpack.c.l.s4 1935823168
  %v3590 = vunpack.c.0.s8 %v3589
  %v3591 = vlaneseq
  %v3592 = vshrl.u32 %v3591, 7
  %v3593 = vsub.s32 %v3590, %v3592
  %v3594 = vrot.slane %v3586, %v3593
  %v3596 = vunpack.c.l.s4 1935823168
  %v3597 = vunpack.c.0.s8 %v3596
  %v3598 = vlaneseq
  %v3599 = vshrl.u32 %v3598, 7
  %v3600 = vsub.s32 %v3597, %v3599
  %v3601 = vrot.slane %v3587, %v3600
  %v3602 = vcombine.low %v3594, %v3601
  %v3604 = vunpack.c.l.s4 1935823168
  %v3605 = vunpack.c.0.s8 %v3604
  %v3606 = vlaneseq
  %v3607 = vshrl.u32 %v3606, 7
  %v3608 = vsub.s32 %v3605, %v3607
  %v3609 = vrot.slane %v3602, %v3608
  %v3611 = vunpack.c.l.s4 1935823168
  %v3612 = vunpack.c.0.s8 %v3611
  %v3613 = vlaneseq
  %v3614 = vshrl.u32 %v3613, 7
  %v3615 = vsub.s32 %v3612, %v3614
  %v3616 = vrot.slane %v2421, %v3615
  %v3618 = vunpack.c.l.s4 1935823168
  %v3619 = vunpack.c.0.s8 %v3618
  %v3620 = vlaneseq
  %v3621 = vshrl.u32 %v3620, 7
  %v3622 = vsub.s32 %v3619, %v3621
  %v3623 = vrot.slane %v3616, %v3622
  %v3624 = vcombine.low %v2606, %v2608
  %v3625 = vcombine.low %v2607, %v2609
  %v3627 = vunpack.c.l.s4 1935823168
  %v3628 = vunpack.c.0.s8 %v3627
  %v3629 = vlaneseq
  %v3630 = vshrl.u32 %v3629, 7
  %v3631 = vsub.s32 %v3628, %v3630
  %v3632 = vrot.slane %v3624, %v3631
  %v3634 = vunpack.c.l.s4 1935823168
  %v3635 = vunpack.c.0.s8 %v3634
  %v3636 = vlaneseq
  %v3637 = vshrl.u32 %v3636, 7
  %v3638 = vsub.s32 %v3635, %v3637
  %v3639 = vrot.slane %v3625, %v3638
  %v3640 = vcombine.low %v3632, %v3639
  %v3642 = vunpack.c.l.s4 1935823168
  %v3643 = vunpack.c.0.s8 %v3642
  %v3644 = vlaneseq
  %v3645 = vshrl.u32 %v3644, 7
  %v3646 = vsub.s32 %v3643, %v3645
  %v3647 = vrot.slane %v3640, %v3646
  %v3649 = vunpack.c.l.s4 1935823168
  %v3650 = vunpack.c.0.s8 %v3649
  %v3651 = vlaneseq
  %v3652 = vshrl.u32 %v3651, 7
  %v3653 = vsub.s32 %v3650, %v3652
  %v3654 = vrot.slane %v2430, %v3653
  %v3656 = vunpack.c.l.s4 1935823168
  %v3657 = vunpack.c.0.s8 %v3656
  %v3658 = vlaneseq
  %v3659 = vshrl.u32 %v3658, 7
  %v3660 = vsub.s32 %v3657, %v3659
  %v3661 = vrot.slane %v3654, %v3660
  %v3662 = vcombine.low %v2611, %v2613
  %v3663 = vcombine.low %v2612, %v2614
  %v3665 = vunpack.c.l.s4 1935823168
  %v3666 = vunpack.c.0.s8 %v3665
  %v3667 = vlaneseq
  %v3668 = vshrl.u32 %v3667, 7
  %v3669 = vsub.s32 %v3666, %v3668
  %v3670 = vrot.slane %v3662, %v3669
  %v3672 = vunpack.c.l.s4 1935823168
  %v3673 = vunpack.c.0.s8 %v3672
  %v3674 = vlaneseq
  %v3675 = vshrl.u32 %v3674, 7
  %v3676 = vsub.s32 %v3673, %v3675
  %v3677 = vrot.slane %v3663, %v3676
  %v3678 = vcombine.low %v3670, %v3677
  %v3680 = vunpack.c.l.s4 1935823168
  %v3681 = vunpack.c.0.s8 %v3680
  %v3682 = vlaneseq
  %v3683 = vshrl.u32 %v3682, 7
  %v3684 = vsub.s32 %v3681, %v3683
  %v3685 = vrot.slane %v3678, %v3684
  %v3687 = vunpack.c.l.s4 1935823168
  %v3688 = vunpack.c.0.s8 %v3687
  %v3689 = vlaneseq
  %v3690 = vshrl.u32 %v3689, 7
  %v3691 = vsub.s32 %v3688, %v3690
  %v3692 = vrot.slane %v2439, %v3691
  %v3694 = vunpack.c.l.s4 1935823168
  %v3695 = vunpack.c.0.s8 %v3694
  %v3696 = vlaneseq
  %v3697 = vshrl.u32 %v3696, 7
  %v3698 = vsub.s32 %v3695, %v3697
  %v3699 = vrot.slane %v3692, %v3698
  %v3700 = vcombine.low %v2616, %v2618
  %v3701 = vcombine.low %v2617, %v2619
  %v3703 = vunpack.c.l.s4 1935823168
  %v3704 = vunpack.c.0.s8 %v3703
  %v3705 = vlaneseq
  %v3706 = vshrl.u32 %v3705, 7
  %v3707 = vsub.s32 %v3704, %v3706
  %v3708 = vrot.slane %v3700, %v3707
  %v3710 = vunpack.c.l.s4 1935823168
  %v3711 = vunpack.c.0.s8 %v3710
  %v3712 = vlaneseq
  %v3713 = vshrl.u32 %v3712, 7
  %v3714 = vsub.s32 %v3711, %v3713
  %v3715 = vrot.slane %v3701, %v3714
  %v3716 = vcombine.low %v3708, %v3715
  %v3718 = vunpack.c.l.s4 1935823168
  %v3719 = vunpack.c.0.s8 %v3718
  %v3720 = vlaneseq
  %v3721 = vshrl.u32 %v3720, 7
  %v3722 = vsub.s32 %v3719, %v3721
  %v3723 = vrot.slane %v3716, %v3722
  %v3725 = vunpack.c.l.s4 1935823168
  %v3726 = vunpack.c.0.s8 %v3725
  %v3727 = vlaneseq
  %v3728 = vshrl.u32 %v3727, 7
  %v3729 = vsub.s32 %v3726, %v3728
  %v3730 = vrot.slane %v2448, %v3729
  %v3732 = vunpack.c.l.s4 1935823168
  %v3733 = vunpack.c.0.s8 %v3732
  %v3734 = vlaneseq
  %v3735 = vshrl.u32 %v3734, 7
  %v3736 = vsub.s32 %v3733, %v3735
  %v3737 = vrot.slane %v3730, %v3736
  %v3738 = vcombine.low %v2621, %v2623
  %v3739 = vcombine.low %v2622, %v2624
  %v3741 = vunpack.c.l.s4 1935823168
  %v3742 = vunpack.c.0.s8 %v3741
  %v3743 = vlaneseq
  %v3744 = vshrl.u32 %v3743, 7
  %v3745 = vsub.s32 %v3742, %v3744
  %v3746 = vrot.slane %v3738, %v3745
  %v3748 = vunpack.c.l.s4 1935823168
  %v3749 = vunpack.c.0.s8 %v3748
  %v3750 = vlaneseq
  %v3751 = vshrl.u32 %v3750, 7
  %v3752 = vsub.s32 %v3749, %v3751
  %v3753 = vrot.slane %v3739, %v3752
  %v3754 = vcombine.low %v3746, %v3753
  %v3756 = vunpack.c.l.s4 1935823168
  %v3757 = vunpack.c.0.s8 %v3756
  %v3758 = vlaneseq
  %v3759 = vshrl.u32 %v3758, 7
  %v3760 = vsub.s32 %v3757, %v3759
  %v3761 = vrot.slane %v3754, %v3760
  %v3763 = vunpack.c.l.s4 1935823168
  %v3764 = vunpack.c.0.s8 %v3763
  %v3765 = vlaneseq
  %v3766 = vshrl.u32 %v3765, 7
  %v3767 = vsub.s32 %v3764, %v3766
  %v3768 = vrot.slane %v2457, %v3767
  %v3770 = vunpack.c.l.s4 1935823168
  %v3771 = vunpack.c.0.s8 %v3770
  %v3772 = vlaneseq
  %v3773 = vshrl.u32 %v3772, 7
  %v3774 = vsub.s32 %v3771, %v3773
  %v3775 = vrot.slane %v3768, %v3774
  %v3776 = vcombine.low %v2626, %v2628
  %v3777 = vcombine.low %v2627, %v2629
  %v3779 = vunpack.c.l.s4 1935823168
  %v3780 = vunpack.c.0.s8 %v3779
  %v3781 = vlaneseq
  %v3782 = vshrl.u32 %v3781, 7
  %v3783 = vsub.s32 %v3780, %v3782
  %v3784 = vrot.slane %v3776, %v3783
  %v3786 = vunpack.c.l.s4 1935823168
  %v3787 = vunpack.c.0.s8 %v3786
  %v3788 = vlaneseq
  %v3789 = vshrl.u32 %v3788, 7
  %v3790 = vsub.s32 %v3787, %v3789
  %v3791 = vrot.slane %v3777, %v3790
  %v3792 = vcombine.low %v3784, %v3791
  %v3794 = vunpack.c.l.s4 1935823168
  %v3795 = vunpack.c.0.s8 %v3794
  %v3796 = vlaneseq
  %v3797 = vshrl.u32 %v3796, 7
  %v3798 = vsub.s32 %v3795, %v3797
  %v3799 = vrot.slane %v3792, %v3798
  %v3801 = vunpack.c.l.s4 1935823168
  %v3802 = vunpack.c.0.s8 %v3801
  %v3803 = vlaneseq
  %v3804 = vshrl.u32 %v3803, 7
  %v3805 = vsub.s32 %v3802, %v3804
  %v3806 = vrot.slane %v2466, %v3805
  %v3808 = vunpack.c.l.s4 1935823168
  %v3809 = vunpack.c.0.s8 %v3808
  %v3810 = vlaneseq
  %v3811 = vshrl.u32 %v3810, 7
  %v3812 = vsub.s32 %v3809, %v3811
  %v3813 = vrot.slane %v3806, %v3812
  %v3814 = vcombine.low %v2631, %v2633
  %v3815 = vcombine.low %v2632, %v2634
  %v3817 = vunpack.c.l.s4 1935823168
  %v3818 = vunpack.c.0.s8 %v3817
  %v3819 = vlaneseq
  %v3820 = vshrl.u32 %v3819, 7
  %v3821 = vsub.s32 %v3818, %v3820
  %v3822 = vrot.slane %v3814, %v3821
  %v3824 = vunpack.c.l.s4 1935823168
  %v3825 = vunpack.c.0.s8 %v3824
  %v3826 = vlaneseq
  %v3827 = vshrl.u32 %v3826, 7
  %v3828 = vsub.s32 %v3825, %v3827
  %v3829 = vrot.slane %v3815, %v3828
  %v3830 = vcombine.low %v3822, %v3829
  %v3832 = vunpack.c.l.s4 1935823168
  %v3833 = vunpack.c.0.s8 %v3832
  %v3834 = vlaneseq
  %v3835 = vshrl.u32 %v3834, 7
  %v3836 = vsub.s32 %v3833, %v3835
  %v3837 = vrot.slane %v3830, %v3836
  %v3839 = vunpack.c.l.s4 1935823168
  %v3840 = vunpack.c.0.s8 %v3839
  %v3841 = vlaneseq
  %v3842 = vshrl.u32 %v3841, 7
  %v3843 = vsub.s32 %v3840, %v3842
  %v3844 = vrot.slane %v2475, %v3843
  %v3846 = vunpack.c.l.s4 1935823168
  %v3847 = vunpack.c.0.s8 %v3846
  %v3848 = vlaneseq
  %v3849 = vshrl.u32 %v3848, 7
  %v3850 = vsub.s32 %v3847, %v3849
  %v3851 = vrot.slane %v3844, %v3850
  %3916 = vst [vmem:[#allocation3] sm:$0xf] %v2659
  %vm3917 = vcmask 1040384
  %vm3918 = vsmask.f32 256
  %vm3919 = vmand %vm3917, %vm3918
  %v3920 = vld [vmem:[#allocation3 + $0x4] sm:$0x1]
  %v3921 = vsel %vm3919, %v2673, %v3920
  %3922 = vst [vmem:[#allocation3 + $0x4] sm:$0x1] %v3921
  %3923 = vst [vmem:[#allocation3 + $0x8] sm:$0xf] %v2697
  %v3924 = vld [vmem:[#allocation3 + $0xc] sm:$0x1]
  %v3925 = vsel %vm3919, %v2711, %v3924
  %3926 = vst [vmem:[#allocation3 + $0xc] sm:$0x1] %v3925
  %3927 = vst [vmem:[#allocation3 + $0x10] sm:$0xf] %v2735
  %v3928 = vld [vmem:[#allocation3 + $0x14] sm:$0x1]
  %v3929 = vsel %vm3919, %v2749, %v3928
  %3930 = vst [vmem:[#allocation3 + $0x14] sm:$0x1] %v3929
  %3931 = vst [vmem:[#allocation3 + $0x18] sm:$0xf] %v2773
  %v3932 = vld [vmem:[#allocation3 + $0x1c] sm:$0x1]
  %v3933 = vsel %vm3919, %v2787, %v3932
  %3934 = vst [vmem:[#allocation3 + $0x1c] sm:$0x1] %v3933
  %3935 = vst [vmem:[#allocation3 + $0x20] sm:$0xf] %v2811
  %v3936 = vld [vmem:[#allocation3 + $0x24] sm:$0x1]
  %v3937 = vsel %vm3919, %v2825, %v3936
  %3938 = vst [vmem:[#allocation3 + $0x24] sm:$0x1] %v3937
  %3939 = vst [vmem:[#allocation3 + $0x28] sm:$0xf] %v2849
  %v3940 = vld [vmem:[#allocation3 + $0x2c] sm:$0x1]
  %v3941 = vsel %vm3919, %v2863, %v3940
  %3942 = vst [vmem:[#allocation3 + $0x2c] sm:$0x1] %v3941
  %3943 = vst [vmem:[#allocation3 + $0x30] sm:$0xf] %v2887
  %v3944 = vld [vmem:[#allocation3 + $0x34] sm:$0x1]
  %v3945 = vsel %vm3919, %v2901, %v3944
  %3946 = vst [vmem:[#allocation3 + $0x34] sm:$0x1] %v3945
  %3947 = vst [vmem:[#allocation3 + $0x38] sm:$0xf] %v2925
  %v3948 = vld [vmem:[#allocation3 + $0x3c] sm:$0x1]
  %v3949 = vsel %vm3919, %v2939, %v3948
  %3950 = vst [vmem:[#allocation3 + $0x3c] sm:$0x1] %v3949
  %3951 = vst [vmem:[#allocation3 + $0x40] sm:$0xf] %v2963
  %v3952 = vld [vmem:[#allocation3 + $0x44] sm:$0x1]
  %v3953 = vsel %vm3919, %v2977, %v3952
  %3954 = vst [vmem:[#allocation3 + $0x44] sm:$0x1] %v3953
  %3955 = vst [vmem:[#allocation3 + $0x48] sm:$0xf] %v3001
  %v3956 = vld [vmem:[#allocation3 + $0x4c] sm:$0x1]
  %v3957 = vsel %vm3919, %v3015, %v3956
  %3958 = vst [vmem:[#allocation3 + $0x4c] sm:$0x1] %v3957
  %3959 = vst [vmem:[#allocation3 + $0x50] sm:$0xf] %v3039
  %v3960 = vld [vmem:[#allocation3 + $0x54] sm:$0x1]
  %v3961 = vsel %vm3919, %v3053, %v3960
  %3962 = vst [vmem:[#allocation3 + $0x54] sm:$0x1] %v3961
  %3963 = vst [vmem:[#allocation3 + $0x58] sm:$0xf] %v3077
  %v3964 = vld [vmem:[#allocation3 + $0x5c] sm:$0x1]
  %v3965 = vsel %vm3919, %v3091, %v3964
  %3966 = vst [vmem:[#allocation3 + $0x5c] sm:$0x1] %v3965
  %3967 = vst [vmem:[#allocation3 + $0x60] sm:$0xf] %v3115
  %v3968 = vld [vmem:[#allocation3 + $0x64] sm:$0x1]
  %v3969 = vsel %vm3919, %v3129, %v3968
  %3970 = vst [vmem:[#allocation3 + $0x64] sm:$0x1] %v3969
  %3971 = vst [vmem:[#allocation3 + $0x68] sm:$0xf] %v3153
  %v3972 = vld [vmem:[#allocation3 + $0x6c] sm:$0x1]
  %v3973 = vsel %vm3919, %v3167, %v3972
  %3974 = vst [vmem:[#allocation3 + $0x6c] sm:$0x1] %v3973
  %3975 = vst [vmem:[#allocation3 + $0x70] sm:$0xf] %v3191
  %v3976 = vld [vmem:[#allocation3 + $0x74] sm:$0x1]
  %v3977 = vsel %vm3919, %v3205, %v3976
  %3978 = vst [vmem:[#allocation3 + $0x74] sm:$0x1] %v3977
  %3979 = vst [vmem:[#allocation3 + $0x78] sm:$0xf] %v3229
  %v3980 = vld [vmem:[#allocation3 + $0x7c] sm:$0x1]
  %v3981 = vsel %vm3919, %v3243, %v3980
  %3982 = vst [vmem:[#allocation3 + $0x7c] sm:$0x1] %v3981
  %3983 = vst [vmem:[#allocation3 + $0x80] sm:$0xf] %v3267
  %v3984 = vld [vmem:[#allocation3 + $0x84] sm:$0x1]
  %v3985 = vsel %vm3919, %v3281, %v3984
  %3986 = vst [vmem:[#allocation3 + $0x84] sm:$0x1] %v3985
  %3987 = vst [vmem:[#allocation3 + $0x88] sm:$0xf] %v3305
  %v3988 = vld [vmem:[#allocation3 + $0x8c] sm:$0x1]
  %v3989 = vsel %vm3919, %v3319, %v3988
  %3990 = vst [vmem:[#allocation3 + $0x8c] sm:$0x1] %v3989
  %3991 = vst [vmem:[#allocation3 + $0x90] sm:$0xf] %v3343
  %v3992 = vld [vmem:[#allocation3 + $0x94] sm:$0x1]
  %v3993 = vsel %vm3919, %v3357, %v3992
  %3994 = vst [vmem:[#allocation3 + $0x94] sm:$0x1] %v3993
  %3995 = vst [vmem:[#allocation3 + $0x98] sm:$0xf] %v3381
  %v3996 = vld [vmem:[#allocation3 + $0x9c] sm:$0x1]
  %v3997 = vsel %vm3919, %v3395, %v3996
  %3998 = vst [vmem:[#allocation3 + $0x9c] sm:$0x1] %v3997
  %3999 = vst [vmem:[#allocation3 + $0xa0] sm:$0xf] %v3419
  %v4000 = vld [vmem:[#allocation3 + $0xa4] sm:$0x1]
  %v4001 = vsel %vm3919, %v3433, %v4000
  %4002 = vst [vmem:[#allocation3 + $0xa4] sm:$0x1] %v4001
  %4003 = vst [vmem:[#allocation3 + $0xa8] sm:$0xf] %v3457
  %v4004 = vld [vmem:[#allocation3 + $0xac] sm:$0x1]
  %v4005 = vsel %vm3919, %v3471, %v4004
  %4006 = vst [vmem:[#allocation3 + $0xac] sm:$0x1] %v4005
  %4007 = vst [vmem:[#allocation3 + $0xb0] sm:$0xf] %v3495
  %v4008 = vld [vmem:[#allocation3 + $0xb4] sm:$0x1]
  %v4009 = vsel %vm3919, %v3509, %v4008
  %4010 = vst [vmem:[#allocation3 + $0xb4] sm:$0x1] %v4009
  %4011 = vst [vmem:[#allocation3 + $0xb8] sm:$0xf] %v3533
  %v4012 = vld [vmem:[#allocation3 + $0xbc] sm:$0x1]
  %v4013 = vsel %vm3919, %v3547, %v4012
  %4014 = vst [vmem:[#allocation3 + $0xbc] sm:$0x1] %v4013
  %4015 = vst [vmem:[#allocation3 + $0xc0] sm:$0xf] %v3571
  %v4016 = vld [vmem:[#allocation3 + $0xc4] sm:$0x1]
  %v4017 = vsel %vm3919, %v3585, %v4016
  %4018 = vst [vmem:[#allocation3 + $0xc4] sm:$0x1] %v4017
  %4019 = vst [vmem:[#allocation3 + $0xc8] sm:$0xf] %v3609
  %v4020 = vld [vmem:[#allocation3 + $0xcc] sm:$0x1]
  %v4021 = vsel %vm3919, %v3623, %v4020
  %4022 = vst [vmem:[#allocation3 + $0xcc] sm:$0x1] %v4021
  %4023 = vst [vmem:[#allocation3 + $0xd0] sm:$0xf] %v3647
  %v4024 = vld [vmem:[#allocation3 + $0xd4] sm:$0x1]
  %v4025 = vsel %vm3919, %v3661, %v4024
  %4026 = vst [vmem:[#allocation3 + $0xd4] sm:$0x1] %v4025
  %4027 = vst [vmem:[#allocation3 + $0xd8] sm:$0xf] %v3685
  %v4028 = vld [vmem:[#allocation3 + $0xdc] sm:$0x1]
  %v4029 = vsel %vm3919, %v3699, %v4028
  %4030 = vst [vmem:[#allocation3 + $0xdc] sm:$0x1] %v4029
  %4031 = vst [vmem:[#allocation3 + $0xe0] sm:$0xf] %v3723
  %v4032 = vld [vmem:[#allocation3 + $0xe4] sm:$0x1]
  %v4033 = vsel %vm3919, %v3737, %v4032
  %4034 = vst [vmem:[#allocation3 + $0xe4] sm:$0x1] %v4033
  %4035 = vst [vmem:[#allocation3 + $0xe8] sm:$0xf] %v3761
  %v4036 = vld [vmem:[#allocation3 + $0xec] sm:$0x1]
  %v4037 = vsel %vm3919, %v3775, %v4036
  %4038 = vst [vmem:[#allocation3 + $0xec] sm:$0x1] %v4037
  %4039 = vst [vmem:[#allocation3 + $0xf0] sm:$0xf] %v3799
  %v4040 = vld [vmem:[#allocation3 + $0xf4] sm:$0x1]
  %v4041 = vsel %vm3919, %v3813, %v4040
  %4042 = vst [vmem:[#allocation3 + $0xf4] sm:$0x1] %v4041
  %4043 = vst [vmem:[#allocation3 + $0xf8] sm:$0xf] %v3837
  %v4044 = vld [vmem:[#allocation3 + $0xfc] sm:$0x1]
  %v4045 = vsel %vm3919, %v3851, %v4044
  %4046 = vst [vmem:[#allocation3 + $0xfc] sm:$0x1] %v4045
  %v4047 = vld [vmem:[#allocation3] sm:$0x1]
  %v4048 = vsel %vm3919, 0, %v4047
  %4049 = vst [vmem:[#allocation3] sm:$0x1] %v4048
  %v4050 = vld [vmem:[#allocation3 + $0x8] sm:$0x1]
  %v4051 = vsel %vm3919, 0, %v4050
  %4052 = vst [vmem:[#allocation3 + $0x8] sm:$0x1] %v4051
  %v4053 = vld [vmem:[#allocation3 + $0x10] sm:$0x1]
  %v4054 = vsel %vm3919, 0, %v4053
  %4055 = vst [vmem:[#allocation3 + $0x10] sm:$0x1] %v4054
  %v4056 = vld [vmem:[#allocation3 + $0x18] sm:$0x1]
  %v4057 = vsel %vm3919, 0, %v4056
  %4058 = vst [vmem:[#allocation3 + $0x18] sm:$0x1] %v4057
  %v4059 = vld [vmem:[#allocation3 + $0x20] sm:$0x1]
  %v4060 = vsel %vm3919, 0, %v4059
  %4061 = vst [vmem:[#allocation3 + $0x20] sm:$0x1] %v4060
  %v4062 = vld [vmem:[#allocation3 + $0x28] sm:$0x1]
  %v4063 = vsel %vm3919, 0, %v4062
  %4064 = vst [vmem:[#allocation3 + $0x28] sm:$0x1] %v4063
  %v4065 = vld [vmem:[#allocation3 + $0x30] sm:$0x1]
  %v4066 = vsel %vm3919, 0, %v4065
  %4067 = vst [vmem:[#allocation3 + $0x30] sm:$0x1] %v4066
  %v4068 = vld [vmem:[#allocation3 + $0x38] sm:$0x1]
  %v4069 = vsel %vm3919, 0, %v4068
  %4070 = vst [vmem:[#allocation3 + $0x38] sm:$0x1] %v4069
  %v4071 = vld [vmem:[#allocation3 + $0x40] sm:$0x1]
  %v4072 = vsel %vm3919, 0, %v4071
  %4073 = vst [vmem:[#allocation3 + $0x40] sm:$0x1] %v4072
  %v4074 = vld [vmem:[#allocation3 + $0x48] sm:$0x1]
  %v4075 = vsel %vm3919, 0, %v4074
  %4076 = vst [vmem:[#allocation3 + $0x48] sm:$0x1] %v4075
  %v4077 = vld [vmem:[#allocation3 + $0x50] sm:$0x1]
  %v4078 = vsel %vm3919, 0, %v4077
  %4079 = vst [vmem:[#allocation3 + $0x50] sm:$0x1] %v4078
  %v4080 = vld [vmem:[#allocation3 + $0x58] sm:$0x1]
  %v4081 = vsel %vm3919, 0, %v4080
  %4082 = vst [vmem:[#allocation3 + $0x58] sm:$0x1] %v4081
  %v4083 = vld [vmem:[#allocation3 + $0x60] sm:$0x1]
  %v4084 = vsel %vm3919, 0, %v4083
  %4085 = vst [vmem:[#allocation3 + $0x60] sm:$0x1] %v4084
  %v4086 = vld [vmem:[#allocation3 + $0x68] sm:$0x1]
  %v4087 = vsel %vm3919, 0, %v4086
  %4088 = vst [vmem:[#allocation3 + $0x68] sm:$0x1] %v4087
  %v4089 = vld [vmem:[#allocation3 + $0x70] sm:$0x1]
  %v4090 = vsel %vm3919, 0, %v4089
  %4091 = vst [vmem:[#allocation3 + $0x70] sm:$0x1] %v4090
  %v4092 = vld [vmem:[#allocation3 + $0x78] sm:$0x1]
  %v4093 = vsel %vm3919, 0, %v4092
  %4094 = vst [vmem:[#allocation3 + $0x78] sm:$0x1] %v4093
  %v4095 = vld [vmem:[#allocation3 + $0x80] sm:$0x1]
  %v4096 = vsel %vm3919, 0, %v4095
  %4097 = vst [vmem:[#allocation3 + $0x80] sm:$0x1] %v4096
  %v4098 = vld [vmem:[#allocation3 + $0x88] sm:$0x1]
  %v4099 = vsel %vm3919, 0, %v4098
  %4100 = vst [vmem:[#allocation3 + $0x88] sm:$0x1] %v4099
  %v4101 = vld [vmem:[#allocation3 + $0x90] sm:$0x1]
  %v4102 = vsel %vm3919, 0, %v4101
  %4103 = vst [vmem:[#allocation3 + $0x90] sm:$0x1] %v4102
  %v4104 = vld [vmem:[#allocation3 + $0x98] sm:$0x1]
  %v4105 = vsel %vm3919, 0, %v4104
  %4106 = vst [vmem:[#allocation3 + $0x98] sm:$0x1] %v4105
  %v4107 = vld [vmem:[#allocation3 + $0xa0] sm:$0x1]
  %v4108 = vsel %vm3919, 0, %v4107
  %4109 = vst [vmem:[#allocation3 + $0xa0] sm:$0x1] %v4108
  %v4110 = vld [vmem:[#allocation3 + $0xa8] sm:$0x1]
  %v4111 = vsel %vm3919, 0, %v4110
  %4112 = vst [vmem:[#allocation3 + $0xa8] sm:$0x1] %v4111
  %v4113 = vld [vmem:[#allocation3 + $0xb0] sm:$0x1]
  %v4114 = vsel %vm3919, 0, %v4113
  %4115 = vst [vmem:[#allocation3 + $0xb0] sm:$0x1] %v4114
  %v4116 = vld [vmem:[#allocation3 + $0xb8] sm:$0x1]
  %v4117 = vsel %vm3919, 0, %v4116
  %4118 = vst [vmem:[#allocation3 + $0xb8] sm:$0x1] %v4117
  %v4119 = vld [vmem:[#allocation3 + $0xc0] sm:$0x1]
  %v4120 = vsel %vm3919, 0, %v4119
  %4121 = vst [vmem:[#allocation3 + $0xc0] sm:$0x1] %v4120
  %v4122 = vld [vmem:[#allocation3 + $0xc8] sm:$0x1]
  %v4123 = vsel %vm3919, 0, %v4122
  %4124 = vst [vmem:[#allocation3 + $0xc8] sm:$0x1] %v4123
  %v4125 = vld [vmem:[#allocation3 + $0xd0] sm:$0x1]
  %v4126 = vsel %vm3919, 0, %v4125
  %4127 = vst [vmem:[#allocation3 + $0xd0] sm:$0x1] %v4126
  %v4128 = vld [vmem:[#allocation3 + $0xd8] sm:$0x1]
  %v4129 = vsel %vm3919, 0, %v4128
  %4130 = vst [vmem:[#allocation3 + $0xd8] sm:$0x1] %v4129
  %v4131 = vld [vmem:[#allocation3 + $0xe0] sm:$0x1]
  %v4132 = vsel %vm3919, 0, %v4131
  %4133 = vst [vmem:[#allocation3 + $0xe0] sm:$0x1] %v4132
  %v4134 = vld [vmem:[#allocation3 + $0xe8] sm:$0x1]
  %v4135 = vsel %vm3919, 0, %v4134
  %4136 = vst [vmem:[#allocation3 + $0xe8] sm:$0x1] %v4135
  %v4137 = vld [vmem:[#allocation3 + $0xf0] sm:$0x1]
  %v4138 = vsel %vm3919, 0, %v4137
  %4139 = vst [vmem:[#allocation3 + $0xf0] sm:$0x1] %v4138
  %v4140 = vld [vmem:[#allocation3 + $0xf8] sm:$0x1]
  %v4141 = vsel %vm3919, 0, %v4140
  %4142 = vst [vmem:[#allocation3 + $0xf8] sm:$0x1] %v4141
  %4143 = vst [vmem:[%s7] sm:$0xff] %v26
  %4144 = vst [vmem:[%s7 + $0x8] sm:$0xff] %v28
  %4145 = vst [vmem:[%s7 + $0x10] sm:$0xff] %v30
  %4146 = vst [vmem:[%s7 + $0x18] sm:$0xff] %v32
  %4147 = vst [vmem:[%s7 + $0x20] sm:$0xff] %v34
  %4148 = vst [vmem:[%s7 + $0x28] sm:$0xff] %v36
  %4149 = vst [vmem:[%s7 + $0x30] sm:$0xff] %v38
  %4150 = vst [vmem:[%s7 + $0x38] sm:$0xff] %v40
  %4151 = vst [vmem:[%s7 + $0x40] sm:$0xff] %v42
  %4152 = vst [vmem:[%s7 + $0x48] sm:$0xff] %v44
  %4153 = vst [vmem:[%s7 + $0x50] sm:$0xff] %v46
  %4154 = vst [vmem:[%s7 + $0x58] sm:$0xff] %v48
  %4155 = vst [vmem:[%s7 + $0x60] sm:$0xff] %v50
  %4156 = vst [vmem:[%s7 + $0x68] sm:$0xff] %v52
  %4157 = vst [vmem:[%s7 + $0x70] sm:$0xff] %v54
  %4158 = vst [vmem:[%s7 + $0x78] sm:$0xff] %v56
  %v4159 = vld [vmem:[#allocation2] sm:$0xf]
  %v4160 = vld [vmem:[#allocation2 + $0x4] sm:$0xf]
  %v4161 = vld [vmem:[#allocation2 + $0x8] sm:$0xf]
  %v4162 = vld [vmem:[#allocation2 + $0xc] sm:$0xf]
  %v4163 = vld [vmem:[#allocation2 + $0x10] sm:$0xf]
  %v4164 = vld [vmem:[#allocation2 + $0x14] sm:$0xf]
  %v4165 = vld [vmem:[#allocation2 + $0x18] sm:$0xf]
  %v4166 = vld [vmem:[#allocation2 + $0x1c] sm:$0xf]
  %v4167 = vld [vmem:[#allocation2 + $0x20] sm:$0xf]
  %v4168 = vld [vmem:[#allocation2 + $0x24] sm:$0xf]
  %v4169 = vld [vmem:[#allocation2 + $0x28] sm:$0xf]
  %v4170 = vld [vmem:[#allocation2 + $0x2c] sm:$0xf]
  %v4171 = vld [vmem:[#allocation2 + $0x30] sm:$0xf]
  %v4172 = vld [vmem:[#allocation2 + $0x34] sm:$0xf]
  %v4173 = vld [vmem:[#allocation2 + $0x38] sm:$0xf]
  %v4174 = vld [vmem:[#allocation2 + $0x3c] sm:$0xf]
  %v4175 = vld [vmem:[#allocation2 + $0x40] sm:$0xf]
  %v4176 = vld [vmem:[#allocation2 + $0x44] sm:$0xf]
  %v4177 = vld [vmem:[#allocation2 + $0x48] sm:$0xf]
  %v4178 = vld [vmem:[#allocation2 + $0x4c] sm:$0xf]
  %v4179 = vld [vmem:[#allocation2 + $0x50] sm:$0xf]
  %v4180 = vld [vmem:[#allocation2 + $0x54] sm:$0xf]
  %v4181 = vld [vmem:[#allocation2 + $0x58] sm:$0xf]
  %v4182 = vld [vmem:[#allocation2 + $0x5c] sm:$0xf]
  %v4183 = vld [vmem:[#allocation2 + $0x60] sm:$0xf]
  %v4184 = vld [vmem:[#allocation2 + $0x64] sm:$0xf]
  %v4185 = vld [vmem:[#allocation2 + $0x68] sm:$0xf]
  %v4186 = vld [vmem:[#allocation2 + $0x6c] sm:$0xf]
  %v4187 = vld [vmem:[#allocation2 + $0x70] sm:$0xf]
  %v4188 = vld [vmem:[#allocation2 + $0x74] sm:$0xf]
  %v4189 = vld [vmem:[#allocation2 + $0x78] sm:$0xf]
  %v4190 = vld [vmem:[#allocation2 + $0x7c] sm:$0xf]
  %v4191 = vld [vmem:[#allocation3] sm:$0xf]
  %v4192 = vld [vmem:[#allocation3 + $0x4] sm:$0x1]
  %v4193 = vld [vmem:[#allocation3 + $0x8] sm:$0xf]
  %v4194 = vld [vmem:[#allocation3 + $0xc] sm:$0x1]
  %v4195 = vld [vmem:[#allocation3 + $0x10] sm:$0xf]
  %v4196 = vld [vmem:[#allocation3 + $0x14] sm:$0x1]
  %v4197 = vld [vmem:[#allocation3 + $0x18] sm:$0xf]
  %v4198 = vld [vmem:[#allocation3 + $0x1c] sm:$0x1]
  %v4199 = vld [vmem:[#allocation3 + $0x20] sm:$0xf]
  %v4200 = vld [vmem:[#allocation3 + $0x24] sm:$0x1]
  %v4201 = vld [vmem:[#allocation3 + $0x28] sm:$0xf]
  %v4202 = vld [vmem:[#allocation3 + $0x2c] sm:$0x1]
  %v4203 = vld [vmem:[#allocation3 + $0x30] sm:$0xf]
  %v4204 = vld [vmem:[#allocation3 + $0x34] sm:$0x1]
  %v4205 = vld [vmem:[#allocation3 + $0x38] sm:$0xf]
  %v4206 = vld [vmem:[#allocation3 + $0x3c] sm:$0x1]
  %v4207 = vld [vmem:[#allocation3 + $0x40] sm:$0xf]
  %v4208 = vld [vmem:[#allocation3 + $0x44] sm:$0x1]
  %v4209 = vld [vmem:[#allocation3 + $0x48] sm:$0xf]
  %v4210 = vld [vmem:[#allocation3 + $0x4c] sm:$0x1]
  %v4211 = vld [vmem:[#allocation3 + $0x50] sm:$0xf]
  %v4212 = vld [vmem:[#allocation3 + $0x54] sm:$0x1]
  %v4213 = vld [vmem:[#allocation3 + $0x58] sm:$0xf]
  %v4214 = vld [vmem:[#allocation3 + $0x5c] sm:$0x1]
  %v4215 = vld [vmem:[#allocation3 + $0x60] sm:$0xf]
  %v4216 = vld [vmem:[#allocation3 + $0x64] sm:$0x1]
  %v4217 = vld [vmem:[#allocation3 + $0x68] sm:$0xf]
  %v4218 = vld [vmem:[#allocation3 + $0x6c] sm:$0x1]
  %v4219 = vld [vmem:[#allocation3 + $0x70] sm:$0xf]
  %v4220 = vld [vmem:[#allocation3 + $0x74] sm:$0x1]
  %v4221 = vld [vmem:[#allocation3 + $0x78] sm:$0xf]
  %v4222 = vld [vmem:[#allocation3 + $0x7c] sm:$0x1]
  %v4223 = vld [vmem:[#allocation3 + $0x80] sm:$0xf]
  %v4224 = vld [vmem:[#allocation3 + $0x84] sm:$0x1]
  %v4225 = vld [vmem:[#allocation3 + $0x88] sm:$0xf]
  %v4226 = vld [vmem:[#allocation3 + $0x8c] sm:$0x1]
  %v4227 = vld [vmem:[#allocation3 + $0x90] sm:$0xf]
  %v4228 = vld [vmem:[#allocation3 + $0x94] sm:$0x1]
  %v4229 = vld [vmem:[#allocation3 + $0x98] sm:$0xf]
  %v4230 = vld [vmem:[#allocation3 + $0x9c] sm:$0x1]
  %v4231 = vld [vmem:[#allocation3 + $0xa0] sm:$0xf]
  %v4232 = vld [vmem:[#allocation3 + $0xa4] sm:$0x1]
  %v4233 = vld [vmem:[#allocation3 + $0xa8] sm:$0xf]
  %v4234 = vld [vmem:[#allocation3 + $0xac] sm:$0x1]
  %v4235 = vld [vmem:[#allocation3 + $0xb0] sm:$0xf]
  %v4236 = vld [vmem:[#allocation3 + $0xb4] sm:$0x1]
  %v4237 = vld [vmem:[#allocation3 + $0xb8] sm:$0xf]
  %v4238 = vld [vmem:[#allocation3 + $0xbc] sm:$0x1]
  %v4239 = vld [vmem:[#allocation3 + $0xc0] sm:$0xf]
  %v4240 = vld [vmem:[#allocation3 + $0xc4] sm:$0x1]
  %v4241 = vld [vmem:[#allocation3 + $0xc8] sm:$0xf]
  %v4242 = vld [vmem:[#allocation3 + $0xcc] sm:$0x1]
  %v4243 = vld [vmem:[#allocation3 + $0xd0] sm:$0xf]
  %v4244 = vld [vmem:[#allocation3 + $0xd4] sm:$0x1]
  %v4245 = vld [vmem:[#allocation3 + $0xd8] sm:$0xf]
  %v4246 = vld [vmem:[#allocation3 + $0xdc] sm:$0x1]
  %v4247 = vld [vmem:[#allocation3 + $0xe0] sm:$0xf]
  %v4248 = vld [vmem:[#allocation3 + $0xe4] sm:$0x1]
  %v4249 = vld [vmem:[#allocation3 + $0xe8] sm:$0xf]
  %v4250 = vld [vmem:[#allocation3 + $0xec] sm:$0x1]
  %v4251 = vld [vmem:[#allocation3 + $0xf0] sm:$0xf]
  %v4252 = vld [vmem:[#allocation3 + $0xf4] sm:$0x1]
  %v4253 = vld [vmem:[#allocation3 + $0xf8] sm:$0xf]
  %v4254 = vld [vmem:[#allocation3 + $0xfc] sm:$0x1]
  %4255 = vst [vmem:[#allocation4 + $0xc] sm:$0xf] %v4191
  %4256 = vst [vmem:[#allocation4 + $0x30] sm:$0xf] %v4195
  %4257 = vst [vmem:[#allocation4 + $0x54] sm:$0xf] %v4199
  %4258 = vst [vmem:[#allocation4 + $0x78] sm:$0xf] %v4203
  %4259 = vst [vmem:[#allocation4 + $0x9c] sm:$0xf] %v4207
  %4260 = vst [vmem:[#allocation4 + $0xc0] sm:$0xf] %v4211
  %4261 = vst [vmem:[#allocation4 + $0xe4] sm:$0xf] %v4215
  %4262 = vst [vmem:[#allocation4 + $0x108] sm:$0xf] %v4219
  %4263 = vst [vmem:[#allocation4 + $0x12c] sm:$0xf] %v4223
  %4264 = vst [vmem:[#allocation4 + $0x150] sm:$0xf] %v4227
  %4265 = vst [vmem:[#allocation4 + $0x174] sm:$0xf] %v4231
  %4266 = vst [vmem:[#allocation4 + $0x198] sm:$0xf] %v4235
  %4267 = vst [vmem:[#allocation4 + $0x1bc] sm:$0xf] %v4239
  %4268 = vst [vmem:[#allocation4 + $0x1e0] sm:$0xf] %v4243
  %4269 = vst [vmem:[#allocation4 + $0x204] sm:$0xf] %v4247
  %4270 = vst [vmem:[#allocation4 + $0x228] sm:$0xf] %v4251
  %4271 = vst [vmem:[#allocation4 + $0x18] sm:$0xf] %v4193
  %4272 = vst [vmem:[#allocation4 + $0x3c] sm:$0xf] %v4197
  %4273 = vst [vmem:[#allocation4 + $0x60] sm:$0xf] %v4201
  %4274 = vst [vmem:[#allocation4 + $0x84] sm:$0xf] %v4205
  %4275 = vst [vmem:[#allocation4 + $0xa8] sm:$0xf] %v4209
  %4276 = vst [vmem:[#allocation4 + $0xcc] sm:$0xf] %v4213
  %4277 = vst [vmem:[#allocation4 + $0xf0] sm:$0xf] %v4217
  %4278 = vst [vmem:[#allocation4 + $0x114] sm:$0xf] %v4221
  %4279 = vst [vmem:[#allocation4 + $0x138] sm:$0xf] %v4225
  %4280 = vst [vmem:[#allocation4 + $0x15c] sm:$0xf] %v4229
  %4281 = vst [vmem:[#allocation4 + $0x180] sm:$0xf] %v4233
  %4282 = vst [vmem:[#allocation4 + $0x1a4] sm:$0xf] %v4237
  %4283 = vst [vmem:[#allocation4 + $0x1c8] sm:$0xf] %v4241
  %4284 = vst [vmem:[#allocation4 + $0x1ec] sm:$0xf] %v4245
  %4285 = vst [vmem:[#allocation4 + $0x210] sm:$0xf] %v4249
  %4286 = vst [vmem:[#allocation4 + $0x234] sm:$0xf] %v4253
  %4287 = vst [vmem:[#allocation4] sm:$0xf] 0
  %4288 = vst [vmem:[#allocation4 + $0x120] sm:$0xf] 0
  %s4289 = scalar_lea.vmem [#allocation4], 36
  %4290 = vst [vmem:[%s4289] sm:$0xf] %v4193
  %4291 = vst [vmem:[%s4289 + $0x24] sm:$0xf] %v4197
  %4292 = vst [vmem:[%s4289 + $0x48] sm:$0xf] %v4201
  %4293 = vst [vmem:[%s4289 + $0x6c] sm:$0xf] %v4205
  %4294 = vst [vmem:[%s4289 + $0x90] sm:$0xf] %v4209
  %4295 = vst [vmem:[%s4289 + $0xb4] sm:$0xf] %v4213
  %4296 = vst [vmem:[%s4289 + $0xd8] sm:$0xf] %v4217
  %4297 = vst [vmem:[%s4289 + $0x120] sm:$0xf] %v4225
  %4298 = vst [vmem:[%s4289 + $0x144] sm:$0xf] %v4229
  %4299 = vst [vmem:[%s4289 + $0x168] sm:$0xf] %v4233
  %4300 = vst [vmem:[%s4289 + $0x18c] sm:$0xf] %v4237
  %4301 = vst [vmem:[%s4289 + $0x1b0] sm:$0xf] %v4241
  %4302 = vst [vmem:[%s4289 + $0x1d4] sm:$0xf] %v4245
  %4303 = vst [vmem:[%s4289 + $0x1f8] sm:$0xf] %v4249
  %4304 = vst [vmem:[#allocation4 + $0x10] sm:$0xf] %v4159
  %4305 = vst [vmem:[#allocation4 + $0x34] sm:$0xf] %v4161
  %4306 = vst [vmem:[#allocation4 + $0x58] sm:$0xf] %v4163
  %4307 = vst [vmem:[#allocation4 + $0x7c] sm:$0xf] %v4165
  %4308 = vst [vmem:[#allocation4 + $0xa0] sm:$0xf] %v4167
  %4309 = vst [vmem:[#allocation4 + $0xc4] sm:$0xf] %v4169
  %4310 = vst [vmem:[#allocation4 + $0xe8] sm:$0xf] %v4171
  %4311 = vst [vmem:[#allocation4 + $0x10c] sm:$0xf] %v4173
  %4312 = vst [vmem:[#allocation4 + $0x130] sm:$0xf] %v4175
  %4313 = vst [vmem:[#allocation4 + $0x154] sm:$0xf] %v4177
  %4314 = vst [vmem:[#allocation4 + $0x178] sm:$0xf] %v4179
  %4315 = vst [vmem:[#allocation4 + $0x19c] sm:$0xf] %v4181
  %4316 = vst [vmem:[#allocation4 + $0x1c0] sm:$0xf] %v4183
  %4317 = vst [vmem:[#allocation4 + $0x1e4] sm:$0xf] %v4185
  %4318 = vst [vmem:[#allocation4 + $0x208] sm:$0xf] %v4187
  %4319 = vst [vmem:[#allocation4 + $0x22c] sm:$0xf] %v4189
  %4320 = vst [vmem:[#allocation4 + $0x1c] sm:$0xf] %v4160
  %4321 = vst [vmem:[#allocation4 + $0x40] sm:$0xf] %v4162
  %4322 = vst [vmem:[#allocation4 + $0x64] sm:$0xf] %v4164
  %4323 = vst [vmem:[#allocation4 + $0x88] sm:$0xf] %v4166
  %4324 = vst [vmem:[#allocation4 + $0xac] sm:$0xf] %v4168
  %4325 = vst [vmem:[#allocation4 + $0xd0] sm:$0xf] %v4170
  %4326 = vst [vmem:[#allocation4 + $0xf4] sm:$0xf] %v4172
  %4327 = vst [vmem:[#allocation4 + $0x118] sm:$0xf] %v4174
  %4328 = vst [vmem:[#allocation4 + $0x13c] sm:$0xf] %v4176
  %4329 = vst [vmem:[#allocation4 + $0x160] sm:$0xf] %v4178
  %4330 = vst [vmem:[#allocation4 + $0x184] sm:$0xf] %v4180
  %4331 = vst [vmem:[#allocation4 + $0x1a8] sm:$0xf] %v4182
  %4332 = vst [vmem:[#allocation4 + $0x1cc] sm:$0xf] %v4184
  %4333 = vst [vmem:[#allocation4 + $0x1f0] sm:$0xf] %v4186
  %4334 = vst [vmem:[#allocation4 + $0x214] sm:$0xf] %v4188
  %4335 = vst [vmem:[#allocation4 + $0x238] sm:$0xf] %v4190
  %4336 = vst [vmem:[#allocation4 + $0x4] sm:$0xf] 0
  %4337 = vst [vmem:[#allocation4 + $0x124] sm:$0xf] 0
  %4338 = vst [vmem:[%s4289 + $0x4] sm:$0xf] %v4160
  %4339 = vst [vmem:[%s4289 + $0x28] sm:$0xf] %v4162
  %4340 = vst [vmem:[%s4289 + $0x4c] sm:$0xf] %v4164
  %4341 = vst [vmem:[%s4289 + $0x70] sm:$0xf] %v4166
  %4342 = vst [vmem:[%s4289 + $0x94] sm:$0xf] %v4168
  %4343 = vst [vmem:[%s4289 + $0xb8] sm:$0xf] %v4170
  %4344 = vst [vmem:[%s4289 + $0xdc] sm:$0xf] %v4172
  %4345 = vst [vmem:[%s4289 + $0x124] sm:$0xf] %v4176
  %4346 = vst [vmem:[%s4289 + $0x148] sm:$0xf] %v4178
  %4347 = vst [vmem:[%s4289 + $0x16c] sm:$0xf] %v4180
  %4348 = vst [vmem:[%s4289 + $0x190] sm:$0xf] %v4182
  %4349 = vst [vmem:[%s4289 + $0x1b4] sm:$0xf] %v4184
  %4350 = vst [vmem:[%s4289 + $0x1d8] sm:$0xf] %v4186
  %4351 = vst [vmem:[%s4289 + $0x1fc] sm:$0xf] %v4188
  %vm4352 = vsmask.f32 3328
  %vm4353 = vsmask.f32 7440
  %vm4354 = vmor %vm4352, %vm4353
  %v4356 = vshrl.u32 %v4191, 16
  %v4358 = vrot.slane %v4356, 4
  %v4359 = vshll.u32 %v4191, 16
  %v4361 = vrot.slane %v4359, 5
  %v4362 = vor.u32 %v4358, %v4361
  %v4363 = vrot.slane %v4362, 4
  %v4365 = vshll.u32 %v4192, 16
  %v4367 = vrot.slane %v4365, 5
  %v4368 = vsel %vm4354, %v4363, %v4367
  %v4370 = vshrl.u32 %v4195, 16
  %v4372 = vrot.slane %v4370, 4
  %v4373 = vshll.u32 %v4195, 16
  %v4375 = vrot.slane %v4373, 5
  %v4376 = vor.u32 %v4372, %v4375
  %v4377 = vrot.slane %v4376, 4
  %v4379 = vshll.u32 %v4196, 16
  %v4381 = vrot.slane %v4379, 5
  %v4382 = vsel %vm4354, %v4377, %v4381
  %v4384 = vshrl.u32 %v4199, 16
  %v4386 = vrot.slane %v4384, 4
  %v4387 = vshll.u32 %v4199, 16
  %v4389 = vrot.slane %v4387, 5
  %v4390 = vor.u32 %v4386, %v4389
  %v4391 = vrot.slane %v4390, 4
  %v4393 = vshll.u32 %v4200, 16
  %v4395 = vrot.slane %v4393, 5
  %v4396 = vsel %vm4354, %v4391, %v4395
  %v4398 = vshrl.u32 %v4203, 16
  %v4400 = vrot.slane %v4398, 4
  %v4401 = vshll.u32 %v4203, 16
  %v4403 = vrot.slane %v4401, 5
  %v4404 = vor.u32 %v4400, %v4403
  %v4405 = vrot.slane %v4404, 4
  %v4407 = vshll.u32 %v4204, 16
  %v4409 = vrot.slane %v4407, 5
  %v4410 = vsel %vm4354, %v4405, %v4409
  %v4412 = vshrl.u32 %v4207, 16
  %v4414 = vrot.slane %v4412, 4
  %v4415 = vshll.u32 %v4207, 16
  %v4417 = vrot.slane %v4415, 5
  %v4418 = vor.u32 %v4414, %v4417
  %v4419 = vrot.slane %v4418, 4
  %v4421 = vshll.u32 %v4208, 16
  %v4423 = vrot.slane %v4421, 5
  %v4424 = vsel %vm4354, %v4419, %v4423
  %v4426 = vshrl.u32 %v4211, 16
  %v4428 = vrot.slane %v4426, 4
  %v4429 = vshll.u32 %v4211, 16
  %v4431 = vrot.slane %v4429, 5
  %v4432 = vor.u32 %v4428, %v4431
  %v4433 = vrot.slane %v4432, 4
  %v4435 = vshll.u32 %v4212, 16
  %v4437 = vrot.slane %v4435, 5
  %v4438 = vsel %vm4354, %v4433, %v4437
  %v4440 = vshrl.u32 %v4215, 16
  %v4442 = vrot.slane %v4440, 4
  %v4443 = vshll.u32 %v4215, 16
  %v4445 = vrot.slane %v4443, 5
  %v4446 = vor.u32 %v4442, %v4445
  %v4447 = vrot.slane %v4446, 4
  %v4449 = vshll.u32 %v4216, 16
  %v4451 = vrot.slane %v4449, 5
  %v4452 = vsel %vm4354, %v4447, %v4451
  %v4454 = vshrl.u32 %v4219, 16
  %v4456 = vrot.slane %v4454, 4
  %v4457 = vshll.u32 %v4219, 16
  %v4459 = vrot.slane %v4457, 5
  %v4460 = vor.u32 %v4456, %v4459
  %v4461 = vrot.slane %v4460, 4
  %v4463 = vshll.u32 %v4220, 16
  %v4465 = vrot.slane %v4463, 5
  %v4466 = vsel %vm4354, %v4461, %v4465
  %v4468 = vshrl.u32 %v4223, 16
  %v4470 = vrot.slane %v4468, 4
  %v4471 = vshll.u32 %v4223, 16
  %v4473 = vrot.slane %v4471, 5
  %v4474 = vor.u32 %v4470, %v4473
  %v4475 = vrot.slane %v4474, 4
  %v4477 = vshll.u32 %v4224, 16
  %v4479 = vrot.slane %v4477, 5
  %v4480 = vsel %vm4354, %v4475, %v4479
  %v4482 = vshrl.u32 %v4227, 16
  %v4484 = vrot.slane %v4482, 4
  %v4485 = vshll.u32 %v4227, 16
  %v4487 = vrot.slane %v4485, 5
  %v4488 = vor.u32 %v4484, %v4487
  %v4489 = vrot.slane %v4488, 4
  %v4491 = vshll.u32 %v4228, 16
  %v4493 = vrot.slane %v4491, 5
  %v4494 = vsel %vm4354, %v4489, %v4493
  %v4496 = vshrl.u32 %v4231, 16
  %v4498 = vrot.slane %v4496, 4
  %v4499 = vshll.u32 %v4231, 16
  %v4501 = vrot.slane %v4499, 5
  %v4502 = vor.u32 %v4498, %v4501
  %v4503 = vrot.slane %v4502, 4
  %v4505 = vshll.u32 %v4232, 16
  %v4507 = vrot.slane %v4505, 5
  %v4508 = vsel %vm4354, %v4503, %v4507
  %v4510 = vshrl.u32 %v4235, 16
  %v4512 = vrot.slane %v4510, 4
  %v4513 = vshll.u32 %v4235, 16
  %v4515 = vrot.slane %v4513, 5
  %v4516 = vor.u32 %v4512, %v4515
  %v4517 = vrot.slane %v4516, 4
  %v4519 = vshll.u32 %v4236, 16
  %v4521 = vrot.slane %v4519, 5
  %v4522 = vsel %vm4354, %v4517, %v4521
  %v4524 = vshrl.u32 %v4239, 16
  %v4526 = vrot.slane %v4524, 4
  %v4527 = vshll.u32 %v4239, 16
  %v4529 = vrot.slane %v4527, 5
  %v4530 = vor.u32 %v4526, %v4529
  %v4531 = vrot.slane %v4530, 4
  %v4533 = vshll.u32 %v4240, 16
  %v4535 = vrot.slane %v4533, 5
  %v4536 = vsel %vm4354, %v4531, %v4535
  %v4538 = vshrl.u32 %v4243, 16
  %v4540 = vrot.slane %v4538, 4
  %v4541 = vshll.u32 %v4243, 16
  %v4543 = vrot.slane %v4541, 5
  %v4544 = vor.u32 %v4540, %v4543
  %v4545 = vrot.slane %v4544, 4
  %v4547 = vshll.u32 %v4244, 16
  %v4549 = vrot.slane %v4547, 5
  %v4550 = vsel %vm4354, %v4545, %v4549
  %v4552 = vshrl.u32 %v4247, 16
  %v4554 = vrot.slane %v4552, 4
  %v4555 = vshll.u32 %v4247, 16
  %v4557 = vrot.slane %v4555, 5
  %v4558 = vor.u32 %v4554, %v4557
  %v4559 = vrot.slane %v4558, 4
  %v4561 = vshll.u32 %v4248, 16
  %v4563 = vrot.slane %v4561, 5
  %v4564 = vsel %vm4354, %v4559, %v4563
  %v4566 = vshrl.u32 %v4251, 16
  %v4568 = vrot.slane %v4566, 4
  %v4569 = vshll.u32 %v4251, 16
  %v4571 = vrot.slane %v4569, 5
  %v4572 = vor.u32 %v4568, %v4571
  %v4573 = vrot.slane %v4572, 4
  %v4575 = vshll.u32 %v4252, 16
  %v4577 = vrot.slane %v4575, 5
  %v4578 = vsel %vm4354, %v4573, %v4577
  %4595 = vst [vmem:[#allocation4 + $0x14] sm:$0xf] %v4368
  %4596 = vst [vmem:[#allocation4 + $0x38] sm:$0xf] %v4382
  %4597 = vst [vmem:[#allocation4 + $0x5c] sm:$0xf] %v4396
  %4598 = vst [vmem:[#allocation4 + $0x80] sm:$0xf] %v4410
  %4599 = vst [vmem:[#allocation4 + $0xa4] sm:$0xf] %v4424
  %4600 = vst [vmem:[#allocation4 + $0xc8] sm:$0xf] %v4438
  %4601 = vst [vmem:[#allocation4 + $0xec] sm:$0xf] %v4452
  %4602 = vst [vmem:[#allocation4 + $0x110] sm:$0xf] %v4466
  %4603 = vst [vmem:[#allocation4 + $0x134] sm:$0xf] %v4480
  %4604 = vst [vmem:[#allocation4 + $0x158] sm:$0xf] %v4494
  %4605 = vst [vmem:[#allocation4 + $0x17c] sm:$0xf] %v4508
  %4606 = vst [vmem:[#allocation4 + $0x1a0] sm:$0xf] %v4522
  %4607 = vst [vmem:[#allocation4 + $0x1c4] sm:$0xf] %v4536
  %4608 = vst [vmem:[#allocation4 + $0x1e8] sm:$0xf] %v4550
  %4609 = vst [vmem:[#allocation4 + $0x20c] sm:$0xf] %v4564
  %4610 = vst [vmem:[#allocation4 + $0x230] sm:$0xf] %v4578
  %v4612 = vshrl.u32 %v4193, 16
  %v4614 = vrot.slane %v4612, 4
  %v4615 = vshll.u32 %v4193, 16
  %v4617 = vrot.slane %v4615, 5
  %v4618 = vor.u32 %v4614, %v4617
  %v4619 = vrot.slane %v4618, 4
  %v4621 = vshll.u32 %v4194, 16
  %v4623 = vrot.slane %v4621, 5
  %v4624 = vsel %vm4354, %v4619, %v4623
  %v4626 = vshrl.u32 %v4197, 16
  %v4628 = vrot.slane %v4626, 4
  %v4629 = vshll.u32 %v4197, 16
  %v4631 = vrot.slane %v4629, 5
  %v4632 = vor.u32 %v4628, %v4631
  %v4633 = vrot.slane %v4632, 4
  %v4635 = vshll.u32 %v4198, 16
  %v4637 = vrot.slane %v4635, 5
  %v4638 = vsel %vm4354, %v4633, %v4637
  %v4640 = vshrl.u32 %v4201, 16
  %v4642 = vrot.slane %v4640, 4
  %v4643 = vshll.u32 %v4201, 16
  %v4645 = vrot.slane %v4643, 5
  %v4646 = vor.u32 %v4642, %v4645
  %v4647 = vrot.slane %v4646, 4
  %v4649 = vshll.u32 %v4202, 16
  %v4651 = vrot.slane %v4649, 5
  %v4652 = vsel %vm4354, %v4647, %v4651
  %v4654 = vshrl.u32 %v4205, 16
  %v4656 = vrot.slane %v4654, 4
  %v4657 = vshll.u32 %v4205, 16
  %v4659 = vrot.slane %v4657, 5
  %v4660 = vor.u32 %v4656, %v4659
  %v4661 = vrot.slane %v4660, 4
  %v4663 = vshll.u32 %v4206, 16
  %v4665 = vrot.slane %v4663, 5
  %v4666 = vsel %vm4354, %v4661, %v4665
  %v4668 = vshrl.u32 %v4209, 16
  %v4670 = vrot.slane %v4668, 4
  %v4671 = vshll.u32 %v4209, 16
  %v4673 = vrot.slane %v4671, 5
  %v4674 = vor.u32 %v4670, %v4673
  %v4675 = vrot.slane %v4674, 4
  %v4677 = vshll.u32 %v4210, 16
  %v4679 = vrot.slane %v4677, 5
  %v4680 = vsel %vm4354, %v4675, %v4679
  %v4682 = vshrl.u32 %v4213, 16
  %v4684 = vrot.slane %v4682, 4
  %v4685 = vshll.u32 %v4213, 16
  %v4687 = vrot.slane %v4685, 5
  %v4688 = vor.u32 %v4684, %v4687
  %v4689 = vrot.slane %v4688, 4
  %v4691 = vshll.u32 %v4214, 16
  %v4693 = vrot.slane %v4691, 5
  %v4694 = vsel %vm4354, %v4689, %v4693
  %v4696 = vshrl.u32 %v4217, 16
  %v4698 = vrot.slane %v4696, 4
  %v4699 = vshll.u32 %v4217, 16
  %v4701 = vrot.slane %v4699, 5
  %v4702 = vor.u32 %v4698, %v4701
  %v4703 = vrot.slane %v4702, 4
  %v4705 = vshll.u32 %v4218, 16
  %v4707 = vrot.slane %v4705, 5
  %v4708 = vsel %vm4354, %v4703, %v4707
  %v4710 = vshrl.u32 %v4221, 16
  %v4712 = vrot.slane %v4710, 4
  %v4713 = vshll.u32 %v4221, 16
  %v4715 = vrot.slane %v4713, 5
  %v4716 = vor.u32 %v4712, %v4715
  %v4717 = vrot.slane %v4716, 4
  %v4719 = vshll.u32 %v4222, 16
  %v4721 = vrot.slane %v4719, 5
  %v4722 = vsel %vm4354, %v4717, %v4721
  %v4724 = vshrl.u32 %v4225, 16
  %v4726 = vrot.slane %v4724, 4
  %v4727 = vshll.u32 %v4225, 16
  %v4729 = vrot.slane %v4727, 5
  %v4730 = vor.u32 %v4726, %v4729
  %v4731 = vrot.slane %v4730, 4
  %v4733 = vshll.u32 %v4226, 16
  %v4735 = vrot.slane %v4733, 5
  %v4736 = vsel %vm4354, %v4731, %v4735
  %v4738 = vshrl.u32 %v4229, 16
  %v4740 = vrot.slane %v4738, 4
  %v4741 = vshll.u32 %v4229, 16
  %v4743 = vrot.slane %v4741, 5
  %v4744 = vor.u32 %v4740, %v4743
  %v4745 = vrot.slane %v4744, 4
  %v4747 = vshll.u32 %v4230, 16
  %v4749 = vrot.slane %v4747, 5
  %v4750 = vsel %vm4354, %v4745, %v4749
  %v4752 = vshrl.u32 %v4233, 16
  %v4754 = vrot.slane %v4752, 4
  %v4755 = vshll.u32 %v4233, 16
  %v4757 = vrot.slane %v4755, 5
  %v4758 = vor.u32 %v4754, %v4757
  %v4759 = vrot.slane %v4758, 4
  %v4761 = vshll.u32 %v4234, 16
  %v4763 = vrot.slane %v4761, 5
  %v4764 = vsel %vm4354, %v4759, %v4763
  %v4766 = vshrl.u32 %v4237, 16
  %v4768 = vrot.slane %v4766, 4
  %v4769 = vshll.u32 %v4237, 16
  %v4771 = vrot.slane %v4769, 5
  %v4772 = vor.u32 %v4768, %v4771
  %v4773 = vrot.slane %v4772, 4
  %v4775 = vshll.u32 %v4238, 16
  %v4777 = vrot.slane %v4775, 5
  %v4778 = vsel %vm4354, %v4773, %v4777
  %v4780 = vshrl.u32 %v4241, 16
  %v4782 = vrot.slane %v4780, 4
  %v4783 = vshll.u32 %v4241, 16
  %v4785 = vrot.slane %v4783, 5
  %v4786 = vor.u32 %v4782, %v4785
  %v4787 = vrot.slane %v4786, 4
  %v4789 = vshll.u32 %v4242, 16
  %v4791 = vrot.slane %v4789, 5
  %v4792 = vsel %vm4354, %v4787, %v4791
  %v4794 = vshrl.u32 %v4245, 16
  %v4796 = vrot.slane %v4794, 4
  %v4797 = vshll.u32 %v4245, 16
  %v4799 = vrot.slane %v4797, 5
  %v4800 = vor.u32 %v4796, %v4799
  %v4801 = vrot.slane %v4800, 4
  %v4803 = vshll.u32 %v4246, 16
  %v4805 = vrot.slane %v4803, 5
  %v4806 = vsel %vm4354, %v4801, %v4805
  %v4808 = vshrl.u32 %v4249, 16
  %v4810 = vrot.slane %v4808, 4
  %v4811 = vshll.u32 %v4249, 16
  %v4813 = vrot.slane %v4811, 5
  %v4814 = vor.u32 %v4810, %v4813
  %v4815 = vrot.slane %v4814, 4
  %v4817 = vshll.u32 %v4250, 16
  %v4819 = vrot.slane %v4817, 5
  %v4820 = vsel %vm4354, %v4815, %v4819
  %v4822 = vshrl.u32 %v4253, 16
  %v4824 = vrot.slane %v4822, 4
  %v4825 = vshll.u32 %v4253, 16
  %v4827 = vrot.slane %v4825, 5
  %v4828 = vor.u32 %v4824, %v4827
  %v4829 = vrot.slane %v4828, 4
  %v4831 = vshll.u32 %v4254, 16
  %v4833 = vrot.slane %v4831, 5
  %v4834 = vsel %vm4354, %v4829, %v4833
  %4851 = vst [vmem:[#allocation4 + $0x20] sm:$0xf] %v4624
  %4852 = vst [vmem:[#allocation4 + $0x44] sm:$0xf] %v4638
  %4853 = vst [vmem:[#allocation4 + $0x68] sm:$0xf] %v4652
  %4854 = vst [vmem:[#allocation4 + $0x8c] sm:$0xf] %v4666
  %4855 = vst [vmem:[#allocation4 + $0xb0] sm:$0xf] %v4680
  %4856 = vst [vmem:[#allocation4 + $0xd4] sm:$0xf] %v4694
  %4857 = vst [vmem:[#allocation4 + $0xf8] sm:$0xf] %v4708
  %4858 = vst [vmem:[#allocation4 + $0x11c] sm:$0xf] %v4722
  %4859 = vst [vmem:[#allocation4 + $0x140] sm:$0xf] %v4736
  %4860 = vst [vmem:[#allocation4 + $0x164] sm:$0xf] %v4750
  %4861 = vst [vmem:[#allocation4 + $0x188] sm:$0xf] %v4764
  %4862 = vst [vmem:[#allocation4 + $0x1ac] sm:$0xf] %v4778
  %4863 = vst [vmem:[#allocation4 + $0x1d0] sm:$0xf] %v4792
  %4864 = vst [vmem:[#allocation4 + $0x1f4] sm:$0xf] %v4806
  %4865 = vst [vmem:[#allocation4 + $0x218] sm:$0xf] %v4820
  %4866 = vst [vmem:[#allocation4 + $0x23c] sm:$0xf] %v4834
  %4867 = vst [vmem:[#allocation4 + $0x8] sm:$0xf] 0
  %4868 = vst [vmem:[#allocation4 + $0x128] sm:$0xf] 0
  %4869 = vst [vmem:[%s4289 + $0x8] sm:$0xf] %v4624
  %4870 = vst [vmem:[%s4289 + $0x2c] sm:$0xf] %v4638
  %4871 = vst [vmem:[%s4289 + $0x50] sm:$0xf] %v4652
  %4872 = vst [vmem:[%s4289 + $0x74] sm:$0xf] %v4666
  %4873 = vst [vmem:[%s4289 + $0x98] sm:$0xf] %v4680
  %4874 = vst [vmem:[%s4289 + $0xbc] sm:$0xf] %v4694
  %4875 = vst [vmem:[%s4289 + $0xe0] sm:$0xf] %v4708
  %4876 = vst [vmem:[%s4289 + $0x128] sm:$0xf] %v4736
  %4877 = vst [vmem:[%s4289 + $0x14c] sm:$0xf] %v4750
  %4878 = vst [vmem:[%s4289 + $0x170] sm:$0xf] %v4764
  %4879 = vst [vmem:[%s4289 + $0x194] sm:$0xf] %v4778
  %4880 = vst [vmem:[%s4289 + $0x1b8] sm:$0xf] %v4792
  %4881 = vst [vmem:[%s4289 + $0x1dc] sm:$0xf] %v4806
  %4882 = vst [vmem:[%s4289 + $0x200] sm:$0xf] %v4820
  %v4883 = vld [vmem:[#allocation4] sm:$0xff]
  %v4884 = vld [vmem:[#allocation4 + $0x8] sm:$0xff]
  %v4885 = vld [vmem:[#allocation4 + $0x10] sm:$0xff]
  %v4886 = vld [vmem:[#allocation4 + $0x18] sm:$0xff]
  %v4887 = vld [vmem:[#allocation4 + $0x20] sm:$0xf]
  %v4888 = vld [vmem:[#allocation4 + $0x24] sm:$0xff]
  %v4889 = vld [vmem:[#allocation4 + $0x2c] sm:$0xff]
  %v4890 = vld [vmem:[#allocation4 + $0x34] sm:$0xff]
  %v4891 = vld [vmem:[#allocation4 + $0x3c] sm:$0xff]
  %v4892 = vld [vmem:[#allocation4 + $0x44] sm:$0xf]
  %v4893 = vld [vmem:[#allocation4 + $0x48] sm:$0xff]
  %v4894 = vld [vmem:[#allocation4 + $0x50] sm:$0xff]
  %v4895 = vld [vmem:[#allocation4 + $0x58] sm:$0xff]
  %v4896 = vld [vmem:[#allocation4 + $0x60] sm:$0xff]
  %v4897 = vld [vmem:[#allocation4 + $0x68] sm:$0xf]
  %v4898 = vld [vmem:[#allocation4 + $0x6c] sm:$0xff]
  %v4899 = vld [vmem:[#allocation4 + $0x74] sm:$0xff]
  %v4900 = vld [vmem:[#allocation4 + $0x7c] sm:$0xff]
  %v4901 = vld [vmem:[#allocation4 + $0x84] sm:$0xff]
  %v4902 = vld [vmem:[#allocation4 + $0x8c] sm:$0xf]
  %v4903 = vld [vmem:[#allocation4 + $0x90] sm:$0xff]
  %v4904 = vld [vmem:[#allocation4 + $0x98] sm:$0xff]
  %v4905 = vld [vmem:[#allocation4 + $0xa0] sm:$0xff]
  %v4906 = vld [vmem:[#allocation4 + $0xa8] sm:$0xff]
  %v4907 = vld [vmem:[#allocation4 + $0xb0] sm:$0xf]
  %v4908 = vld [vmem:[#allocation4 + $0xb4] sm:$0xff]
  %v4909 = vld [vmem:[#allocation4 + $0xbc] sm:$0xff]
  %v4910 = vld [vmem:[#allocation4 + $0xc4] sm:$0xff]
  %v4911 = vld [vmem:[#allocation4 + $0xcc] sm:$0xff]
  %v4912 = vld [vmem:[#allocation4 + $0xd4] sm:$0xf]
  %v4913 = vld [vmem:[#allocation4 + $0xd8] sm:$0xff]
  %v4914 = vld [vmem:[#allocation4 + $0xe0] sm:$0xff]
  %v4915 = vld [vmem:[#allocation4 + $0xe8] sm:$0xff]
  %v4916 = vld [vmem:[#allocation4 + $0xf0] sm:$0xff]
  %v4917 = vld [vmem:[#allocation4 + $0xf8] sm:$0xf]
  %v4918 = vld [vmem:[#allocation4 + $0xfc] sm:$0xff]
  %v4919 = vld [vmem:[#allocation4 + $0x104] sm:$0xff]
  %v4920 = vld [vmem:[#allocation4 + $0x10c] sm:$0xff]
  %v4921 = vld [vmem:[#allocation4 + $0x114] sm:$0xff]
  %v4922 = vld [vmem:[#allocation4 + $0x11c] sm:$0xf]
  %v4923 = vld [vmem:[#allocation4 + $0x120] sm:$0xff]
  %v4924 = vld [vmem:[#allocation4 + $0x128] sm:$0xff]
  %v4925 = vld [vmem:[#allocation4 + $0x130] sm:$0xff]
  %v4926 = vld [vmem:[#allocation4 + $0x138] sm:$0xff]
  %v4927 = vld [vmem:[#allocation4 + $0x140] sm:$0xf]
  %v4928 = vld [vmem:[#allocation4 + $0x144] sm:$0xff]
  %v4929 = vld [vmem:[#allocation4 + $0x14c] sm:$0xff]
  %v4930 = vld [vmem:[#allocation4 + $0x154] sm:$0xff]
  %v4931 = vld [vmem:[#allocation4 + $0x15c] sm:$0xff]
  %v4932 = vld [vmem:[#allocation4 + $0x164] sm:$0xf]
  %v4933 = vld [vmem:[#allocation4 + $0x168] sm:$0xff]
  %v4934 = vld [vmem:[#allocation4 + $0x170] sm:$0xff]
  %v4935 = vld [vmem:[#allocation4 + $0x178] sm:$0xff]
  %v4936 = vld [vmem:[#allocation4 + $0x180] sm:$0xff]
  %v4937 = vld [vmem:[#allocation4 + $0x188] sm:$0xf]
  %v4938 = vld [vmem:[#allocation4 + $0x18c] sm:$0xff]
  %v4939 = vld [vmem:[#allocation4 + $0x194] sm:$0xff]
  %v4940 = vld [vmem:[#allocation4 + $0x19c] sm:$0xff]
  %v4941 = vld [vmem:[#allocation4 + $0x1a4] sm:$0xff]
  %v4942 = vld [vmem:[#allocation4 + $0x1ac] sm:$0xf]
  %v4943 = vld [vmem:[#allocation4 + $0x1b0] sm:$0xff]
  %v4944 = vld [vmem:[#allocation4 + $0x1b8] sm:$0xff]
  %v4945 = vld [vmem:[#allocation4 + $0x1c0] sm:$0xff]
  %v4946 = vld [vmem:[#allocation4 + $0x1c8] sm:$0xff]
  %v4947 = vld [vmem:[#allocation4 + $0x1d0] sm:$0xf]
  %v4948 = vld [vmem:[#allocation4 + $0x1d4] sm:$0xff]
  %v4949 = vld [vmem:[#allocation4 + $0x1dc] sm:$0xff]
  %v4950 = vld [vmem:[#allocation4 + $0x1e4] sm:$0xff]
  %v4951 = vld [vmem:[#allocation4 + $0x1ec] sm:$0xff]
  %v4952 = vld [vmem:[#allocation4 + $0x1f4] sm:$0xf]
  %v4953 = vld [vmem:[#allocation4 + $0x1f8] sm:$0xff]
  %v4954 = vld [vmem:[#allocation4 + $0x200] sm:$0xff]
  %v4955 = vld [vmem:[#allocation4 + $0x208] sm:$0xff]
  %v4956 = vld [vmem:[#allocation4 + $0x210] sm:$0xff]
  %v4957 = vld [vmem:[#allocation4 + $0x218] sm:$0xf]
  %v4958 = vld [vmem:[#allocation4 + $0x21c] sm:$0xff]
  %v4959 = vld [vmem:[#allocation4 + $0x224] sm:$0xff]
  %v4960 = vld [vmem:[#allocation4 + $0x22c] sm:$0xff]
  %v4961 = vld [vmem:[#allocation4 + $0x234] sm:$0xff]
  %v4962 = vld [vmem:[#allocation4 + $0x23c] sm:$0xf]
  %v4963 = vld [vmem:[%s4] sm:$0xf]
  %v4964 = vld [vmem:[%s4 + $0x4] sm:$0xf]
  %v4965 = vld [vmem:[%s4 + $0x8] sm:$0xf]
  %v4966 = vld [vmem:[%s4 + $0xc] sm:$0xf]
  %v4967 = vld [vmem:[%s4 + $0x10] sm:$0xf]
  %v4968 = vld [vmem:[%s4 + $0x14] sm:$0xf]
  %v4969 = vld [vmem:[%s4 + $0x18] sm:$0xf]
  %v4970 = vld [vmem:[%s4 + $0x1c] sm:$0xf]
  %v4971 = vld [vmem:[%s4 + $0x20] sm:$0xf]
  %v4972 = vld [vmem:[%s4 + $0x24] sm:$0xf]
  %v4973 = vld [vmem:[%s4 + $0x28] sm:$0xf]
  %v4974 = vld [vmem:[%s4 + $0x2c] sm:$0xf]
  %v4975 = vld [vmem:[%s4 + $0x30] sm:$0xf]
  %v4976 = vld [vmem:[%s4 + $0x34] sm:$0xf]
  %v4977 = vld [vmem:[%s4 + $0x38] sm:$0xf]
  %v4978 = vld [vmem:[%s4 + $0x3c] sm:$0xf]
  %v4979 = vld [vmem:[%s4 + $0x40] sm:$0xf]
  %v4980 = vld [vmem:[%s4 + $0x44] sm:$0xf]
  %v4981 = vld [vmem:[%s4 + $0x48] sm:$0xf]
  %v4982 = vld [vmem:[%s4 + $0x4c] sm:$0xf]
  %v4983 = vld [vmem:[%s4 + $0x50] sm:$0xf]
  %v4984 = vld [vmem:[%s4 + $0x54] sm:$0xf]
  %v4985 = vld [vmem:[%s4 + $0x58] sm:$0xf]
  %v4986 = vld [vmem:[%s4 + $0x5c] sm:$0xf]
  %v4987 = vld [vmem:[%s4 + $0x60] sm:$0xf]
  %v4988 = vld [vmem:[%s4 + $0x64] sm:$0xf]
  %v4989 = vld [vmem:[%s4 + $0x68] sm:$0xf]
  %v4990 = vld [vmem:[%s4 + $0x6c] sm:$0xf]
  %v4991 = vld [vmem:[%s4 + $0x70] sm:$0xf]
  %v4992 = vld [vmem:[%s4 + $0x74] sm:$0xf]
  %v4993 = vld [vmem:[%s4 + $0x78] sm:$0xf]
  %v4994 = vld [vmem:[%s4 + $0x7c] sm:$0xf]
  %v4995 = vld [vmem:[%s4 + $0x80] sm:$0xf]
  %v4996 = vld [vmem:[%s4 + $0x84] sm:$0xf]
  %v4997 = vld [vmem:[%s4 + $0x88] sm:$0xf]
  %v4998 = vld [vmem:[%s4 + $0x8c] sm:$0xf]
  %v4999 = vld [vmem:[%s4 + $0x90] sm:$0xf]
  %v5000 = vld [vmem:[%s4 + $0x94] sm:$0xf]
  %v5001 = vld [vmem:[%s4 + $0x98] sm:$0xf]
  %v5002 = vld [vmem:[%s4 + $0x9c] sm:$0xf]
  %v5003 = vld [vmem:[%s4 + $0xa0] sm:$0xf]
  %v5004 = vld [vmem:[%s4 + $0xa4] sm:$0xf]
  %v5005 = vld [vmem:[%s4 + $0xa8] sm:$0xf]
  %v5006 = vld [vmem:[%s4 + $0xac] sm:$0xf]
  %v5007 = vld [vmem:[%s4 + $0xb0] sm:$0xf]
  %v5008 = vld [vmem:[%s4 + $0xb4] sm:$0xf]
  %v5009 = vld [vmem:[%s4 + $0xb8] sm:$0xf]
  %v5010 = vld [vmem:[%s4 + $0xbc] sm:$0xf]
  %v5011 = vld [vmem:[%s4 + $0xc0] sm:$0xf]
  %v5012 = vld [vmem:[%s4 + $0xc4] sm:$0xf]
  %v5013 = vld [vmem:[%s4 + $0xc8] sm:$0xf]
  %v5014 = vld [vmem:[%s4 + $0xcc] sm:$0xf]
  %v5015 = vld [vmem:[%s4 + $0xd0] sm:$0xf]
  %v5016 = vld [vmem:[%s4 + $0xd4] sm:$0xf]
  %v5017 = vld [vmem:[%s4 + $0xd8] sm:$0xf]
  %v5018 = vld [vmem:[%s4 + $0xdc] sm:$0xf]
  %v5019 = vld [vmem:[%s4 + $0xe0] sm:$0xf]
  %v5020 = vld [vmem:[%s4 + $0xe4] sm:$0xf]
  %v5021 = vld [vmem:[%s4 + $0xe8] sm:$0xf]
  %v5022 = vld [vmem:[%s4 + $0xec] sm:$0xf]
  %v5023 = vld [vmem:[%s4 + $0xf0] sm:$0xf]
  %v5024 = vld [vmem:[%s4 + $0xf4] sm:$0xf]
  %v5025 = vld [vmem:[%s4 + $0xf8] sm:$0xf]
  %v5026 = vld [vmem:[%s4 + $0xfc] sm:$0xf]
  %v5027 = vld [vmem:[%s4 + $0x100] sm:$0xf]
  %v5028 = vld [vmem:[%s4 + $0x104] sm:$0xf]
  %v5029 = vld [vmem:[%s4 + $0x108] sm:$0xf]
  %v5030 = vld [vmem:[%s4 + $0x10c] sm:$0xf]
  %v5031 = vld [vmem:[%s4 + $0x110] sm:$0xf]
  %v5032 = vld [vmem:[%s4 + $0x114] sm:$0xf]
  %v5033 = vld [vmem:[%s4 + $0x118] sm:$0xf]
  %v5034 = vld [vmem:[%s4 + $0x11c] sm:$0xf]
  %v5035 = vld [vmem:[%s4 + $0x120] sm:$0xf]
  %v5036 = vld [vmem:[%s4 + $0x124] sm:$0xf]
  %v5037 = vld [vmem:[%s4 + $0x128] sm:$0xf]
  %v5038 = vld [vmem:[%s4 + $0x12c] sm:$0xf]
  %v5039 = vld [vmem:[%s4 + $0x130] sm:$0xf]
  %v5040 = vld [vmem:[%s4 + $0x134] sm:$0xf]
  %v5041 = vld [vmem:[%s4 + $0x138] sm:$0xf]
  %v5042 = vld [vmem:[%s4 + $0x13c] sm:$0xf]
  %v5043 = vld [vmem:[%s4 + $0x140] sm:$0xf]
  %v5044 = vld [vmem:[%s4 + $0x144] sm:$0xf]
  %v5045 = vld [vmem:[%s4 + $0x148] sm:$0xf]
  %v5046 = vld [vmem:[%s4 + $0x14c] sm:$0xf]
  %v5047 = vld [vmem:[%s4 + $0x150] sm:$0xf]
  %v5048 = vld [vmem:[%s4 + $0x154] sm:$0xf]
  %v5049 = vld [vmem:[%s4 + $0x158] sm:$0xf]
  %v5050 = vld [vmem:[%s4 + $0x15c] sm:$0xf]
  %v5051 = vld [vmem:[%s4 + $0x160] sm:$0xf]
  %v5052 = vld [vmem:[%s4 + $0x164] sm:$0xf]
  %v5053 = vld [vmem:[%s4 + $0x168] sm:$0xf]
  %v5054 = vld [vmem:[%s4 + $0x16c] sm:$0xf]
  %v5055 = vld [vmem:[%s4 + $0x170] sm:$0xf]
  %v5056 = vld [vmem:[%s4 + $0x174] sm:$0xf]
  %v5057 = vld [vmem:[%s4 + $0x178] sm:$0xf]
  %v5058 = vld [vmem:[%s4 + $0x17c] sm:$0xf]
  %v5059 = vld [vmem:[%s4 + $0x180] sm:$0xf]
  %v5060 = vld [vmem:[%s4 + $0x184] sm:$0xf]
  %v5061 = vld [vmem:[%s4 + $0x188] sm:$0xf]
  %v5062 = vld [vmem:[%s4 + $0x18c] sm:$0xf]
  %v5063 = vld [vmem:[%s4 + $0x190] sm:$0xf]
  %v5064 = vld [vmem:[%s4 + $0x194] sm:$0xf]
  %v5065 = vld [vmem:[%s4 + $0x198] sm:$0xf]
  %v5066 = vld [vmem:[%s4 + $0x19c] sm:$0xf]
  %v5067 = vld [vmem:[%s4 + $0x1a0] sm:$0xf]
  %v5068 = vld [vmem:[%s4 + $0x1a4] sm:$0xf]
  %v5069 = vld [vmem:[%s4 + $0x1a8] sm:$0xf]
  %v5070 = vld [vmem:[%s4 + $0x1ac] sm:$0xf]
  %v5071 = vld [vmem:[%s4 + $0x1b0] sm:$0xf]
  %v5072 = vld [vmem:[%s4 + $0x1b4] sm:$0xf]
  %v5073 = vld [vmem:[%s4 + $0x1b8] sm:$0xf]
  %v5074 = vld [vmem:[%s4 + $0x1bc] sm:$0xf]
  %v5075 = vld [vmem:[%s4 + $0x1c0] sm:$0xf]
  %v5076 = vld [vmem:[%s4 + $0x1c4] sm:$0xf]
  %v5077 = vld [vmem:[%s4 + $0x1c8] sm:$0xf]
  %v5078 = vld [vmem:[%s4 + $0x1cc] sm:$0xf]
  %v5079 = vld [vmem:[%s4 + $0x1d0] sm:$0xf]
  %v5080 = vld [vmem:[%s4 + $0x1d4] sm:$0xf]
  %v5081 = vld [vmem:[%s4 + $0x1d8] sm:$0xf]
  %v5082 = vld [vmem:[%s4 + $0x1dc] sm:$0xf]
  %v5083 = vld [vmem:[%s4 + $0x1e0] sm:$0xf]
  %v5084 = vld [vmem:[%s4 + $0x1e4] sm:$0xf]
  %v5085 = vld [vmem:[%s4 + $0x1e8] sm:$0xf]
  %v5086 = vld [vmem:[%s4 + $0x1ec] sm:$0xf]
  %v5087 = vld [vmem:[%s4 + $0x1f0] sm:$0xf]
  %v5088 = vld [vmem:[%s4 + $0x1f4] sm:$0xf]
  %v5089 = vld [vmem:[%s4 + $0x1f8] sm:$0xf]
  %v5090 = vld [vmem:[%s4 + $0x1fc] sm:$0xf]
  %v5091 = vld [vmem:[%s4 + $0x200] sm:$0xf]
  %v5092 = vld [vmem:[%s4 + $0x204] sm:$0xf]
  %v5093 = vld [vmem:[%s4 + $0x208] sm:$0xf]
  %v5094 = vld [vmem:[%s4 + $0x20c] sm:$0xf]
  %v5095 = vld [vmem:[%s4 + $0x210] sm:$0xf]
  %v5096 = vld [vmem:[%s4 + $0x214] sm:$0xf]
  %v5097 = vld [vmem:[%s4 + $0x218] sm:$0xf]
  %v5098 = vld [vmem:[%s4 + $0x21c] sm:$0xf]
  %v5099 = vld [vmem:[%s4 + $0x220] sm:$0xf]
  %v5100 = vld [vmem:[%s4 + $0x224] sm:$0xf]
  %v5101 = vld [vmem:[%s4 + $0x228] sm:$0xf]
  %v5102 = vld [vmem:[%s4 + $0x22c] sm:$0xf]
  %v5103 = vld [vmem:[%s4 + $0x230] sm:$0xf]
  %v5104 = vld [vmem:[%s4 + $0x234] sm:$0xf]
  %v5105 = vld [vmem:[%s4 + $0x238] sm:$0xf]
  %v5106 = vld [vmem:[%s4 + $0x23c] sm:$0xf]
  %v5107 = vld [vmem:[%s5] sm:$0x1]
  %v5109 = vlaneseq
  %v5110 = vshrl.u32 %v5109, 7
  %v5111 = vsub.s32 0, %v5110
  %v5112 = vrot.slane %v5107, %v5111
  %v5194 = vunpack.c.l.b16 %v4883
  %v5195 = vunpack.c.h.b16 %v4883
  %v5196 = vunpack.c.l.b16 %v4884
  %v5197 = vunpack.c.h.b16 %v4884
  %v5198 = vunpack.c.l.b16 %v4885
  %v5199 = vunpack.c.h.b16 %v4885
  %v5200 = vunpack.c.l.b16 %v4886
  %v5201 = vunpack.c.h.b16 %v4886
  %v5202 = vunpack.c.l.b16 %v4887
  %v5203 = vunpack.c.l.b16 %v4888
  %v5204 = vunpack.c.h.b16 %v4888
  %v5205 = vunpack.c.l.b16 %v4889
  %v5206 = vunpack.c.h.b16 %v4889
  %v5207 = vunpack.c.l.b16 %v4890
  %v5208 = vunpack.c.h.b16 %v4890
  %v5209 = vunpack.c.l.b16 %v4891
  %v5210 = vunpack.c.h.b16 %v4891
  %v5211 = vunpack.c.l.b16 %v4892
  %v5212 = vunpack.c.l.b16 %v4893
  %v5213 = vunpack.c.h.b16 %v4893
  %v5214 = vunpack.c.l.b16 %v4894
  %v5215 = vunpack.c.h.b16 %v4894
  %v5216 = vunpack.c.l.b16 %v4895
  %v5217 = vunpack.c.h.b16 %v4895
  %v5218 = vunpack.c.l.b16 %v4896
  %v5219 = vunpack.c.h.b16 %v4896
  %v5220 = vunpack.c.l.b16 %v4897
  %v5221 = vunpack.c.l.b16 %v4898
  %v5222 = vunpack.c.h.b16 %v4898
  %v5223 = vunpack.c.l.b16 %v4899
  %v5224 = vunpack.c.h.b16 %v4899
  %v5225 = vunpack.c.l.b16 %v4900
  %v5226 = vunpack.c.h.b16 %v4900
  %v5227 = vunpack.c.l.b16 %v4901
  %v5228 = vunpack.c.h.b16 %v4901
  %v5229 = vunpack.c.l.b16 %v4902
  %v5230 = vunpack.c.l.b16 %v4903
  %v5231 = vunpack.c.h.b16 %v4903
  %v5232 = vunpack.c.l.b16 %v4904
  %v5233 = vunpack.c.h.b16 %v4904
  %v5234 = vunpack.c.l.b16 %v4905
  %v5235 = vunpack.c.h.b16 %v4905
  %v5236 = vunpack.c.l.b16 %v4906
  %v5237 = vunpack.c.h.b16 %v4906
  %v5238 = vunpack.c.l.b16 %v4907
  %v5239 = vunpack.c.l.b16 %v4908
  %v5240 = vunpack.c.h.b16 %v4908
  %v5241 = vunpack.c.l.b16 %v4909
  %v5242 = vunpack.c.h.b16 %v4909
  %v5243 = vunpack.c.l.b16 %v4910
  %v5244 = vunpack.c.h.b16 %v4910
  %v5245 = vunpack.c.l.b16 %v4911
  %v5246 = vunpack.c.h.b16 %v4911
  %v5247 = vunpack.c.l.b16 %v4912
  %v5248 = vunpack.c.l.b16 %v4913
  %v5249 = vunpack.c.h.b16 %v4913
  %v5250 = vunpack.c.l.b16 %v4914
  %v5251 = vunpack.c.h.b16 %v4914
  %v5252 = vunpack.c.l.b16 %v4915
  %v5253 = vunpack.c.h.b16 %v4915
  %v5254 = vunpack.c.l.b16 %v4916
  %v5255 = vunpack.c.h.b16 %v4916
  %v5256 = vunpack.c.l.b16 %v4917
  %v5257 = vunpack.c.l.b16 %v4918
  %v5258 = vunpack.c.h.b16 %v4918
  %v5259 = vunpack.c.l.b16 %v4919
  %v5260 = vunpack.c.h.b16 %v4919
  %v5261 = vunpack.c.l.b16 %v4920
  %v5262 = vunpack.c.h.b16 %v4920
  %v5263 = vunpack.c.l.b16 %v4921
  %v5264 = vunpack.c.h.b16 %v4921
  %v5265 = vunpack.c.l.b16 %v4922
  %v5266 = vunpack.c.l.b16 %v4923
  %v5267 = vunpack.c.h.b16 %v4923
  %v5268 = vunpack.c.l.b16 %v4924
  %v5269 = vunpack.c.h.b16 %v4924
  %v5270 = vunpack.c.l.b16 %v4925
  %v5271 = vunpack.c.h.b16 %v4925
  %v5272 = vunpack.c.l.b16 %v4926
  %v5273 = vunpack.c.h.b16 %v4926
  %v5274 = vunpack.c.l.b16 %v4927
  %v5275 = vunpack.c.l.b16 %v4928
  %v5276 = vunpack.c.h.b16 %v4928
  %v5277 = vunpack.c.l.b16 %v4929
  %v5278 = vunpack.c.h.b16 %v4929
  %v5279 = vunpack.c.l.b16 %v4930
  %v5280 = vunpack.c.h.b16 %v4930
  %v5281 = vunpack.c.l.b16 %v4931
  %v5282 = vunpack.c.h.b16 %v4931
  %v5283 = vunpack.c.l.b16 %v4932
  %v5284 = vunpack.c.l.b16 %v4933
  %v5285 = vunpack.c.h.b16 %v4933
  %v5286 = vunpack.c.l.b16 %v4934
  %v5287 = vunpack.c.h.b16 %v4934
  %v5288 = vunpack.c.l.b16 %v4935
  %v5289 = vunpack.c.h.b16 %v4935
  %v5290 = vunpack.c.l.b16 %v4936
  %v5291 = vunpack.c.h.b16 %v4936
  %v5292 = vunpack.c.l.b16 %v4937
  %v5293 = vunpack.c.l.b16 %v4938
  %v5294 = vunpack.c.h.b16 %v4938
  %v5295 = vunpack.c.l.b16 %v4939
  %v5296 = vunpack.c.h.b16 %v4939
  %v5297 = vunpack.c.l.b16 %v4940
  %v5298 = vunpack.c.h.b16 %v4940
  %v5299 = vunpack.c.l.b16 %v4941
  %v5300 = vunpack.c.h.b16 %v4941
  %v5301 = vunpack.c.l.b16 %v4942
  %v5302 = vunpack.c.l.b16 %v4943
  %v5303 = vunpack.c.h.b16 %v4943
  %v5304 = vunpack.c.l.b16 %v4944
  %v5305 = vunpack.c.h.b16 %v4944
  %v5306 = vunpack.c.l.b16 %v4945
  %v5307 = vunpack.c.h.b16 %v4945
  %v5308 = vunpack.c.l.b16 %v4946
  %v5309 = vunpack.c.h.b16 %v4946
  %v5310 = vunpack.c.l.b16 %v4947
  %v5311 = vunpack.c.l.b16 %v4948
  %v5312 = vunpack.c.h.b16 %v4948
  %v5313 = vunpack.c.l.b16 %v4949
  %v5314 = vunpack.c.h.b16 %v4949
  %v5315 = vunpack.c.l.b16 %v4950
  %v5316 = vunpack.c.h.b16 %v4950
  %v5317 = vunpack.c.l.b16 %v4951
  %v5318 = vunpack.c.h.b16 %v4951
  %v5319 = vunpack.c.l.b16 %v4952
  %v5320 = vunpack.c.l.b16 %v4953
  %v5321 = vunpack.c.h.b16 %v4953
  %v5322 = vunpack.c.l.b16 %v4954
  %v5323 = vunpack.c.h.b16 %v4954
  %v5324 = vunpack.c.l.b16 %v4955
  %v5325 = vunpack.c.h.b16 %v4955
  %v5326 = vunpack.c.l.b16 %v4956
  %v5327 = vunpack.c.h.b16 %v4956
  %v5328 = vunpack.c.l.b16 %v4957
  %v5329 = vunpack.c.l.b16 %v4958
  %v5330 = vunpack.c.h.b16 %v4958
  %v5331 = vunpack.c.l.b16 %v4959
  %v5332 = vunpack.c.h.b16 %v4959
  %v5333 = vunpack.c.l.b16 %v4960
  %v5334 = vunpack.c.h.b16 %v4960
  %v5335 = vunpack.c.l.b16 %v4961
  %v5336 = vunpack.c.h.b16 %v4961
  %v5337 = vunpack.c.l.b16 %v4962
  %v5338 = vpack.c.b16 %v5203, %v5194
  %v5339 = vpack.c.b16 %v5204, %v5195
  %v5340 = vpack.c.b16 %v5205, %v5196
  %v5341 = vpack.c.b16 %v5206, %v5197
  %v5342 = vpack.c.b16 %v5207, %v5198
  %v5343 = vpack.c.b16 %v5208, %v5199
  %v5344 = vpack.c.b16 %v5209, %v5200
  %v5345 = vpack.c.b16 %v5210, %v5201
  %v5346 = vpack.c.b16 %v5211, %v5202
  %v5347 = vpack.c.b16 %v5221, %v5212
  %v5348 = vpack.c.b16 %v5222, %v5213
  %v5349 = vpack.c.b16 %v5223, %v5214
  %v5350 = vpack.c.b16 %v5224, %v5215
  %v5351 = vpack.c.b16 %v5225, %v5216
  %v5352 = vpack.c.b16 %v5226, %v5217
  %v5353 = vpack.c.b16 %v5227, %v5218
  %v5354 = vpack.c.b16 %v5228, %v5219
  %v5355 = vpack.c.b16 %v5229, %v5220
  %v5356 = vpack.c.b16 %v5239, %v5230
  %v5357 = vpack.c.b16 %v5240, %v5231
  %v5358 = vpack.c.b16 %v5241, %v5232
  %v5359 = vpack.c.b16 %v5242, %v5233
  %v5360 = vpack.c.b16 %v5243, %v5234
  %v5361 = vpack.c.b16 %v5244, %v5235
  %v5362 = vpack.c.b16 %v5245, %v5236
  %v5363 = vpack.c.b16 %v5246, %v5237
  %v5364 = vpack.c.b16 %v5247, %v5238
  %v5365 = vpack.c.b16 %v5257, %v5248
  %v5366 = vpack.c.b16 %v5258, %v5249
  %v5367 = vpack.c.b16 %v5259, %v5250
  %v5368 = vpack.c.b16 %v5260, %v5251
  %v5369 = vpack.c.b16 %v5261, %v5252
  %v5370 = vpack.c.b16 %v5262, %v5253
  %v5371 = vpack.c.b16 %v5263, %v5254
  %v5372 = vpack.c.b16 %v5264, %v5255
  %v5373 = vpack.c.b16 %v5265, %v5256
  %v5374 = vpack.c.b16 %v5275, %v5266
  %v5375 = vpack.c.b16 %v5276, %v5267
  %v5376 = vpack.c.b16 %v5277, %v5268
  %v5377 = vpack.c.b16 %v5278, %v5269
  %v5378 = vpack.c.b16 %v5279, %v5270
  %v5379 = vpack.c.b16 %v5280, %v5271
  %v5380 = vpack.c.b16 %v5281, %v5272
  %v5381 = vpack.c.b16 %v5282, %v5273
  %v5382 = vpack.c.b16 %v5283, %v5274
  %v5383 = vpack.c.b16 %v5293, %v5284
  %v5384 = vpack.c.b16 %v5294, %v5285
  %v5385 = vpack.c.b16 %v5295, %v5286
  %v5386 = vpack.c.b16 %v5296, %v5287
  %v5387 = vpack.c.b16 %v5297, %v5288
  %v5388 = vpack.c.b16 %v5298, %v5289
  %v5389 = vpack.c.b16 %v5299, %v5290
  %v5390 = vpack.c.b16 %v5300, %v5291
  %v5391 = vpack.c.b16 %v5301, %v5292
  %v5392 = vpack.c.b16 %v5311, %v5302
  %v5393 = vpack.c.b16 %v5312, %v5303
  %v5394 = vpack.c.b16 %v5313, %v5304
  %v5395 = vpack.c.b16 %v5314, %v5305
  %v5396 = vpack.c.b16 %v5315, %v5306
  %v5397 = vpack.c.b16 %v5316, %v5307
  %v5398 = vpack.c.b16 %v5317, %v5308
  %v5399 = vpack.c.b16 %v5318, %v5309
  %v5400 = vpack.c.b16 %v5319, %v5310
  %v5401 = vpack.c.b16 %v5329, %v5320
  %v5402 = vpack.c.b16 %v5330, %v5321
  %v5403 = vpack.c.b16 %v5331, %v5322
  %v5404 = vpack.c.b16 %v5332, %v5323
  %v5405 = vpack.c.b16 %v5333, %v5324
  %v5406 = vpack.c.b16 %v5334, %v5325
  %v5407 = vpack.c.b16 %v5335, %v5326
  %v5408 = vpack.c.b16 %v5336, %v5327
  %v5409 = vpack.c.b16 %v5337, %v5328
  %v5626 = vunpack.c.l.b16 %v4963
  %v5627 = vunpack.c.l.b16 %v4964
  %v5628 = vunpack.c.l.b16 %v4965
  %v5629 = vunpack.c.l.b16 %v4966
  %v5630 = vunpack.c.l.b16 %v4967
  %v5631 = vunpack.c.l.b16 %v4968
  %v5632 = vunpack.c.l.b16 %v4969
  %v5633 = vunpack.c.l.b16 %v4970
  %v5634 = vunpack.c.l.b16 %v4971
  %v5635 = vunpack.c.l.b16 %v4972
  %v5636 = vunpack.c.l.b16 %v4973
  %v5637 = vunpack.c.l.b16 %v4974
  %v5638 = vunpack.c.l.b16 %v4975
  %v5639 = vunpack.c.l.b16 %v4976
  %v5640 = vunpack.c.l.b16 %v4977
  %v5641 = vunpack.c.l.b16 %v4978
  %v5642 = vunpack.c.l.b16 %v4979
  %v5643 = vunpack.c.l.b16 %v4980
  %v5644 = vunpack.c.l.b16 %v4981
  %v5645 = vunpack.c.l.b16 %v4982
  %v5646 = vunpack.c.l.b16 %v4983
  %v5647 = vunpack.c.l.b16 %v4984
  %v5648 = vunpack.c.l.b16 %v4985
  %v5649 = vunpack.c.l.b16 %v4986
  %v5650 = vunpack.c.l.b16 %v4987
  %v5651 = vunpack.c.l.b16 %v4988
  %v5652 = vunpack.c.l.b16 %v4989
  %v5653 = vunpack.c.l.b16 %v4990
  %v5654 = vunpack.c.l.b16 %v4991
  %v5655 = vunpack.c.l.b16 %v4992
  %v5656 = vunpack.c.l.b16 %v4993
  %v5657 = vunpack.c.l.b16 %v4994
  %v5658 = vunpack.c.l.b16 %v4995
  %v5659 = vunpack.c.l.b16 %v4996
  %v5660 = vunpack.c.l.b16 %v4997
  %v5661 = vunpack.c.l.b16 %v4998
  %v5662 = vunpack.c.l.b16 %v4999
  %v5663 = vunpack.c.l.b16 %v5000
  %v5664 = vunpack.c.l.b16 %v5001
  %v5665 = vunpack.c.l.b16 %v5002
  %v5666 = vunpack.c.l.b16 %v5003
  %v5667 = vunpack.c.l.b16 %v5004
  %v5668 = vunpack.c.l.b16 %v5005
  %v5669 = vunpack.c.l.b16 %v5006
  %v5670 = vunpack.c.l.b16 %v5007
  %v5671 = vunpack.c.l.b16 %v5008
  %v5672 = vunpack.c.l.b16 %v5009
  %v5673 = vunpack.c.l.b16 %v5010
  %v5674 = vunpack.c.l.b16 %v5011
  %v5675 = vunpack.c.l.b16 %v5012
  %v5676 = vunpack.c.l.b16 %v5013
  %v5677 = vunpack.c.l.b16 %v5014
  %v5678 = vunpack.c.l.b16 %v5015
  %v5679 = vunpack.c.l.b16 %v5016
  %v5680 = vunpack.c.l.b16 %v5017
  %v5681 = vunpack.c.l.b16 %v5018
  %v5682 = vunpack.c.l.b16 %v5019
  %v5683 = vunpack.c.l.b16 %v5020
  %v5684 = vunpack.c.l.b16 %v5021
  %v5685 = vunpack.c.l.b16 %v5022
  %v5686 = vunpack.c.l.b16 %v5023
  %v5687 = vunpack.c.l.b16 %v5024
  %v5688 = vunpack.c.l.b16 %v5025
  %v5689 = vunpack.c.l.b16 %v5026
  %v5690 = vunpack.c.l.b16 %v5027
  %v5691 = vunpack.c.l.b16 %v5028
  %v5692 = vunpack.c.l.b16 %v5029
  %v5693 = vunpack.c.l.b16 %v5030
  %v5694 = vunpack.c.l.b16 %v5031
  %v5695 = vunpack.c.l.b16 %v5032
  %v5696 = vunpack.c.l.b16 %v5033
  %v5697 = vunpack.c.l.b16 %v5034
  %v5698 = vunpack.c.l.b16 %v5035
  %v5699 = vunpack.c.l.b16 %v5036
  %v5700 = vunpack.c.l.b16 %v5037
  %v5701 = vunpack.c.l.b16 %v5038
  %v5702 = vunpack.c.l.b16 %v5039
  %v5703 = vunpack.c.l.b16 %v5040
  %v5704 = vunpack.c.l.b16 %v5041
  %v5705 = vunpack.c.l.b16 %v5042
  %v5706 = vunpack.c.l.b16 %v5043
  %v5707 = vunpack.c.l.b16 %v5044
  %v5708 = vunpack.c.l.b16 %v5045
  %v5709 = vunpack.c.l.b16 %v5046
  %v5710 = vunpack.c.l.b16 %v5047
  %v5711 = vunpack.c.l.b16 %v5048
  %v5712 = vunpack.c.l.b16 %v5049
  %v5713 = vunpack.c.l.b16 %v5050
  %v5714 = vunpack.c.l.b16 %v5051
  %v5715 = vunpack.c.l.b16 %v5052
  %v5716 = vunpack.c.l.b16 %v5053
  %v5717 = vunpack.c.l.b16 %v5054
  %v5718 = vunpack.c.l.b16 %v5055
  %v5719 = vunpack.c.l.b16 %v5056
  %v5720 = vunpack.c.l.b16 %v5057
  %v5721 = vunpack.c.l.b16 %v5058
  %v5722 = vunpack.c.l.b16 %v5059
  %v5723 = vunpack.c.l.b16 %v5060
  %v5724 = vunpack.c.l.b16 %v5061
  %v5725 = vunpack.c.l.b16 %v5062
  %v5726 = vunpack.c.l.b16 %v5063
  %v5727 = vunpack.c.l.b16 %v5064
  %v5728 = vunpack.c.l.b16 %v5065
  %v5729 = vunpack.c.l.b16 %v5066
  %v5730 = vunpack.c.l.b16 %v5067
  %v5731 = vunpack.c.l.b16 %v5068
  %v5732 = vunpack.c.l.b16 %v5069
  %v5733 = vunpack.c.l.b16 %v5070
  %v5734 = vunpack.c.l.b16 %v5071
  %v5735 = vunpack.c.l.b16 %v5072
  %v5736 = vunpack.c.l.b16 %v5073
  %v5737 = vunpack.c.l.b16 %v5074
  %v5738 = vunpack.c.l.b16 %v5075
  %v5739 = vunpack.c.l.b16 %v5076
  %v5740 = vunpack.c.l.b16 %v5077
  %v5741 = vunpack.c.l.b16 %v5078
  %v5742 = vunpack.c.l.b16 %v5079
  %v5743 = vunpack.c.l.b16 %v5080
  %v5744 = vunpack.c.l.b16 %v5081
  %v5745 = vunpack.c.l.b16 %v5082
  %v5746 = vunpack.c.l.b16 %v5083
  %v5747 = vunpack.c.l.b16 %v5084
  %v5748 = vunpack.c.l.b16 %v5085
  %v5749 = vunpack.c.l.b16 %v5086
  %v5750 = vunpack.c.l.b16 %v5087
  %v5751 = vunpack.c.l.b16 %v5088
  %v5752 = vunpack.c.l.b16 %v5089
  %v5753 = vunpack.c.l.b16 %v5090
  %v5754 = vunpack.c.l.b16 %v5091
  %v5755 = vunpack.c.l.b16 %v5092
  %v5756 = vunpack.c.l.b16 %v5093
  %v5757 = vunpack.c.l.b16 %v5094
  %v5758 = vunpack.c.l.b16 %v5095
  %v5759 = vunpack.c.l.b16 %v5096
  %v5760 = vunpack.c.l.b16 %v5097
  %v5761 = vunpack.c.l.b16 %v5098
  %v5762 = vunpack.c.l.b16 %v5099
  %v5763 = vunpack.c.l.b16 %v5100
  %v5764 = vunpack.c.l.b16 %v5101
  %v5765 = vunpack.c.l.b16 %v5102
  %v5766 = vunpack.c.l.b16 %v5103
  %v5767 = vunpack.c.l.b16 %v5104
  %v5768 = vunpack.c.l.b16 %v5105
  %v5769 = vunpack.c.l.b16 %v5106
  %v5770 = vpack.c.b16 %v5627, %v5626
  %v5771 = vpack.c.b16 %v5629, %v5628
  %v5772 = vpack.c.b16 %v5631, %v5630
  %v5773 = vpack.c.b16 %v5633, %v5632
  %v5774 = vpack.c.b16 %v5635, %v5634
  %v5775 = vpack.c.b16 %v5637, %v5636
  %v5776 = vpack.c.b16 %v5639, %v5638
  %v5777 = vpack.c.b16 %v5641, %v5640
  %v5778 = vpack.c.b16 %v5643, %v5642
  %v5779 = vpack.c.b16 %v5645, %v5644
  %v5780 = vpack.c.b16 %v5647, %v5646
  %v5781 = vpack.c.b16 %v5649, %v5648
  %v5782 = vpack.c.b16 %v5651, %v5650
  %v5783 = vpack.c.b16 %v5653, %v5652
  %v5784 = vpack.c.b16 %v5655, %v5654
  %v5785 = vpack.c.b16 %v5657, %v5656
  %v5786 = vpack.c.b16 %v5659, %v5658
  %v5787 = vpack.c.b16 %v5661, %v5660
  %v5788 = vpack.c.b16 %v5663, %v5662
  %v5789 = vpack.c.b16 %v5665, %v5664
  %v5790 = vpack.c.b16 %v5667, %v5666
  %v5791 = vpack.c.b16 %v5669, %v5668
  %v5792 = vpack.c.b16 %v5671, %v5670
  %v5793 = vpack.c.b16 %v5673, %v5672
  %v5794 = vpack.c.b16 %v5675, %v5674
  %v5795 = vpack.c.b16 %v5677, %v5676
  %v5796 = vpack.c.b16 %v5679, %v5678
  %v5797 = vpack.c.b16 %v5681, %v5680
  %v5798 = vpack.c.b16 %v5683, %v5682
  %v5799 = vpack.c.b16 %v5685, %v5684
  %v5800 = vpack.c.b16 %v5687, %v5686
  %v5801 = vpack.c.b16 %v5689, %v5688
  %v5802 = vpack.c.b16 %v5691, %v5690
  %v5803 = vpack.c.b16 %v5693, %v5692
  %v5804 = vpack.c.b16 %v5695, %v5694
  %v5805 = vpack.c.b16 %v5697, %v5696
  %v5806 = vpack.c.b16 %v5699, %v5698
  %v5807 = vpack.c.b16 %v5701, %v5700
  %v5808 = vpack.c.b16 %v5703, %v5702
  %v5809 = vpack.c.b16 %v5705, %v5704
  %v5810 = vpack.c.b16 %v5707, %v5706
  %v5811 = vpack.c.b16 %v5709, %v5708
  %v5812 = vpack.c.b16 %v5711, %v5710
  %v5813 = vpack.c.b16 %v5713, %v5712
  %v5814 = vpack.c.b16 %v5715, %v5714
  %v5815 = vpack.c.b16 %v5717, %v5716
  %v5816 = vpack.c.b16 %v5719, %v5718
  %v5817 = vpack.c.b16 %v5721, %v5720
  %v5818 = vpack.c.b16 %v5723, %v5722
  %v5819 = vpack.c.b16 %v5725, %v5724
  %v5820 = vpack.c.b16 %v5727, %v5726
  %v5821 = vpack.c.b16 %v5729, %v5728
  %v5822 = vpack.c.b16 %v5731, %v5730
  %v5823 = vpack.c.b16 %v5733, %v5732
  %v5824 = vpack.c.b16 %v5735, %v5734
  %v5825 = vpack.c.b16 %v5737, %v5736
  %v5826 = vpack.c.b16 %v5739, %v5738
  %v5827 = vpack.c.b16 %v5741, %v5740
  %v5828 = vpack.c.b16 %v5743, %v5742
  %v5829 = vpack.c.b16 %v5745, %v5744
  %v5830 = vpack.c.b16 %v5747, %v5746
  %v5831 = vpack.c.b16 %v5749, %v5748
  %v5832 = vpack.c.b16 %v5751, %v5750
  %v5833 = vpack.c.b16 %v5753, %v5752
  %v5834 = vpack.c.b16 %v5755, %v5754
  %v5835 = vpack.c.b16 %v5757, %v5756
  %v5836 = vpack.c.b16 %v5759, %v5758
  %v5837 = vpack.c.b16 %v5761, %v5760
  %v5838 = vpack.c.b16 %v5763, %v5762
  %v5839 = vpack.c.b16 %v5765, %v5764
  %v5840 = vpack.c.b16 %v5767, %v5766
  %v5841 = vpack.c.b16 %v5769, %v5768
  %5914 = vmatprep.subr.bf16.mxu0 0
  %5915 = vmatpush1.bf16.msra.mxu0 %v5777
  %5916 = vmatprep.subr.bf16.mxu0 0
  %5917 = vmatpush1.bf16.msra.mxu0 %v5776
  %5918 = vmatprep.subr.bf16.mxu0 0
  %5919 = vmatpush1.bf16.msra.mxu0 %v5775
  %5920 = vmatprep.subr.bf16.mxu0 0
  %5921 = vmatpush1.bf16.msra.mxu0 %v5774
  %5922 = vmatprep.subr.bf16.mxu0 0
  %5923 = vmatpush1.bf16.msra.mxu0 %v5773
  %5924 = vmatprep.subr.bf16.mxu0 0
  %5925 = vmatpush1.bf16.msra.mxu0 %v5772
  %5926 = vmatprep.subr.bf16.mxu0 0
  %5927 = vmatpush1.bf16.msra.mxu0 %v5771
  %5928 = vmatprep.subr.bf16.mxu0 0
  %5929 = vmatpush1.bf16.msra.mxu0 %v5770
  %5930 = vmatprep.subr.bf16.mxu0 0
  %5931 = vmatpush2.bf16.msra.mxu0 %v5785
  %5932 = vmatprep.subr.bf16.mxu0 0
  %5933 = vmatpush2.bf16.msra.mxu0 %v5784
  %5934 = vmatprep.subr.bf16.mxu0 0
  %5935 = vmatpush2.bf16.msra.mxu0 %v5783
  %5936 = vmatprep.subr.bf16.mxu0 0
  %5937 = vmatpush2.bf16.msra.mxu0 %v5782
  %5938 = vmatprep.subr.bf16.mxu0 0
  %5939 = vmatpush2.bf16.msra.mxu0 %v5781
  %5940 = vmatprep.subr.bf16.mxu0 0
  %5941 = vmatpush2.bf16.msra.mxu0 %v5780
  %5942 = vmatprep.subr.bf16.mxu0 0
  %5943 = vmatpush2.bf16.msra.mxu0 %v5779
  %5944 = vmatprep.subr.bf16.mxu0 0
  %5945 = vmatpush2.bf16.msra.mxu0 %v5778
  %5946 = vmatprep.mubr.bf16.mxu0 %v5339
  %5947 = vmatmul.mubr.bf16.gmra.mxu0 %v5338
  %v5948 = vpop.f32.mrf.mxu0
  %v5949 = vadd.f32 %v5112, %v5948
  %v5950 = vpop.f32.mrf.mxu0
  %v5951 = vpop.f32.mrf.mxu0
  %v5952 = vadd.f32 %v5112, %v5951
  %v5953 = vpop.f32.mrf.mxu0
  %5954 = vmatprep.mubr.bf16.mxu0 %v5348
  %5955 = vmatmul.mubr.bf16.gmra.mxu0 %v5347
  %v5956 = vpop.f32.mrf.mxu0
  %v5957 = vadd.f32 %v5112, %v5956
  %v5958 = vpop.f32.mrf.mxu0
  %v5959 = vpop.f32.mrf.mxu0
  %v5960 = vadd.f32 %v5112, %v5959
  %v5961 = vpop.f32.mrf.mxu0
  %5962 = vmatprep.mubr.bf16.mxu0 %v5357
  %5963 = vmatmul.mubr.bf16.gmra.mxu0 %v5356
  %v5964 = vpop.f32.mrf.mxu0
  %v5965 = vadd.f32 %v5112, %v5964
  %v5966 = vpop.f32.mrf.mxu0
  %v5967 = vpop.f32.mrf.mxu0
  %v5968 = vadd.f32 %v5112, %v5967
  %v5969 = vpop.f32.mrf.mxu0
  %5970 = vmatprep.mubr.bf16.mxu0 %v5366
  %5971 = vmatmul.mubr.bf16.gmra.mxu0 %v5365
  %v5972 = vpop.f32.mrf.mxu0
  %v5973 = vadd.f32 %v5112, %v5972
  %v5974 = vpop.f32.mrf.mxu0
  %v5975 = vpop.f32.mrf.mxu0
  %v5976 = vadd.f32 %v5112, %v5975
  %v5977 = vpop.f32.mrf.mxu0
  %5978 = vmatprep.mubr.bf16.mxu0 %v5375
  %5979 = vmatmul.mubr.bf16.gmra.mxu0 %v5374
  %v5980 = vpop.f32.mrf.mxu0
  %v5981 = vadd.f32 %v5112, %v5980
  %v5982 = vpop.f32.mrf.mxu0
  %v5983 = vpop.f32.mrf.mxu0
  %v5984 = vadd.f32 %v5112, %v5983
  %v5985 = vpop.f32.mrf.mxu0
  %5986 = vmatprep.mubr.bf16.mxu0 %v5384
  %5987 = vmatmul.mubr.bf16.gmra.mxu0 %v5383
  %v5988 = vpop.f32.mrf.mxu0
  %v5989 = vadd.f32 %v5112, %v5988
  %v5990 = vpop.f32.mrf.mxu0
  %v5991 = vpop.f32.mrf.mxu0
  %v5992 = vadd.f32 %v5112, %v5991
  %v5993 = vpop.f32.mrf.mxu0
  %5994 = vmatprep.mubr.bf16.mxu0 %v5393
  %5995 = vmatmul.mubr.bf16.gmra.mxu0 %v5392
  %v5996 = vpop.f32.mrf.mxu0
  %v5997 = vadd.f32 %v5112, %v5996
  %v5998 = vpop.f32.mrf.mxu0
  %v5999 = vpop.f32.mrf.mxu0
  %v6000 = vadd.f32 %v5112, %v5999
  %v6001 = vpop.f32.mrf.mxu0
  %6002 = vmatprep.mubr.bf16.mxu0 %v5402
  %6003 = vmatmul.mubr.bf16.gmra.mxu0 %v5401
  %v6004 = vpop.f32.mrf.mxu0
  %v6005 = vadd.f32 %v5112, %v6004
  %v6006 = vpop.f32.mrf.mxu0
  %v6007 = vpop.f32.mrf.mxu0
  %v6008 = vadd.f32 %v5112, %v6007
  %v6009 = vpop.f32.mrf.mxu0
  %6010 = vdwg.mxu0
  %6011 = vmatprep.subr.bf16.mxu0 0
  %6012 = vmatpush1.bf16.msra.mxu0 %v5793
  %6013 = vmatprep.subr.bf16.mxu0 0
  %6014 = vmatpush1.bf16.msra.mxu0 %v5792
  %6015 = vmatprep.subr.bf16.mxu0 0
  %6016 = vmatpush1.bf16.msra.mxu0 %v5791
  %6017 = vmatprep.subr.bf16.mxu0 0
  %6018 = vmatpush1.bf16.msra.mxu0 %v5790
  %6019 = vmatprep.subr.bf16.mxu0 0
  %6020 = vmatpush1.bf16.msra.mxu0 %v5789
  %6021 = vmatprep.subr.bf16.mxu0 0
  %6022 = vmatpush1.bf16.msra.mxu0 %v5788
  %6023 = vmatprep.subr.bf16.mxu0 0
  %6024 = vmatpush1.bf16.msra.mxu0 %v5787
  %6025 = vmatprep.subr.bf16.mxu0 0
  %6026 = vmatpush1.bf16.msra.mxu0 %v5786
  %6027 = vmatprep.subr.bf16.mxu0 0
  %6028 = vmatpush2.bf16.msra.mxu0 %v5801
  %6029 = vmatprep.subr.bf16.mxu0 0
  %6030 = vmatpush2.bf16.msra.mxu0 %v5800
  %6031 = vmatprep.subr.bf16.mxu0 0
  %6032 = vmatpush2.bf16.msra.mxu0 %v5799
  %6033 = vmatprep.subr.bf16.mxu0 0
  %6034 = vmatpush2.bf16.msra.mxu0 %v5798
  %6035 = vmatprep.subr.bf16.mxu0 0
  %6036 = vmatpush2.bf16.msra.mxu0 %v5797
  %6037 = vmatprep.subr.bf16.mxu0 0
  %6038 = vmatpush2.bf16.msra.mxu0 %v5796
  %6039 = vmatprep.subr.bf16.mxu0 0
  %6040 = vmatpush2.bf16.msra.mxu0 %v5795
  %6041 = vmatprep.subr.bf16.mxu0 0
  %6042 = vmatpush2.bf16.msra.mxu0 %v5794
  %6043 = vmatprep.mubr.bf16.mxu0 %v5341
  %6044 = vmatmul.mubr.bf16.gmra.mxu0 %v5340
  %v6045 = vpop.f32.mrf.mxu0
  %v6046 = vadd.f32 %v5949, %v6045
  %v6047 = vpop.f32.mrf.mxu0
  %v6048 = vpop.f32.mrf.mxu0
  %v6049 = vadd.f32 %v5952, %v6048
  %v6050 = vpop.f32.mrf.mxu0
  %6051 = vmatprep.mubr.bf16.mxu0 %v5350
  %6052 = vmatmul.mubr.bf16.gmra.mxu0 %v5349
  %v6053 = vpop.f32.mrf.mxu0
  %v6054 = vadd.f32 %v5957, %v6053
  %v6055 = vpop.f32.mrf.mxu0
  %v6056 = vpop.f32.mrf.mxu0
  %v6057 = vadd.f32 %v5960, %v6056
  %v6058 = vpop.f32.mrf.mxu0
  %6059 = vmatprep.mubr.bf16.mxu0 %v5359
  %6060 = vmatmul.mubr.bf16.gmra.mxu0 %v5358
  %v6061 = vpop.f32.mrf.mxu0
  %v6062 = vadd.f32 %v5965, %v6061
  %v6063 = vpop.f32.mrf.mxu0
  %v6064 = vpop.f32.mrf.mxu0
  %v6065 = vadd.f32 %v5968, %v6064
  %v6066 = vpop.f32.mrf.mxu0
  %6067 = vmatprep.mubr.bf16.mxu0 %v5368
  %6068 = vmatmul.mubr.bf16.gmra.mxu0 %v5367
  %v6069 = vpop.f32.mrf.mxu0
  %v6070 = vadd.f32 %v5973, %v6069
  %v6071 = vpop.f32.mrf.mxu0
  %v6072 = vpop.f32.mrf.mxu0
  %v6073 = vadd.f32 %v5976, %v6072
  %v6074 = vpop.f32.mrf.mxu0
  %6075 = vmatprep.mubr.bf16.mxu0 %v5377
  %6076 = vmatmul.mubr.bf16.gmra.mxu0 %v5376
  %v6077 = vpop.f32.mrf.mxu0
  %v6078 = vadd.f32 %v5981, %v6077
  %v6079 = vpop.f32.mrf.mxu0
  %v6080 = vpop.f32.mrf.mxu0
  %v6081 = vadd.f32 %v5984, %v6080
  %v6082 = vpop.f32.mrf.mxu0
  %6083 = vmatprep.mubr.bf16.mxu0 %v5386
  %6084 = vmatmul.mubr.bf16.gmra.mxu0 %v5385
  %v6085 = vpop.f32.mrf.mxu0
  %v6086 = vadd.f32 %v5989, %v6085
  %v6087 = vpop.f32.mrf.mxu0
  %v6088 = vpop.f32.mrf.mxu0
  %v6089 = vadd.f32 %v5992, %v6088
  %v6090 = vpop.f32.mrf.mxu0
  %6091 = vmatprep.mubr.bf16.mxu0 %v5395
  %6092 = vmatmul.mubr.bf16.gmra.mxu0 %v5394
  %v6093 = vpop.f32.mrf.mxu0
  %v6094 = vadd.f32 %v5997, %v6093
  %v6095 = vpop.f32.mrf.mxu0
  %v6096 = vpop.f32.mrf.mxu0
  %v6097 = vadd.f32 %v6000, %v6096
  %v6098 = vpop.f32.mrf.mxu0
  %6099 = vmatprep.mubr.bf16.mxu0 %v5404
  %6100 = vmatmul.mubr.bf16.gmra.mxu0 %v5403
  %v6101 = vpop.f32.mrf.mxu0
  %v6102 = vadd.f32 %v6005, %v6101
  %v6103 = vpop.f32.mrf.mxu0
  %v6104 = vpop.f32.mrf.mxu0
  %v6105 = vadd.f32 %v6008, %v6104
  %v6106 = vpop.f32.mrf.mxu0
  %6107 = vdwg.mxu0
  %6108 = vmatprep.subr.bf16.mxu0 0
  %6109 = vmatpush1.bf16.msra.mxu0 %v5809
  %6110 = vmatprep.subr.bf16.mxu0 0
  %6111 = vmatpush1.bf16.msra.mxu0 %v5808
  %6112 = vmatprep.subr.bf16.mxu0 0
  %6113 = vmatpush1.bf16.msra.mxu0 %v5807
  %6114 = vmatprep.subr.bf16.mxu0 0
  %6115 = vmatpush1.bf16.msra.mxu0 %v5806
  %6116 = vmatprep.subr.bf16.mxu0 0
  %6117 = vmatpush1.bf16.msra.mxu0 %v5805
  %6118 = vmatprep.subr.bf16.mxu0 0
  %6119 = vmatpush1.bf16.msra.mxu0 %v5804
  %6120 = vmatprep.subr.bf16.mxu0 0
  %6121 = vmatpush1.bf16.msra.mxu0 %v5803
  %6122 = vmatprep.subr.bf16.mxu0 0
  %6123 = vmatpush1.bf16.msra.mxu0 %v5802
  %6124 = vmatprep.subr.bf16.mxu0 0
  %6125 = vmatpush2.bf16.msra.mxu0 %v5817
  %6126 = vmatprep.subr.bf16.mxu0 0
  %6127 = vmatpush2.bf16.msra.mxu0 %v5816
  %6128 = vmatprep.subr.bf16.mxu0 0
  %6129 = vmatpush2.bf16.msra.mxu0 %v5815
  %6130 = vmatprep.subr.bf16.mxu0 0
  %6131 = vmatpush2.bf16.msra.mxu0 %v5814
  %6132 = vmatprep.subr.bf16.mxu0 0
  %6133 = vmatpush2.bf16.msra.mxu0 %v5813
  %6134 = vmatprep.subr.bf16.mxu0 0
  %6135 = vmatpush2.bf16.msra.mxu0 %v5812
  %6136 = vmatprep.subr.bf16.mxu0 0
  %6137 = vmatpush2.bf16.msra.mxu0 %v5811
  %6138 = vmatprep.subr.bf16.mxu0 0
  %6139 = vmatpush2.bf16.msra.mxu0 %v5810
  %6140 = vmatprep.mubr.bf16.mxu0 %v5343
  %6141 = vmatmul.mubr.bf16.gmra.mxu0 %v5342
  %v6142 = vpop.f32.mrf.mxu0
  %v6143 = vadd.f32 %v6046, %v6142
  %v6144 = vpop.f32.mrf.mxu0
  %v6145 = vpop.f32.mrf.mxu0
  %v6146 = vadd.f32 %v6049, %v6145
  %v6147 = vpop.f32.mrf.mxu0
  %6148 = vmatprep.mubr.bf16.mxu0 %v5352
  %6149 = vmatmul.mubr.bf16.gmra.mxu0 %v5351
  %v6150 = vpop.f32.mrf.mxu0
  %v6151 = vadd.f32 %v6054, %v6150
  %v6152 = vpop.f32.mrf.mxu0
  %v6153 = vpop.f32.mrf.mxu0
  %v6154 = vadd.f32 %v6057, %v6153
  %v6155 = vpop.f32.mrf.mxu0
  %6156 = vmatprep.mubr.bf16.mxu0 %v5361
  %6157 = vmatmul.mubr.bf16.gmra.mxu0 %v5360
  %v6158 = vpop.f32.mrf.mxu0
  %v6159 = vadd.f32 %v6062, %v6158
  %v6160 = vpop.f32.mrf.mxu0
  %v6161 = vpop.f32.mrf.mxu0
  %v6162 = vadd.f32 %v6065, %v6161
  %v6163 = vpop.f32.mrf.mxu0
  %6164 = vmatprep.mubr.bf16.mxu0 %v5370
  %6165 = vmatmul.mubr.bf16.gmra.mxu0 %v5369
  %v6166 = vpop.f32.mrf.mxu0
  %v6167 = vadd.f32 %v6070, %v6166
  %v6168 = vpop.f32.mrf.mxu0
  %v6169 = vpop.f32.mrf.mxu0
  %v6170 = vadd.f32 %v6073, %v6169
  %v6171 = vpop.f32.mrf.mxu0
  %6172 = vmatprep.mubr.bf16.mxu0 %v5379
  %6173 = vmatmul.mubr.bf16.gmra.mxu0 %v5378
  %v6174 = vpop.f32.mrf.mxu0
  %v6175 = vadd.f32 %v6078, %v6174
  %v6176 = vpop.f32.mrf.mxu0
  %v6177 = vpop.f32.mrf.mxu0
  %v6178 = vadd.f32 %v6081, %v6177
  %v6179 = vpop.f32.mrf.mxu0
  %6180 = vmatprep.mubr.bf16.mxu0 %v5388
  %6181 = vmatmul.mubr.bf16.gmra.mxu0 %v5387
  %v6182 = vpop.f32.mrf.mxu0
  %v6183 = vadd.f32 %v6086, %v6182
  %v6184 = vpop.f32.mrf.mxu0
  %v6185 = vpop.f32.mrf.mxu0
  %v6186 = vadd.f32 %v6089, %v6185
  %v6187 = vpop.f32.mrf.mxu0
  %6188 = vmatprep.mubr.bf16.mxu0 %v5397
  %6189 = vmatmul.mubr.bf16.gmra.mxu0 %v5396
  %v6190 = vpop.f32.mrf.mxu0
  %v6191 = vadd.f32 %v6094, %v6190
  %v6192 = vpop.f32.mrf.mxu0
  %v6193 = vpop.f32.mrf.mxu0
  %v6194 = vadd.f32 %v6097, %v6193
  %v6195 = vpop.f32.mrf.mxu0
  %6196 = vmatprep.mubr.bf16.mxu0 %v5406
  %6197 = vmatmul.mubr.bf16.gmra.mxu0 %v5405
  %v6198 = vpop.f32.mrf.mxu0
  %v6199 = vadd.f32 %v6102, %v6198
  %v6200 = vpop.f32.mrf.mxu0
  %v6201 = vpop.f32.mrf.mxu0
  %v6202 = vadd.f32 %v6105, %v6201
  %v6203 = vpop.f32.mrf.mxu0
  %6204 = vdwg.mxu0
  %6205 = vmatprep.subr.bf16.mxu0 0
  %6206 = vmatpush1.bf16.msra.mxu0 %v5825
  %6207 = vmatprep.subr.bf16.mxu0 0
  %6208 = vmatpush1.bf16.msra.mxu0 %v5824
  %6209 = vmatprep.subr.bf16.mxu0 0
  %6210 = vmatpush1.bf16.msra.mxu0 %v5823
  %6211 = vmatprep.subr.bf16.mxu0 0
  %6212 = vmatpush1.bf16.msra.mxu0 %v5822
  %6213 = vmatprep.subr.bf16.mxu0 0
  %6214 = vmatpush1.bf16.msra.mxu0 %v5821
  %6215 = vmatprep.subr.bf16.mxu0 0
  %6216 = vmatpush1.bf16.msra.mxu0 %v5820
  %6217 = vmatprep.subr.bf16.mxu0 0
  %6218 = vmatpush1.bf16.msra.mxu0 %v5819
  %6219 = vmatprep.subr.bf16.mxu0 0
  %6220 = vmatpush1.bf16.msra.mxu0 %v5818
  %6221 = vmatprep.subr.bf16.mxu0 0
  %6222 = vmatpush2.bf16.msra.mxu0 %v5833
  %6223 = vmatprep.subr.bf16.mxu0 0
  %6224 = vmatpush2.bf16.msra.mxu0 %v5832
  %6225 = vmatprep.subr.bf16.mxu0 0
  %6226 = vmatpush2.bf16.msra.mxu0 %v5831
  %6227 = vmatprep.subr.bf16.mxu0 0
  %6228 = vmatpush2.bf16.msra.mxu0 %v5830
  %6229 = vmatprep.subr.bf16.mxu0 0
  %6230 = vmatpush2.bf16.msra.mxu0 %v5829
  %6231 = vmatprep.subr.bf16.mxu0 0
  %6232 = vmatpush2.bf16.msra.mxu0 %v5828
  %6233 = vmatprep.subr.bf16.mxu0 0
  %6234 = vmatpush2.bf16.msra.mxu0 %v5827
  %6235 = vmatprep.subr.bf16.mxu0 0
  %6236 = vmatpush2.bf16.msra.mxu0 %v5826
  %6237 = vmatprep.mubr.bf16.mxu0 %v5345
  %6238 = vmatmul.mubr.bf16.gmra.mxu0 %v5344
  %v6239 = vpop.f32.mrf.mxu0
  %v6240 = vadd.f32 %v6143, %v6239
  %v6241 = vpop.f32.mrf.mxu0
  %v6242 = vpop.f32.mrf.mxu0
  %v6243 = vadd.f32 %v6146, %v6242
  %v6244 = vpop.f32.mrf.mxu0
  %6245 = vmatprep.mubr.bf16.mxu0 %v5354
  %6246 = vmatmul.mubr.bf16.gmra.mxu0 %v5353
  %v6247 = vpop.f32.mrf.mxu0
  %v6248 = vadd.f32 %v6151, %v6247
  %v6249 = vpop.f32.mrf.mxu0
  %v6250 = vpop.f32.mrf.mxu0
  %v6251 = vadd.f32 %v6154, %v6250
  %v6252 = vpop.f32.mrf.mxu0
  %6253 = vmatprep.mubr.bf16.mxu0 %v5363
  %6254 = vmatmul.mubr.bf16.gmra.mxu0 %v5362
  %v6255 = vpop.f32.mrf.mxu0
  %v6256 = vadd.f32 %v6159, %v6255
  %v6257 = vpop.f32.mrf.mxu0
  %v6258 = vpop.f32.mrf.mxu0
  %v6259 = vadd.f32 %v6162, %v6258
  %v6260 = vpop.f32.mrf.mxu0
  %6261 = vmatprep.mubr.bf16.mxu0 %v5372
  %6262 = vmatmul.mubr.bf16.gmra.mxu0 %v5371
  %v6263 = vpop.f32.mrf.mxu0
  %v6264 = vadd.f32 %v6167, %v6263
  %v6265 = vpop.f32.mrf.mxu0
  %v6266 = vpop.f32.mrf.mxu0
  %v6267 = vadd.f32 %v6170, %v6266
  %v6268 = vpop.f32.mrf.mxu0
  %6269 = vmatprep.mubr.bf16.mxu0 %v5381
  %6270 = vmatmul.mubr.bf16.gmra.mxu0 %v5380
  %v6271 = vpop.f32.mrf.mxu0
  %v6272 = vadd.f32 %v6175, %v6271
  %v6273 = vpop.f32.mrf.mxu0
  %v6274 = vpop.f32.mrf.mxu0
  %v6275 = vadd.f32 %v6178, %v6274
  %v6276 = vpop.f32.mrf.mxu0
  %6277 = vmatprep.mubr.bf16.mxu0 %v5390
  %6278 = vmatmul.mubr.bf16.gmra.mxu0 %v5389
  %v6279 = vpop.f32.mrf.mxu0
  %v6280 = vadd.f32 %v6183, %v6279
  %v6281 = vpop.f32.mrf.mxu0
  %v6282 = vpop.f32.mrf.mxu0
  %v6283 = vadd.f32 %v6186, %v6282
  %v6284 = vpop.f32.mrf.mxu0
  %6285 = vmatprep.mubr.bf16.mxu0 %v5399
  %6286 = vmatmul.mubr.bf16.gmra.mxu0 %v5398
  %v6287 = vpop.f32.mrf.mxu0
  %v6288 = vadd.f32 %v6191, %v6287
  %v6289 = vpop.f32.mrf.mxu0
  %v6290 = vpop.f32.mrf.mxu0
  %v6291 = vadd.f32 %v6194, %v6290
  %v6292 = vpop.f32.mrf.mxu0
  %6293 = vmatprep.mubr.bf16.mxu0 %v5408
  %6294 = vmatmul.mubr.bf16.gmra.mxu0 %v5407
  %v6295 = vpop.f32.mrf.mxu0
  %v6296 = vadd.f32 %v6199, %v6295
  %v6297 = vpop.f32.mrf.mxu0
  %v6298 = vpop.f32.mrf.mxu0
  %v6299 = vadd.f32 %v6202, %v6298
  %v6300 = vpop.f32.mrf.mxu0
  %6301 = vdwg.mxu0
  %6302 = vmatprep.subr.bf16.mxu0 0
  %6303 = vmatpush1.bf16.msra.mxu0 %v5841
  %6304 = vmatprep.subr.bf16.mxu0 0
  %6305 = vmatpush1.bf16.msra.mxu0 %v5840
  %6306 = vmatprep.subr.bf16.mxu0 0
  %6307 = vmatpush1.bf16.msra.mxu0 %v5839
  %6308 = vmatprep.subr.bf16.mxu0 0
  %6309 = vmatpush1.bf16.msra.mxu0 %v5838
  %6310 = vmatprep.subr.bf16.mxu0 0
  %6311 = vmatpush1.bf16.msra.mxu0 %v5837
  %6312 = vmatprep.subr.bf16.mxu0 0
  %6313 = vmatpush1.bf16.msra.mxu0 %v5836
  %6314 = vmatprep.subr.bf16.mxu0 0
  %6315 = vmatpush1.bf16.msra.mxu0 %v5835
  %6316 = vmatprep.subr.bf16.mxu0 0
  %6317 = vmatpush1.bf16.msra.mxu0 %v5834
  %6318 = vmatprep.subr.bf16.mxu0 0
  %6319 = vmatpush2.bf16.msra.mxu0 0
  %6320 = vmatprep.subr.bf16.mxu0 0
  %6321 = vmatpush2.bf16.msra.mxu0 0
  %6322 = vmatprep.subr.bf16.mxu0 0
  %6323 = vmatpush2.bf16.msra.mxu0 0
  %6324 = vmatprep.subr.bf16.mxu0 0
  %6325 = vmatpush2.bf16.msra.mxu0 0
  %6326 = vmatprep.subr.bf16.mxu0 0
  %6327 = vmatpush2.bf16.msra.mxu0 0
  %6328 = vmatprep.subr.bf16.mxu0 0
  %6329 = vmatpush2.bf16.msra.mxu0 0
  %6330 = vmatprep.subr.bf16.mxu0 0
  %6331 = vmatpush2.bf16.msra.mxu0 0
  %6332 = vmatprep.subr.bf16.mxu0 0
  %6333 = vmatpush2.bf16.msra.mxu0 0
  %6334 = vmatprep.mubr.bf16.mxu0 0
  %6335 = vmatmul.mubr.bf16.gmra.mxu0 %v5346
  %v6336 = vpop.f32.mrf.mxu0
  %v6337 = vadd.f32 %v6240, %v6336
  %v6338 = vpop.f32.mrf.mxu0
  %v6339 = vpop.f32.mrf.mxu0
  %v6340 = vadd.f32 %v6243, %v6339
  %v6341 = vpop.f32.mrf.mxu0
  %6342 = vmatprep.mubr.bf16.mxu0 0
  %6343 = vmatmul.mubr.bf16.gmra.mxu0 %v5355
  %v6344 = vpop.f32.mrf.mxu0
  %v6345 = vadd.f32 %v6248, %v6344
  %v6346 = vpop.f32.mrf.mxu0
  %v6347 = vpop.f32.mrf.mxu0
  %v6348 = vadd.f32 %v6251, %v6347
  %v6349 = vpop.f32.mrf.mxu0
  %6350 = vmatprep.mubr.bf16.mxu0 0
  %6351 = vmatmul.mubr.bf16.gmra.mxu0 %v5364
  %v6352 = vpop.f32.mrf.mxu0
  %v6353 = vadd.f32 %v6256, %v6352
  %v6354 = vpop.f32.mrf.mxu0
  %v6355 = vpop.f32.mrf.mxu0
  %v6356 = vadd.f32 %v6259, %v6355
  %v6357 = vpop.f32.mrf.mxu0
  %6358 = vmatprep.mubr.bf16.mxu0 0
  %6359 = vmatmul.mubr.bf16.gmra.mxu0 %v5373
  %v6360 = vpop.f32.mrf.mxu0
  %v6361 = vadd.f32 %v6264, %v6360
  %v6362 = vpop.f32.mrf.mxu0
  %v6363 = vpop.f32.mrf.mxu0
  %v6364 = vadd.f32 %v6267, %v6363
  %v6365 = vpop.f32.mrf.mxu0
  %6366 = vmatprep.mubr.bf16.mxu0 0
  %6367 = vmatmul.mubr.bf16.gmra.mxu0 %v5382
  %v6368 = vpop.f32.mrf.mxu0
  %v6369 = vadd.f32 %v6272, %v6368
  %v6370 = vpop.f32.mrf.mxu0
  %v6371 = vpop.f32.mrf.mxu0
  %v6372 = vadd.f32 %v6275, %v6371
  %v6373 = vpop.f32.mrf.mxu0
  %6374 = vmatprep.mubr.bf16.mxu0 0
  %6375 = vmatmul.mubr.bf16.gmra.mxu0 %v5391
  %v6376 = vpop.f32.mrf.mxu0
  %v6377 = vadd.f32 %v6280, %v6376
  %v6378 = vpop.f32.mrf.mxu0
  %v6379 = vpop.f32.mrf.mxu0
  %v6380 = vadd.f32 %v6283, %v6379
  %v6381 = vpop.f32.mrf.mxu0
  %6382 = vmatprep.mubr.bf16.mxu0 0
  %6383 = vmatmul.mubr.bf16.gmra.mxu0 %v5400
  %v6384 = vpop.f32.mrf.mxu0
  %v6385 = vadd.f32 %v6288, %v6384
  %v6386 = vpop.f32.mrf.mxu0
  %v6387 = vpop.f32.mrf.mxu0
  %v6388 = vadd.f32 %v6291, %v6387
  %v6389 = vpop.f32.mrf.mxu0
  %6390 = vmatprep.mubr.bf16.mxu0 0
  %6391 = vmatmul.mubr.bf16.gmra.mxu0 %v5409
  %v6392 = vpop.f32.mrf.mxu0
  %v6393 = vadd.f32 %v6296, %v6392
  %v6394 = vpop.f32.mrf.mxu0
  %v6395 = vpop.f32.mrf.mxu0
  %v6396 = vadd.f32 %v6299, %v6395
  %v6397 = vpop.f32.mrf.mxu0
  %6398 = vdwg.mxu0
  %v6399 = vmax.f32 %v6337, 0.0
  %v6400 = vmax.f32 %v6340, 0.0
  %v6401 = vmax.f32 %v6345, 0.0
  %v6402 = vmax.f32 %v6348, 0.0
  %v6403 = vmax.f32 %v6353, 0.0
  %v6404 = vmax.f32 %v6356, 0.0
  %v6405 = vmax.f32 %v6361, 0.0
  %v6406 = vmax.f32 %v6364, 0.0
  %v6407 = vmax.f32 %v6369, 0.0
  %v6408 = vmax.f32 %v6372, 0.0
  %v6409 = vmax.f32 %v6377, 0.0
  %v6410 = vmax.f32 %v6380, 0.0
  %v6411 = vmax.f32 %v6385, 0.0
  %v6412 = vmax.f32 %v6388, 0.0
  %v6413 = vmax.f32 %v6393, 0.0
  %v6414 = vmax.f32 %v6396, 0.0
  %v6415 = vpack.c.bf16 %v6400, %v6399
  %v6416 = vpack.c.bf16 %v6402, %v6401
  %v6417 = vpack.c.bf16 %v6404, %v6403
  %v6418 = vpack.c.bf16 %v6406, %v6405
  %v6419 = vpack.c.bf16 %v6408, %v6407
  %v6420 = vpack.c.bf16 %v6410, %v6409
  %v6421 = vpack.c.bf16 %v6412, %v6411
  %v6422 = vpack.c.bf16 %v6414, %v6413
  %v6431 = vunpack.c.l.b16 %v6415
  %v6432 = vunpack.c.h.b16 %v6415
  %v6433 = vunpack.c.l.b16 %v6416
  %v6434 = vunpack.c.h.b16 %v6416
  %v6435 = vunpack.c.l.b16 %v6417
  %v6436 = vunpack.c.h.b16 %v6417
  %v6437 = vunpack.c.l.b16 %v6418
  %v6438 = vunpack.c.h.b16 %v6418
  %v6439 = vunpack.c.l.b16 %v6419
  %v6440 = vunpack.c.h.b16 %v6419
  %v6441 = vunpack.c.l.b16 %v6420
  %v6442 = vunpack.c.h.b16 %v6420
  %v6443 = vunpack.c.l.b16 %v6421
  %v6444 = vunpack.c.h.b16 %v6421
  %v6445 = vunpack.c.l.b16 %v6422
  %v6446 = vunpack.c.h.b16 %v6422
  %v6447 = vpack.c.b16 %v6431, %v6431
  %v6448 = vpack.c.b16 %v6432, %v6432
  %v6449 = vpack.c.b16 %v6433, %v6433
  %v6450 = vpack.c.b16 %v6434, %v6434
  %v6451 = vpack.c.b16 %v6435, %v6435
  %v6452 = vpack.c.b16 %v6436, %v6436
  %v6453 = vpack.c.b16 %v6437, %v6437
  %v6454 = vpack.c.b16 %v6438, %v6438
  %v6455 = vpack.c.b16 %v6439, %v6439
  %v6456 = vpack.c.b16 %v6440, %v6440
  %v6457 = vpack.c.b16 %v6441, %v6441
  %v6458 = vpack.c.b16 %v6442, %v6442
  %v6459 = vpack.c.b16 %v6443, %v6443
  %v6460 = vpack.c.b16 %v6444, %v6444
  %v6461 = vpack.c.b16 %v6445, %v6445
  %v6462 = vpack.c.b16 %v6446, %v6446
  %6479 = vst [vmem:[%s6] sm:$0xf] %v6447
  %6480 = vst [vmem:[%s6 + $0x4] sm:$0xf] %v6448
  %6481 = vst [vmem:[%s6 + $0x8] sm:$0xf] %v6449
  %6482 = vst [vmem:[%s6 + $0xc] sm:$0xf] %v6450
  %6483 = vst [vmem:[%s6 + $0x10] sm:$0xf] %v6451
  %6484 = vst [vmem:[%s6 + $0x14] sm:$0xf] %v6452
  %6485 = vst [vmem:[%s6 + $0x18] sm:$0xf] %v6453
  %6486 = vst [vmem:[%s6 + $0x1c] sm:$0xf] %v6454
  %6487 = vst [vmem:[%s6 + $0x20] sm:$0xf] %v6455
  %6488 = vst [vmem:[%s6 + $0x24] sm:$0xf] %v6456
  %6489 = vst [vmem:[%s6 + $0x28] sm:$0xf] %v6457
  %6490 = vst [vmem:[%s6 + $0x2c] sm:$0xf] %v6458
  %6491 = vst [vmem:[%s6 + $0x30] sm:$0xf] %v6459
  %6492 = vst [vmem:[%s6 + $0x34] sm:$0xf] %v6460
  %6493 = vst [vmem:[%s6 + $0x38] sm:$0xf] %v6461
  %6494 = vst [vmem:[%s6 + $0x3c] sm:$0xf] %v6462
  // Predicated region
  $region26: #{main_output_layer_forward.2} parent=0 // pred_check
    _
  $region27: #{main_output_layer_forward.2} parent=0 // pred_check_branch
    %6496 = sbr.rel (0) target = $region29
  $region28: #{main_output_layer_forward.2} parent=0 // pred_region
    _
  $region29: #{main_output_layer_forward.2} parent=0 // pred_fallthru
    _
  // Predicated region
  $region30: #{main_output_layer_forward.2} parent=0 // pred_check
    _
  $region31: #{main_output_layer_forward.2} parent=0 // pred_check_branch
    %6498 = sbr.rel (0) target = $region33
  $region32: #{main_output_layer_forward.2} parent=0 // pred_region
    _
  $region33: #{main_output_layer_forward.2} parent=0 // pred_fallthru
    _
  // Predicated region
  $region34: #{main_output_layer_forward.2} parent=0 // pred_check
    _
  $region35: #{main_output_layer_forward.2} parent=0 // pred_check_branch
    %6500 = sbr.rel (0) target = $region37
  $region36: #{main_output_layer_forward.2} parent=0 // pred_region
    _
  $region37: #{main_output_layer_forward.2} parent=0 // pred_fallthru
    _
  // Predicated region
  $region38: #{main_output_layer_forward.2} parent=0 // pred_check
    _
  $region39: #{main_output_layer_forward.2} parent=0 // pred_check_branch
    %6502 = sbr.rel (0) target = $region41
  $region40: #{main_output_layer_forward.2} parent=0 // pred_region
    _
  $region41: #{main_output_layer_forward.2} parent=0 // pred_fallthru
    _

</llo_original>
